<compile_context>
chip_gen: v7x
topology: tpu7x:2x2x1
jax: 0.10.0
libtpu: 0.0.40
codegen_flags: <defaults>
</compile_context>

<pallas_src>
import functools

import jax
import jax.numpy as jnp
from jax import lax
from jax.experimental import pallas as pl
from jax.experimental.pallas import tpu as pltpu

_LANE = 128
_SUBLANE = 8


def _round_up(x, m):
    return ((x + m - 1) // m) * m


def _device_kind():
    try:
        return jax.devices()[0].device_kind.lower()
    except Exception:
        return ""


def _tensorcores_per_chip():
    kind = _device_kind()
    return 2 if ("v7" in kind or "7x" in kind) else 1


def _has_bf16_transcendentals():
    kind = _device_kind()
    # v5e and earlier have no bf16 VPU/EUP; keep activations f32 there.
    return not any(v in kind for v in ("v2", "v3", "v4", "v5"))


# -----------------------------------------------------------------------------
# Pallas kernel
# -----------------------------------------------------------------------------
def neural_ode_kernel(dt_ref, sph_ref, z_ref,
                      w1_ref, b1_ref, w2_ref, b2_ref,
                      w3_ref, b3_ref, w4_ref, b4_ref,
                      out_ref, *, matmul_dtype, act_dtype):
    f32 = jnp.float32
    act_is_f32 = jnp.dtype(act_dtype) == jnp.dtype(f32)

    # softplus(beta)/2 scalars, precomputed host-side, resident in SMEM.
    sph1 = sph_ref[0]
    sph2 = sph_ref[1]
    sph3 = sph_ref[2]

    def mm(x, w_ref):
        # Weights re-read from VMEM per use (vld slots are idle in this kernel);
        # keeps live ranges short under the fully unrolled Euler loop.
        return jnp.dot(x.astype(matmul_dtype), w_ref[...],
                       preferred_element_type=f32)

    def swish(x, sph):
        # PyTorch Swish: x * sigmoid(x * softplus(beta)) / 1.1
        #   sigmoid(y) = 0.5*tanh(y/2) + 0.5  -> single EUP push per element.
        #   The 0.5 and the 1/1.1 are folded into the next layer's weights
        #   host-side (scale 1/2.2), so here we return x*(tanh(x*sp/2) + 1).
        y = x * sph
        if not act_is_f32:
            y = y.astype(act_dtype)        # bf16 EUP path on v6e/v7x
        t = jnp.tanh(y).astype(f32)
        return x * t + x

    def vec_field(y):
        # (1, N) bias tiles added directly: implicit sublane broadcast, no
        # materialized (block_b, N) bias copies pinning vregs.
        h = swish(mm(y, w1_ref) + b1_ref[...], sph1)
        h = swish(mm(h, w2_ref) + b2_ref[...], sph2)
        h = swish(mm(h, w3_ref) + b3_ref[...], sph3)
        return mm(h, w4_ref) + b4_ref[...]

    z0 = z_ref[...]
    out_ref[0] = z0                        # odeint returns z(t[0]) == z0 first
    num_steps = out_ref.shape[0] - 1       # static trip count (T - 1)

    def body(i, z):
        z_next = z + dt_ref[i] * vec_field(z)    # explicit Euler step, f32 state
        out_ref[i + 1] = z_next                  # lane-dense, unmasked vst
        return z_next

    # Fully unrolled (T-1 is small/static): the scheduler overlaps step i's
    # store with step i+1's matmuls.
    lax.fori_loop(0, num_steps, body, z0, unroll=True)


# -----------------------------------------------------------------------------
# Wrapper
# -----------------------------------------------------------------------------
def neural_ode_forward(z, t, params, *, block_b=None,
                       matmul_dtype=jnp.float32, act_dtype=None):
    """Euler odeint of the Swish-MLP vector field. Returns (T, B, D) float32."""
    (w1, b1), (w2, b2), (w3, b3), (w4, b4), betas = params
    T = int(t.shape[0])
    B, D = z.shape
    assert T >= 2, "need at least two time points"
    f32 = jnp.float32

    if act_dtype is None:
        if jnp.dtype(matmul_dtype) == jnp.dtype(f32):
            act_dtype = f32
        else:
            act_dtype = jnp.bfloat16 if _has_bf16_transcendentals() else f32

    # --- lane-dense padding of the latent dim (padded lanes stay exactly 0) --
    Dp = _round_up(D, _LANE)
    dpad = Dp - D
    z_p = jnp.pad(z.astype(f32), ((0, 0), (0, dpad)))
    w1_p = jnp.pad(w1.astype(f32), ((0, dpad), (0, 0)))
    w4_p = jnp.pad(w4.astype(f32), ((0, 0), (0, dpad)))
    b4_p = jnp.pad(b4.astype(f32), ((0, 0), (0, dpad)))

    # --- batch tiling: one block per TensorCore ------------------------------
    # v5e/v6e (single TC): one full-batch block, grid=(1,), no grid overhead.
    # v7x (2 TCs): one batch tile per core, grid=(2,), CORE_PARALLEL.
    n_tc = _tensorcores_per_chip()
    if block_b is None:
        block_b = (_round_up(pl.cdiv(B, n_tc), _SUBLANE) if n_tc > 1
                   else _round_up(B, _SUBLANE))
    block_b = max(_SUBLANE, _round_up(block_b, _SUBLANE))
    Bp = _round_up(B, block_b)
    z_p = jnp.pad(z_p, ((0, Bp - B), (0, 0)))
    grid = (Bp // block_b,)
    if n_tc > 1 and grid[0] > 1:
        dim_sem = (pltpu.CORE_PARALLEL,)   # split batch tiles across the 2 TCs
    else:
        dim_sem = ("arbitrary",)           # single TC: grid is a serial loop

    # --- loop-invariant scalars precomputed host-side, passed via SMEM -------
    dt = (t[1:] - t[:-1]).astype(f32)                    # (T-1,)
    sp_half = 0.5 * jax.nn.softplus(betas.astype(f32))   # (3,) softplus(beta)/2

    # Fold the Swish output scales into the downstream weights:
    #   kernel swish returns x*(tanh(x*sp/2)+1) = 2.2 * torch_swish(x),
    #   so w2, w3, w4 are pre-scaled by 1/2.2 (biases unchanged).
    fold = f32(1.0 / 2.2)
    w1_c = w1_p.astype(matmul_dtype)
    w2_c = (w2.astype(f32) * fold).astype(matmul_dtype)
    w3_c = (w3.astype(f32) * fold).astype(matmul_dtype)
    w4_c = (w4_p * fold).astype(matmul_dtype)
    b1_c = b1.astype(f32)
    b2_c = b2.astype(f32)
    b3_c = b3.astype(f32)

    smem = pl.BlockSpec(memory_space=pltpu.MemorySpace.SMEM)
    _rep = lambda b: (0, 0)                # same weight/bias block every tile

    out_p = pl.pallas_call(
        functools.partial(neural_ode_kernel,
                          matmul_dtype=matmul_dtype, act_dtype=act_dtype),
        out_shape=jax.ShapeDtypeStruct((T, Bp, Dp), f32),
        grid=grid,
        in_specs=[
            smem,                                            # dt        (T-1,)
            smem,                                            # softplus(beta)/2
            pl.BlockSpec((block_b, Dp), lambda b: (b, 0)),   # z batch tile
            pl.BlockSpec(w1_c.shape, _rep), pl.BlockSpec(b1_c.shape, _rep),
            pl.BlockSpec(w2_c.shape, _rep), pl.BlockSpec(b2_c.shape, _rep),
            pl.BlockSpec(w3_c.shape, _rep), pl.BlockSpec(b3_c.shape, _rep),
            pl.BlockSpec(w4_c.shape, _rep), pl.BlockSpec(b4_p.shape, _rep),
        ],
        out_specs=pl.BlockSpec((T, block_b, Dp), lambda b: (0, b, 0)),
        compiler_params=pltpu.CompilerParams(dimension_semantics=dim_sem),
    )(dt, sp_half, z_p, w1_c, b1_c, w2_c, b2_c, w3_c, b3_c, w4_c, b4_p)

    # TODO(synk): for large T, add T as a trailing "arbitrary" grid axis with a
    # (tT, block_b, Dp) out block and carry z in VMEM scratch so the resident
    # output block stays bounded (v7x VMEM is 64 MiB); unnecessary at T=5.
    if Bp == B and Dp == D:
        return out_p
    # NOTE: this slice is an extra HBM copy of the trajectory; when it matters,
    # consume the Dp-padded layout directly or fuse the slice into the consumer.
    # With the auto block choice Bp == B, so only the D padding is sliced here.
    return out_p[:, :B, :D]


# -----------------------------------------------------------------------------
# Pure-JAX reference (mirrors torchdiffeq odeint(..., method='euler'))
# -----------------------------------------------------------------------------
def neural_ode_reference(z, t, params):
    (w1, b1), (w2, b2), (w3, b3), (w4, b4), betas = params

    def swish(x, beta):
        return (x * jax.nn.sigmoid(x * jax.nn.softplus(beta))) / 1.1

    def vec_field(y):
        h = swish(y @ w1 + b1, betas[0])
        h = swish(h @ w2 + b2, betas[1])
        h = swish(h @ w3 + b3, betas[2])
        return h @ w4 + b4

    outs = [z]
    zz = z
    for i in range(t.shape[0] - 1):
        dt = t[i + 1] - t[i]
        zz = zz + dt * vec_field(zz)
        outs.append(zz)
    return jnp.stack(outs, axis=0)


def init_params(key, latent_dim, hidden_dims):
    """Deterministic PyTorch-style Linear init; Swish betas = 0.5."""
    dims = [latent_dim] + list(hidden_dims) + [latent_dim]
    params = []
    for fan_in, fan_out in zip(dims[:-1], dims[1:]):
        key, kw, kb = jax.random.split(key, 3)
        bound = 1.0 / jnp.sqrt(fan_in)
        w = jax.random.uniform(kw, (fan_in, fan_out), jnp.float32, -bound, bound)
        b = jax.random.uniform(kb, (1, fan_out), jnp.float32, -bound, bound)
        params.append((w, b))
    betas = jnp.full((len(hidden_dims),), 0.5, dtype=jnp.float32)
    return tuple(params) + (betas,)


if __name__ == "__main__":
    key = jax.random.PRNGKey(0)

    latent_dim = 16
    hidden_dims = (64, 64, 64)   # module default
    B = 256                      # one full block (single TC) / 2 tiles (v7x)
    T = 5

    key, kz = jax.random.split(key)
    z = jax.random.normal(kz, (B, latent_dim), dtype=jnp.float32)
    t = jnp.linspace(0.0, 1.0, T, dtype=jnp.float32)
    params = init_params(key, latent_dim, hidden_dims)

    ref = neural_ode_reference(z, t, params)

    # f32 path: exact tanh-form sigmoid, f32 Euler state and activations.
    out = neural_ode_forward(z, t, params, matmul_dtype=jnp.float32)
    out = jax.block_until_ready(out)
    assert out.shape == (T, B, latent_dim)
    assert jnp.allclose(out, ref, rtol=2e-3, atol=5e-4), "f32 mismatch vs reference"

    # bf16 MXU path: bf16 matmul operands (and bf16 tanh on chips with a bf16
    # EUP), f32 accumulation, f32 Euler state — looser tolerance for rounding.
    out_bf16 = neural_ode_forward(z, t, params, matmul_dtype=jnp.bfloat16)
    out_bf16 = jax.block_until_ready(out_bf16)
    assert out_bf16.shape == (T, B, latent_dim)
    assert jnp.allclose(out_bf16, ref, rtol=3e-2, atol=3e-2), "bf16 mismatch vs reference"

    print("KERNEL_OK")
</pallas_src>

<mosaic_0001>
module attributes {stable_mosaic.version = 11 : i64} {
  func.func @neural_ode_kernel(%arg0: i32, %arg1: memref<4xf32, #tpu.memory_space<smem>>, %arg2: memref<3xf32, #tpu.memory_space<smem>>, %arg3: memref<256x128xf32, #tpu.memory_space<vmem>>, %arg4: memref<128x64xf32, #tpu.memory_space<vmem>>, %arg5: memref<1x64xf32, #tpu.memory_space<vmem>>, %arg6: memref<64x64xf32, #tpu.memory_space<vmem>>, %arg7: memref<1x64xf32, #tpu.memory_space<vmem>>, %arg8: memref<64x64xf32, #tpu.memory_space<vmem>>, %arg9: memref<1x64xf32, #tpu.memory_space<vmem>>, %arg10: memref<64x128xf32, #tpu.memory_space<vmem>>, %arg11: memref<1x128xf32, #tpu.memory_space<vmem>>, %arg12: memref<5x256x128xf32, #tpu.memory_space<vmem>>) attributes {dimension_semantics = [#tpu.dimension_semantics<arbitrary>], iteration_bounds = array<i64: 1>, scalar_prefetch = 0 : i64, scratch_operands = 0 : i64, tpu.core_type = #tpu.core_type<tc>, window_params = [{transform_indices = @transform_0, window_bounds = array<i64: 4>}, {transform_indices = @transform_1, window_bounds = array<i64: 3>}, {transform_indices = @transform_2, window_bounds = array<i64: 256, 128>}, {pipeline_mode = #tpu.pipeline_mode<synchronous>, transform_indices = @transform_3, window_bounds = array<i64: 128, 64>}, {pipeline_mode = #tpu.pipeline_mode<synchronous>, transform_indices = @transform_4, window_bounds = array<i64: 1, 64>}, {pipeline_mode = #tpu.pipeline_mode<synchronous>, transform_indices = @transform_5, window_bounds = array<i64: 64, 64>}, {pipeline_mode = #tpu.pipeline_mode<synchronous>, transform_indices = @transform_6, window_bounds = array<i64: 1, 64>}, {pipeline_mode = #tpu.pipeline_mode<synchronous>, transform_indices = @transform_7, window_bounds = array<i64: 64, 64>}, {pipeline_mode = #tpu.pipeline_mode<synchronous>, transform_indices = @transform_8, window_bounds = array<i64: 1, 64>}, {pipeline_mode = #tpu.pipeline_mode<synchronous>, transform_indices = @transform_9, window_bounds = array<i64: 64, 128>}, {pipeline_mode = #tpu.pipeline_mode<synchronous>, transform_indices = @transform_10, window_bounds = array<i64: 1, 128>}, {transform_indices = @transform_11, window_bounds = array<i64: 5, 256, 128>}]} {
    %c0 = arith.constant 0 : index
    %0 = memref.load %arg2[%c0] : memref<3xf32, #tpu.memory_space<smem>>
    %c1 = arith.constant 1 : index
    %1 = memref.load %arg2[%c1] : memref<3xf32, #tpu.memory_space<smem>>
    %c2 = arith.constant 2 : index
    %2 = memref.load %arg2[%c2] : memref<3xf32, #tpu.memory_space<smem>>
    %c0_0 = arith.constant 0 : index
    %c0_1 = arith.constant 0 : index
    %3 = vector.load %arg3[%c0_0, %c0_1] : memref<256x128xf32, #tpu.memory_space<vmem>>, vector<256x128xf32>
    %c0_2 = arith.constant 0 : index
    %c0_3 = arith.constant 0 : index
    %c0_4 = arith.constant 0 : index
    %4 = vector.load %arg12[%c0_2, %c0_3, %c0_4] : memref<5x256x128xf32, #tpu.memory_space<vmem>>, vector<1x256x128xf32>
    %5 = vector.shape_cast %4 : vector<1x256x128xf32> to vector<256x128xf32>
    %6 = vector.shape_cast %3 : vector<256x128xf32> to vector<1x256x128xf32>
    tpu.vector_store %arg12[%c0_2, %c0_3, %c0_4], %6 {strides = array<i32>} : memref<5x256x128xf32, #tpu.memory_space<vmem>>, vector<1x256x128xf32>,
    %c0_i32 = arith.constant 0 : i32
    %7 = arith.index_cast %c0_i32 : i32 to index
    %8 = memref.load %arg1[%7] : memref<4xf32, #tpu.memory_space<smem>>
    %c0_5 = arith.constant 0 : index
    %c0_6 = arith.constant 0 : index
    %9 = vector.load %arg4[%c0_5, %c0_6] : memref<128x64xf32, #tpu.memory_space<vmem>>, vector<128x64xf32>
    %cst = arith.constant dense<0.000000e+00> : vector<256x64xf32>
    %10 = tpu.matmul %3, %9, %cst {dimension_numbers = #tpu.dot_dimension_numbers<[1], [0], [0], [1], [0, 0, 1, 1], [], []>} : vector<256x128xf32>, vector<128x64xf32>, vector<256x64xf32> -> vector<256x64xf32>
    %c0_7 = arith.constant 0 : index
    %c0_8 = arith.constant 0 : index
    %11 = vector.load %arg5[%c0_7, %c0_8] : memref<1x64xf32, #tpu.memory_space<vmem>>, vector<1x64xf32>
    %12 = vector.broadcast %11 : vector<1x64xf32> to vector<256x64xf32>
    %13 = arith.addf %10, %12 : vector<256x64xf32>
    %14 = vector.broadcast %0 : f32 to vector<256x64xf32>
    %15 = arith.mulf %13, %14 : vector<256x64xf32>
    %16 = math.tanh %15 : vector<256x64xf32>
    %17 = arith.mulf %13, %16 : vector<256x64xf32>
    %18 = arith.addf %17, %13 : vector<256x64xf32>
    %c0_9 = arith.constant 0 : index
    %c0_10 = arith.constant 0 : index
    %19 = vector.load %arg6[%c0_9, %c0_10] : memref<64x64xf32, #tpu.memory_space<vmem>>, vector<64x64xf32>
    %cst_11 = arith.constant dense<0.000000e+00> : vector<256x64xf32>
    %20 = tpu.matmul %18, %19, %cst_11 {dimension_numbers = #tpu.dot_dimension_numbers<[1], [0], [0], [1], [0, 0, 1, 1], [], []>} : vector<256x64xf32>, vector<64x64xf32>, vector<256x64xf32> -> vector<256x64xf32>
    %c0_12 = arith.constant 0 : index
    %c0_13 = arith.constant 0 : index
    %21 = vector.load %arg7[%c0_12, %c0_13] : memref<1x64xf32, #tpu.memory_space<vmem>>, vector<1x64xf32>
    %22 = vector.broadcast %21 : vector<1x64xf32> to vector<256x64xf32>
    %23 = arith.addf %20, %22 : vector<256x64xf32>
    %24 = vector.broadcast %1 : f32 to vector<256x64xf32>
    %25 = arith.mulf %23, %24 : vector<256x64xf32>
    %26 = math.tanh %25 : vector<256x64xf32>
    %27 = arith.mulf %23, %26 : vector<256x64xf32>
    %28 = arith.addf %27, %23 : vector<256x64xf32>
    %c0_14 = arith.constant 0 : index
    %c0_15 = arith.constant 0 : index
    %29 = vector.load %arg8[%c0_14, %c0_15] : memref<64x64xf32, #tpu.memory_space<vmem>>, vector<64x64xf32>
    %cst_16 = arith.constant dense<0.000000e+00> : vector<256x64xf32>
    %30 = tpu.matmul %28, %29, %cst_16 {dimension_numbers = #tpu.dot_dimension_numbers<[1], [0], [0], [1], [0, 0, 1, 1], [], []>} : vector<256x64xf32>, vector<64x64xf32>, vector<256x64xf32> -> vector<256x64xf32>
    %c0_17 = arith.constant 0 : index
    %c0_18 = arith.constant 0 : index
    %31 = vector.load %arg9[%c0_17, %c0_18] : memref<1x64xf32, #tpu.memory_space<vmem>>, vector<1x64xf32>
    %32 = vector.broadcast %31 : vector<1x64xf32> to vector<256x64xf32>
    %33 = arith.addf %30, %32 : vector<256x64xf32>
    %34 = vector.broadcast %2 : f32 to vector<256x64xf32>
    %35 = arith.mulf %33, %34 : vector<256x64xf32>
    %36 = math.tanh %35 : vector<256x64xf32>
    %37 = arith.mulf %33, %36 : vector<256x64xf32>
    %38 = arith.addf %37, %33 : vector<256x64xf32>
    %c0_19 = arith.constant 0 : index
    %c0_20 = arith.constant 0 : index
    %39 = vector.load %arg10[%c0_19, %c0_20] : memref<64x128xf32, #tpu.memory_space<vmem>>, vector<64x128xf32>
    %cst_21 = arith.constant dense<0.000000e+00> : vector<256x128xf32>
    %40 = tpu.matmul %38, %39, %cst_21 {dimension_numbers = #tpu.dot_dimension_numbers<[1], [0], [0], [1], [0, 0, 1, 1], [], []>} : vector<256x64xf32>, vector<64x128xf32>, vector<256x128xf32> -> vector<256x128xf32>
    %c0_22 = arith.constant 0 : index
    %c0_23 = arith.constant 0 : index
    %41 = vector.load %arg11[%c0_22, %c0_23] : memref<1x128xf32, #tpu.memory_space<vmem>>, vector<1x128xf32>
    %42 = vector.broadcast %41 : vector<1x128xf32> to vector<256x128xf32>
    %43 = arith.addf %40, %42 : vector<256x128xf32>
    %44 = vector.broadcast %8 : f32 to vector<256x128xf32>
    %45 = arith.mulf %44, %43 : vector<256x128xf32>
    %46 = arith.addf %3, %45 : vector<256x128xf32>
    %c1_i32 = arith.constant 1 : i32
    %47 = arith.addi %c0_i32, %c1_i32 : i32
    %48 = arith.index_cast %47 : i32 to index
    %c0_24 = arith.constant 0 : index
    %c0_25 = arith.constant 0 : index
    %49 = vector.load %arg12[%48, %c0_24, %c0_25] : memref<5x256x128xf32, #tpu.memory_space<vmem>>, vector<1x256x128xf32>
    %50 = vector.shape_cast %49 : vector<1x256x128xf32> to vector<256x128xf32>
    %51 = vector.shape_cast %46 : vector<256x128xf32> to vector<1x256x128xf32>
    tpu.vector_store %arg12[%48, %c0_24, %c0_25], %51 {strides = array<i32>} : memref<5x256x128xf32, #tpu.memory_space<vmem>>, vector<1x256x128xf32>,
    %c1_i32_26 = arith.constant 1 : i32
    %52 = arith.index_cast %c1_i32_26 : i32 to index
    %53 = memref.load %arg1[%52] : memref<4xf32, #tpu.memory_space<smem>>
    %c0_27 = arith.constant 0 : index
    %c0_28 = arith.constant 0 : index
    %54 = vector.load %arg4[%c0_27, %c0_28] : memref<128x64xf32, #tpu.memory_space<vmem>>, vector<128x64xf32>
    %cst_29 = arith.constant dense<0.000000e+00> : vector<256x64xf32>
    %55 = tpu.matmul %46, %54, %cst_29 {dimension_numbers = #tpu.dot_dimension_numbers<[1], [0], [0], [1], [0, 0, 1, 1], [], []>} : vector<256x128xf32>, vector<128x64xf32>, vector<256x64xf32> -> vector<256x64xf32>
    %c0_30 = arith.constant 0 : index
    %c0_31 = arith.constant 0 : index
    %56 = vector.load %arg5[%c0_30, %c0_31] : memref<1x64xf32, #tpu.memory_space<vmem>>, vector<1x64xf32>
    %57 = vector.broadcast %56 : vector<1x64xf32> to vector<256x64xf32>
    %58 = arith.addf %55, %57 : vector<256x64xf32>
    %59 = vector.broadcast %0 : f32 to vector<256x64xf32>
    %60 = arith.mulf %58, %59 : vector<256x64xf32>
    %61 = math.tanh %60 : vector<256x64xf32>
    %62 = arith.mulf %58, %61 : vector<256x64xf32>
    %63 = arith.addf %62, %58 : vector<256x64xf32>
    %c0_32 = arith.constant 0 : index
    %c0_33 = arith.constant 0 : index
    %64 = vector.load %arg6[%c0_32, %c0_33] : memref<64x64xf32, #tpu.memory_space<vmem>>, vector<64x64xf32>
    %cst_34 = arith.constant dense<0.000000e+00> : vector<256x64xf32>
    %65 = tpu.matmul %63, %64, %cst_34 {dimension_numbers = #tpu.dot_dimension_numbers<[1], [0], [0], [1], [0, 0, 1, 1], [], []>} : vector<256x64xf32>, vector<64x64xf32>, vector<256x64xf32> -> vector<256x64xf32>
    %c0_35 = arith.constant 0 : index
    %c0_36 = arith.constant 0 : index
    %66 = vector.load %arg7[%c0_35, %c0_36] : memref<1x64xf32, #tpu.memory_space<vmem>>, vector<1x64xf32>
    %67 = vector.broadcast %66 : vector<1x64xf32> to vector<256x64xf32>
    %68 = arith.addf %65, %67 : vector<256x64xf32>
    %69 = vector.broadcast %1 : f32 to vector<256x64xf32>
    %70 = arith.mulf %68, %69 : vector<256x64xf32>
    %71 = math.tanh %70 : vector<256x64xf32>
    %72 = arith.mulf %68, %71 : vector<256x64xf32>
    %73 = arith.addf %72, %68 : vector<256x64xf32>
    %c0_37 = arith.constant 0 : index
    %c0_38 = arith.constant 0 : index
    %74 = vector.load %arg8[%c0_37, %c0_38] : memref<64x64xf32, #tpu.memory_space<vmem>>, vector<64x64xf32>
    %cst_39 = arith.constant dense<0.000000e+00> : vector<256x64xf32>
    %75 = tpu.matmul %73, %74, %cst_39 {dimension_numbers = #tpu.dot_dimension_numbers<[1], [0], [0], [1], [0, 0, 1, 1], [], []>} : vector<256x64xf32>, vector<64x64xf32>, vector<256x64xf32> -> vector<256x64xf32>
    %c0_40 = arith.constant 0 : index
    %c0_41 = arith.constant 0 : index
    %76 = vector.load %arg9[%c0_40, %c0_41] : memref<1x64xf32, #tpu.memory_space<vmem>>, vector<1x64xf32>
    %77 = vector.broadcast %76 : vector<1x64xf32> to vector<256x64xf32>
    %78 = arith.addf %75, %77 : vector<256x64xf32>
    %79 = vector.broadcast %2 : f32 to vector<256x64xf32>
    %80 = arith.mulf %78, %79 : vector<256x64xf32>
    %81 = math.tanh %80 : vector<256x64xf32>
    %82 = arith.mulf %78, %81 : vector<256x64xf32>
    %83 = arith.addf %82, %78 : vector<256x64xf32>
    %c0_42 = arith.constant 0 : index
    %c0_43 = arith.constant 0 : index
    %84 = vector.load %arg10[%c0_42, %c0_43] : memref<64x128xf32, #tpu.memory_space<vmem>>, vector<64x128xf32>
    %cst_44 = arith.constant dense<0.000000e+00> : vector<256x128xf32>
    %85 = tpu.matmul %83, %84, %cst_44 {dimension_numbers = #tpu.dot_dimension_numbers<[1], [0], [0], [1], [0, 0, 1, 1], [], []>} : vector<256x64xf32>, vector<64x128xf32>, vector<256x128xf32> -> vector<256x128xf32>
    %c0_45 = arith.constant 0 : index
    %c0_46 = arith.constant 0 : index
    %86 = vector.load %arg11[%c0_45, %c0_46] : memref<1x128xf32, #tpu.memory_space<vmem>>, vector<1x128xf32>
    %87 = vector.broadcast %86 : vector<1x128xf32> to vector<256x128xf32>
    %88 = arith.addf %85, %87 : vector<256x128xf32>
    %89 = vector.broadcast %53 : f32 to vector<256x128xf32>
    %90 = arith.mulf %89, %88 : vector<256x128xf32>
    %91 = arith.addf %46, %90 : vector<256x128xf32>
    %c1_i32_47 = arith.constant 1 : i32
    %92 = arith.addi %c1_i32_26, %c1_i32_47 : i32
    %93 = arith.index_cast %92 : i32 to index
    %c0_48 = arith.constant 0 : index
    %c0_49 = arith.constant 0 : index
    %94 = vector.load %arg12[%93, %c0_48, %c0_49] : memref<5x256x128xf32, #tpu.memory_space<vmem>>, vector<1x256x128xf32>
    %95 = vector.shape_cast %94 : vector<1x256x128xf32> to vector<256x128xf32>
    %96 = vector.shape_cast %91 : vector<256x128xf32> to vector<1x256x128xf32>
    tpu.vector_store %arg12[%93, %c0_48, %c0_49], %96 {strides = array<i32>} : memref<5x256x128xf32, #tpu.memory_space<vmem>>, vector<1x256x128xf32>,
    %c2_i32 = arith.constant 2 : i32
    %97 = arith.index_cast %c2_i32 : i32 to index
    %98 = memref.load %arg1[%97] : memref<4xf32, #tpu.memory_space<smem>>
    %c0_50 = arith.constant 0 : index
    %c0_51 = arith.constant 0 : index
    %99 = vector.load %arg4[%c0_50, %c0_51] : memref<128x64xf32, #tpu.memory_space<vmem>>, vector<128x64xf32>
    %cst_52 = arith.constant dense<0.000000e+00> : vector<256x64xf32>
    %100 = tpu.matmul %91, %99, %cst_52 {dimension_numbers = #tpu.dot_dimension_numbers<[1], [0], [0], [1], [0, 0, 1, 1], [], []>} : vector<256x128xf32>, vector<128x64xf32>, vector<256x64xf32> -> vector<256x64xf32>
    %c0_53 = arith.constant 0 : index
    %c0_54 = arith.constant 0 : index
    %101 = vector.load %arg5[%c0_53, %c0_54] : memref<1x64xf32, #tpu.memory_space<vmem>>, vector<1x64xf32>
    %102 = vector.broadcast %101 : vector<1x64xf32> to vector<256x64xf32>
    %103 = arith.addf %100, %102 : vector<256x64xf32>
    %104 = vector.broadcast %0 : f32 to vector<256x64xf32>
    %105 = arith.mulf %103, %104 : vector<256x64xf32>
    %106 = math.tanh %105 : vector<256x64xf32>
    %107 = arith.mulf %103, %106 : vector<256x64xf32>
    %108 = arith.addf %107, %103 : vector<256x64xf32>
    %c0_55 = arith.constant 0 : index
    %c0_56 = arith.constant 0 : index
    %109 = vector.load %arg6[%c0_55, %c0_56] : memref<64x64xf32, #tpu.memory_space<vmem>>, vector<64x64xf32>
    %cst_57 = arith.constant dense<0.000000e+00> : vector<256x64xf32>
    %110 = tpu.matmul %108, %109, %cst_57 {dimension_numbers = #tpu.dot_dimension_numbers<[1], [0], [0], [1], [0, 0, 1, 1], [], []>} : vector<256x64xf32>, vector<64x64xf32>, vector<256x64xf32> -> vector<256x64xf32>
    %c0_58 = arith.constant 0 : index
    %c0_59 = arith.constant 0 : index
    %111 = vector.load %arg7[%c0_58, %c0_59] : memref<1x64xf32, #tpu.memory_space<vmem>>, vector<1x64xf32>
    %112 = vector.broadcast %111 : vector<1x64xf32> to vector<256x64xf32>
    %113 = arith.addf %110, %112 : vector<256x64xf32>
    %114 = vector.broadcast %1 : f32 to vector<256x64xf32>
    %115 = arith.mulf %113, %114 : vector<256x64xf32>
    %116 = math.tanh %115 : vector<256x64xf32>
    %117 = arith.mulf %113, %116 : vector<256x64xf32>
    %118 = arith.addf %117, %113 : vector<256x64xf32>
    %c0_60 = arith.constant 0 : index
    %c0_61 = arith.constant 0 : index
    %119 = vector.load %arg8[%c0_60, %c0_61] : memref<64x64xf32, #tpu.memory_space<vmem>>, vector<64x64xf32>
    %cst_62 = arith.constant dense<0.000000e+00> : vector<256x64xf32>
    %120 = tpu.matmul %118, %119, %cst_62 {dimension_numbers = #tpu.dot_dimension_numbers<[1], [0], [0], [1], [0, 0, 1, 1], [], []>} : vector<256x64xf32>, vector<64x64xf32>, vector<256x64xf32> -> vector<256x64xf32>
    %c0_63 = arith.constant 0 : index
    %c0_64 = arith.constant 0 : index
    %121 = vector.load %arg9[%c0_63, %c0_64] : memref<1x64xf32, #tpu.memory_space<vmem>>, vector<1x64xf32>
    %122 = vector.broadcast %121 : vector<1x64xf32> to vector<256x64xf32>
    %123 = arith.addf %120, %122 : vector<256x64xf32>
    %124 = vector.broadcast %2 : f32 to vector<256x64xf32>
    %125 = arith.mulf %123, %124 : vector<256x64xf32>
    %126 = math.tanh %125 : vector<256x64xf32>
    %127 = arith.mulf %123, %126 : vector<256x64xf32>
    %128 = arith.addf %127, %123 : vector<256x64xf32>
    %c0_65 = arith.constant 0 : index
    %c0_66 = arith.constant 0 : index
    %129 = vector.load %arg10[%c0_65, %c0_66] : memref<64x128xf32, #tpu.memory_space<vmem>>, vector<64x128xf32>
    %cst_67 = arith.constant dense<0.000000e+00> : vector<256x128xf32>
    %130 = tpu.matmul %128, %129, %cst_67 {dimension_numbers = #tpu.dot_dimension_numbers<[1], [0], [0], [1], [0, 0, 1, 1], [], []>} : vector<256x64xf32>, vector<64x128xf32>, vector<256x128xf32> -> vector<256x128xf32>
    %c0_68 = arith.constant 0 : index
    %c0_69 = arith.constant 0 : index
    %131 = vector.load %arg11[%c0_68, %c0_69] : memref<1x128xf32, #tpu.memory_space<vmem>>, vector<1x128xf32>
    %132 = vector.broadcast %131 : vector<1x128xf32> to vector<256x128xf32>
    %133 = arith.addf %130, %132 : vector<256x128xf32>
    %134 = vector.broadcast %98 : f32 to vector<256x128xf32>
    %135 = arith.mulf %134, %133 : vector<256x128xf32>
    %136 = arith.addf %91, %135 : vector<256x128xf32>
    %c1_i32_70 = arith.constant 1 : i32
    %137 = arith.addi %c2_i32, %c1_i32_70 : i32
    %138 = arith.index_cast %137 : i32 to index
    %c0_71 = arith.constant 0 : index
    %c0_72 = arith.constant 0 : index
    %139 = vector.load %arg12[%138, %c0_71, %c0_72] : memref<5x256x128xf32, #tpu.memory_space<vmem>>, vector<1x256x128xf32>
    %140 = vector.shape_cast %139 : vector<1x256x128xf32> to vector<256x128xf32>
    %141 = vector.shape_cast %136 : vector<256x128xf32> to vector<1x256x128xf32>
    tpu.vector_store %arg12[%138, %c0_71, %c0_72], %141 {strides = array<i32>} : memref<5x256x128xf32, #tpu.memory_space<vmem>>, vector<1x256x128xf32>,
    %c3_i32 = arith.constant 3 : i32
    %142 = arith.index_cast %c3_i32 : i32 to index
    %143 = memref.load %arg1[%142] : memref<4xf32, #tpu.memory_space<smem>>
    %c0_73 = arith.constant 0 : index
    %c0_74 = arith.constant 0 : index
    %144 = vector.load %arg4[%c0_73, %c0_74] : memref<128x64xf32, #tpu.memory_space<vmem>>, vector<128x64xf32>
    %cst_75 = arith.constant dense<0.000000e+00> : vector<256x64xf32>
    %145 = tpu.matmul %136, %144, %cst_75 {dimension_numbers = #tpu.dot_dimension_numbers<[1], [0], [0], [1], [0, 0, 1, 1], [], []>} : vector<256x128xf32>, vector<128x64xf32>, vector<256x64xf32> -> vector<256x64xf32>
    %c0_76 = arith.constant 0 : index
    %c0_77 = arith.constant 0 : index
    %146 = vector.load %arg5[%c0_76, %c0_77] : memref<1x64xf32, #tpu.memory_space<vmem>>, vector<1x64xf32>
    %147 = vector.broadcast %146 : vector<1x64xf32> to vector<256x64xf32>
    %148 = arith.addf %145, %147 : vector<256x64xf32>
    %149 = vector.broadcast %0 : f32 to vector<256x64xf32>
    %150 = arith.mulf %148, %149 : vector<256x64xf32>
    %151 = math.tanh %150 : vector<256x64xf32>
    %152 = arith.mulf %148, %151 : vector<256x64xf32>
    %153 = arith.addf %152, %148 : vector<256x64xf32>
    %c0_78 = arith.constant 0 : index
    %c0_79 = arith.constant 0 : index
    %154 = vector.load %arg6[%c0_78, %c0_79] : memref<64x64xf32, #tpu.memory_space<vmem>>, vector<64x64xf32>
    %cst_80 = arith.constant dense<0.000000e+00> : vector<256x64xf32>
    %155 = tpu.matmul %153, %154, %cst_80 {dimension_numbers = #tpu.dot_dimension_numbers<[1], [0], [0], [1], [0, 0, 1, 1], [], []>} : vector<256x64xf32>, vector<64x64xf32>, vector<256x64xf32> -> vector<256x64xf32>
    %c0_81 = arith.constant 0 : index
    %c0_82 = arith.constant 0 : index
    %156 = vector.load %arg7[%c0_81, %c0_82] : memref<1x64xf32, #tpu.memory_space<vmem>>, vector<1x64xf32>
    %157 = vector.broadcast %156 : vector<1x64xf32> to vector<256x64xf32>
    %158 = arith.addf %155, %157 : vector<256x64xf32>
    %159 = vector.broadcast %1 : f32 to vector<256x64xf32>
    %160 = arith.mulf %158, %159 : vector<256x64xf32>
    %161 = math.tanh %160 : vector<256x64xf32>
    %162 = arith.mulf %158, %161 : vector<256x64xf32>
    %163 = arith.addf %162, %158 : vector<256x64xf32>
    %c0_83 = arith.constant 0 : index
    %c0_84 = arith.constant 0 : index
    %164 = vector.load %arg8[%c0_83, %c0_84] : memref<64x64xf32, #tpu.memory_space<vmem>>, vector<64x64xf32>
    %cst_85 = arith.constant dense<0.000000e+00> : vector<256x64xf32>
    %165 = tpu.matmul %163, %164, %cst_85 {dimension_numbers = #tpu.dot_dimension_numbers<[1], [0], [0], [1], [0, 0, 1, 1], [], []>} : vector<256x64xf32>, vector<64x64xf32>, vector<256x64xf32> -> vector<256x64xf32>
    %c0_86 = arith.constant 0 : index
    %c0_87 = arith.constant 0 : index
    %166 = vector.load %arg9[%c0_86, %c0_87] : memref<1x64xf32, #tpu.memory_space<vmem>>, vector<1x64xf32>
    %167 = vector.broadcast %166 : vector<1x64xf32> to vector<256x64xf32>
    %168 = arith.addf %165, %167 : vector<256x64xf32>
    %169 = vector.broadcast %2 : f32 to vector<256x64xf32>
    %170 = arith.mulf %168, %169 : vector<256x64xf32>
    %171 = math.tanh %170 : vector<256x64xf32>
    %172 = arith.mulf %168, %171 : vector<256x64xf32>
    %173 = arith.addf %172, %168 : vector<256x64xf32>
    %c0_88 = arith.constant 0 : index
    %c0_89 = arith.constant 0 : index
    %174 = vector.load %arg10[%c0_88, %c0_89] : memref<64x128xf32, #tpu.memory_space<vmem>>, vector<64x128xf32>
    %cst_90 = arith.constant dense<0.000000e+00> : vector<256x128xf32>
    %175 = tpu.matmul %173, %174, %cst_90 {dimension_numbers = #tpu.dot_dimension_numbers<[1], [0], [0], [1], [0, 0, 1, 1], [], []>} : vector<256x64xf32>, vector<64x128xf32>, vector<256x128xf32> -> vector<256x128xf32>
    %c0_91 = arith.constant 0 : index
    %c0_92 = arith.constant 0 : index
    %176 = vector.load %arg11[%c0_91, %c0_92] : memref<1x128xf32, #tpu.memory_space<vmem>>, vector<1x128xf32>
    %177 = vector.broadcast %176 : vector<1x128xf32> to vector<256x128xf32>
    %178 = arith.addf %175, %177 : vector<256x128xf32>
    %179 = vector.broadcast %143 : f32 to vector<256x128xf32>
    %180 = arith.mulf %179, %178 : vector<256x128xf32>
    %181 = arith.addf %136, %180 : vector<256x128xf32>
    %c1_i32_93 = arith.constant 1 : i32
    %182 = arith.addi %c3_i32, %c1_i32_93 : i32
    %183 = arith.index_cast %182 : i32 to index
    %c0_94 = arith.constant 0 : index
    %c0_95 = arith.constant 0 : index
    %184 = vector.load %arg12[%183, %c0_94, %c0_95] : memref<5x256x128xf32, #tpu.memory_space<vmem>>, vector<1x256x128xf32>
    %185 = vector.shape_cast %184 : vector<1x256x128xf32> to vector<256x128xf32>
    %186 = vector.shape_cast %181 : vector<256x128xf32> to vector<1x256x128xf32>
    tpu.vector_store %arg12[%183, %c0_94, %c0_95], %186 {strides = array<i32>} : memref<5x256x128xf32, #tpu.memory_space<vmem>>, vector<1x256x128xf32>,
    %c4_i32 = arith.constant 4 : i32
    return
  }
  func.func @transform_0(%arg0: i32) -> i32 {
    %c0_i32 = arith.constant 0 : i32
    %c0_i32_0 = arith.constant 0 : i32
    return %c0_i32 : i32
  }
  func.func @transform_1(%arg0: i32) -> i32 {
    %c0_i32 = arith.constant 0 : i32
    %c0_i32_0 = arith.constant 0 : i32
    return %c0_i32 : i32
  }
  func.func @transform_2(%arg0: i32) -> (i32, i32) {
    %c0_i32 = arith.constant 0 : i32
    %c0_i32_0 = arith.constant 0 : i32
    return %arg0, %c0_i32 : i32, i32
  }
  func.func @transform_3(%arg0: i32) -> (i32, i32) {
    %c0_i32 = arith.constant 0 : i32
    %c0_i32_0 = arith.constant 0 : i32
    %c0_i32_1 = arith.constant 0 : i32
    return %c0_i32, %c0_i32_0 : i32, i32
  }
  func.func @transform_4(%arg0: i32) -> (i32, i32) {
    %c0_i32 = arith.constant 0 : i32
    %c0_i32_0 = arith.constant 0 : i32
    %c0_i32_1 = arith.constant 0 : i32
    return %c0_i32, %c0_i32_0 : i32, i32
  }
  func.func @transform_5(%arg0: i32) -> (i32, i32) {
    %c0_i32 = arith.constant 0 : i32
    %c0_i32_0 = arith.constant 0 : i32
    %c0_i32_1 = arith.constant 0 : i32
    return %c0_i32, %c0_i32_0 : i32, i32
  }
  func.func @transform_6(%arg0: i32) -> (i32, i32) {
    %c0_i32 = arith.constant 0 : i32
    %c0_i32_0 = arith.constant 0 : i32
    %c0_i32_1 = arith.constant 0 : i32
    return %c0_i32, %c0_i32_0 : i32, i32
  }
  func.func @transform_7(%arg0: i32) -> (i32, i32) {
    %c0_i32 = arith.constant 0 : i32
    %c0_i32_0 = arith.constant 0 : i32
    %c0_i32_1 = arith.constant 0 : i32
    return %c0_i32, %c0_i32_0 : i32, i32
  }
  func.func @transform_8(%arg0: i32) -> (i32, i32) {
    %c0_i32 = arith.constant 0 : i32
    %c0_i32_0 = arith.constant 0 : i32
    %c0_i32_1 = arith.constant 0 : i32
    return %c0_i32, %c0_i32_0 : i32, i32
  }
  func.func @transform_9(%arg0: i32) -> (i32, i32) {
    %c0_i32 = arith.constant 0 : i32
    %c0_i32_0 = arith.constant 0 : i32
    %c0_i32_1 = arith.constant 0 : i32
    return %c0_i32, %c0_i32_0 : i32, i32
  }
  func.func @transform_10(%arg0: i32) -> (i32, i32) {
    %c0_i32 = arith.constant 0 : i32
    %c0_i32_0 = arith.constant 0 : i32
    %c0_i32_1 = arith.constant 0 : i32
    return %c0_i32, %c0_i32_0 : i32, i32
  }
  func.func @transform_11(%arg0: i32) -> (i32, i32, i32) {
    %c0_i32 = arith.constant 0 : i32
    %c0_i32_0 = arith.constant 0 : i32
    %c0_i32_1 = arith.constant 0 : i32
    return %c0_i32, %arg0, %c0_i32_0 : i32, i32, i32
  }
}

</mosaic_0001>

<llo_original>
// kernel: tpu_custom_call.1
$region0: #{tpu_custom_call.1}
  #allocation0 [shape = 'u32[]', space=smem, size = 0x4, offset = 0x4, fixed_abs, tag = 'smem constant byte address 0x4 - core index']
  #allocation1 [shape = 'u32[144,128]{1,0:T(1,128)}', space=vmem, size = 0x12000, scoped, tag = 'internal scratch']
  %s0 = inlined_call_operand.hbm [shape: f32[4], index: 0, kind: input, shape index: {}]
  %s1 = inlined_call_operand.vmem [shape: f32[3], index: 1, kind: input, shape index: {}]
  %s2 = inlined_call_operand.hbm [shape: f32[256,128], index: 2, kind: input, shape index: {}]
  %s3 = inlined_call_operand.vmem [shape: f32[128,64], index: 3, kind: input, shape index: {}]
  %s4 = inlined_call_operand.vmem [shape: f32[1,64], index: 4, kind: input, shape index: {}]
  %s5 = inlined_call_operand.vmem [shape: f32[64,64], index: 5, kind: input, shape index: {}]
  %s6 = inlined_call_operand.vmem [shape: f32[1,64], index: 6, kind: input, shape index: {}]
  %s7 = inlined_call_operand.vmem [shape: f32[64,64], index: 7, kind: input, shape index: {}]
  %s8 = inlined_call_operand.vmem [shape: f32[1,64], index: 8, kind: input, shape index: {}]
  %s9 = inlined_call_operand.vmem [shape: f32[64,128], index: 9, kind: input, shape index: {}]
  %s10 = inlined_call_operand.vmem [shape: f32[1,128], index: 10, kind: input, shape index: {}]
  %s11 = inlined_call_operand.hbm [shape: f32[5,256,128], index: 11, kind: output, shape index: {}]
  %s12 = sld [smem:[#allocation0]]
  $region66: #{tpu_custom_call.1} parent=0
    _
  %s14 = ssub.s32 1, %s12
  %s15 = scalar_select 0, %s14, %s12
  $region1: #{tpu_custom_call.1} parent=0
    #allocation2 [shape = 'u8[512]{0}', space=smem, size = 0x200, scoped, tag = 'input window, operand 0, single buffered']
    #allocation3 [shape = 's32[1]{0}', space=sflag, size = 0x4, scoped, tag = 'scoped memory for tpu_custom_call.1']
    #allocation4 [shape = 's32[1]{0}', space=sflag, size = 0x4, scoped, tag = 'scoped memory for tpu_custom_call.1']
    #allocation5 [shape = 's32[1]{0}', space=sflag, size = 0x4, scoped, tag = 'scoped memory for tpu_custom_call.1']
    #allocation6 [shape = 's32[1]{0}', space=sflag, size = 0x4, scoped, tag = 'scoped memory for tpu_custom_call.1']
    #allocation7 [shape = 'u8[512]{0}', space=smem, size = 0x200, scoped, tag = 'input window, operand 1, single buffered']
    #allocation8 [shape = 'u8[131072]{0}', space=vmem, size = 0x20000, scoped, tag = 'input window, operand 2, single buffered']
    #allocation9 [shape = 'u8[655360]{0}', space=vmem, size = 0xa0000, scoped, tag = 'output window, operand 0, single buffered']
    %16 = vsyncpa [#allocation5], 0
    %17 = vsyncpa [#allocation6], 0
    %18 = vsyncpa [#allocation3], 0
    %19 = vsyncpa [#allocation4], 0
    // Predicated region
    $region2: #{tpu_custom_call.1} parent=1 // pred_check
      _
    $region3: #{tpu_custom_call.1} parent=1 // pred_check_branch
      %21 = sbr.rel (0) target = $region5
    $region4: #{tpu_custom_call.1} parent=1 // pred_region
      %s23 = ssub.s32 16, 16
      %24 = vsyncadd [#allocation5], %s23
      %27 = dma.hbm_to_smem %s0, 16, [#allocation2], [#allocation5]
    $region5: #{tpu_custom_call.1} parent=1 // pred_fallthru
      _
    // Predicated region
    $region6: #{tpu_custom_call.1} parent=1 // pred_check
      _
    $region7: #{tpu_custom_call.1} parent=1 // pred_check_branch
      %29 = sbr.rel (0) target = $region9
    $region8: #{tpu_custom_call.1} parent=1 // pred_region
      %s31 = ssub.s32 16, 16
      %32 = vsyncadd [#allocation6], %s31
      %s34 = sshll.u32 %s1, 4
      %s35 = int_to_ptr.vmem [resolvable:$true] %s34
      %37 = dma.vmem_to_smem %s35, 16, [#allocation7], [#allocation6]
    $region9: #{tpu_custom_call.1} parent=1 // pred_fallthru
      _
    // Predicated region
    $region10: #{tpu_custom_call.1} parent=1 // pred_check
      _
    $region11: #{tpu_custom_call.1} parent=1 // pred_check_branch
      %39 = sbr.rel (0) target = $region13
    $region12: #{tpu_custom_call.1} parent=1 // pred_region
      %s41 = ssub.s32 4096, 4096
      %42 = vsyncadd [#allocation3], %s41
      %s43 = sshll.u32 [#allocation8], 4
      %s44 = int_to_ptr.vmem [resolvable:$true] %s43
      %49 = dma.hbm_to_vmem [thread:$0]  %s2, 4096, %s44, [#allocation3], 128, 128, 8
    $region13: #{tpu_custom_call.1} parent=1 // pred_fallthru
      _
    // Predicated region
    $region14: #{tpu_custom_call.1} parent=1 // pred_check
      _
    $region15: #{tpu_custom_call.1} parent=1 // pred_check_branch
      %51 = sbr.rel (0) target = $region17
    $region16: #{tpu_custom_call.1} parent=1 // pred_region
      _
    $region17: #{tpu_custom_call.1} parent=1 // pred_fallthru
      _
    // Predicated region
    $region18: #{tpu_custom_call.1} parent=1 // pred_check
      _
    $region19: #{tpu_custom_call.1} parent=1 // pred_check_branch
      %53 = sbr.rel (0) target = $region21
    $region20: #{tpu_custom_call.1} parent=1 // pred_region
      _
    $region21: #{tpu_custom_call.1} parent=1 // pred_fallthru
      _
    // Predicated region
    $region22: #{tpu_custom_call.1} parent=1 // pred_check
      _
    $region23: #{tpu_custom_call.1} parent=1 // pred_check_branch
      %55 = sbr.rel (0) target = $region25
    $region24: #{tpu_custom_call.1} parent=1 // pred_region
      _
    $region25: #{tpu_custom_call.1} parent=1 // pred_fallthru
      _
    // Predicated region
    $region26: #{tpu_custom_call.1} parent=1 // pred_check
      _
    $region27: #{tpu_custom_call.1} parent=1 // pred_check_branch
      %57 = sbr.rel (0) target = $region29
    $region28: #{tpu_custom_call.1} parent=1 // pred_region
      _
    $region29: #{tpu_custom_call.1} parent=1 // pred_fallthru
      _
    // Predicated region
    $region30: #{tpu_custom_call.1} parent=1 // pred_check
      _
    $region31: #{tpu_custom_call.1} parent=1 // pred_check_branch
      %59 = sbr.rel (0) target = $region33
    $region32: #{tpu_custom_call.1} parent=1 // pred_region
      _
    $region33: #{tpu_custom_call.1} parent=1 // pred_fallthru
      _
    // Predicated region
    $region34: #{tpu_custom_call.1} parent=1 // pred_check
      _
    $region35: #{tpu_custom_call.1} parent=1 // pred_check_branch
      %61 = sbr.rel (0) target = $region37
    $region36: #{tpu_custom_call.1} parent=1 // pred_region
      _
    $region37: #{tpu_custom_call.1} parent=1 // pred_fallthru
      _
    // Predicated region
    $region38: #{tpu_custom_call.1} parent=1 // pred_check
      _
    $region39: #{tpu_custom_call.1} parent=1 // pred_check_branch
      %63 = sbr.rel (0) target = $region41
    $region40: #{tpu_custom_call.1} parent=1 // pred_region
      _
    $region41: #{tpu_custom_call.1} parent=1 // pred_fallthru
      _
    // Predicated region
    $region42: #{tpu_custom_call.1} parent=1 // pred_check
      _
    $region43: #{tpu_custom_call.1} parent=1 // pred_check_branch
      %65 = sbr.rel (0) target = $region45
    $region44: #{tpu_custom_call.1} parent=1 // pred_region
      _
    $region45: #{tpu_custom_call.1} parent=1 // pred_fallthru
      _
    // Predicated region
    $region46: #{tpu_custom_call.1} parent=1 // pred_check
      _
    $region47: #{tpu_custom_call.1} parent=1 // pred_check_branch
      %67 = sbr.rel (0) target = $region49
    $region48: #{tpu_custom_call.1} parent=1 // pred_region
      %68 = dma.done [#allocation5], 16
    $region49: #{tpu_custom_call.1} parent=1 // pred_fallthru
      _
    // Predicated region
    $region50: #{tpu_custom_call.1} parent=1 // pred_check
      _
    $region51: #{tpu_custom_call.1} parent=1 // pred_check_branch
      %70 = sbr.rel (0) target = $region53
    $region52: #{tpu_custom_call.1} parent=1 // pred_region
      %71 = dma.done [#allocation6], 16
    $region53: #{tpu_custom_call.1} parent=1 // pred_fallthru
      _
    // Predicated region
    $region54: #{tpu_custom_call.1} parent=1 // pred_check
      _
    $region55: #{tpu_custom_call.1} parent=1 // pred_check_branch
      %73 = sbr.rel (0) target = $region57
    $region56: #{tpu_custom_call.1} parent=1 // pred_region
      %74 = dma.done [#allocation3], 4096
    $region57: #{tpu_custom_call.1} parent=1 // pred_fallthru
      _
    %75 = sfence
    %s76 = sld [smem:[#allocation7]]
    %s77 = sld [smem:[#allocation7 + $0x1]]
    %s78 = sld [smem:[#allocation7 + $0x2]]
    %v79 = vld [vmem:[#allocation8] sm:$0xff]
    %v80 = vld [vmem:[#allocation8 + $0x8] sm:$0xff]
    %v81 = vld [vmem:[#allocation8 + $0x10] sm:$0xff]
    %v82 = vld [vmem:[#allocation8 + $0x18] sm:$0xff]
    %v83 = vld [vmem:[#allocation8 + $0x20] sm:$0xff]
    %v84 = vld [vmem:[#allocation8 + $0x28] sm:$0xff]
    %v85 = vld [vmem:[#allocation8 + $0x30] sm:$0xff]
    %v86 = vld [vmem:[#allocation8 + $0x38] sm:$0xff]
    %v87 = vld [vmem:[#allocation8 + $0x40] sm:$0xff]
    %v88 = vld [vmem:[#allocation8 + $0x48] sm:$0xff]
    %v89 = vld [vmem:[#allocation8 + $0x50] sm:$0xff]
    %v90 = vld [vmem:[#allocation8 + $0x58] sm:$0xff]
    %v91 = vld [vmem:[#allocation8 + $0x60] sm:$0xff]
    %v92 = vld [vmem:[#allocation8 + $0x68] sm:$0xff]
    %v93 = vld [vmem:[#allocation8 + $0x70] sm:$0xff]
    %v94 = vld [vmem:[#allocation8 + $0x78] sm:$0xff]
    %v95 = vld [vmem:[#allocation8 + $0x80] sm:$0xff]
    %v96 = vld [vmem:[#allocation8 + $0x88] sm:$0xff]
    %v97 = vld [vmem:[#allocation8 + $0x90] sm:$0xff]
    %v98 = vld [vmem:[#allocation8 + $0x98] sm:$0xff]
    %v99 = vld [vmem:[#allocation8 + $0xa0] sm:$0xff]
    %v100 = vld [vmem:[#allocation8 + $0xa8] sm:$0xff]
    %v101 = vld [vmem:[#allocation8 + $0xb0] sm:$0xff]
    %v102 = vld [vmem:[#allocation8 + $0xb8] sm:$0xff]
    %v103 = vld [vmem:[#allocation8 + $0xc0] sm:$0xff]
    %v104 = vld [vmem:[#allocation8 + $0xc8] sm:$0xff]
    %v105 = vld [vmem:[#allocation8 + $0xd0] sm:$0xff]
    %v106 = vld [vmem:[#allocation8 + $0xd8] sm:$0xff]
    %v107 = vld [vmem:[#allocation8 + $0xe0] sm:$0xff]
    %v108 = vld [vmem:[#allocation8 + $0xe8] sm:$0xff]
    %v109 = vld [vmem:[#allocation8 + $0xf0] sm:$0xff]
    %v110 = vld [vmem:[#allocation8 + $0xf8] sm:$0xff]
    %111 = vst [vmem:[#allocation9] sm:$0xff] %v79
    %112 = vst [vmem:[#allocation9 + $0x8] sm:$0xff] %v80
    %113 = vst [vmem:[#allocation9 + $0x10] sm:$0xff] %v81
    %114 = vst [vmem:[#allocation9 + $0x18] sm:$0xff] %v82
    %115 = vst [vmem:[#allocation9 + $0x20] sm:$0xff] %v83
    %116 = vst [vmem:[#allocation9 + $0x28] sm:$0xff] %v84
    %117 = vst [vmem:[#allocation9 + $0x30] sm:$0xff] %v85
    %118 = vst [vmem:[#allocation9 + $0x38] sm:$0xff] %v86
    %119 = vst [vmem:[#allocation9 + $0x40] sm:$0xff] %v87
    %120 = vst [vmem:[#allocation9 + $0x48] sm:$0xff] %v88
    %121 = vst [vmem:[#allocation9 + $0x50] sm:$0xff] %v89
    %122 = vst [vmem:[#allocation9 + $0x58] sm:$0xff] %v90
    %123 = vst [vmem:[#allocation9 + $0x60] sm:$0xff] %v91
    %124 = vst [vmem:[#allocation9 + $0x68] sm:$0xff] %v92
    %125 = vst [vmem:[#allocation9 + $0x70] sm:$0xff] %v93
    %126 = vst [vmem:[#allocation9 + $0x78] sm:$0xff] %v94
    %127 = vst [vmem:[#allocation9 + $0x80] sm:$0xff] %v95
    %128 = vst [vmem:[#allocation9 + $0x88] sm:$0xff] %v96
    %129 = vst [vmem:[#allocation9 + $0x90] sm:$0xff] %v97
    %130 = vst [vmem:[#allocation9 + $0x98] sm:$0xff] %v98
    %131 = vst [vmem:[#allocation9 + $0xa0] sm:$0xff] %v99
    %132 = vst [vmem:[#allocation9 + $0xa8] sm:$0xff] %v100
    %133 = vst [vmem:[#allocation9 + $0xb0] sm:$0xff] %v101
    %134 = vst [vmem:[#allocation9 + $0xb8] sm:$0xff] %v102
    %135 = vst [vmem:[#allocation9 + $0xc0] sm:$0xff] %v103
    %136 = vst [vmem:[#allocation9 + $0xc8] sm:$0xff] %v104
    %137 = vst [vmem:[#allocation9 + $0xd0] sm:$0xff] %v105
    %138 = vst [vmem:[#allocation9 + $0xd8] sm:$0xff] %v106
    %139 = vst [vmem:[#allocation9 + $0xe0] sm:$0xff] %v107
    %140 = vst [vmem:[#allocation9 + $0xe8] sm:$0xff] %v108
    %141 = vst [vmem:[#allocation9 + $0xf0] sm:$0xff] %v109
    %142 = vst [vmem:[#allocation9 + $0xf8] sm:$0xff] %v110
    %s143 = sld [smem:[#allocation2]]
    %v144 = vld [vmem:[%s3] sm:$0xff]
    %v145 = vld [vmem:[%s3 + $0x8] sm:$0xff]
    %v146 = vld [vmem:[%s3 + $0x10] sm:$0xff]
    %v147 = vld [vmem:[%s3 + $0x18] sm:$0xff]
    %v148 = vld [vmem:[%s3 + $0x20] sm:$0xff]
    %v149 = vld [vmem:[%s3 + $0x28] sm:$0xff]
    %v150 = vld [vmem:[%s3 + $0x30] sm:$0xff]
    %v151 = vld [vmem:[%s3 + $0x38] sm:$0xff]
    %v152 = vld [vmem:[%s3 + $0x40] sm:$0xff]
    %v153 = vld [vmem:[%s3 + $0x48] sm:$0xff]
    %v154 = vld [vmem:[%s3 + $0x50] sm:$0xff]
    %v155 = vld [vmem:[%s3 + $0x58] sm:$0xff]
    %v156 = vld [vmem:[%s3 + $0x60] sm:$0xff]
    %v157 = vld [vmem:[%s3 + $0x68] sm:$0xff]
    %v158 = vld [vmem:[%s3 + $0x70] sm:$0xff]
    %v159 = vld [vmem:[%s3 + $0x78] sm:$0xff]
    %v160 = vld [vmem:[%s4] sm:$0x1]
    %v162 = vlaneseq
    %v163 = vshrl.u32 %v162, 7
    %v164 = vsub.s32 0, %v163
    %v165 = vrot.slane %v160, %v164
    %167 = vmatprep.subr.mxu0 0.0
    %168 = vmatpush1.msra.mxu0 %v144
    %169 = vmatprep.subr.mxu0 0.0
    %170 = vmatpush1.msra.mxu0 %v145
    %171 = vmatprep.subr.mxu0 0.0
    %172 = vmatpush1.msra.mxu0 %v146
    %173 = vmatprep.subr.mxu0 0.0
    %174 = vmatpush1.msra.mxu0 %v147
    %175 = vmatprep.subr.mxu0 0.0
    %176 = vmatpush1.msra.mxu0 %v148
    %177 = vmatprep.subr.mxu0 0.0
    %178 = vmatpush1.msra.mxu0 %v149
    %179 = vmatprep.subr.mxu0 0.0
    %180 = vmatpush1.msra.mxu0 %v150
    %181 = vmatprep.subr.mxu0 0.0
    %182 = vmatpush1.msra.mxu0 %v151
    %183 = vmatprep.subr.mxu0 0.0
    %184 = vmatpush1.msra.mxu0 %v152
    %185 = vmatprep.subr.mxu0 0.0
    %186 = vmatpush1.msra.mxu0 %v153
    %187 = vmatprep.subr.mxu0 0.0
    %188 = vmatpush1.msra.mxu0 %v154
    %189 = vmatprep.subr.mxu0 0.0
    %190 = vmatpush1.msra.mxu0 %v155
    %191 = vmatprep.subr.mxu0 0.0
    %192 = vmatpush1.msra.mxu0 %v156
    %193 = vmatprep.subr.mxu0 0.0
    %194 = vmatpush1.msra.mxu0 %v157
    %195 = vmatprep.subr.mxu0 0.0
    %196 = vmatpush1.msra.mxu0 %v158
    %197 = vmatprep.subr.mxu0 0.0
    %198 = vmatpush1.msra.mxu0 %v159
    %199 = vmatprep.subr.mxu0 0.0
    %200 = vmatpush1.msra.mxu0 0.0
    %201 = vmatprep.subr.mxu0 0.0
    %202 = vmatpush1.msra.mxu0 0.0
    %203 = vmatprep.subr.mxu0 0.0
    %204 = vmatpush1.msra.mxu0 0.0
    %205 = vmatprep.subr.mxu0 0.0
    %206 = vmatpush1.msra.mxu0 0.0
    %207 = vmatprep.subr.mxu0 0.0
    %208 = vmatpush1.msra.mxu0 0.0
    %209 = vmatprep.subr.mxu0 0.0
    %210 = vmatpush1.msra.mxu0 0.0
    %211 = vmatprep.subr.mxu0 0.0
    %212 = vmatpush1.msra.mxu0 0.0
    %213 = vmatprep.subr.mxu0 0.0
    %214 = vmatpush1.msra.mxu0 0.0
    %215 = vmatprep.subr.mxu0 0.0
    %216 = vmatpush1.msra.mxu0 0.0
    %217 = vmatprep.subr.mxu0 0.0
    %218 = vmatpush1.msra.mxu0 0.0
    %219 = vmatprep.subr.mxu0 0.0
    %220 = vmatpush1.msra.mxu0 0.0
    %221 = vmatprep.subr.mxu0 0.0
    %222 = vmatpush1.msra.mxu0 0.0
    %223 = vmatprep.subr.mxu0 0.0
    %224 = vmatpush1.msra.mxu0 0.0
    %225 = vmatprep.subr.mxu0 0.0
    %226 = vmatpush1.msra.mxu0 0.0
    %227 = vmatprep.subr.mxu0 0.0
    %228 = vmatpush1.msra.mxu0 0.0
    %229 = vmatprep.subr.mxu0 0.0
    %230 = vmatpush1.msra.mxu0 0.0
    %231 = vmatprep.mubr.f32.mxu0 0.0
    %232 = vmatmul.mubr.f32.gmra.mrb[0].mxu0 %v79
    %v233 = vpop.f32.mrb[0].mxu0
    %v234 = vadd.f32 %v165, %v233
    %v235 = vpop.f32.mrb[0].mxu0
    %236 = vmatprep.mubr.f32.mxu0 0.0
    %237 = vmatmul.mubr.f32.gmra.mrb[0].mxu0 %v80
    %v238 = vpop.f32.mrb[0].mxu0
    %v239 = vadd.f32 %v165, %v238
    %v240 = vpop.f32.mrb[0].mxu0
    %241 = vmatprep.mubr.f32.mxu0 0.0
    %242 = vmatmul.mubr.f32.gmra.mrb[0].mxu0 %v81
    %v243 = vpop.f32.mrb[0].mxu0
    %v244 = vadd.f32 %v165, %v243
    %v245 = vpop.f32.mrb[0].mxu0
    %246 = vmatprep.mubr.f32.mxu0 0.0
    %247 = vmatmul.mubr.f32.gmra.mrb[0].mxu0 %v82
    %v248 = vpop.f32.mrb[0].mxu0
    %v249 = vadd.f32 %v165, %v248
    %v250 = vpop.f32.mrb[0].mxu0
    %251 = vmatprep.mubr.f32.mxu0 0.0
    %252 = vmatmul.mubr.f32.gmra.mrb[0].mxu0 %v83
    %v253 = vpop.f32.mrb[0].mxu0
    %v254 = vadd.f32 %v165, %v253
    %v255 = vpop.f32.mrb[0].mxu0
    %256 = vmatprep.mubr.f32.mxu0 0.0
    %257 = vmatmul.mubr.f32.gmra.mrb[0].mxu0 %v84
    %v258 = vpop.f32.mrb[0].mxu0
    %v259 = vadd.f32 %v165, %v258
    %v260 = vpop.f32.mrb[0].mxu0
    %261 = vmatprep.mubr.f32.mxu0 0.0
    %262 = vmatmul.mubr.f32.gmra.mrb[0].mxu0 %v85
    %v263 = vpop.f32.mrb[0].mxu0
    %v264 = vadd.f32 %v165, %v263
    %v265 = vpop.f32.mrb[0].mxu0
    %266 = vmatprep.mubr.f32.mxu0 0.0
    %267 = vmatmul.mubr.f32.gmra.mrb[0].mxu0 %v86
    %v268 = vpop.f32.mrb[0].mxu0
    %v269 = vadd.f32 %v165, %v268
    %v270 = vpop.f32.mrb[0].mxu0
    %271 = vmatprep.mubr.f32.mxu0 0.0
    %272 = vmatmul.mubr.f32.gmra.mrb[0].mxu0 %v87
    %v273 = vpop.f32.mrb[0].mxu0
    %v274 = vadd.f32 %v165, %v273
    %v275 = vpop.f32.mrb[0].mxu0
    %276 = vmatprep.mubr.f32.mxu0 0.0
    %277 = vmatmul.mubr.f32.gmra.mrb[0].mxu0 %v88
    %v278 = vpop.f32.mrb[0].mxu0
    %v279 = vadd.f32 %v165, %v278
    %v280 = vpop.f32.mrb[0].mxu0
    %281 = vmatprep.mubr.f32.mxu0 0.0
    %282 = vmatmul.mubr.f32.gmra.mrb[0].mxu0 %v89
    %v283 = vpop.f32.mrb[0].mxu0
    %v284 = vadd.f32 %v165, %v283
    %v285 = vpop.f32.mrb[0].mxu0
    %286 = vmatprep.mubr.f32.mxu0 0.0
    %287 = vmatmul.mubr.f32.gmra.mrb[0].mxu0 %v90
    %v288 = vpop.f32.mrb[0].mxu0
    %v289 = vadd.f32 %v165, %v288
    %v290 = vpop.f32.mrb[0].mxu0
    %291 = vmatprep.mubr.f32.mxu0 0.0
    %292 = vmatmul.mubr.f32.gmra.mrb[0].mxu0 %v91
    %v293 = vpop.f32.mrb[0].mxu0
    %v294 = vadd.f32 %v165, %v293
    %v295 = vpop.f32.mrb[0].mxu0
    %296 = vmatprep.mubr.f32.mxu0 0.0
    %297 = vmatmul.mubr.f32.gmra.mrb[0].mxu0 %v92
    %v298 = vpop.f32.mrb[0].mxu0
    %v299 = vadd.f32 %v165, %v298
    %v300 = vpop.f32.mrb[0].mxu0
    %301 = vmatprep.mubr.f32.mxu0 0.0
    %302 = vmatmul.mubr.f32.gmra.mrb[0].mxu0 %v93
    %v303 = vpop.f32.mrb[0].mxu0
    %v304 = vadd.f32 %v165, %v303
    %v305 = vpop.f32.mrb[0].mxu0
    %306 = vmatprep.mubr.f32.mxu0 0.0
    %307 = vmatmul.mubr.f32.gmra.mrb[0].mxu0 %v94
    %v308 = vpop.f32.mrb[0].mxu0
    %v309 = vadd.f32 %v165, %v308
    %v310 = vpop.f32.mrb[0].mxu0
    %311 = vmatprep.mubr.f32.mxu0 0.0
    %312 = vmatmul.mubr.f32.gmra.mrb[0].mxu0 %v95
    %v313 = vpop.f32.mrb[0].mxu0
    %v314 = vadd.f32 %v165, %v313
    %v315 = vpop.f32.mrb[0].mxu0
    %316 = vmatprep.mubr.f32.mxu0 0.0
    %317 = vmatmul.mubr.f32.gmra.mrb[0].mxu0 %v96
    %v318 = vpop.f32.mrb[0].mxu0
    %v319 = vadd.f32 %v165, %v318
    %v320 = vpop.f32.mrb[0].mxu0
    %321 = vmatprep.mubr.f32.mxu0 0.0
    %322 = vmatmul.mubr.f32.gmra.mrb[0].mxu0 %v97
    %v323 = vpop.f32.mrb[0].mxu0
    %v324 = vadd.f32 %v165, %v323
    %v325 = vpop.f32.mrb[0].mxu0
    %326 = vmatprep.mubr.f32.mxu0 0.0
    %327 = vmatmul.mubr.f32.gmra.mrb[0].mxu0 %v98
    %v328 = vpop.f32.mrb[0].mxu0
    %v329 = vadd.f32 %v165, %v328
    %v330 = vpop.f32.mrb[0].mxu0
    %331 = vmatprep.mubr.f32.mxu0 0.0
    %332 = vmatmul.mubr.f32.gmra.mrb[0].mxu0 %v99
    %v333 = vpop.f32.mrb[0].mxu0
    %v334 = vadd.f32 %v165, %v333
    %v335 = vpop.f32.mrb[0].mxu0
    %336 = vmatprep.mubr.f32.mxu0 0.0
    %337 = vmatmul.mubr.f32.gmra.mrb[0].mxu0 %v100
    %v338 = vpop.f32.mrb[0].mxu0
    %v339 = vadd.f32 %v165, %v338
    %v340 = vpop.f32.mrb[0].mxu0
    %341 = vmatprep.mubr.f32.mxu0 0.0
    %342 = vmatmul.mubr.f32.gmra.mrb[0].mxu0 %v101
    %v343 = vpop.f32.mrb[0].mxu0
    %v344 = vadd.f32 %v165, %v343
    %v345 = vpop.f32.mrb[0].mxu0
    %346 = vmatprep.mubr.f32.mxu0 0.0
    %347 = vmatmul.mubr.f32.gmra.mrb[0].mxu0 %v102
    %v348 = vpop.f32.mrb[0].mxu0
    %v349 = vadd.f32 %v165, %v348
    %v350 = vpop.f32.mrb[0].mxu0
    %351 = vmatprep.mubr.f32.mxu0 0.0
    %352 = vmatmul.mubr.f32.gmra.mrb[0].mxu0 %v103
    %v353 = vpop.f32.mrb[0].mxu0
    %v354 = vadd.f32 %v165, %v353
    %v355 = vpop.f32.mrb[0].mxu0
    %356 = vmatprep.mubr.f32.mxu0 0.0
    %357 = vmatmul.mubr.f32.gmra.mrb[0].mxu0 %v104
    %v358 = vpop.f32.mrb[0].mxu0
    %v359 = vadd.f32 %v165, %v358
    %v360 = vpop.f32.mrb[0].mxu0
    %361 = vmatprep.mubr.f32.mxu0 0.0
    %362 = vmatmul.mubr.f32.gmra.mrb[0].mxu0 %v105
    %v363 = vpop.f32.mrb[0].mxu0
    %v364 = vadd.f32 %v165, %v363
    %v365 = vpop.f32.mrb[0].mxu0
    %366 = vmatprep.mubr.f32.mxu0 0.0
    %367 = vmatmul.mubr.f32.gmra.mrb[0].mxu0 %v106
    %v368 = vpop.f32.mrb[0].mxu0
    %v369 = vadd.f32 %v165, %v368
    %v370 = vpop.f32.mrb[0].mxu0
    %371 = vmatprep.mubr.f32.mxu0 0.0
    %372 = vmatmul.mubr.f32.gmra.mrb[0].mxu0 %v107
    %v373 = vpop.f32.mrb[0].mxu0
    %v374 = vadd.f32 %v165, %v373
    %v375 = vpop.f32.mrb[0].mxu0
    %376 = vmatprep.mubr.f32.mxu0 0.0
    %377 = vmatmul.mubr.f32.gmra.mrb[0].mxu0 %v108
    %v378 = vpop.f32.mrb[0].mxu0
    %v379 = vadd.f32 %v165, %v378
    %v380 = vpop.f32.mrb[0].mxu0
    %381 = vmatprep.mubr.f32.mxu0 0.0
    %382 = vmatmul.mubr.f32.gmra.mrb[0].mxu0 %v109
    %v383 = vpop.f32.mrb[0].mxu0
    %v384 = vadd.f32 %v165, %v383
    %v385 = vpop.f32.mrb[0].mxu0
    %386 = vmatprep.mubr.f32.mxu0 0.0
    %387 = vmatmul.mubr.f32.gmra.mrb[0].mxu0 %v110
    %v388 = vpop.f32.mrb[0].mxu0
    %v389 = vadd.f32 %v165, %v388
    %v390 = vpop.f32.mrb[0].mxu0
    %391 = vdwg.mxu0
    %v392 = vstv %s76
    %v393 = vmul.f32 %v234, %v392
    %v394 = vmul.f32 %v239, %v392
    %v395 = vmul.f32 %v244, %v392
    %v396 = vmul.f32 %v249, %v392
    %v397 = vmul.f32 %v254, %v392
    %v398 = vmul.f32 %v259, %v392
    %v399 = vmul.f32 %v264, %v392
    %v400 = vmul.f32 %v269, %v392
    %v401 = vmul.f32 %v274, %v392
    %v402 = vmul.f32 %v279, %v392
    %v403 = vmul.f32 %v284, %v392
    %v404 = vmul.f32 %v289, %v392
    %v405 = vmul.f32 %v294, %v392
    %v406 = vmul.f32 %v299, %v392
    %v407 = vmul.f32 %v304, %v392
    %v408 = vmul.f32 %v309, %v392
    %v409 = vmul.f32 %v314, %v392
    %v410 = vmul.f32 %v319, %v392
    %v411 = vmul.f32 %v324, %v392
    %v412 = vmul.f32 %v329, %v392
    %v413 = vmul.f32 %v334, %v392
    %v414 = vmul.f32 %v339, %v392
    %v415 = vmul.f32 %v344, %v392
    %v416 = vmul.f32 %v349, %v392
    %v417 = vmul.f32 %v354, %v392
    %v418 = vmul.f32 %v359, %v392
    %v419 = vmul.f32 %v364, %v392
    %v420 = vmul.f32 %v369, %v392
    %v421 = vmul.f32 %v374, %v392
    %v422 = vmul.f32 %v379, %v392
    %v423 = vmul.f32 %v384, %v392
    %v424 = vmul.f32 %v389, %v392
    %v425 = vtanh.pop %v393
    %v426 = vtanh.pop %v394
    %v427 = vtanh.pop %v395
    %v428 = vtanh.pop %v396
    %v429 = vtanh.pop %v397
    %v430 = vtanh.pop %v398
    %v431 = vtanh.pop %v399
    %v432 = vtanh.pop %v400
    %v433 = vtanh.pop %v401
    %v434 = vtanh.pop %v402
    %v435 = vtanh.pop %v403
    %v436 = vtanh.pop %v404
    %v437 = vtanh.pop %v405
    %v438 = vtanh.pop %v406
    %v439 = vtanh.pop %v407
    %v440 = vtanh.pop %v408
    %v441 = vtanh.pop %v409
    %v442 = vtanh.pop %v410
    %v443 = vtanh.pop %v411
    %v444 = vtanh.pop %v412
    %v445 = vtanh.pop %v413
    %v446 = vtanh.pop %v414
    %v447 = vtanh.pop %v415
    %v448 = vtanh.pop %v416
    %v449 = vtanh.pop %v417
    %v450 = vtanh.pop %v418
    %v451 = vtanh.pop %v419
    %v452 = vtanh.pop %v420
    %v453 = vtanh.pop %v421
    %v454 = vtanh.pop %v422
    %v455 = vtanh.pop %v423
    %v456 = vtanh.pop %v424
    %v457 = vmul.f32 %v234, %v425
    %v458 = vmul.f32 %v239, %v426
    %v459 = vmul.f32 %v244, %v427
    %v460 = vmul.f32 %v249, %v428
    %v461 = vmul.f32 %v254, %v429
    %v462 = vmul.f32 %v259, %v430
    %v463 = vmul.f32 %v264, %v431
    %v464 = vmul.f32 %v269, %v432
    %v465 = vmul.f32 %v274, %v433
    %v466 = vmul.f32 %v279, %v434
    %v467 = vmul.f32 %v284, %v435
    %v468 = vmul.f32 %v289, %v436
    %v469 = vmul.f32 %v294, %v437
    %v470 = vmul.f32 %v299, %v438
    %v471 = vmul.f32 %v304, %v439
    %v472 = vmul.f32 %v309, %v440
    %v473 = vmul.f32 %v314, %v441
    %v474 = vmul.f32 %v319, %v442
    %v475 = vmul.f32 %v324, %v443
    %v476 = vmul.f32 %v329, %v444
    %v477 = vmul.f32 %v334, %v445
    %v478 = vmul.f32 %v339, %v446
    %v479 = vmul.f32 %v344, %v447
    %v480 = vmul.f32 %v349, %v448
    %v481 = vmul.f32 %v354, %v449
    %v482 = vmul.f32 %v359, %v450
    %v483 = vmul.f32 %v364, %v451
    %v484 = vmul.f32 %v369, %v452
    %v485 = vmul.f32 %v374, %v453
    %v486 = vmul.f32 %v379, %v454
    %v487 = vmul.f32 %v384, %v455
    %v488 = vmul.f32 %v389, %v456
    %v489 = vadd.f32 %v457, %v234
    %v490 = vadd.f32 %v458, %v239
    %v491 = vadd.f32 %v459, %v244
    %v492 = vadd.f32 %v460, %v249
    %v493 = vadd.f32 %v461, %v254
    %v494 = vadd.f32 %v462, %v259
    %v495 = vadd.f32 %v463, %v264
    %v496 = vadd.f32 %v464, %v269
    %v497 = vadd.f32 %v465, %v274
    %v498 = vadd.f32 %v466, %v279
    %v499 = vadd.f32 %v467, %v284
    %v500 = vadd.f32 %v468, %v289
    %v501 = vadd.f32 %v469, %v294
    %v502 = vadd.f32 %v470, %v299
    %v503 = vadd.f32 %v471, %v304
    %v504 = vadd.f32 %v472, %v309
    %v505 = vadd.f32 %v473, %v314
    %v506 = vadd.f32 %v474, %v319
    %v507 = vadd.f32 %v475, %v324
    %v508 = vadd.f32 %v476, %v329
    %v509 = vadd.f32 %v477, %v334
    %v510 = vadd.f32 %v478, %v339
    %v511 = vadd.f32 %v479, %v344
    %v512 = vadd.f32 %v480, %v349
    %v513 = vadd.f32 %v481, %v354
    %v514 = vadd.f32 %v482, %v359
    %v515 = vadd.f32 %v483, %v364
    %v516 = vadd.f32 %v484, %v369
    %v517 = vadd.f32 %v485, %v374
    %v518 = vadd.f32 %v486, %v379
    %v519 = vadd.f32 %v487, %v384
    %v520 = vadd.f32 %v488, %v389
    %v521 = vld [vmem:[%s5] sm:$0xff]
    %v522 = vld [vmem:[%s5 + $0x8] sm:$0xff]
    %v523 = vld [vmem:[%s5 + $0x10] sm:$0xff]
    %v524 = vld [vmem:[%s5 + $0x18] sm:$0xff]
    %v525 = vld [vmem:[%s5 + $0x20] sm:$0xff]
    %v526 = vld [vmem:[%s5 + $0x28] sm:$0xff]
    %v527 = vld [vmem:[%s5 + $0x30] sm:$0xff]
    %v528 = vld [vmem:[%s5 + $0x38] sm:$0xff]
    %v529 = vld [vmem:[%s6] sm:$0x1]
    %v531 = vlaneseq
    %v532 = vshrl.u32 %v531, 7
    %v533 = vsub.s32 0, %v532
    %v534 = vrot.slane %v529, %v533
    %vm536 = vcmask 523264
    %v538 = vsel %vm536, %v489, 0
    %v541 = vsel %vm536, %v490, 0
    %v544 = vsel %vm536, %v491, 0
    %v547 = vsel %vm536, %v492, 0
    %v550 = vsel %vm536, %v493, 0
    %v553 = vsel %vm536, %v494, 0
    %v556 = vsel %vm536, %v495, 0
    %v559 = vsel %vm536, %v496, 0
    %v562 = vsel %vm536, %v497, 0
    %v565 = vsel %vm536, %v498, 0
    %v568 = vsel %vm536, %v499, 0
    %v571 = vsel %vm536, %v500, 0
    %v574 = vsel %vm536, %v501, 0
    %v577 = vsel %vm536, %v502, 0
    %v580 = vsel %vm536, %v503, 0
    %v583 = vsel %vm536, %v504, 0
    %v586 = vsel %vm536, %v505, 0
    %v589 = vsel %vm536, %v506, 0
    %v592 = vsel %vm536, %v507, 0
    %v595 = vsel %vm536, %v508, 0
    %v598 = vsel %vm536, %v509, 0
    %v601 = vsel %vm536, %v510, 0
    %v604 = vsel %vm536, %v511, 0
    %v607 = vsel %vm536, %v512, 0
    %v610 = vsel %vm536, %v513, 0
    %v613 = vsel %vm536, %v514, 0
    %v616 = vsel %vm536, %v515, 0
    %v619 = vsel %vm536, %v516, 0
    %v622 = vsel %vm536, %v517, 0
    %v625 = vsel %vm536, %v518, 0
    %v628 = vsel %vm536, %v519, 0
    %v631 = vsel %vm536, %v520, 0
    %633 = vmatprep.subr.mxu0 0.0
    %634 = vmatpush1.msra.mxu0 %v521
    %635 = vmatprep.subr.mxu0 0.0
    %636 = vmatpush1.msra.mxu0 %v522
    %637 = vmatprep.subr.mxu0 0.0
    %638 = vmatpush1.msra.mxu0 %v523
    %639 = vmatprep.subr.mxu0 0.0
    %640 = vmatpush1.msra.mxu0 %v524
    %641 = vmatprep.subr.mxu0 0.0
    %642 = vmatpush1.msra.mxu0 %v525
    %643 = vmatprep.subr.mxu0 0.0
    %644 = vmatpush1.msra.mxu0 %v526
    %645 = vmatprep.subr.mxu0 0.0
    %646 = vmatpush1.msra.mxu0 %v527
    %647 = vmatprep.subr.mxu0 0.0
    %648 = vmatpush1.msra.mxu0 %v528
    %649 = vmatprep.subr.mxu0 0.0
    %650 = vmatpush1.msra.mxu0 0.0
    %651 = vmatprep.subr.mxu0 0.0
    %652 = vmatpush1.msra.mxu0 0.0
    %653 = vmatprep.subr.mxu0 0.0
    %654 = vmatpush1.msra.mxu0 0.0
    %655 = vmatprep.subr.mxu0 0.0
    %656 = vmatpush1.msra.mxu0 0.0
    %657 = vmatprep.subr.mxu0 0.0
    %658 = vmatpush1.msra.mxu0 0.0
    %659 = vmatprep.subr.mxu0 0.0
    %660 = vmatpush1.msra.mxu0 0.0
    %661 = vmatprep.subr.mxu0 0.0
    %662 = vmatpush1.msra.mxu0 0.0
    %663 = vmatprep.subr.mxu0 0.0
    %664 = vmatpush1.msra.mxu0 0.0
    %665 = vmatprep.subr.mxu0 0.0
    %666 = vmatpush1.msra.mxu0 0.0
    %667 = vmatprep.subr.mxu0 0.0
    %668 = vmatpush1.msra.mxu0 0.0
    %669 = vmatprep.subr.mxu0 0.0
    %670 = vmatpush1.msra.mxu0 0.0
    %671 = vmatprep.subr.mxu0 0.0
    %672 = vmatpush1.msra.mxu0 0.0
    %673 = vmatprep.subr.mxu0 0.0
    %674 = vmatpush1.msra.mxu0 0.0
    %675 = vmatprep.subr.mxu0 0.0
    %676 = vmatpush1.msra.mxu0 0.0
    %677 = vmatprep.subr.mxu0 0.0
    %678 = vmatpush1.msra.mxu0 0.0
    %679 = vmatprep.subr.mxu0 0.0
    %680 = vmatpush1.msra.mxu0 0.0
    %681 = vmatprep.subr.mxu0 0.0
    %682 = vmatpush1.msra.mxu0 0.0
    %683 = vmatprep.subr.mxu0 0.0
    %684 = vmatpush1.msra.mxu0 0.0
    %685 = vmatprep.subr.mxu0 0.0
    %686 = vmatpush1.msra.mxu0 0.0
    %687 = vmatprep.subr.mxu0 0.0
    %688 = vmatpush1.msra.mxu0 0.0
    %689 = vmatprep.subr.mxu0 0.0
    %690 = vmatpush1.msra.mxu0 0.0
    %691 = vmatprep.subr.mxu0 0.0
    %692 = vmatpush1.msra.mxu0 0.0
    %693 = vmatprep.subr.mxu0 0.0
    %694 = vmatpush1.msra.mxu0 0.0
    %695 = vmatprep.subr.mxu0 0.0
    %696 = vmatpush1.msra.mxu0 0.0
    %697 = vmatprep.mubr.f32.mxu0 0.0
    %698 = vmatmul.mubr.f32.gmra.mrb[0].mxu0 %v538
    %v699 = vpop.f32.mrb[0].mxu0
    %v700 = vadd.f32 %v534, %v699
    %v701 = vpop.f32.mrb[0].mxu0
    %702 = vmatprep.mubr.f32.mxu0 0.0
    %703 = vmatmul.mubr.f32.gmra.mrb[0].mxu0 %v541
    %v704 = vpop.f32.mrb[0].mxu0
    %v705 = vadd.f32 %v534, %v704
    %v706 = vpop.f32.mrb[0].mxu0
    %707 = vmatprep.mubr.f32.mxu0 0.0
    %708 = vmatmul.mubr.f32.gmra.mrb[0].mxu0 %v544
    %v709 = vpop.f32.mrb[0].mxu0
    %v710 = vadd.f32 %v534, %v709
    %v711 = vpop.f32.mrb[0].mxu0
    %712 = vmatprep.mubr.f32.mxu0 0.0
    %713 = vmatmul.mubr.f32.gmra.mrb[0].mxu0 %v547
    %v714 = vpop.f32.mrb[0].mxu0
    %v715 = vadd.f32 %v534, %v714
    %v716 = vpop.f32.mrb[0].mxu0
    %717 = vmatprep.mubr.f32.mxu0 0.0
    %718 = vmatmul.mubr.f32.gmra.mrb[0].mxu0 %v550
    %v719 = vpop.f32.mrb[0].mxu0
    %v720 = vadd.f32 %v534, %v719
    %v721 = vpop.f32.mrb[0].mxu0
    %722 = vmatprep.mubr.f32.mxu0 0.0
    %723 = vmatmul.mubr.f32.gmra.mrb[0].mxu0 %v553
    %v724 = vpop.f32.mrb[0].mxu0
    %v725 = vadd.f32 %v534, %v724
    %v726 = vpop.f32.mrb[0].mxu0
    %727 = vmatprep.mubr.f32.mxu0 0.0
    %728 = vmatmul.mubr.f32.gmra.mrb[0].mxu0 %v556
    %v729 = vpop.f32.mrb[0].mxu0
    %v730 = vadd.f32 %v534, %v729
    %v731 = vpop.f32.mrb[0].mxu0
    %732 = vmatprep.mubr.f32.mxu0 0.0
    %733 = vmatmul.mubr.f32.gmra.mrb[0].mxu0 %v559
    %v734 = vpop.f32.mrb[0].mxu0
    %v735 = vadd.f32 %v534, %v734
    %v736 = vpop.f32.mrb[0].mxu0
    %737 = vmatprep.mubr.f32.mxu0 0.0
    %738 = vmatmul.mubr.f32.gmra.mrb[0].mxu0 %v562
    %v739 = vpop.f32.mrb[0].mxu0
    %v740 = vadd.f32 %v534, %v739
    %v741 = vpop.f32.mrb[0].mxu0
    %742 = vmatprep.mubr.f32.mxu0 0.0
    %743 = vmatmul.mubr.f32.gmra.mrb[0].mxu0 %v565
    %v744 = vpop.f32.mrb[0].mxu0
    %v745 = vadd.f32 %v534, %v744
    %v746 = vpop.f32.mrb[0].mxu0
    %747 = vmatprep.mubr.f32.mxu0 0.0
    %748 = vmatmul.mubr.f32.gmra.mrb[0].mxu0 %v568
    %v749 = vpop.f32.mrb[0].mxu0
    %v750 = vadd.f32 %v534, %v749
    %v751 = vpop.f32.mrb[0].mxu0
    %752 = vmatprep.mubr.f32.mxu0 0.0
    %753 = vmatmul.mubr.f32.gmra.mrb[0].mxu0 %v571
    %v754 = vpop.f32.mrb[0].mxu0
    %v755 = vadd.f32 %v534, %v754
    %v756 = vpop.f32.mrb[0].mxu0
    %757 = vmatprep.mubr.f32.mxu0 0.0
    %758 = vmatmul.mubr.f32.gmra.mrb[0].mxu0 %v574
    %v759 = vpop.f32.mrb[0].mxu0
    %v760 = vadd.f32 %v534, %v759
    %v761 = vpop.f32.mrb[0].mxu0
    %762 = vmatprep.mubr.f32.mxu0 0.0
    %763 = vmatmul.mubr.f32.gmra.mrb[0].mxu0 %v577
    %v764 = vpop.f32.mrb[0].mxu0
    %v765 = vadd.f32 %v534, %v764
    %v766 = vpop.f32.mrb[0].mxu0
    %767 = vmatprep.mubr.f32.mxu0 0.0
    %768 = vmatmul.mubr.f32.gmra.mrb[0].mxu0 %v580
    %v769 = vpop.f32.mrb[0].mxu0
    %v770 = vadd.f32 %v534, %v769
    %v771 = vpop.f32.mrb[0].mxu0
    %772 = vmatprep.mubr.f32.mxu0 0.0
    %773 = vmatmul.mubr.f32.gmra.mrb[0].mxu0 %v583
    %v774 = vpop.f32.mrb[0].mxu0
    %v775 = vadd.f32 %v534, %v774
    %v776 = vpop.f32.mrb[0].mxu0
    %777 = vmatprep.mubr.f32.mxu0 0.0
    %778 = vmatmul.mubr.f32.gmra.mrb[0].mxu0 %v586
    %v779 = vpop.f32.mrb[0].mxu0
    %v780 = vadd.f32 %v534, %v779
    %v781 = vpop.f32.mrb[0].mxu0
    %782 = vmatprep.mubr.f32.mxu0 0.0
    %783 = vmatmul.mubr.f32.gmra.mrb[0].mxu0 %v589
    %v784 = vpop.f32.mrb[0].mxu0
    %v785 = vadd.f32 %v534, %v784
    %v786 = vpop.f32.mrb[0].mxu0
    %787 = vmatprep.mubr.f32.mxu0 0.0
    %788 = vmatmul.mubr.f32.gmra.mrb[0].mxu0 %v592
    %v789 = vpop.f32.mrb[0].mxu0
    %v790 = vadd.f32 %v534, %v789
    %v791 = vpop.f32.mrb[0].mxu0
    %792 = vmatprep.mubr.f32.mxu0 0.0
    %793 = vmatmul.mubr.f32.gmra.mrb[0].mxu0 %v595
    %v794 = vpop.f32.mrb[0].mxu0
    %v795 = vadd.f32 %v534, %v794
    %v796 = vpop.f32.mrb[0].mxu0
    %797 = vmatprep.mubr.f32.mxu0 0.0
    %798 = vmatmul.mubr.f32.gmra.mrb[0].mxu0 %v598
    %v799 = vpop.f32.mrb[0].mxu0
    %v800 = vadd.f32 %v534, %v799
    %v801 = vpop.f32.mrb[0].mxu0
    %802 = vmatprep.mubr.f32.mxu0 0.0
    %803 = vmatmul.mubr.f32.gmra.mrb[0].mxu0 %v601
    %v804 = vpop.f32.mrb[0].mxu0
    %v805 = vadd.f32 %v534, %v804
    %v806 = vpop.f32.mrb[0].mxu0
    %807 = vmatprep.mubr.f32.mxu0 0.0
    %808 = vmatmul.mubr.f32.gmra.mrb[0].mxu0 %v604
    %v809 = vpop.f32.mrb[0].mxu0
    %v810 = vadd.f32 %v534, %v809
    %v811 = vpop.f32.mrb[0].mxu0
    %812 = vmatprep.mubr.f32.mxu0 0.0
    %813 = vmatmul.mubr.f32.gmra.mrb[0].mxu0 %v607
    %v814 = vpop.f32.mrb[0].mxu0
    %v815 = vadd.f32 %v534, %v814
    %v816 = vpop.f32.mrb[0].mxu0
    %817 = vmatprep.mubr.f32.mxu0 0.0
    %818 = vmatmul.mubr.f32.gmra.mrb[0].mxu0 %v610
    %v819 = vpop.f32.mrb[0].mxu0
    %v820 = vadd.f32 %v534, %v819
    %v821 = vpop.f32.mrb[0].mxu0
    %822 = vmatprep.mubr.f32.mxu0 0.0
    %823 = vmatmul.mubr.f32.gmra.mrb[0].mxu0 %v613
    %v824 = vpop.f32.mrb[0].mxu0
    %v825 = vadd.f32 %v534, %v824
    %v826 = vpop.f32.mrb[0].mxu0
    %827 = vmatprep.mubr.f32.mxu0 0.0
    %828 = vmatmul.mubr.f32.gmra.mrb[0].mxu0 %v616
    %v829 = vpop.f32.mrb[0].mxu0
    %v830 = vadd.f32 %v534, %v829
    %v831 = vpop.f32.mrb[0].mxu0
    %832 = vmatprep.mubr.f32.mxu0 0.0
    %833 = vmatmul.mubr.f32.gmra.mrb[0].mxu0 %v619
    %v834 = vpop.f32.mrb[0].mxu0
    %v835 = vadd.f32 %v534, %v834
    %v836 = vpop.f32.mrb[0].mxu0
    %837 = vmatprep.mubr.f32.mxu0 0.0
    %838 = vmatmul.mubr.f32.gmra.mrb[0].mxu0 %v622
    %v839 = vpop.f32.mrb[0].mxu0
    %v840 = vadd.f32 %v534, %v839
    %v841 = vpop.f32.mrb[0].mxu0
    %842 = vmatprep.mubr.f32.mxu0 0.0
    %843 = vmatmul.mubr.f32.gmra.mrb[0].mxu0 %v625
    %v844 = vpop.f32.mrb[0].mxu0
    %v845 = vadd.f32 %v534, %v844
    %v846 = vpop.f32.mrb[0].mxu0
    %847 = vmatprep.mubr.f32.mxu0 0.0
    %848 = vmatmul.mubr.f32.gmra.mrb[0].mxu0 %v628
    %v849 = vpop.f32.mrb[0].mxu0
    %v850 = vadd.f32 %v534, %v849
    %v851 = vpop.f32.mrb[0].mxu0
    %852 = vmatprep.mubr.f32.mxu0 0.0
    %853 = vmatmul.mubr.f32.gmra.mrb[0].mxu0 %v631
    %v854 = vpop.f32.mrb[0].mxu0
    %v855 = vadd.f32 %v534, %v854
    %v856 = vpop.f32.mrb[0].mxu0
    %857 = vdwg.mxu0
    %v858 = vstv %s77
    %v859 = vmul.f32 %v700, %v858
    %v860 = vmul.f32 %v705, %v858
    %v861 = vmul.f32 %v710, %v858
    %v862 = vmul.f32 %v715, %v858
    %v863 = vmul.f32 %v720, %v858
    %v864 = vmul.f32 %v725, %v858
    %v865 = vmul.f32 %v730, %v858
    %v866 = vmul.f32 %v735, %v858
    %v867 = vmul.f32 %v740, %v858
    %v868 = vmul.f32 %v745, %v858
    %v869 = vmul.f32 %v750, %v858
    %v870 = vmul.f32 %v755, %v858
    %v871 = vmul.f32 %v760, %v858
    %v872 = vmul.f32 %v765, %v858
    %v873 = vmul.f32 %v770, %v858
    %v874 = vmul.f32 %v775, %v858
    %v875 = vmul.f32 %v780, %v858
    %v876 = vmul.f32 %v785, %v858
    %v877 = vmul.f32 %v790, %v858
    %v878 = vmul.f32 %v795, %v858
    %v879 = vmul.f32 %v800, %v858
    %v880 = vmul.f32 %v805, %v858
    %v881 = vmul.f32 %v810, %v858
    %v882 = vmul.f32 %v815, %v858
    %v883 = vmul.f32 %v820, %v858
    %v884 = vmul.f32 %v825, %v858
    %v885 = vmul.f32 %v830, %v858
    %v886 = vmul.f32 %v835, %v858
    %v887 = vmul.f32 %v840, %v858
    %v888 = vmul.f32 %v845, %v858
    %v889 = vmul.f32 %v850, %v858
    %v890 = vmul.f32 %v855, %v858
    %v891 = vtanh.pop %v859
    %v892 = vtanh.pop %v860
    %v893 = vtanh.pop %v861
    %v894 = vtanh.pop %v862
    %v895 = vtanh.pop %v863
    %v896 = vtanh.pop %v864
    %v897 = vtanh.pop %v865
    %v898 = vtanh.pop %v866
    %v899 = vtanh.pop %v867
    %v900 = vtanh.pop %v868
    %v901 = vtanh.pop %v869
    %v902 = vtanh.pop %v870
    %v903 = vtanh.pop %v871
    %v904 = vtanh.pop %v872
    %v905 = vtanh.pop %v873
    %v906 = vtanh.pop %v874
    %v907 = vtanh.pop %v875
    %v908 = vtanh.pop %v876
    %v909 = vtanh.pop %v877
    %v910 = vtanh.pop %v878
    %v911 = vtanh.pop %v879
    %v912 = vtanh.pop %v880
    %v913 = vtanh.pop %v881
    %v914 = vtanh.pop %v882
    %v915 = vtanh.pop %v883
    %v916 = vtanh.pop %v884
    %v917 = vtanh.pop %v885
    %v918 = vtanh.pop %v886
    %v919 = vtanh.pop %v887
    %v920 = vtanh.pop %v888
    %v921 = vtanh.pop %v889
    %v922 = vtanh.pop %v890
    %v923 = vmul.f32 %v700, %v891
    %v924 = vmul.f32 %v705, %v892
    %v925 = vmul.f32 %v710, %v893
    %v926 = vmul.f32 %v715, %v894
    %v927 = vmul.f32 %v720, %v895
    %v928 = vmul.f32 %v725, %v896
    %v929 = vmul.f32 %v730, %v897
    %v930 = vmul.f32 %v735, %v898
    %v931 = vmul.f32 %v740, %v899
    %v932 = vmul.f32 %v745, %v900
    %v933 = vmul.f32 %v750, %v901
    %v934 = vmul.f32 %v755, %v902
    %v935 = vmul.f32 %v760, %v903
    %v936 = vmul.f32 %v765, %v904
    %v937 = vmul.f32 %v770, %v905
    %v938 = vmul.f32 %v775, %v906
    %v939 = vmul.f32 %v780, %v907
    %v940 = vmul.f32 %v785, %v908
    %v941 = vmul.f32 %v790, %v909
    %v942 = vmul.f32 %v795, %v910
    %v943 = vmul.f32 %v800, %v911
    %v944 = vmul.f32 %v805, %v912
    %v945 = vmul.f32 %v810, %v913
    %v946 = vmul.f32 %v815, %v914
    %v947 = vmul.f32 %v820, %v915
    %v948 = vmul.f32 %v825, %v916
    %v949 = vmul.f32 %v830, %v917
    %v950 = vmul.f32 %v835, %v918
    %v951 = vmul.f32 %v840, %v919
    %v952 = vmul.f32 %v845, %v920
    %v953 = vmul.f32 %v850, %v921
    %v954 = vmul.f32 %v855, %v922
    %v955 = vadd.f32 %v923, %v700
    %v956 = vadd.f32 %v924, %v705
    %v957 = vadd.f32 %v925, %v710
    %v958 = vadd.f32 %v926, %v715
    %v959 = vadd.f32 %v927, %v720
    %v960 = vadd.f32 %v928, %v725
    %v961 = vadd.f32 %v929, %v730
    %v962 = vadd.f32 %v930, %v735
    %v963 = vadd.f32 %v931, %v740
    %v964 = vadd.f32 %v932, %v745
    %v965 = vadd.f32 %v933, %v750
    %v966 = vadd.f32 %v934, %v755
    %v967 = vadd.f32 %v935, %v760
    %v968 = vadd.f32 %v936, %v765
    %v969 = vadd.f32 %v937, %v770
    %v970 = vadd.f32 %v938, %v775
    %v971 = vadd.f32 %v939, %v780
    %v972 = vadd.f32 %v940, %v785
    %v973 = vadd.f32 %v941, %v790
    %v974 = vadd.f32 %v942, %v795
    %v975 = vadd.f32 %v943, %v800
    %v976 = vadd.f32 %v944, %v805
    %v977 = vadd.f32 %v945, %v810
    %v978 = vadd.f32 %v946, %v815
    %v979 = vadd.f32 %v947, %v820
    %v980 = vadd.f32 %v948, %v825
    %v981 = vadd.f32 %v949, %v830
    %v982 = vadd.f32 %v950, %v835
    %v983 = vadd.f32 %v951, %v840
    %v984 = vadd.f32 %v952, %v845
    %v985 = vadd.f32 %v953, %v850
    %v986 = vadd.f32 %v954, %v855
    %v987 = vld [vmem:[%s7] sm:$0xff]
    %v988 = vld [vmem:[%s7 + $0x8] sm:$0xff]
    %v989 = vld [vmem:[%s7 + $0x10] sm:$0xff]
    %v990 = vld [vmem:[%s7 + $0x18] sm:$0xff]
    %v991 = vld [vmem:[%s7 + $0x20] sm:$0xff]
    %v992 = vld [vmem:[%s7 + $0x28] sm:$0xff]
    %v993 = vld [vmem:[%s7 + $0x30] sm:$0xff]
    %v994 = vld [vmem:[%s7 + $0x38] sm:$0xff]
    %v995 = vld [vmem:[%s8] sm:$0x1]
    %v997 = vlaneseq
    %v998 = vshrl.u32 %v997, 7
    %v999 = vsub.s32 0, %v998
    %v1000 = vrot.slane %v995, %v999
    %v1003 = vsel %vm536, %v955, 0
    %v1006 = vsel %vm536, %v956, 0
    %v1009 = vsel %vm536, %v957, 0
    %v1012 = vsel %vm536, %v958, 0
    %v1015 = vsel %vm536, %v959, 0
    %v1018 = vsel %vm536, %v960, 0
    %v1021 = vsel %vm536, %v961, 0
    %v1024 = vsel %vm536, %v962, 0
    %v1027 = vsel %vm536, %v963, 0
    %v1030 = vsel %vm536, %v964, 0
    %v1033 = vsel %vm536, %v965, 0
    %v1036 = vsel %vm536, %v966, 0
    %v1039 = vsel %vm536, %v967, 0
    %v1042 = vsel %vm536, %v968, 0
    %v1045 = vsel %vm536, %v969, 0
    %v1048 = vsel %vm536, %v970, 0
    %v1051 = vsel %vm536, %v971, 0
    %v1054 = vsel %vm536, %v972, 0
    %v1057 = vsel %vm536, %v973, 0
    %v1060 = vsel %vm536, %v974, 0
    %v1063 = vsel %vm536, %v975, 0
    %v1066 = vsel %vm536, %v976, 0
    %v1069 = vsel %vm536, %v977, 0
    %v1072 = vsel %vm536, %v978, 0
    %v1075 = vsel %vm536, %v979, 0
    %v1078 = vsel %vm536, %v980, 0
    %v1081 = vsel %vm536, %v981, 0
    %v1084 = vsel %vm536, %v982, 0
    %v1087 = vsel %vm536, %v983, 0
    %v1090 = vsel %vm536, %v984, 0
    %v1093 = vsel %vm536, %v985, 0
    %v1096 = vsel %vm536, %v986, 0
    %1098 = vmatprep.subr.mxu0 0.0
    %1099 = vmatpush1.msra.mxu0 %v987
    %1100 = vmatprep.subr.mxu0 0.0
    %1101 = vmatpush1.msra.mxu0 %v988
    %1102 = vmatprep.subr.mxu0 0.0
    %1103 = vmatpush1.msra.mxu0 %v989
    %1104 = vmatprep.subr.mxu0 0.0
    %1105 = vmatpush1.msra.mxu0 %v990
    %1106 = vmatprep.subr.mxu0 0.0
    %1107 = vmatpush1.msra.mxu0 %v991
    %1108 = vmatprep.subr.mxu0 0.0
    %1109 = vmatpush1.msra.mxu0 %v992
    %1110 = vmatprep.subr.mxu0 0.0
    %1111 = vmatpush1.msra.mxu0 %v993
    %1112 = vmatprep.subr.mxu0 0.0
    %1113 = vmatpush1.msra.mxu0 %v994
    %1114 = vmatprep.subr.mxu0 0.0
    %1115 = vmatpush1.msra.mxu0 0.0
    %1116 = vmatprep.subr.mxu0 0.0
    %1117 = vmatpush1.msra.mxu0 0.0
    %1118 = vmatprep.subr.mxu0 0.0
    %1119 = vmatpush1.msra.mxu0 0.0
    %1120 = vmatprep.subr.mxu0 0.0
    %1121 = vmatpush1.msra.mxu0 0.0
    %1122 = vmatprep.subr.mxu0 0.0
    %1123 = vmatpush1.msra.mxu0 0.0
    %1124 = vmatprep.subr.mxu0 0.0
    %1125 = vmatpush1.msra.mxu0 0.0
    %1126 = vmatprep.subr.mxu0 0.0
    %1127 = vmatpush1.msra.mxu0 0.0
    %1128 = vmatprep.subr.mxu0 0.0
    %1129 = vmatpush1.msra.mxu0 0.0
    %1130 = vmatprep.subr.mxu0 0.0
    %1131 = vmatpush1.msra.mxu0 0.0
    %1132 = vmatprep.subr.mxu0 0.0
    %1133 = vmatpush1.msra.mxu0 0.0
    %1134 = vmatprep.subr.mxu0 0.0
    %1135 = vmatpush1.msra.mxu0 0.0
    %1136 = vmatprep.subr.mxu0 0.0
    %1137 = vmatpush1.msra.mxu0 0.0
    %1138 = vmatprep.subr.mxu0 0.0
    %1139 = vmatpush1.msra.mxu0 0.0
    %1140 = vmatprep.subr.mxu0 0.0
    %1141 = vmatpush1.msra.mxu0 0.0
    %1142 = vmatprep.subr.mxu0 0.0
    %1143 = vmatpush1.msra.mxu0 0.0
    %1144 = vmatprep.subr.mxu0 0.0
    %1145 = vmatpush1.msra.mxu0 0.0
    %1146 = vmatprep.subr.mxu0 0.0
    %1147 = vmatpush1.msra.mxu0 0.0
    %1148 = vmatprep.subr.mxu0 0.0
    %1149 = vmatpush1.msra.mxu0 0.0
    %1150 = vmatprep.subr.mxu0 0.0
    %1151 = vmatpush1.msra.mxu0 0.0
    %1152 = vmatprep.subr.mxu0 0.0
    %1153 = vmatpush1.msra.mxu0 0.0
    %1154 = vmatprep.subr.mxu0 0.0
    %1155 = vmatpush1.msra.mxu0 0.0
    %1156 = vmatprep.subr.mxu0 0.0
    %1157 = vmatpush1.msra.mxu0 0.0
    %1158 = vmatprep.subr.mxu0 0.0
    %1159 = vmatpush1.msra.mxu0 0.0
    %1160 = vmatprep.subr.mxu0 0.0
    %1161 = vmatpush1.msra.mxu0 0.0
    %1162 = vmatprep.mubr.f32.mxu0 0.0
    %1163 = vmatmul.mubr.f32.gmra.mrb[0].mxu0 %v1003
    %v1164 = vpop.f32.mrb[0].mxu0
    %v1165 = vadd.f32 %v1000, %v1164
    %v1166 = vpop.f32.mrb[0].mxu0
    %1167 = vmatprep.mubr.f32.mxu0 0.0
    %1168 = vmatmul.mubr.f32.gmra.mrb[0].mxu0 %v1006
    %v1169 = vpop.f32.mrb[0].mxu0
    %v1170 = vadd.f32 %v1000, %v1169
    %v1171 = vpop.f32.mrb[0].mxu0
    %1172 = vmatprep.mubr.f32.mxu0 0.0
    %1173 = vmatmul.mubr.f32.gmra.mrb[0].mxu0 %v1009
    %v1174 = vpop.f32.mrb[0].mxu0
    %v1175 = vadd.f32 %v1000, %v1174
    %v1176 = vpop.f32.mrb[0].mxu0
    %1177 = vmatprep.mubr.f32.mxu0 0.0
    %1178 = vmatmul.mubr.f32.gmra.mrb[0].mxu0 %v1012
    %v1179 = vpop.f32.mrb[0].mxu0
    %v1180 = vadd.f32 %v1000, %v1179
    %v1181 = vpop.f32.mrb[0].mxu0
    %1182 = vmatprep.mubr.f32.mxu0 0.0
    %1183 = vmatmul.mubr.f32.gmra.mrb[0].mxu0 %v1015
    %v1184 = vpop.f32.mrb[0].mxu0
    %v1185 = vadd.f32 %v1000, %v1184
    %v1186 = vpop.f32.mrb[0].mxu0
    %1187 = vmatprep.mubr.f32.mxu0 0.0
    %1188 = vmatmul.mubr.f32.gmra.mrb[0].mxu0 %v1018
    %v1189 = vpop.f32.mrb[0].mxu0
    %v1190 = vadd.f32 %v1000, %v1189
    %v1191 = vpop.f32.mrb[0].mxu0
    %1192 = vmatprep.mubr.f32.mxu0 0.0
    %1193 = vmatmul.mubr.f32.gmra.mrb[0].mxu0 %v1021
    %v1194 = vpop.f32.mrb[0].mxu0
    %v1195 = vadd.f32 %v1000, %v1194
    %v1196 = vpop.f32.mrb[0].mxu0
    %1197 = vmatprep.mubr.f32.mxu0 0.0
    %1198 = vmatmul.mubr.f32.gmra.mrb[0].mxu0 %v1024
    %v1199 = vpop.f32.mrb[0].mxu0
    %v1200 = vadd.f32 %v1000, %v1199
    %v1201 = vpop.f32.mrb[0].mxu0
    %1202 = vmatprep.mubr.f32.mxu0 0.0
    %1203 = vmatmul.mubr.f32.gmra.mrb[0].mxu0 %v1027
    %v1204 = vpop.f32.mrb[0].mxu0
    %v1205 = vadd.f32 %v1000, %v1204
    %v1206 = vpop.f32.mrb[0].mxu0
    %1207 = vmatprep.mubr.f32.mxu0 0.0
    %1208 = vmatmul.mubr.f32.gmra.mrb[0].mxu0 %v1030
    %v1209 = vpop.f32.mrb[0].mxu0
    %v1210 = vadd.f32 %v1000, %v1209
    %v1211 = vpop.f32.mrb[0].mxu0
    %1212 = vmatprep.mubr.f32.mxu0 0.0
    %1213 = vmatmul.mubr.f32.gmra.mrb[0].mxu0 %v1033
    %v1214 = vpop.f32.mrb[0].mxu0
    %v1215 = vadd.f32 %v1000, %v1214
    %v1216 = vpop.f32.mrb[0].mxu0
    %1217 = vmatprep.mubr.f32.mxu0 0.0
    %1218 = vmatmul.mubr.f32.gmra.mrb[0].mxu0 %v1036
    %v1219 = vpop.f32.mrb[0].mxu0
    %v1220 = vadd.f32 %v1000, %v1219
    %v1221 = vpop.f32.mrb[0].mxu0
    %1222 = vmatprep.mubr.f32.mxu0 0.0
    %1223 = vmatmul.mubr.f32.gmra.mrb[0].mxu0 %v1039
    %v1224 = vpop.f32.mrb[0].mxu0
    %v1225 = vadd.f32 %v1000, %v1224
    %v1226 = vpop.f32.mrb[0].mxu0
    %1227 = vmatprep.mubr.f32.mxu0 0.0
    %1228 = vmatmul.mubr.f32.gmra.mrb[0].mxu0 %v1042
    %v1229 = vpop.f32.mrb[0].mxu0
    %v1230 = vadd.f32 %v1000, %v1229
    %v1231 = vpop.f32.mrb[0].mxu0
    %1232 = vmatprep.mubr.f32.mxu0 0.0
    %1233 = vmatmul.mubr.f32.gmra.mrb[0].mxu0 %v1045
    %v1234 = vpop.f32.mrb[0].mxu0
    %v1235 = vadd.f32 %v1000, %v1234
    %v1236 = vpop.f32.mrb[0].mxu0
    %1237 = vmatprep.mubr.f32.mxu0 0.0
    %1238 = vmatmul.mubr.f32.gmra.mrb[0].mxu0 %v1048
    %v1239 = vpop.f32.mrb[0].mxu0
    %v1240 = vadd.f32 %v1000, %v1239
    %v1241 = vpop.f32.mrb[0].mxu0
    %1242 = vmatprep.mubr.f32.mxu0 0.0
    %1243 = vmatmul.mubr.f32.gmra.mrb[0].mxu0 %v1051
    %v1244 = vpop.f32.mrb[0].mxu0
    %v1245 = vadd.f32 %v1000, %v1244
    %v1246 = vpop.f32.mrb[0].mxu0
    %1247 = vmatprep.mubr.f32.mxu0 0.0
    %1248 = vmatmul.mubr.f32.gmra.mrb[0].mxu0 %v1054
    %v1249 = vpop.f32.mrb[0].mxu0
    %v1250 = vadd.f32 %v1000, %v1249
    %v1251 = vpop.f32.mrb[0].mxu0
    %1252 = vmatprep.mubr.f32.mxu0 0.0
    %1253 = vmatmul.mubr.f32.gmra.mrb[0].mxu0 %v1057
    %v1254 = vpop.f32.mrb[0].mxu0
    %v1255 = vadd.f32 %v1000, %v1254
    %v1256 = vpop.f32.mrb[0].mxu0
    %1257 = vmatprep.mubr.f32.mxu0 0.0
    %1258 = vmatmul.mubr.f32.gmra.mrb[0].mxu0 %v1060
    %v1259 = vpop.f32.mrb[0].mxu0
    %v1260 = vadd.f32 %v1000, %v1259
    %v1261 = vpop.f32.mrb[0].mxu0
    %1262 = vmatprep.mubr.f32.mxu0 0.0
    %1263 = vmatmul.mubr.f32.gmra.mrb[0].mxu0 %v1063
    %v1264 = vpop.f32.mrb[0].mxu0
    %v1265 = vadd.f32 %v1000, %v1264
    %v1266 = vpop.f32.mrb[0].mxu0
    %1267 = vmatprep.mubr.f32.mxu0 0.0
    %1268 = vmatmul.mubr.f32.gmra.mrb[0].mxu0 %v1066
    %v1269 = vpop.f32.mrb[0].mxu0
    %v1270 = vadd.f32 %v1000, %v1269
    %v1271 = vpop.f32.mrb[0].mxu0
    %1272 = vmatprep.mubr.f32.mxu0 0.0
    %1273 = vmatmul.mubr.f32.gmra.mrb[0].mxu0 %v1069
    %v1274 = vpop.f32.mrb[0].mxu0
    %v1275 = vadd.f32 %v1000, %v1274
    %v1276 = vpop.f32.mrb[0].mxu0
    %1277 = vmatprep.mubr.f32.mxu0 0.0
    %1278 = vmatmul.mubr.f32.gmra.mrb[0].mxu0 %v1072
    %v1279 = vpop.f32.mrb[0].mxu0
    %v1280 = vadd.f32 %v1000, %v1279
    %v1281 = vpop.f32.mrb[0].mxu0
    %1282 = vmatprep.mubr.f32.mxu0 0.0
    %1283 = vmatmul.mubr.f32.gmra.mrb[0].mxu0 %v1075
    %v1284 = vpop.f32.mrb[0].mxu0
    %v1285 = vadd.f32 %v1000, %v1284
    %v1286 = vpop.f32.mrb[0].mxu0
    %1287 = vmatprep.mubr.f32.mxu0 0.0
    %1288 = vmatmul.mubr.f32.gmra.mrb[0].mxu0 %v1078
    %v1289 = vpop.f32.mrb[0].mxu0
    %v1290 = vadd.f32 %v1000, %v1289
    %v1291 = vpop.f32.mrb[0].mxu0
    %1292 = vmatprep.mubr.f32.mxu0 0.0
    %1293 = vmatmul.mubr.f32.gmra.mrb[0].mxu0 %v1081
    %v1294 = vpop.f32.mrb[0].mxu0
    %v1295 = vadd.f32 %v1000, %v1294
    %v1296 = vpop.f32.mrb[0].mxu0
    %1297 = vmatprep.mubr.f32.mxu0 0.0
    %1298 = vmatmul.mubr.f32.gmra.mrb[0].mxu0 %v1084
    %v1299 = vpop.f32.mrb[0].mxu0
    %v1300 = vadd.f32 %v1000, %v1299
    %v1301 = vpop.f32.mrb[0].mxu0
    %1302 = vmatprep.mubr.f32.mxu0 0.0
    %1303 = vmatmul.mubr.f32.gmra.mrb[0].mxu0 %v1087
    %v1304 = vpop.f32.mrb[0].mxu0
    %v1305 = vadd.f32 %v1000, %v1304
    %v1306 = vpop.f32.mrb[0].mxu0
    %1307 = vmatprep.mubr.f32.mxu0 0.0
    %1308 = vmatmul.mubr.f32.gmra.mrb[0].mxu0 %v1090
    %v1309 = vpop.f32.mrb[0].mxu0
    %v1310 = vadd.f32 %v1000, %v1309
    %v1311 = vpop.f32.mrb[0].mxu0
    %1312 = vmatprep.mubr.f32.mxu0 0.0
    %1313 = vmatmul.mubr.f32.gmra.mrb[0].mxu0 %v1093
    %v1314 = vpop.f32.mrb[0].mxu0
    %v1315 = vadd.f32 %v1000, %v1314
    %v1316 = vpop.f32.mrb[0].mxu0
    %1317 = vmatprep.mubr.f32.mxu0 0.0
    %1318 = vmatmul.mubr.f32.gmra.mrb[0].mxu0 %v1096
    %v1319 = vpop.f32.mrb[0].mxu0
    %v1320 = vadd.f32 %v1000, %v1319
    %v1321 = vpop.f32.mrb[0].mxu0
    %1322 = vdwg.mxu0
    %v1323 = vstv %s78
    %v1324 = vmul.f32 %v1165, %v1323
    %v1325 = vmul.f32 %v1170, %v1323
    %v1326 = vmul.f32 %v1175, %v1323
    %v1327 = vmul.f32 %v1180, %v1323
    %v1328 = vmul.f32 %v1185, %v1323
    %v1329 = vmul.f32 %v1190, %v1323
    %v1330 = vmul.f32 %v1195, %v1323
    %v1331 = vmul.f32 %v1200, %v1323
    %v1332 = vmul.f32 %v1205, %v1323
    %v1333 = vmul.f32 %v1210, %v1323
    %v1334 = vmul.f32 %v1215, %v1323
    %v1335 = vmul.f32 %v1220, %v1323
    %v1336 = vmul.f32 %v1225, %v1323
    %v1337 = vmul.f32 %v1230, %v1323
    %v1338 = vmul.f32 %v1235, %v1323
    %v1339 = vmul.f32 %v1240, %v1323
    %v1340 = vmul.f32 %v1245, %v1323
    %v1341 = vmul.f32 %v1250, %v1323
    %v1342 = vmul.f32 %v1255, %v1323
    %v1343 = vmul.f32 %v1260, %v1323
    %v1344 = vmul.f32 %v1265, %v1323
    %v1345 = vmul.f32 %v1270, %v1323
    %v1346 = vmul.f32 %v1275, %v1323
    %v1347 = vmul.f32 %v1280, %v1323
    %v1348 = vmul.f32 %v1285, %v1323
    %v1349 = vmul.f32 %v1290, %v1323
    %v1350 = vmul.f32 %v1295, %v1323
    %v1351 = vmul.f32 %v1300, %v1323
    %v1352 = vmul.f32 %v1305, %v1323
    %v1353 = vmul.f32 %v1310, %v1323
    %v1354 = vmul.f32 %v1315, %v1323
    %v1355 = vmul.f32 %v1320, %v1323
    %v1356 = vtanh.pop %v1324
    %v1357 = vtanh.pop %v1325
    %v1358 = vtanh.pop %v1326
    %v1359 = vtanh.pop %v1327
    %v1360 = vtanh.pop %v1328
    %v1361 = vtanh.pop %v1329
    %v1362 = vtanh.pop %v1330
    %v1363 = vtanh.pop %v1331
    %v1364 = vtanh.pop %v1332
    %v1365 = vtanh.pop %v1333
    %v1366 = vtanh.pop %v1334
    %v1367 = vtanh.pop %v1335
    %v1368 = vtanh.pop %v1336
    %v1369 = vtanh.pop %v1337
    %v1370 = vtanh.pop %v1338
    %v1371 = vtanh.pop %v1339
    %v1372 = vtanh.pop %v1340
    %v1373 = vtanh.pop %v1341
    %v1374 = vtanh.pop %v1342
    %v1375 = vtanh.pop %v1343
    %v1376 = vtanh.pop %v1344
    %v1377 = vtanh.pop %v1345
    %v1378 = vtanh.pop %v1346
    %v1379 = vtanh.pop %v1347
    %v1380 = vtanh.pop %v1348
    %v1381 = vtanh.pop %v1349
    %v1382 = vtanh.pop %v1350
    %v1383 = vtanh.pop %v1351
    %v1384 = vtanh.pop %v1352
    %v1385 = vtanh.pop %v1353
    %v1386 = vtanh.pop %v1354
    %v1387 = vtanh.pop %v1355
    %v1388 = vmul.f32 %v1165, %v1356
    %v1389 = vmul.f32 %v1170, %v1357
    %v1390 = vmul.f32 %v1175, %v1358
    %v1391 = vmul.f32 %v1180, %v1359
    %v1392 = vmul.f32 %v1185, %v1360
    %v1393 = vmul.f32 %v1190, %v1361
    %v1394 = vmul.f32 %v1195, %v1362
    %v1395 = vmul.f32 %v1200, %v1363
    %v1396 = vmul.f32 %v1205, %v1364
    %v1397 = vmul.f32 %v1210, %v1365
    %v1398 = vmul.f32 %v1215, %v1366
    %v1399 = vmul.f32 %v1220, %v1367
    %v1400 = vmul.f32 %v1225, %v1368
    %v1401 = vmul.f32 %v1230, %v1369
    %v1402 = vmul.f32 %v1235, %v1370
    %v1403 = vmul.f32 %v1240, %v1371
    %v1404 = vmul.f32 %v1245, %v1372
    %v1405 = vmul.f32 %v1250, %v1373
    %v1406 = vmul.f32 %v1255, %v1374
    %v1407 = vmul.f32 %v1260, %v1375
    %v1408 = vmul.f32 %v1265, %v1376
    %v1409 = vmul.f32 %v1270, %v1377
    %v1410 = vmul.f32 %v1275, %v1378
    %v1411 = vmul.f32 %v1280, %v1379
    %v1412 = vmul.f32 %v1285, %v1380
    %v1413 = vmul.f32 %v1290, %v1381
    %v1414 = vmul.f32 %v1295, %v1382
    %v1415 = vmul.f32 %v1300, %v1383
    %v1416 = vmul.f32 %v1305, %v1384
    %v1417 = vmul.f32 %v1310, %v1385
    %v1418 = vmul.f32 %v1315, %v1386
    %v1419 = vmul.f32 %v1320, %v1387
    %v1420 = vadd.f32 %v1388, %v1165
    %v1421 = vadd.f32 %v1389, %v1170
    %v1422 = vadd.f32 %v1390, %v1175
    %v1423 = vadd.f32 %v1391, %v1180
    %v1424 = vadd.f32 %v1392, %v1185
    %v1425 = vadd.f32 %v1393, %v1190
    %v1426 = vadd.f32 %v1394, %v1195
    %v1427 = vadd.f32 %v1395, %v1200
    %v1428 = vadd.f32 %v1396, %v1205
    %v1429 = vadd.f32 %v1397, %v1210
    %v1430 = vadd.f32 %v1398, %v1215
    %v1431 = vadd.f32 %v1399, %v1220
    %v1432 = vadd.f32 %v1400, %v1225
    %v1433 = vadd.f32 %v1401, %v1230
    %v1434 = vadd.f32 %v1402, %v1235
    %v1435 = vadd.f32 %v1403, %v1240
    %v1436 = vadd.f32 %v1404, %v1245
    %v1437 = vadd.f32 %v1405, %v1250
    %v1438 = vadd.f32 %v1406, %v1255
    %v1439 = vadd.f32 %v1407, %v1260
    %v1440 = vadd.f32 %v1408, %v1265
    %v1441 = vadd.f32 %v1409, %v1270
    %v1442 = vadd.f32 %v1410, %v1275
    %v1443 = vadd.f32 %v1411, %v1280
    %v1444 = vadd.f32 %v1412, %v1285
    %v1445 = vadd.f32 %v1413, %v1290
    %v1446 = vadd.f32 %v1414, %v1295
    %v1447 = vadd.f32 %v1415, %v1300
    %v1448 = vadd.f32 %v1416, %v1305
    %v1449 = vadd.f32 %v1417, %v1310
    %v1450 = vadd.f32 %v1418, %v1315
    %v1451 = vadd.f32 %v1419, %v1320
    %v1452 = vld [vmem:[%s9] sm:$0xff]
    %v1453 = vld [vmem:[%s9 + $0x8] sm:$0xff]
    %v1454 = vld [vmem:[%s9 + $0x10] sm:$0xff]
    %v1455 = vld [vmem:[%s9 + $0x18] sm:$0xff]
    %v1456 = vld [vmem:[%s9 + $0x20] sm:$0xff]
    %v1457 = vld [vmem:[%s9 + $0x28] sm:$0xff]
    %v1458 = vld [vmem:[%s9 + $0x30] sm:$0xff]
    %v1459 = vld [vmem:[%s9 + $0x38] sm:$0xff]
    %v1460 = vld [vmem:[%s10] sm:$0x1]
    %v1462 = vlaneseq
    %v1463 = vshrl.u32 %v1462, 7
    %v1464 = vsub.s32 0, %v1463
    %v1465 = vrot.slane %v1460, %v1464
    %v1468 = vsel %vm536, %v1420, 0
    %v1471 = vsel %vm536, %v1421, 0
    %v1474 = vsel %vm536, %v1422, 0
    %v1477 = vsel %vm536, %v1423, 0
    %v1480 = vsel %vm536, %v1424, 0
    %v1483 = vsel %vm536, %v1425, 0
    %v1486 = vsel %vm536, %v1426, 0
    %v1489 = vsel %vm536, %v1427, 0
    %v1492 = vsel %vm536, %v1428, 0
    %v1495 = vsel %vm536, %v1429, 0
    %v1498 = vsel %vm536, %v1430, 0
    %v1501 = vsel %vm536, %v1431, 0
    %v1504 = vsel %vm536, %v1432, 0
    %v1507 = vsel %vm536, %v1433, 0
    %v1510 = vsel %vm536, %v1434, 0
    %v1513 = vsel %vm536, %v1435, 0
    %v1516 = vsel %vm536, %v1436, 0
    %v1519 = vsel %vm536, %v1437, 0
    %v1522 = vsel %vm536, %v1438, 0
    %v1525 = vsel %vm536, %v1439, 0
    %v1528 = vsel %vm536, %v1440, 0
    %v1531 = vsel %vm536, %v1441, 0
    %v1534 = vsel %vm536, %v1442, 0
    %v1537 = vsel %vm536, %v1443, 0
    %v1540 = vsel %vm536, %v1444, 0
    %v1543 = vsel %vm536, %v1445, 0
    %v1546 = vsel %vm536, %v1446, 0
    %v1549 = vsel %vm536, %v1447, 0
    %v1552 = vsel %vm536, %v1448, 0
    %v1555 = vsel %vm536, %v1449, 0
    %v1558 = vsel %vm536, %v1450, 0
    %v1561 = vsel %vm536, %v1451, 0
    %1563 = vmatprep.subr.mxu0 0.0
    %1564 = vmatpush1.msra.mxu0 %v1452
    %1565 = vmatprep.subr.mxu0 0.0
    %1566 = vmatpush1.msra.mxu0 %v1453
    %1567 = vmatprep.subr.mxu0 0.0
    %1568 = vmatpush1.msra.mxu0 %v1454
    %1569 = vmatprep.subr.mxu0 0.0
    %1570 = vmatpush1.msra.mxu0 %v1455
    %1571 = vmatprep.subr.mxu0 0.0
    %1572 = vmatpush1.msra.mxu0 %v1456
    %1573 = vmatprep.subr.mxu0 0.0
    %1574 = vmatpush1.msra.mxu0 %v1457
    %1575 = vmatprep.subr.mxu0 0.0
    %1576 = vmatpush1.msra.mxu0 %v1458
    %1577 = vmatprep.subr.mxu0 0.0
    %1578 = vmatpush1.msra.mxu0 %v1459
    %1579 = vmatprep.subr.mxu0 0.0
    %1580 = vmatpush1.msra.mxu0 0.0
    %1581 = vmatprep.subr.mxu0 0.0
    %1582 = vmatpush1.msra.mxu0 0.0
    %1583 = vmatprep.subr.mxu0 0.0
    %1584 = vmatpush1.msra.mxu0 0.0
    %1585 = vmatprep.subr.mxu0 0.0
    %1586 = vmatpush1.msra.mxu0 0.0
    %1587 = vmatprep.subr.mxu0 0.0
    %1588 = vmatpush1.msra.mxu0 0.0
    %1589 = vmatprep.subr.mxu0 0.0
    %1590 = vmatpush1.msra.mxu0 0.0
    %1591 = vmatprep.subr.mxu0 0.0
    %1592 = vmatpush1.msra.mxu0 0.0
    %1593 = vmatprep.subr.mxu0 0.0
    %1594 = vmatpush1.msra.mxu0 0.0
    %1595 = vmatprep.subr.mxu0 0.0
    %1596 = vmatpush1.msra.mxu0 0.0
    %1597 = vmatprep.subr.mxu0 0.0
    %1598 = vmatpush1.msra.mxu0 0.0
    %1599 = vmatprep.subr.mxu0 0.0
    %1600 = vmatpush1.msra.mxu0 0.0
    %1601 = vmatprep.subr.mxu0 0.0
    %1602 = vmatpush1.msra.mxu0 0.0
    %1603 = vmatprep.subr.mxu0 0.0
    %1604 = vmatpush1.msra.mxu0 0.0
    %1605 = vmatprep.subr.mxu0 0.0
    %1606 = vmatpush1.msra.mxu0 0.0
    %1607 = vmatprep.subr.mxu0 0.0
    %1608 = vmatpush1.msra.mxu0 0.0
    %1609 = vmatprep.subr.mxu0 0.0
    %1610 = vmatpush1.msra.mxu0 0.0
    %1611 = vmatprep.subr.mxu0 0.0
    %1612 = vmatpush1.msra.mxu0 0.0
    %1613 = vmatprep.subr.mxu0 0.0
    %1614 = vmatpush1.msra.mxu0 0.0
    %1615 = vmatprep.subr.mxu0 0.0
    %1616 = vmatpush1.msra.mxu0 0.0
    %1617 = vmatprep.subr.mxu0 0.0
    %1618 = vmatpush1.msra.mxu0 0.0
    %1619 = vmatprep.subr.mxu0 0.0
    %1620 = vmatpush1.msra.mxu0 0.0
    %1621 = vmatprep.subr.mxu0 0.0
    %1622 = vmatpush1.msra.mxu0 0.0
    %1623 = vmatprep.subr.mxu0 0.0
    %1624 = vmatpush1.msra.mxu0 0.0
    %1625 = vmatprep.subr.mxu0 0.0
    %1626 = vmatpush1.msra.mxu0 0.0
    %1627 = vmatprep.mubr.f32.mxu0 0.0
    %1628 = vmatmul.mubr.f32.gmra.mrb[0].mxu0 %v1468
    %v1629 = vpop.f32.mrb[0].mxu0
    %v1630 = vadd.f32 %v1465, %v1629
    %v1631 = vpop.f32.mrb[0].mxu0
    %1632 = vmatprep.mubr.f32.mxu0 0.0
    %1633 = vmatmul.mubr.f32.gmra.mrb[0].mxu0 %v1471
    %v1634 = vpop.f32.mrb[0].mxu0
    %v1635 = vadd.f32 %v1465, %v1634
    %v1636 = vpop.f32.mrb[0].mxu0
    %1637 = vmatprep.mubr.f32.mxu0 0.0
    %1638 = vmatmul.mubr.f32.gmra.mrb[0].mxu0 %v1474
    %v1639 = vpop.f32.mrb[0].mxu0
    %v1640 = vadd.f32 %v1465, %v1639
    %v1641 = vpop.f32.mrb[0].mxu0
    %1642 = vmatprep.mubr.f32.mxu0 0.0
    %1643 = vmatmul.mubr.f32.gmra.mrb[0].mxu0 %v1477
    %v1644 = vpop.f32.mrb[0].mxu0
    %v1645 = vadd.f32 %v1465, %v1644
    %v1646 = vpop.f32.mrb[0].mxu0
    %1647 = vmatprep.mubr.f32.mxu0 0.0
    %1648 = vmatmul.mubr.f32.gmra.mrb[0].mxu0 %v1480
    %v1649 = vpop.f32.mrb[0].mxu0
    %v1650 = vadd.f32 %v1465, %v1649
    %v1651 = vpop.f32.mrb[0].mxu0
    %1652 = vmatprep.mubr.f32.mxu0 0.0
    %1653 = vmatmul.mubr.f32.gmra.mrb[0].mxu0 %v1483
    %v1654 = vpop.f32.mrb[0].mxu0
    %v1655 = vadd.f32 %v1465, %v1654
    %v1656 = vpop.f32.mrb[0].mxu0
    %1657 = vmatprep.mubr.f32.mxu0 0.0
    %1658 = vmatmul.mubr.f32.gmra.mrb[0].mxu0 %v1486
    %v1659 = vpop.f32.mrb[0].mxu0
    %v1660 = vadd.f32 %v1465, %v1659
    %v1661 = vpop.f32.mrb[0].mxu0
    %1662 = vmatprep.mubr.f32.mxu0 0.0
    %1663 = vmatmul.mubr.f32.gmra.mrb[0].mxu0 %v1489
    %v1664 = vpop.f32.mrb[0].mxu0
    %v1665 = vadd.f32 %v1465, %v1664
    %v1666 = vpop.f32.mrb[0].mxu0
    %1667 = vmatprep.mubr.f32.mxu0 0.0
    %1668 = vmatmul.mubr.f32.gmra.mrb[0].mxu0 %v1492
    %v1669 = vpop.f32.mrb[0].mxu0
    %v1670 = vadd.f32 %v1465, %v1669
    %v1671 = vpop.f32.mrb[0].mxu0
    %1672 = vmatprep.mubr.f32.mxu0 0.0
    %1673 = vmatmul.mubr.f32.gmra.mrb[0].mxu0 %v1495
    %v1674 = vpop.f32.mrb[0].mxu0
    %v1675 = vadd.f32 %v1465, %v1674
    %v1676 = vpop.f32.mrb[0].mxu0
    %1677 = vmatprep.mubr.f32.mxu0 0.0
    %1678 = vmatmul.mubr.f32.gmra.mrb[0].mxu0 %v1498
    %v1679 = vpop.f32.mrb[0].mxu0
    %v1680 = vadd.f32 %v1465, %v1679
    %v1681 = vpop.f32.mrb[0].mxu0
    %1682 = vmatprep.mubr.f32.mxu0 0.0
    %1683 = vmatmul.mubr.f32.gmra.mrb[0].mxu0 %v1501
    %v1684 = vpop.f32.mrb[0].mxu0
    %v1685 = vadd.f32 %v1465, %v1684
    %v1686 = vpop.f32.mrb[0].mxu0
    %1687 = vmatprep.mubr.f32.mxu0 0.0
    %1688 = vmatmul.mubr.f32.gmra.mrb[0].mxu0 %v1504
    %v1689 = vpop.f32.mrb[0].mxu0
    %v1690 = vadd.f32 %v1465, %v1689
    %v1691 = vpop.f32.mrb[0].mxu0
    %1692 = vmatprep.mubr.f32.mxu0 0.0
    %1693 = vmatmul.mubr.f32.gmra.mrb[0].mxu0 %v1507
    %v1694 = vpop.f32.mrb[0].mxu0
    %v1695 = vadd.f32 %v1465, %v1694
    %v1696 = vpop.f32.mrb[0].mxu0
    %1697 = vmatprep.mubr.f32.mxu0 0.0
    %1698 = vmatmul.mubr.f32.gmra.mrb[0].mxu0 %v1510
    %v1699 = vpop.f32.mrb[0].mxu0
    %v1700 = vadd.f32 %v1465, %v1699
    %v1701 = vpop.f32.mrb[0].mxu0
    %1702 = vmatprep.mubr.f32.mxu0 0.0
    %1703 = vmatmul.mubr.f32.gmra.mrb[0].mxu0 %v1513
    %v1704 = vpop.f32.mrb[0].mxu0
    %v1705 = vadd.f32 %v1465, %v1704
    %v1706 = vpop.f32.mrb[0].mxu0
    %1707 = vmatprep.mubr.f32.mxu0 0.0
    %1708 = vmatmul.mubr.f32.gmra.mrb[0].mxu0 %v1516
    %v1709 = vpop.f32.mrb[0].mxu0
    %v1710 = vadd.f32 %v1465, %v1709
    %v1711 = vpop.f32.mrb[0].mxu0
    %1712 = vmatprep.mubr.f32.mxu0 0.0
    %1713 = vmatmul.mubr.f32.gmra.mrb[0].mxu0 %v1519
    %v1714 = vpop.f32.mrb[0].mxu0
    %v1715 = vadd.f32 %v1465, %v1714
    %v1716 = vpop.f32.mrb[0].mxu0
    %1717 = vmatprep.mubr.f32.mxu0 0.0
    %1718 = vmatmul.mubr.f32.gmra.mrb[0].mxu0 %v1522
    %v1719 = vpop.f32.mrb[0].mxu0
    %v1720 = vadd.f32 %v1465, %v1719
    %v1721 = vpop.f32.mrb[0].mxu0
    %1722 = vmatprep.mubr.f32.mxu0 0.0
    %1723 = vmatmul.mubr.f32.gmra.mrb[0].mxu0 %v1525
    %v1724 = vpop.f32.mrb[0].mxu0
    %v1725 = vadd.f32 %v1465, %v1724
    %v1726 = vpop.f32.mrb[0].mxu0
    %1727 = vmatprep.mubr.f32.mxu0 0.0
    %1728 = vmatmul.mubr.f32.gmra.mrb[0].mxu0 %v1528
    %v1729 = vpop.f32.mrb[0].mxu0
    %v1730 = vadd.f32 %v1465, %v1729
    %v1731 = vpop.f32.mrb[0].mxu0
    %1732 = vmatprep.mubr.f32.mxu0 0.0
    %1733 = vmatmul.mubr.f32.gmra.mrb[0].mxu0 %v1531
    %v1734 = vpop.f32.mrb[0].mxu0
    %v1735 = vadd.f32 %v1465, %v1734
    %v1736 = vpop.f32.mrb[0].mxu0
    %1737 = vmatprep.mubr.f32.mxu0 0.0
    %1738 = vmatmul.mubr.f32.gmra.mrb[0].mxu0 %v1534
    %v1739 = vpop.f32.mrb[0].mxu0
    %v1740 = vadd.f32 %v1465, %v1739
    %v1741 = vpop.f32.mrb[0].mxu0
    %1742 = vmatprep.mubr.f32.mxu0 0.0
    %1743 = vmatmul.mubr.f32.gmra.mrb[0].mxu0 %v1537
    %v1744 = vpop.f32.mrb[0].mxu0
    %v1745 = vadd.f32 %v1465, %v1744
    %v1746 = vpop.f32.mrb[0].mxu0
    %1747 = vmatprep.mubr.f32.mxu0 0.0
    %1748 = vmatmul.mubr.f32.gmra.mrb[0].mxu0 %v1540
    %v1749 = vpop.f32.mrb[0].mxu0
    %v1750 = vadd.f32 %v1465, %v1749
    %v1751 = vpop.f32.mrb[0].mxu0
    %1752 = vmatprep.mubr.f32.mxu0 0.0
    %1753 = vmatmul.mubr.f32.gmra.mrb[0].mxu0 %v1543
    %v1754 = vpop.f32.mrb[0].mxu0
    %v1755 = vadd.f32 %v1465, %v1754
    %v1756 = vpop.f32.mrb[0].mxu0
    %1757 = vmatprep.mubr.f32.mxu0 0.0
    %1758 = vmatmul.mubr.f32.gmra.mrb[0].mxu0 %v1546
    %v1759 = vpop.f32.mrb[0].mxu0
    %v1760 = vadd.f32 %v1465, %v1759
    %v1761 = vpop.f32.mrb[0].mxu0
    %1762 = vmatprep.mubr.f32.mxu0 0.0
    %1763 = vmatmul.mubr.f32.gmra.mrb[0].mxu0 %v1549
    %v1764 = vpop.f32.mrb[0].mxu0
    %v1765 = vadd.f32 %v1465, %v1764
    %v1766 = vpop.f32.mrb[0].mxu0
    %1767 = vmatprep.mubr.f32.mxu0 0.0
    %1768 = vmatmul.mubr.f32.gmra.mrb[0].mxu0 %v1552
    %v1769 = vpop.f32.mrb[0].mxu0
    %v1770 = vadd.f32 %v1465, %v1769
    %v1771 = vpop.f32.mrb[0].mxu0
    %1772 = vmatprep.mubr.f32.mxu0 0.0
    %1773 = vmatmul.mubr.f32.gmra.mrb[0].mxu0 %v1555
    %v1774 = vpop.f32.mrb[0].mxu0
    %v1775 = vadd.f32 %v1465, %v1774
    %v1776 = vpop.f32.mrb[0].mxu0
    %1777 = vmatprep.mubr.f32.mxu0 0.0
    %1778 = vmatmul.mubr.f32.gmra.mrb[0].mxu0 %v1558
    %v1779 = vpop.f32.mrb[0].mxu0
    %v1780 = vadd.f32 %v1465, %v1779
    %v1781 = vpop.f32.mrb[0].mxu0
    %1782 = vmatprep.mubr.f32.mxu0 0.0
    %1783 = vmatmul.mubr.f32.gmra.mrb[0].mxu0 %v1561
    %v1784 = vpop.f32.mrb[0].mxu0
    %v1785 = vadd.f32 %v1465, %v1784
    %v1786 = vpop.f32.mrb[0].mxu0
    %1787 = vdwg.mxu0
    %v1788 = vstv %s143
    %v1789 = vmul.f32 %v1788, %v1630
    %v1790 = vmul.f32 %v1788, %v1635
    %v1791 = vmul.f32 %v1788, %v1640
    %v1792 = vmul.f32 %v1788, %v1645
    %v1793 = vmul.f32 %v1788, %v1650
    %v1794 = vmul.f32 %v1788, %v1655
    %v1795 = vmul.f32 %v1788, %v1660
    %v1796 = vmul.f32 %v1788, %v1665
    %v1797 = vmul.f32 %v1788, %v1670
    %v1798 = vmul.f32 %v1788, %v1675
    %v1799 = vmul.f32 %v1788, %v1680
    %v1800 = vmul.f32 %v1788, %v1685
    %v1801 = vmul.f32 %v1788, %v1690
    %v1802 = vmul.f32 %v1788, %v1695
    %v1803 = vmul.f32 %v1788, %v1700
    %v1804 = vmul.f32 %v1788, %v1705
    %v1805 = vmul.f32 %v1788, %v1710
    %v1806 = vmul.f32 %v1788, %v1715
    %v1807 = vmul.f32 %v1788, %v1720
    %v1808 = vmul.f32 %v1788, %v1725
    %v1809 = vmul.f32 %v1788, %v1730
    %v1810 = vmul.f32 %v1788, %v1735
    %v1811 = vmul.f32 %v1788, %v1740
    %v1812 = vmul.f32 %v1788, %v1745
    %v1813 = vmul.f32 %v1788, %v1750
    %v1814 = vmul.f32 %v1788, %v1755
    %v1815 = vmul.f32 %v1788, %v1760
    %v1816 = vmul.f32 %v1788, %v1765
    %v1817 = vmul.f32 %v1788, %v1770
    %v1818 = vmul.f32 %v1788, %v1775
    %v1819 = vmul.f32 %v1788, %v1780
    %v1820 = vmul.f32 %v1788, %v1785
    %v1821 = vadd.f32 %v79, %v1789
    %v1822 = vadd.f32 %v80, %v1790
    %v1823 = vadd.f32 %v81, %v1791
    %v1824 = vadd.f32 %v82, %v1792
    %v1825 = vadd.f32 %v83, %v1793
    %v1826 = vadd.f32 %v84, %v1794
    %v1827 = vadd.f32 %v85, %v1795
    %v1828 = vadd.f32 %v86, %v1796
    %v1829 = vadd.f32 %v87, %v1797
    %v1830 = vadd.f32 %v88, %v1798
    %v1831 = vadd.f32 %v89, %v1799
    %v1832 = vadd.f32 %v90, %v1800
    %v1833 = vadd.f32 %v91, %v1801
    %v1834 = vadd.f32 %v92, %v1802
    %v1835 = vadd.f32 %v93, %v1803
    %v1836 = vadd.f32 %v94, %v1804
    %v1837 = vadd.f32 %v95, %v1805
    %v1838 = vadd.f32 %v96, %v1806
    %v1839 = vadd.f32 %v97, %v1807
    %v1840 = vadd.f32 %v98, %v1808
    %v1841 = vadd.f32 %v99, %v1809
    %v1842 = vadd.f32 %v100, %v1810
    %v1843 = vadd.f32 %v101, %v1811
    %v1844 = vadd.f32 %v102, %v1812
    %v1845 = vadd.f32 %v103, %v1813
    %v1846 = vadd.f32 %v104, %v1814
    %v1847 = vadd.f32 %v105, %v1815
    %v1848 = vadd.f32 %v106, %v1816
    %v1849 = vadd.f32 %v107, %v1817
    %v1850 = vadd.f32 %v108, %v1818
    %v1851 = vadd.f32 %v109, %v1819
    %v1852 = vadd.f32 %v110, %v1820
    %s1853 = scalar_lea.vmem [#allocation9], 256
    %1854 = vst [vmem:[%s1853] sm:$0xff] %v1821
    %1855 = vst [vmem:[%s1853 + $0x8] sm:$0xff] %v1822
    %1856 = vst [vmem:[%s1853 + $0x10] sm:$0xff] %v1823
    %1857 = vst [vmem:[%s1853 + $0x18] sm:$0xff] %v1824
    %1858 = vst [vmem:[%s1853 + $0x20] sm:$0xff] %v1825
    %1859 = vst [vmem:[%s1853 + $0x28] sm:$0xff] %v1826
    %1860 = vst [vmem:[%s1853 + $0x30] sm:$0xff] %v1827
    %1861 = vst [vmem:[%s1853 + $0x38] sm:$0xff] %v1828
    %1862 = vst [vmem:[%s1853 + $0x40] sm:$0xff] %v1829
    %1863 = vst [vmem:[%s1853 + $0x48] sm:$0xff] %v1830
    %1864 = vst [vmem:[%s1853 + $0x50] sm:$0xff] %v1831
    %1865 = vst [vmem:[%s1853 + $0x58] sm:$0xff] %v1832
    %1866 = vst [vmem:[%s1853 + $0x60] sm:$0xff] %v1833
    %1867 = vst [vmem:[%s1853 + $0x68] sm:$0xff] %v1834
    %1868 = vst [vmem:[%s1853 + $0x70] sm:$0xff] %v1835
    %1869 = vst [vmem:[%s1853 + $0x78] sm:$0xff] %v1836
    %1870 = vst [vmem:[%s1853 + $0x80] sm:$0xff] %v1837
    %1871 = vst [vmem:[%s1853 + $0x88] sm:$0xff] %v1838
    %1872 = vst [vmem:[%s1853 + $0x90] sm:$0xff] %v1839
    %1873 = vst [vmem:[%s1853 + $0x98] sm:$0xff] %v1840
    %1874 = vst [vmem:[%s1853 + $0xa0] sm:$0xff] %v1841
    %1875 = vst [vmem:[%s1853 + $0xa8] sm:$0xff] %v1842
    %1876 = vst [vmem:[%s1853 + $0xb0] sm:$0xff] %v1843
    %1877 = vst [vmem:[%s1853 + $0xb8] sm:$0xff] %v1844
    %1878 = vst [vmem:[%s1853 + $0xc0] sm:$0xff] %v1845
    %1879 = vst [vmem:[%s1853 + $0xc8] sm:$0xff] %v1846
    %1880 = vst [vmem:[%s1853 + $0xd0] sm:$0xff] %v1847
    %1881 = vst [vmem:[%s1853 + $0xd8] sm:$0xff] %v1848
    %1882 = vst [vmem:[%s1853 + $0xe0] sm:$0xff] %v1849
    %1883 = vst [vmem:[%s1853 + $0xe8] sm:$0xff] %v1850
    %1884 = vst [vmem:[%s1853 + $0xf0] sm:$0xff] %v1851
    %1885 = vst [vmem:[%s1853 + $0xf8] sm:$0xff] %v1852
    %s1886 = sld [smem:[#allocation2 + $0x1]]
    %v1887 = vld [vmem:[%s3] sm:$0xff]
    %v1888 = vld [vmem:[%s3 + $0x8] sm:$0xff]
    %v1889 = vld [vmem:[%s3 + $0x10] sm:$0xff]
    %v1890 = vld [vmem:[%s3 + $0x18] sm:$0xff]
    %v1891 = vld [vmem:[%s3 + $0x20] sm:$0xff]
    %v1892 = vld [vmem:[%s3 + $0x28] sm:$0xff]
    %v1893 = vld [vmem:[%s3 + $0x30] sm:$0xff]
    %v1894 = vld [vmem:[%s3 + $0x38] sm:$0xff]
    %v1895 = vld [vmem:[%s3 + $0x40] sm:$0xff]
    %v1896 = vld [vmem:[%s3 + $0x48] sm:$0xff]
    %v1897 = vld [vmem:[%s3 + $0x50] sm:$0xff]
    %v1898 = vld [vmem:[%s3 + $0x58] sm:$0xff]
    %v1899 = vld [vmem:[%s3 + $0x60] sm:$0xff]
    %v1900 = vld [vmem:[%s3 + $0x68] sm:$0xff]
    %v1901 = vld [vmem:[%s3 + $0x70] sm:$0xff]
    %v1902 = vld [vmem:[%s3 + $0x78] sm:$0xff]
    %v1903 = vld [vmem:[%s4] sm:$0x1]
    %v1905 = vlaneseq
    %v1906 = vshrl.u32 %v1905, 7
    %v1907 = vsub.s32 0, %v1906
    %v1908 = vrot.slane %v1903, %v1907
    %1910 = vmatprep.subr.mxu0 0.0
    %1911 = vmatpush1.msra.mxu0 %v1887
    %1912 = vmatprep.subr.mxu0 0.0
    %1913 = vmatpush1.msra.mxu0 %v1888
    %1914 = vmatprep.subr.mxu0 0.0
    %1915 = vmatpush1.msra.mxu0 %v1889
    %1916 = vmatprep.subr.mxu0 0.0
    %1917 = vmatpush1.msra.mxu0 %v1890
    %1918 = vmatprep.subr.mxu0 0.0
    %1919 = vmatpush1.msra.mxu0 %v1891
    %1920 = vmatprep.subr.mxu0 0.0
    %1921 = vmatpush1.msra.mxu0 %v1892
    %1922 = vmatprep.subr.mxu0 0.0
    %1923 = vmatpush1.msra.mxu0 %v1893
    %1924 = vmatprep.subr.mxu0 0.0
    %1925 = vmatpush1.msra.mxu0 %v1894
    %1926 = vmatprep.subr.mxu0 0.0
    %1927 = vmatpush1.msra.mxu0 %v1895
    %1928 = vmatprep.subr.mxu0 0.0
    %1929 = vmatpush1.msra.mxu0 %v1896
    %1930 = vmatprep.subr.mxu0 0.0
    %1931 = vmatpush1.msra.mxu0 %v1897
    %1932 = vmatprep.subr.mxu0 0.0
    %1933 = vmatpush1.msra.mxu0 %v1898
    %1934 = vmatprep.subr.mxu0 0.0
    %1935 = vmatpush1.msra.mxu0 %v1899
    %1936 = vmatprep.subr.mxu0 0.0
    %1937 = vmatpush1.msra.mxu0 %v1900
    %1938 = vmatprep.subr.mxu0 0.0
    %1939 = vmatpush1.msra.mxu0 %v1901
    %1940 = vmatprep.subr.mxu0 0.0
    %1941 = vmatpush1.msra.mxu0 %v1902
    %1942 = vmatprep.subr.mxu0 0.0
    %1943 = vmatpush1.msra.mxu0 0.0
    %1944 = vmatprep.subr.mxu0 0.0
    %1945 = vmatpush1.msra.mxu0 0.0
    %1946 = vmatprep.subr.mxu0 0.0
    %1947 = vmatpush1.msra.mxu0 0.0
    %1948 = vmatprep.subr.mxu0 0.0
    %1949 = vmatpush1.msra.mxu0 0.0
    %1950 = vmatprep.subr.mxu0 0.0
    %1951 = vmatpush1.msra.mxu0 0.0
    %1952 = vmatprep.subr.mxu0 0.0
    %1953 = vmatpush1.msra.mxu0 0.0
    %1954 = vmatprep.subr.mxu0 0.0
    %1955 = vmatpush1.msra.mxu0 0.0
    %1956 = vmatprep.subr.mxu0 0.0
    %1957 = vmatpush1.msra.mxu0 0.0
    %1958 = vmatprep.subr.mxu0 0.0
    %1959 = vmatpush1.msra.mxu0 0.0
    %1960 = vmatprep.subr.mxu0 0.0
    %1961 = vmatpush1.msra.mxu0 0.0
    %1962 = vmatprep.subr.mxu0 0.0
    %1963 = vmatpush1.msra.mxu0 0.0
    %1964 = vmatprep.subr.mxu0 0.0
    %1965 = vmatpush1.msra.mxu0 0.0
    %1966 = vmatprep.subr.mxu0 0.0
    %1967 = vmatpush1.msra.mxu0 0.0
    %1968 = vmatprep.subr.mxu0 0.0
    %1969 = vmatpush1.msra.mxu0 0.0
    %1970 = vmatprep.subr.mxu0 0.0
    %1971 = vmatpush1.msra.mxu0 0.0
    %1972 = vmatprep.subr.mxu0 0.0
    %1973 = vmatpush1.msra.mxu0 0.0
    %1974 = vmatprep.mubr.f32.mxu0 0.0
    %1975 = vmatmul.mubr.f32.gmra.mrb[0].mxu0 %v1821
    %v1976 = vpop.f32.mrb[0].mxu0
    %v1977 = vadd.f32 %v1908, %v1976
    %v1978 = vpop.f32.mrb[0].mxu0
    %1979 = vmatprep.mubr.f32.mxu0 0.0
    %1980 = vmatmul.mubr.f32.gmra.mrb[0].mxu0 %v1822
    %v1981 = vpop.f32.mrb[0].mxu0
    %v1982 = vadd.f32 %v1908, %v1981
    %v1983 = vpop.f32.mrb[0].mxu0
    %1984 = vmatprep.mubr.f32.mxu0 0.0
    %1985 = vmatmul.mubr.f32.gmra.mrb[0].mxu0 %v1823
    %v1986 = vpop.f32.mrb[0].mxu0
    %v1987 = vadd.f32 %v1908, %v1986
    %v1988 = vpop.f32.mrb[0].mxu0
    %1989 = vmatprep.mubr.f32.mxu0 0.0
    %1990 = vmatmul.mubr.f32.gmra.mrb[0].mxu0 %v1824
    %v1991 = vpop.f32.mrb[0].mxu0
    %v1992 = vadd.f32 %v1908, %v1991
    %v1993 = vpop.f32.mrb[0].mxu0
    %1994 = vmatprep.mubr.f32.mxu0 0.0
    %1995 = vmatmul.mubr.f32.gmra.mrb[0].mxu0 %v1825
    %v1996 = vpop.f32.mrb[0].mxu0
    %v1997 = vadd.f32 %v1908, %v1996
    %v1998 = vpop.f32.mrb[0].mxu0
    %1999 = vmatprep.mubr.f32.mxu0 0.0
    %2000 = vmatmul.mubr.f32.gmra.mrb[0].mxu0 %v1826
    %v2001 = vpop.f32.mrb[0].mxu0
    %v2002 = vadd.f32 %v1908, %v2001
    %v2003 = vpop.f32.mrb[0].mxu0
    %2004 = vmatprep.mubr.f32.mxu0 0.0
    %2005 = vmatmul.mubr.f32.gmra.mrb[0].mxu0 %v1827
    %v2006 = vpop.f32.mrb[0].mxu0
    %v2007 = vadd.f32 %v1908, %v2006
    %v2008 = vpop.f32.mrb[0].mxu0
    %2009 = vmatprep.mubr.f32.mxu0 0.0
    %2010 = vmatmul.mubr.f32.gmra.mrb[0].mxu0 %v1828
    %v2011 = vpop.f32.mrb[0].mxu0
    %v2012 = vadd.f32 %v1908, %v2011
    %v2013 = vpop.f32.mrb[0].mxu0
    %2014 = vmatprep.mubr.f32.mxu0 0.0
    %2015 = vmatmul.mubr.f32.gmra.mrb[0].mxu0 %v1829
    %v2016 = vpop.f32.mrb[0].mxu0
    %v2017 = vadd.f32 %v1908, %v2016
    %v2018 = vpop.f32.mrb[0].mxu0
    %2019 = vmatprep.mubr.f32.mxu0 0.0
    %2020 = vmatmul.mubr.f32.gmra.mrb[0].mxu0 %v1830
    %v2021 = vpop.f32.mrb[0].mxu0
    %v2022 = vadd.f32 %v1908, %v2021
    %v2023 = vpop.f32.mrb[0].mxu0
    %2024 = vmatprep.mubr.f32.mxu0 0.0
    %2025 = vmatmul.mubr.f32.gmra.mrb[0].mxu0 %v1831
    %v2026 = vpop.f32.mrb[0].mxu0
    %v2027 = vadd.f32 %v1908, %v2026
    %v2028 = vpop.f32.mrb[0].mxu0
    %2029 = vmatprep.mubr.f32.mxu0 0.0
    %2030 = vmatmul.mubr.f32.gmra.mrb[0].mxu0 %v1832
    %v2031 = vpop.f32.mrb[0].mxu0
    %v2032 = vadd.f32 %v1908, %v2031
    %v2033 = vpop.f32.mrb[0].mxu0
    %2034 = vmatprep.mubr.f32.mxu0 0.0
    %2035 = vmatmul.mubr.f32.gmra.mrb[0].mxu0 %v1833
    %v2036 = vpop.f32.mrb[0].mxu0
    %v2037 = vadd.f32 %v1908, %v2036
    %v2038 = vpop.f32.mrb[0].mxu0
    %2039 = vmatprep.mubr.f32.mxu0 0.0
    %2040 = vmatmul.mubr.f32.gmra.mrb[0].mxu0 %v1834
    %v2041 = vpop.f32.mrb[0].mxu0
    %v2042 = vadd.f32 %v1908, %v2041
    %v2043 = vpop.f32.mrb[0].mxu0
    %2044 = vmatprep.mubr.f32.mxu0 0.0
    %2045 = vmatmul.mubr.f32.gmra.mrb[0].mxu0 %v1835
    %v2046 = vpop.f32.mrb[0].mxu0
    %v2047 = vadd.f32 %v1908, %v2046
    %v2048 = vpop.f32.mrb[0].mxu0
    %2049 = vmatprep.mubr.f32.mxu0 0.0
    %2050 = vmatmul.mubr.f32.gmra.mrb[0].mxu0 %v1836
    %v2051 = vpop.f32.mrb[0].mxu0
    %v2052 = vadd.f32 %v1908, %v2051
    %v2053 = vpop.f32.mrb[0].mxu0
    %2054 = vmatprep.mubr.f32.mxu0 0.0
    %2055 = vmatmul.mubr.f32.gmra.mrb[0].mxu0 %v1837
    %v2056 = vpop.f32.mrb[0].mxu0
    %v2057 = vadd.f32 %v1908, %v2056
    %v2058 = vpop.f32.mrb[0].mxu0
    %2059 = vmatprep.mubr.f32.mxu0 0.0
    %2060 = vmatmul.mubr.f32.gmra.mrb[0].mxu0 %v1838
    %v2061 = vpop.f32.mrb[0].mxu0
    %v2062 = vadd.f32 %v1908, %v2061
    %v2063 = vpop.f32.mrb[0].mxu0
    %2064 = vmatprep.mubr.f32.mxu0 0.0
    %2065 = vmatmul.mubr.f32.gmra.mrb[0].mxu0 %v1839
    %v2066 = vpop.f32.mrb[0].mxu0
    %v2067 = vadd.f32 %v1908, %v2066
    %v2068 = vpop.f32.mrb[0].mxu0
    %2069 = vmatprep.mubr.f32.mxu0 0.0
    %2070 = vmatmul.mubr.f32.gmra.mrb[0].mxu0 %v1840
    %v2071 = vpop.f32.mrb[0].mxu0
    %v2072 = vadd.f32 %v1908, %v2071
    %v2073 = vpop.f32.mrb[0].mxu0
    %2074 = vmatprep.mubr.f32.mxu0 0.0
    %2075 = vmatmul.mubr.f32.gmra.mrb[0].mxu0 %v1841
    %v2076 = vpop.f32.mrb[0].mxu0
    %v2077 = vadd.f32 %v1908, %v2076
    %v2078 = vpop.f32.mrb[0].mxu0
    %2079 = vmatprep.mubr.f32.mxu0 0.0
    %2080 = vmatmul.mubr.f32.gmra.mrb[0].mxu0 %v1842
    %v2081 = vpop.f32.mrb[0].mxu0
    %v2082 = vadd.f32 %v1908, %v2081
    %v2083 = vpop.f32.mrb[0].mxu0
    %2084 = vmatprep.mubr.f32.mxu0 0.0
    %2085 = vmatmul.mubr.f32.gmra.mrb[0].mxu0 %v1843
    %v2086 = vpop.f32.mrb[0].mxu0
    %v2087 = vadd.f32 %v1908, %v2086
    %v2088 = vpop.f32.mrb[0].mxu0
    %2089 = vmatprep.mubr.f32.mxu0 0.0
    %2090 = vmatmul.mubr.f32.gmra.mrb[0].mxu0 %v1844
    %v2091 = vpop.f32.mrb[0].mxu0
    %v2092 = vadd.f32 %v1908, %v2091
    %v2093 = vpop.f32.mrb[0].mxu0
    %2094 = vmatprep.mubr.f32.mxu0 0.0
    %2095 = vmatmul.mubr.f32.gmra.mrb[0].mxu0 %v1845
    %v2096 = vpop.f32.mrb[0].mxu0
    %v2097 = vadd.f32 %v1908, %v2096
    %v2098 = vpop.f32.mrb[0].mxu0
    %2099 = vmatprep.mubr.f32.mxu0 0.0
    %2100 = vmatmul.mubr.f32.gmra.mrb[0].mxu0 %v1846
    %v2101 = vpop.f32.mrb[0].mxu0
    %v2102 = vadd.f32 %v1908, %v2101
    %v2103 = vpop.f32.mrb[0].mxu0
    %2104 = vmatprep.mubr.f32.mxu0 0.0
    %2105 = vmatmul.mubr.f32.gmra.mrb[0].mxu0 %v1847
    %v2106 = vpop.f32.mrb[0].mxu0
    %v2107 = vadd.f32 %v1908, %v2106
    %v2108 = vpop.f32.mrb[0].mxu0
    %2109 = vmatprep.mubr.f32.mxu0 0.0
    %2110 = vmatmul.mubr.f32.gmra.mrb[0].mxu0 %v1848
    %v2111 = vpop.f32.mrb[0].mxu0
    %v2112 = vadd.f32 %v1908, %v2111
    %v2113 = vpop.f32.mrb[0].mxu0
    %2114 = vmatprep.mubr.f32.mxu0 0.0
    %2115 = vmatmul.mubr.f32.gmra.mrb[0].mxu0 %v1849
    %v2116 = vpop.f32.mrb[0].mxu0
    %v2117 = vadd.f32 %v1908, %v2116
    %v2118 = vpop.f32.mrb[0].mxu0
    %2119 = vmatprep.mubr.f32.mxu0 0.0
    %2120 = vmatmul.mubr.f32.gmra.mrb[0].mxu0 %v1850
    %v2121 = vpop.f32.mrb[0].mxu0
    %v2122 = vadd.f32 %v1908, %v2121
    %v2123 = vpop.f32.mrb[0].mxu0
    %2124 = vmatprep.mubr.f32.mxu0 0.0
    %2125 = vmatmul.mubr.f32.gmra.mrb[0].mxu0 %v1851
    %v2126 = vpop.f32.mrb[0].mxu0
    %v2127 = vadd.f32 %v1908, %v2126
    %v2128 = vpop.f32.mrb[0].mxu0
    %2129 = vmatprep.mubr.f32.mxu0 0.0
    %2130 = vmatmul.mubr.f32.gmra.mrb[0].mxu0 %v1852
    %v2131 = vpop.f32.mrb[0].mxu0
    %v2132 = vadd.f32 %v1908, %v2131
    %v2133 = vpop.f32.mrb[0].mxu0
    %2134 = vdwg.mxu0
    %v2135 = vmul.f32 %v1977, %v392
    %v2136 = vmul.f32 %v1982, %v392
    %v2137 = vmul.f32 %v1987, %v392
    %v2138 = vmul.f32 %v1992, %v392
    %v2139 = vmul.f32 %v1997, %v392
    %v2140 = vmul.f32 %v2002, %v392
    %v2141 = vmul.f32 %v2007, %v392
    %v2142 = vmul.f32 %v2012, %v392
    %v2143 = vmul.f32 %v2017, %v392
    %v2144 = vmul.f32 %v2022, %v392
    %v2145 = vmul.f32 %v2027, %v392
    %v2146 = vmul.f32 %v2032, %v392
    %v2147 = vmul.f32 %v2037, %v392
    %v2148 = vmul.f32 %v2042, %v392
    %v2149 = vmul.f32 %v2047, %v392
    %v2150 = vmul.f32 %v2052, %v392
    %v2151 = vmul.f32 %v2057, %v392
    %v2152 = vmul.f32 %v2062, %v392
    %v2153 = vmul.f32 %v2067, %v392
    %v2154 = vmul.f32 %v2072, %v392
    %v2155 = vmul.f32 %v2077, %v392
    %v2156 = vmul.f32 %v2082, %v392
    %v2157 = vmul.f32 %v2087, %v392
    %v2158 = vmul.f32 %v2092, %v392
    %v2159 = vmul.f32 %v2097, %v392
    %v2160 = vmul.f32 %v2102, %v392
    %v2161 = vmul.f32 %v2107, %v392
    %v2162 = vmul.f32 %v2112, %v392
    %v2163 = vmul.f32 %v2117, %v392
    %v2164 = vmul.f32 %v2122, %v392
    %v2165 = vmul.f32 %v2127, %v392
    %v2166 = vmul.f32 %v2132, %v392
    %v2167 = vtanh.pop %v2135
    %v2168 = vtanh.pop %v2136
    %v2169 = vtanh.pop %v2137
    %v2170 = vtanh.pop %v2138
    %v2171 = vtanh.pop %v2139
    %v2172 = vtanh.pop %v2140
    %v2173 = vtanh.pop %v2141
    %v2174 = vtanh.pop %v2142
    %v2175 = vtanh.pop %v2143
    %v2176 = vtanh.pop %v2144
    %v2177 = vtanh.pop %v2145
    %v2178 = vtanh.pop %v2146
    %v2179 = vtanh.pop %v2147
    %v2180 = vtanh.pop %v2148
    %v2181 = vtanh.pop %v2149
    %v2182 = vtanh.pop %v2150
    %v2183 = vtanh.pop %v2151
    %v2184 = vtanh.pop %v2152
    %v2185 = vtanh.pop %v2153
    %v2186 = vtanh.pop %v2154
    %v2187 = vtanh.pop %v2155
    %v2188 = vtanh.pop %v2156
    %v2189 = vtanh.pop %v2157
    %v2190 = vtanh.pop %v2158
    %v2191 = vtanh.pop %v2159
    %v2192 = vtanh.pop %v2160
    %v2193 = vtanh.pop %v2161
    %v2194 = vtanh.pop %v2162
    %v2195 = vtanh.pop %v2163
    %v2196 = vtanh.pop %v2164
    %v2197 = vtanh.pop %v2165
    %v2198 = vtanh.pop %v2166
    %v2199 = vmul.f32 %v1977, %v2167
    %v2200 = vmul.f32 %v1982, %v2168
    %v2201 = vmul.f32 %v1987, %v2169
    %v2202 = vmul.f32 %v1992, %v2170
    %v2203 = vmul.f32 %v1997, %v2171
    %v2204 = vmul.f32 %v2002, %v2172
    %v2205 = vmul.f32 %v2007, %v2173
    %v2206 = vmul.f32 %v2012, %v2174
    %v2207 = vmul.f32 %v2017, %v2175
    %v2208 = vmul.f32 %v2022, %v2176
    %v2209 = vmul.f32 %v2027, %v2177
    %v2210 = vmul.f32 %v2032, %v2178
    %v2211 = vmul.f32 %v2037, %v2179
    %v2212 = vmul.f32 %v2042, %v2180
    %v2213 = vmul.f32 %v2047, %v2181
    %v2214 = vmul.f32 %v2052, %v2182
    %v2215 = vmul.f32 %v2057, %v2183
    %v2216 = vmul.f32 %v2062, %v2184
    %v2217 = vmul.f32 %v2067, %v2185
    %v2218 = vmul.f32 %v2072, %v2186
    %v2219 = vmul.f32 %v2077, %v2187
    %v2220 = vmul.f32 %v2082, %v2188
    %v2221 = vmul.f32 %v2087, %v2189
    %v2222 = vmul.f32 %v2092, %v2190
    %v2223 = vmul.f32 %v2097, %v2191
    %v2224 = vmul.f32 %v2102, %v2192
    %v2225 = vmul.f32 %v2107, %v2193
    %v2226 = vmul.f32 %v2112, %v2194
    %v2227 = vmul.f32 %v2117, %v2195
    %v2228 = vmul.f32 %v2122, %v2196
    %v2229 = vmul.f32 %v2127, %v2197
    %v2230 = vmul.f32 %v2132, %v2198
    %v2231 = vadd.f32 %v2199, %v1977
    %v2232 = vadd.f32 %v2200, %v1982
    %v2233 = vadd.f32 %v2201, %v1987
    %v2234 = vadd.f32 %v2202, %v1992
    %v2235 = vadd.f32 %v2203, %v1997
    %v2236 = vadd.f32 %v2204, %v2002
    %v2237 = vadd.f32 %v2205, %v2007
    %v2238 = vadd.f32 %v2206, %v2012
    %v2239 = vadd.f32 %v2207, %v2017
    %v2240 = vadd.f32 %v2208, %v2022
    %v2241 = vadd.f32 %v2209, %v2027
    %v2242 = vadd.f32 %v2210, %v2032
    %v2243 = vadd.f32 %v2211, %v2037
    %v2244 = vadd.f32 %v2212, %v2042
    %v2245 = vadd.f32 %v2213, %v2047
    %v2246 = vadd.f32 %v2214, %v2052
    %v2247 = vadd.f32 %v2215, %v2057
    %v2248 = vadd.f32 %v2216, %v2062
    %v2249 = vadd.f32 %v2217, %v2067
    %v2250 = vadd.f32 %v2218, %v2072
    %v2251 = vadd.f32 %v2219, %v2077
    %v2252 = vadd.f32 %v2220, %v2082
    %v2253 = vadd.f32 %v2221, %v2087
    %v2254 = vadd.f32 %v2222, %v2092
    %v2255 = vadd.f32 %v2223, %v2097
    %v2256 = vadd.f32 %v2224, %v2102
    %v2257 = vadd.f32 %v2225, %v2107
    %v2258 = vadd.f32 %v2226, %v2112
    %v2259 = vadd.f32 %v2227, %v2117
    %v2260 = vadd.f32 %v2228, %v2122
    %v2261 = vadd.f32 %v2229, %v2127
    %v2262 = vadd.f32 %v2230, %v2132
    %v2263 = vld [vmem:[%s5] sm:$0xff]
    %v2264 = vld [vmem:[%s5 + $0x8] sm:$0xff]
    %v2265 = vld [vmem:[%s5 + $0x10] sm:$0xff]
    %v2266 = vld [vmem:[%s5 + $0x18] sm:$0xff]
    %v2267 = vld [vmem:[%s5 + $0x20] sm:$0xff]
    %v2268 = vld [vmem:[%s5 + $0x28] sm:$0xff]
    %v2269 = vld [vmem:[%s5 + $0x30] sm:$0xff]
    %v2270 = vld [vmem:[%s5 + $0x38] sm:$0xff]
    %v2271 = vld [vmem:[%s6] sm:$0x1]
    %v2273 = vlaneseq
    %v2274 = vshrl.u32 %v2273, 7
    %v2275 = vsub.s32 0, %v2274
    %v2276 = vrot.slane %v2271, %v2275
    %v2279 = vsel %vm536, %v2231, 0
    %v2282 = vsel %vm536, %v2232, 0
    %v2285 = vsel %vm536, %v2233, 0
    %v2288 = vsel %vm536, %v2234, 0
    %v2291 = vsel %vm536, %v2235, 0
    %v2294 = vsel %vm536, %v2236, 0
    %v2297 = vsel %vm536, %v2237, 0
    %v2300 = vsel %vm536, %v2238, 0
    %v2303 = vsel %vm536, %v2239, 0
    %v2306 = vsel %vm536, %v2240, 0
    %v2309 = vsel %vm536, %v2241, 0
    %v2312 = vsel %vm536, %v2242, 0
    %v2315 = vsel %vm536, %v2243, 0
    %v2318 = vsel %vm536, %v2244, 0
    %v2321 = vsel %vm536, %v2245, 0
    %v2324 = vsel %vm536, %v2246, 0
    %v2327 = vsel %vm536, %v2247, 0
    %v2330 = vsel %vm536, %v2248, 0
    %v2333 = vsel %vm536, %v2249, 0
    %v2336 = vsel %vm536, %v2250, 0
    %v2339 = vsel %vm536, %v2251, 0
    %v2342 = vsel %vm536, %v2252, 0
    %v2345 = vsel %vm536, %v2253, 0
    %v2348 = vsel %vm536, %v2254, 0
    %v2351 = vsel %vm536, %v2255, 0
    %v2354 = vsel %vm536, %v2256, 0
    %v2357 = vsel %vm536, %v2257, 0
    %v2360 = vsel %vm536, %v2258, 0
    %v2363 = vsel %vm536, %v2259, 0
    %v2366 = vsel %vm536, %v2260, 0
    %v2369 = vsel %vm536, %v2261, 0
    %v2372 = vsel %vm536, %v2262, 0
    %2374 = vmatprep.subr.mxu0 0.0
    %2375 = vmatpush1.msra.mxu0 %v2263
    %2376 = vmatprep.subr.mxu0 0.0
    %2377 = vmatpush1.msra.mxu0 %v2264
    %2378 = vmatprep.subr.mxu0 0.0
    %2379 = vmatpush1.msra.mxu0 %v2265
    %2380 = vmatprep.subr.mxu0 0.0
    %2381 = vmatpush1.msra.mxu0 %v2266
    %2382 = vmatprep.subr.mxu0 0.0
    %2383 = vmatpush1.msra.mxu0 %v2267
    %2384 = vmatprep.subr.mxu0 0.0
    %2385 = vmatpush1.msra.mxu0 %v2268
    %2386 = vmatprep.subr.mxu0 0.0
    %2387 = vmatpush1.msra.mxu0 %v2269
    %2388 = vmatprep.subr.mxu0 0.0
    %2389 = vmatpush1.msra.mxu0 %v2270
    %2390 = vmatprep.subr.mxu0 0.0
    %2391 = vmatpush1.msra.mxu0 0.0
    %2392 = vmatprep.subr.mxu0 0.0
    %2393 = vmatpush1.msra.mxu0 0.0
    %2394 = vmatprep.subr.mxu0 0.0
    %2395 = vmatpush1.msra.mxu0 0.0
    %2396 = vmatprep.subr.mxu0 0.0
    %2397 = vmatpush1.msra.mxu0 0.0
    %2398 = vmatprep.subr.mxu0 0.0
    %2399 = vmatpush1.msra.mxu0 0.0
    %2400 = vmatprep.subr.mxu0 0.0
    %2401 = vmatpush1.msra.mxu0 0.0
    %2402 = vmatprep.subr.mxu0 0.0
    %2403 = vmatpush1.msra.mxu0 0.0
    %2404 = vmatprep.subr.mxu0 0.0
    %2405 = vmatpush1.msra.mxu0 0.0
    %2406 = vmatprep.subr.mxu0 0.0
    %2407 = vmatpush1.msra.mxu0 0.0
    %2408 = vmatprep.subr.mxu0 0.0
    %2409 = vmatpush1.msra.mxu0 0.0
    %2410 = vmatprep.subr.mxu0 0.0
    %2411 = vmatpush1.msra.mxu0 0.0
    %2412 = vmatprep.subr.mxu0 0.0
    %2413 = vmatpush1.msra.mxu0 0.0
    %2414 = vmatprep.subr.mxu0 0.0
    %2415 = vmatpush1.msra.mxu0 0.0
    %2416 = vmatprep.subr.mxu0 0.0
    %2417 = vmatpush1.msra.mxu0 0.0
    %2418 = vmatprep.subr.mxu0 0.0
    %2419 = vmatpush1.msra.mxu0 0.0
    %2420 = vmatprep.subr.mxu0 0.0
    %2421 = vmatpush1.msra.mxu0 0.0
    %2422 = vmatprep.subr.mxu0 0.0
    %2423 = vmatpush1.msra.mxu0 0.0
    %2424 = vmatprep.subr.mxu0 0.0
    %2425 = vmatpush1.msra.mxu0 0.0
    %2426 = vmatprep.subr.mxu0 0.0
    %2427 = vmatpush1.msra.mxu0 0.0
    %2428 = vmatprep.subr.mxu0 0.0
    %2429 = vmatpush1.msra.mxu0 0.0
    %2430 = vmatprep.subr.mxu0 0.0
    %2431 = vmatpush1.msra.mxu0 0.0
    %2432 = vmatprep.subr.mxu0 0.0
    %2433 = vmatpush1.msra.mxu0 0.0
    %2434 = vmatprep.subr.mxu0 0.0
    %2435 = vmatpush1.msra.mxu0 0.0
    %2436 = vmatprep.subr.mxu0 0.0
    %2437 = vmatpush1.msra.mxu0 0.0
    %2438 = vmatprep.mubr.f32.mxu0 0.0
    %2439 = vmatmul.mubr.f32.gmra.mrb[0].mxu0 %v2279
    %v2440 = vpop.f32.mrb[0].mxu0
    %v2441 = vadd.f32 %v2276, %v2440
    %v2442 = vpop.f32.mrb[0].mxu0
    %2443 = vmatprep.mubr.f32.mxu0 0.0
    %2444 = vmatmul.mubr.f32.gmra.mrb[0].mxu0 %v2282
    %v2445 = vpop.f32.mrb[0].mxu0
    %v2446 = vadd.f32 %v2276, %v2445
    %v2447 = vpop.f32.mrb[0].mxu0
    %2448 = vmatprep.mubr.f32.mxu0 0.0
    %2449 = vmatmul.mubr.f32.gmra.mrb[0].mxu0 %v2285
    %v2450 = vpop.f32.mrb[0].mxu0
    %v2451 = vadd.f32 %v2276, %v2450
    %v2452 = vpop.f32.mrb[0].mxu0
    %2453 = vmatprep.mubr.f32.mxu0 0.0
    %2454 = vmatmul.mubr.f32.gmra.mrb[0].mxu0 %v2288
    %v2455 = vpop.f32.mrb[0].mxu0
    %v2456 = vadd.f32 %v2276, %v2455
    %v2457 = vpop.f32.mrb[0].mxu0
    %2458 = vmatprep.mubr.f32.mxu0 0.0
    %2459 = vmatmul.mubr.f32.gmra.mrb[0].mxu0 %v2291
    %v2460 = vpop.f32.mrb[0].mxu0
    %v2461 = vadd.f32 %v2276, %v2460
    %v2462 = vpop.f32.mrb[0].mxu0
    %2463 = vmatprep.mubr.f32.mxu0 0.0
    %2464 = vmatmul.mubr.f32.gmra.mrb[0].mxu0 %v2294
    %v2465 = vpop.f32.mrb[0].mxu0
    %v2466 = vadd.f32 %v2276, %v2465
    %v2467 = vpop.f32.mrb[0].mxu0
    %2468 = vmatprep.mubr.f32.mxu0 0.0
    %2469 = vmatmul.mubr.f32.gmra.mrb[0].mxu0 %v2297
    %v2470 = vpop.f32.mrb[0].mxu0
    %v2471 = vadd.f32 %v2276, %v2470
    %v2472 = vpop.f32.mrb[0].mxu0
    %2473 = vmatprep.mubr.f32.mxu0 0.0
    %2474 = vmatmul.mubr.f32.gmra.mrb[0].mxu0 %v2300
    %v2475 = vpop.f32.mrb[0].mxu0
    %v2476 = vadd.f32 %v2276, %v2475
    %v2477 = vpop.f32.mrb[0].mxu0
    %2478 = vmatprep.mubr.f32.mxu0 0.0
    %2479 = vmatmul.mubr.f32.gmra.mrb[0].mxu0 %v2303
    %v2480 = vpop.f32.mrb[0].mxu0
    %v2481 = vadd.f32 %v2276, %v2480
    %v2482 = vpop.f32.mrb[0].mxu0
    %2483 = vmatprep.mubr.f32.mxu0 0.0
    %2484 = vmatmul.mubr.f32.gmra.mrb[0].mxu0 %v2306
    %v2485 = vpop.f32.mrb[0].mxu0
    %v2486 = vadd.f32 %v2276, %v2485
    %v2487 = vpop.f32.mrb[0].mxu0
    %2488 = vmatprep.mubr.f32.mxu0 0.0
    %2489 = vmatmul.mubr.f32.gmra.mrb[0].mxu0 %v2309
    %v2490 = vpop.f32.mrb[0].mxu0
    %v2491 = vadd.f32 %v2276, %v2490
    %v2492 = vpop.f32.mrb[0].mxu0
    %2493 = vmatprep.mubr.f32.mxu0 0.0
    %2494 = vmatmul.mubr.f32.gmra.mrb[0].mxu0 %v2312
    %v2495 = vpop.f32.mrb[0].mxu0
    %v2496 = vadd.f32 %v2276, %v2495
    %v2497 = vpop.f32.mrb[0].mxu0
    %2498 = vmatprep.mubr.f32.mxu0 0.0
    %2499 = vmatmul.mubr.f32.gmra.mrb[0].mxu0 %v2315
    %v2500 = vpop.f32.mrb[0].mxu0
    %v2501 = vadd.f32 %v2276, %v2500
    %v2502 = vpop.f32.mrb[0].mxu0
    %2503 = vmatprep.mubr.f32.mxu0 0.0
    %2504 = vmatmul.mubr.f32.gmra.mrb[0].mxu0 %v2318
    %v2505 = vpop.f32.mrb[0].mxu0
    %v2506 = vadd.f32 %v2276, %v2505
    %v2507 = vpop.f32.mrb[0].mxu0
    %2508 = vmatprep.mubr.f32.mxu0 0.0
    %2509 = vmatmul.mubr.f32.gmra.mrb[0].mxu0 %v2321
    %v2510 = vpop.f32.mrb[0].mxu0
    %v2511 = vadd.f32 %v2276, %v2510
    %v2512 = vpop.f32.mrb[0].mxu0
    %2513 = vmatprep.mubr.f32.mxu0 0.0
    %2514 = vmatmul.mubr.f32.gmra.mrb[0].mxu0 %v2324
    %v2515 = vpop.f32.mrb[0].mxu0
    %v2516 = vadd.f32 %v2276, %v2515
    %v2517 = vpop.f32.mrb[0].mxu0
    %2518 = vmatprep.mubr.f32.mxu0 0.0
    %2519 = vmatmul.mubr.f32.gmra.mrb[0].mxu0 %v2327
    %v2520 = vpop.f32.mrb[0].mxu0
    %v2521 = vadd.f32 %v2276, %v2520
    %v2522 = vpop.f32.mrb[0].mxu0
    %2523 = vmatprep.mubr.f32.mxu0 0.0
    %2524 = vmatmul.mubr.f32.gmra.mrb[0].mxu0 %v2330
    %v2525 = vpop.f32.mrb[0].mxu0
    %v2526 = vadd.f32 %v2276, %v2525
    %v2527 = vpop.f32.mrb[0].mxu0
    %2528 = vmatprep.mubr.f32.mxu0 0.0
    %2529 = vmatmul.mubr.f32.gmra.mrb[0].mxu0 %v2333
    %v2530 = vpop.f32.mrb[0].mxu0
    %v2531 = vadd.f32 %v2276, %v2530
    %v2532 = vpop.f32.mrb[0].mxu0
    %2533 = vmatprep.mubr.f32.mxu0 0.0
    %2534 = vmatmul.mubr.f32.gmra.mrb[0].mxu0 %v2336
    %v2535 = vpop.f32.mrb[0].mxu0
    %v2536 = vadd.f32 %v2276, %v2535
    %v2537 = vpop.f32.mrb[0].mxu0
    %2538 = vmatprep.mubr.f32.mxu0 0.0
    %2539 = vmatmul.mubr.f32.gmra.mrb[0].mxu0 %v2339
    %v2540 = vpop.f32.mrb[0].mxu0
    %v2541 = vadd.f32 %v2276, %v2540
    %v2542 = vpop.f32.mrb[0].mxu0
    %2543 = vmatprep.mubr.f32.mxu0 0.0
    %2544 = vmatmul.mubr.f32.gmra.mrb[0].mxu0 %v2342
    %v2545 = vpop.f32.mrb[0].mxu0
    %v2546 = vadd.f32 %v2276, %v2545
    %v2547 = vpop.f32.mrb[0].mxu0
    %2548 = vmatprep.mubr.f32.mxu0 0.0
    %2549 = vmatmul.mubr.f32.gmra.mrb[0].mxu0 %v2345
    %v2550 = vpop.f32.mrb[0].mxu0
    %v2551 = vadd.f32 %v2276, %v2550
    %v2552 = vpop.f32.mrb[0].mxu0
    %2553 = vmatprep.mubr.f32.mxu0 0.0
    %2554 = vmatmul.mubr.f32.gmra.mrb[0].mxu0 %v2348
    %v2555 = vpop.f32.mrb[0].mxu0
    %v2556 = vadd.f32 %v2276, %v2555
    %v2557 = vpop.f32.mrb[0].mxu0
    %2558 = vmatprep.mubr.f32.mxu0 0.0
    %2559 = vmatmul.mubr.f32.gmra.mrb[0].mxu0 %v2351
    %v2560 = vpop.f32.mrb[0].mxu0
    %v2561 = vadd.f32 %v2276, %v2560
    %v2562 = vpop.f32.mrb[0].mxu0
    %2563 = vmatprep.mubr.f32.mxu0 0.0
    %2564 = vmatmul.mubr.f32.gmra.mrb[0].mxu0 %v2354
    %v2565 = vpop.f32.mrb[0].mxu0
    %v2566 = vadd.f32 %v2276, %v2565
    %v2567 = vpop.f32.mrb[0].mxu0
    %2568 = vmatprep.mubr.f32.mxu0 0.0
    %2569 = vmatmul.mubr.f32.gmra.mrb[0].mxu0 %v2357
    %v2570 = vpop.f32.mrb[0].mxu0
    %v2571 = vadd.f32 %v2276, %v2570
    %v2572 = vpop.f32.mrb[0].mxu0
    %2573 = vmatprep.mubr.f32.mxu0 0.0
    %2574 = vmatmul.mubr.f32.gmra.mrb[0].mxu0 %v2360
    %v2575 = vpop.f32.mrb[0].mxu0
    %v2576 = vadd.f32 %v2276, %v2575
    %v2577 = vpop.f32.mrb[0].mxu0
    %2578 = vmatprep.mubr.f32.mxu0 0.0
    %2579 = vmatmul.mubr.f32.gmra.mrb[0].mxu0 %v2363
    %v2580 = vpop.f32.mrb[0].mxu0
    %v2581 = vadd.f32 %v2276, %v2580
    %v2582 = vpop.f32.mrb[0].mxu0
    %2583 = vmatprep.mubr.f32.mxu0 0.0
    %2584 = vmatmul.mubr.f32.gmra.mrb[0].mxu0 %v2366
    %v2585 = vpop.f32.mrb[0].mxu0
    %v2586 = vadd.f32 %v2276, %v2585
    %v2587 = vpop.f32.mrb[0].mxu0
    %2588 = vmatprep.mubr.f32.mxu0 0.0
    %2589 = vmatmul.mubr.f32.gmra.mrb[0].mxu0 %v2369
    %v2590 = vpop.f32.mrb[0].mxu0
    %v2591 = vadd.f32 %v2276, %v2590
    %v2592 = vpop.f32.mrb[0].mxu0
    %2593 = vmatprep.mubr.f32.mxu0 0.0
    %2594 = vmatmul.mubr.f32.gmra.mrb[0].mxu0 %v2372
    %v2595 = vpop.f32.mrb[0].mxu0
    %v2596 = vadd.f32 %v2276, %v2595
    %v2597 = vpop.f32.mrb[0].mxu0
    %2598 = vdwg.mxu0
    %v2599 = vmul.f32 %v2441, %v858
    %v2600 = vmul.f32 %v2446, %v858
    %v2601 = vmul.f32 %v2451, %v858
    %v2602 = vmul.f32 %v2456, %v858
    %v2603 = vmul.f32 %v2461, %v858
    %v2604 = vmul.f32 %v2466, %v858
    %v2605 = vmul.f32 %v2471, %v858
    %v2606 = vmul.f32 %v2476, %v858
    %v2607 = vmul.f32 %v2481, %v858
    %v2608 = vmul.f32 %v2486, %v858
    %v2609 = vmul.f32 %v2491, %v858
    %v2610 = vmul.f32 %v2496, %v858
    %v2611 = vmul.f32 %v2501, %v858
    %v2612 = vmul.f32 %v2506, %v858
    %v2613 = vmul.f32 %v2511, %v858
    %v2614 = vmul.f32 %v2516, %v858
    %v2615 = vmul.f32 %v2521, %v858
    %v2616 = vmul.f32 %v2526, %v858
    %v2617 = vmul.f32 %v2531, %v858
    %v2618 = vmul.f32 %v2536, %v858
    %v2619 = vmul.f32 %v2541, %v858
    %v2620 = vmul.f32 %v2546, %v858
    %v2621 = vmul.f32 %v2551, %v858
    %v2622 = vmul.f32 %v2556, %v858
    %v2623 = vmul.f32 %v2561, %v858
    %v2624 = vmul.f32 %v2566, %v858
    %v2625 = vmul.f32 %v2571, %v858
    %v2626 = vmul.f32 %v2576, %v858
    %v2627 = vmul.f32 %v2581, %v858
    %v2628 = vmul.f32 %v2586, %v858
    %v2629 = vmul.f32 %v2591, %v858
    %v2630 = vmul.f32 %v2596, %v858
    %v2631 = vtanh.pop %v2599
    %v2632 = vtanh.pop %v2600
    %v2633 = vtanh.pop %v2601
    %v2634 = vtanh.pop %v2602
    %v2635 = vtanh.pop %v2603
    %v2636 = vtanh.pop %v2604
    %v2637 = vtanh.pop %v2605
    %v2638 = vtanh.pop %v2606
    %v2639 = vtanh.pop %v2607
    %v2640 = vtanh.pop %v2608
    %v2641 = vtanh.pop %v2609
    %v2642 = vtanh.pop %v2610
    %v2643 = vtanh.pop %v2611
    %v2644 = vtanh.pop %v2612
    %v2645 = vtanh.pop %v2613
    %v2646 = vtanh.pop %v2614
    %v2647 = vtanh.pop %v2615
    %v2648 = vtanh.pop %v2616
    %v2649 = vtanh.pop %v2617
    %v2650 = vtanh.pop %v2618
    %v2651 = vtanh.pop %v2619
    %v2652 = vtanh.pop %v2620
    %v2653 = vtanh.pop %v2621
    %v2654 = vtanh.pop %v2622
    %v2655 = vtanh.pop %v2623
    %v2656 = vtanh.pop %v2624
    %v2657 = vtanh.pop %v2625
    %v2658 = vtanh.pop %v2626
    %v2659 = vtanh.pop %v2627
    %v2660 = vtanh.pop %v2628
    %v2661 = vtanh.pop %v2629
    %v2662 = vtanh.pop %v2630
    %v2663 = vmul.f32 %v2441, %v2631
    %v2664 = vmul.f32 %v2446, %v2632
    %v2665 = vmul.f32 %v2451, %v2633
    %v2666 = vmul.f32 %v2456, %v2634
    %v2667 = vmul.f32 %v2461, %v2635
    %v2668 = vmul.f32 %v2466, %v2636
    %v2669 = vmul.f32 %v2471, %v2637
    %v2670 = vmul.f32 %v2476, %v2638
    %v2671 = vmul.f32 %v2481, %v2639
    %v2672 = vmul.f32 %v2486, %v2640
    %v2673 = vmul.f32 %v2491, %v2641
    %v2674 = vmul.f32 %v2496, %v2642
    %v2675 = vmul.f32 %v2501, %v2643
    %v2676 = vmul.f32 %v2506, %v2644
    %v2677 = vmul.f32 %v2511, %v2645
    %v2678 = vmul.f32 %v2516, %v2646
    %v2679 = vmul.f32 %v2521, %v2647
    %v2680 = vmul.f32 %v2526, %v2648
    %v2681 = vmul.f32 %v2531, %v2649
    %v2682 = vmul.f32 %v2536, %v2650
    %v2683 = vmul.f32 %v2541, %v2651
    %v2684 = vmul.f32 %v2546, %v2652
    %v2685 = vmul.f32 %v2551, %v2653
    %v2686 = vmul.f32 %v2556, %v2654
    %v2687 = vmul.f32 %v2561, %v2655
    %v2688 = vmul.f32 %v2566, %v2656
    %v2689 = vmul.f32 %v2571, %v2657
    %v2690 = vmul.f32 %v2576, %v2658
    %v2691 = vmul.f32 %v2581, %v2659
    %v2692 = vmul.f32 %v2586, %v2660
    %v2693 = vmul.f32 %v2591, %v2661
    %v2694 = vmul.f32 %v2596, %v2662
    %v2695 = vadd.f32 %v2663, %v2441
    %v2696 = vadd.f32 %v2664, %v2446
    %v2697 = vadd.f32 %v2665, %v2451
    %v2698 = vadd.f32 %v2666, %v2456
    %v2699 = vadd.f32 %v2667, %v2461
    %v2700 = vadd.f32 %v2668, %v2466
    %v2701 = vadd.f32 %v2669, %v2471
    %v2702 = vadd.f32 %v2670, %v2476
    %v2703 = vadd.f32 %v2671, %v2481
    %v2704 = vadd.f32 %v2672, %v2486
    %v2705 = vadd.f32 %v2673, %v2491
    %v2706 = vadd.f32 %v2674, %v2496
    %v2707 = vadd.f32 %v2675, %v2501
    %v2708 = vadd.f32 %v2676, %v2506
    %v2709 = vadd.f32 %v2677, %v2511
    %v2710 = vadd.f32 %v2678, %v2516
    %v2711 = vadd.f32 %v2679, %v2521
    %v2712 = vadd.f32 %v2680, %v2526
    %v2713 = vadd.f32 %v2681, %v2531
    %v2714 = vadd.f32 %v2682, %v2536
    %v2715 = vadd.f32 %v2683, %v2541
    %v2716 = vadd.f32 %v2684, %v2546
    %v2717 = vadd.f32 %v2685, %v2551
    %v2718 = vadd.f32 %v2686, %v2556
    %v2719 = vadd.f32 %v2687, %v2561
    %v2720 = vadd.f32 %v2688, %v2566
    %v2721 = vadd.f32 %v2689, %v2571
    %v2722 = vadd.f32 %v2690, %v2576
    %v2723 = vadd.f32 %v2691, %v2581
    %v2724 = vadd.f32 %v2692, %v2586
    %v2725 = vadd.f32 %v2693, %v2591
    %v2726 = vadd.f32 %v2694, %v2596
    %v2727 = vld [vmem:[%s7] sm:$0xff]
    %v2728 = vld [vmem:[%s7 + $0x8] sm:$0xff]
    %v2729 = vld [vmem:[%s7 + $0x10] sm:$0xff]
    %v2730 = vld [vmem:[%s7 + $0x18] sm:$0xff]
    %v2731 = vld [vmem:[%s7 + $0x20] sm:$0xff]
    %v2732 = vld [vmem:[%s7 + $0x28] sm:$0xff]
    %v2733 = vld [vmem:[%s7 + $0x30] sm:$0xff]
    %v2734 = vld [vmem:[%s7 + $0x38] sm:$0xff]
    %v2735 = vld [vmem:[%s8] sm:$0x1]
    %v2737 = vlaneseq
    %v2738 = vshrl.u32 %v2737, 7
    %v2739 = vsub.s32 0, %v2738
    %v2740 = vrot.slane %v2735, %v2739
    %v2743 = vsel %vm536, %v2695, 0
    %v2746 = vsel %vm536, %v2696, 0
    %v2749 = vsel %vm536, %v2697, 0
    %v2752 = vsel %vm536, %v2698, 0
    %v2755 = vsel %vm536, %v2699, 0
    %v2758 = vsel %vm536, %v2700, 0
    %v2761 = vsel %vm536, %v2701, 0
    %v2764 = vsel %vm536, %v2702, 0
    %v2767 = vsel %vm536, %v2703, 0
    %v2770 = vsel %vm536, %v2704, 0
    %v2773 = vsel %vm536, %v2705, 0
    %v2776 = vsel %vm536, %v2706, 0
    %v2779 = vsel %vm536, %v2707, 0
    %v2782 = vsel %vm536, %v2708, 0
    %v2785 = vsel %vm536, %v2709, 0
    %v2788 = vsel %vm536, %v2710, 0
    %v2791 = vsel %vm536, %v2711, 0
    %v2794 = vsel %vm536, %v2712, 0
    %v2797 = vsel %vm536, %v2713, 0
    %v2800 = vsel %vm536, %v2714, 0
    %v2803 = vsel %vm536, %v2715, 0
    %v2806 = vsel %vm536, %v2716, 0
    %v2809 = vsel %vm536, %v2717, 0
    %v2812 = vsel %vm536, %v2718, 0
    %v2815 = vsel %vm536, %v2719, 0
    %v2818 = vsel %vm536, %v2720, 0
    %v2821 = vsel %vm536, %v2721, 0
    %v2824 = vsel %vm536, %v2722, 0
    %v2827 = vsel %vm536, %v2723, 0
    %v2830 = vsel %vm536, %v2724, 0
    %v2833 = vsel %vm536, %v2725, 0
    %v2836 = vsel %vm536, %v2726, 0
    %2838 = vmatprep.subr.mxu0 0.0
    %2839 = vmatpush1.msra.mxu0 %v2727
    %2840 = vmatprep.subr.mxu0 0.0
    %2841 = vmatpush1.msra.mxu0 %v2728
    %2842 = vmatprep.subr.mxu0 0.0
    %2843 = vmatpush1.msra.mxu0 %v2729
    %2844 = vmatprep.subr.mxu0 0.0
    %2845 = vmatpush1.msra.mxu0 %v2730
    %2846 = vmatprep.subr.mxu0 0.0
    %2847 = vmatpush1.msra.mxu0 %v2731
    %2848 = vmatprep.subr.mxu0 0.0
    %2849 = vmatpush1.msra.mxu0 %v2732
    %2850 = vmatprep.subr.mxu0 0.0
    %2851 = vmatpush1.msra.mxu0 %v2733
    %2852 = vmatprep.subr.mxu0 0.0
    %2853 = vmatpush1.msra.mxu0 %v2734
    %2854 = vmatprep.subr.mxu0 0.0
    %2855 = vmatpush1.msra.mxu0 0.0
    %2856 = vmatprep.subr.mxu0 0.0
    %2857 = vmatpush1.msra.mxu0 0.0
    %2858 = vmatprep.subr.mxu0 0.0
    %2859 = vmatpush1.msra.mxu0 0.0
    %2860 = vmatprep.subr.mxu0 0.0
    %2861 = vmatpush1.msra.mxu0 0.0
    %2862 = vmatprep.subr.mxu0 0.0
    %2863 = vmatpush1.msra.mxu0 0.0
    %2864 = vmatprep.subr.mxu0 0.0
    %2865 = vmatpush1.msra.mxu0 0.0
    %2866 = vmatprep.subr.mxu0 0.0
    %2867 = vmatpush1.msra.mxu0 0.0
    %2868 = vmatprep.subr.mxu0 0.0
    %2869 = vmatpush1.msra.mxu0 0.0
    %2870 = vmatprep.subr.mxu0 0.0
    %2871 = vmatpush1.msra.mxu0 0.0
    %2872 = vmatprep.subr.mxu0 0.0
    %2873 = vmatpush1.msra.mxu0 0.0
    %2874 = vmatprep.subr.mxu0 0.0
    %2875 = vmatpush1.msra.mxu0 0.0
    %2876 = vmatprep.subr.mxu0 0.0
    %2877 = vmatpush1.msra.mxu0 0.0
    %2878 = vmatprep.subr.mxu0 0.0
    %2879 = vmatpush1.msra.mxu0 0.0
    %2880 = vmatprep.subr.mxu0 0.0
    %2881 = vmatpush1.msra.mxu0 0.0
    %2882 = vmatprep.subr.mxu0 0.0
    %2883 = vmatpush1.msra.mxu0 0.0
    %2884 = vmatprep.subr.mxu0 0.0
    %2885 = vmatpush1.msra.mxu0 0.0
    %2886 = vmatprep.subr.mxu0 0.0
    %2887 = vmatpush1.msra.mxu0 0.0
    %2888 = vmatprep.subr.mxu0 0.0
    %2889 = vmatpush1.msra.mxu0 0.0
    %2890 = vmatprep.subr.mxu0 0.0
    %2891 = vmatpush1.msra.mxu0 0.0
    %2892 = vmatprep.subr.mxu0 0.0
    %2893 = vmatpush1.msra.mxu0 0.0
    %2894 = vmatprep.subr.mxu0 0.0
    %2895 = vmatpush1.msra.mxu0 0.0
    %2896 = vmatprep.subr.mxu0 0.0
    %2897 = vmatpush1.msra.mxu0 0.0
    %2898 = vmatprep.subr.mxu0 0.0
    %2899 = vmatpush1.msra.mxu0 0.0
    %2900 = vmatprep.subr.mxu0 0.0
    %2901 = vmatpush1.msra.mxu0 0.0
    %2902 = vmatprep.mubr.f32.mxu0 0.0
    %2903 = vmatmul.mubr.f32.gmra.mrb[0].mxu0 %v2743
    %v2904 = vpop.f32.mrb[0].mxu0
    %v2905 = vadd.f32 %v2740, %v2904
    %v2906 = vpop.f32.mrb[0].mxu0
    %2907 = vmatprep.mubr.f32.mxu0 0.0
    %2908 = vmatmul.mubr.f32.gmra.mrb[0].mxu0 %v2746
    %v2909 = vpop.f32.mrb[0].mxu0
    %v2910 = vadd.f32 %v2740, %v2909
    %v2911 = vpop.f32.mrb[0].mxu0
    %2912 = vmatprep.mubr.f32.mxu0 0.0
    %2913 = vmatmul.mubr.f32.gmra.mrb[0].mxu0 %v2749
    %v2914 = vpop.f32.mrb[0].mxu0
    %v2915 = vadd.f32 %v2740, %v2914
    %v2916 = vpop.f32.mrb[0].mxu0
    %2917 = vmatprep.mubr.f32.mxu0 0.0
    %2918 = vmatmul.mubr.f32.gmra.mrb[0].mxu0 %v2752
    %v2919 = vpop.f32.mrb[0].mxu0
    %v2920 = vadd.f32 %v2740, %v2919
    %v2921 = vpop.f32.mrb[0].mxu0
    %2922 = vmatprep.mubr.f32.mxu0 0.0
    %2923 = vmatmul.mubr.f32.gmra.mrb[0].mxu0 %v2755
    %v2924 = vpop.f32.mrb[0].mxu0
    %v2925 = vadd.f32 %v2740, %v2924
    %v2926 = vpop.f32.mrb[0].mxu0
    %2927 = vmatprep.mubr.f32.mxu0 0.0
    %2928 = vmatmul.mubr.f32.gmra.mrb[0].mxu0 %v2758
    %v2929 = vpop.f32.mrb[0].mxu0
    %v2930 = vadd.f32 %v2740, %v2929
    %v2931 = vpop.f32.mrb[0].mxu0
    %2932 = vmatprep.mubr.f32.mxu0 0.0
    %2933 = vmatmul.mubr.f32.gmra.mrb[0].mxu0 %v2761
    %v2934 = vpop.f32.mrb[0].mxu0
    %v2935 = vadd.f32 %v2740, %v2934
    %v2936 = vpop.f32.mrb[0].mxu0
    %2937 = vmatprep.mubr.f32.mxu0 0.0
    %2938 = vmatmul.mubr.f32.gmra.mrb[0].mxu0 %v2764
    %v2939 = vpop.f32.mrb[0].mxu0
    %v2940 = vadd.f32 %v2740, %v2939
    %v2941 = vpop.f32.mrb[0].mxu0
    %2942 = vmatprep.mubr.f32.mxu0 0.0
    %2943 = vmatmul.mubr.f32.gmra.mrb[0].mxu0 %v2767
    %v2944 = vpop.f32.mrb[0].mxu0
    %v2945 = vadd.f32 %v2740, %v2944
    %v2946 = vpop.f32.mrb[0].mxu0
    %2947 = vmatprep.mubr.f32.mxu0 0.0
    %2948 = vmatmul.mubr.f32.gmra.mrb[0].mxu0 %v2770
    %v2949 = vpop.f32.mrb[0].mxu0
    %v2950 = vadd.f32 %v2740, %v2949
    %v2951 = vpop.f32.mrb[0].mxu0
    %2952 = vmatprep.mubr.f32.mxu0 0.0
    %2953 = vmatmul.mubr.f32.gmra.mrb[0].mxu0 %v2773
    %v2954 = vpop.f32.mrb[0].mxu0
    %v2955 = vadd.f32 %v2740, %v2954
    %v2956 = vpop.f32.mrb[0].mxu0
    %2957 = vmatprep.mubr.f32.mxu0 0.0
    %2958 = vmatmul.mubr.f32.gmra.mrb[0].mxu0 %v2776
    %v2959 = vpop.f32.mrb[0].mxu0
    %v2960 = vadd.f32 %v2740, %v2959
    %v2961 = vpop.f32.mrb[0].mxu0
    %2962 = vmatprep.mubr.f32.mxu0 0.0
    %2963 = vmatmul.mubr.f32.gmra.mrb[0].mxu0 %v2779
    %v2964 = vpop.f32.mrb[0].mxu0
    %v2965 = vadd.f32 %v2740, %v2964
    %v2966 = vpop.f32.mrb[0].mxu0
    %2967 = vmatprep.mubr.f32.mxu0 0.0
    %2968 = vmatmul.mubr.f32.gmra.mrb[0].mxu0 %v2782
    %v2969 = vpop.f32.mrb[0].mxu0
    %v2970 = vadd.f32 %v2740, %v2969
    %v2971 = vpop.f32.mrb[0].mxu0
    %2972 = vmatprep.mubr.f32.mxu0 0.0
    %2973 = vmatmul.mubr.f32.gmra.mrb[0].mxu0 %v2785
    %v2974 = vpop.f32.mrb[0].mxu0
    %v2975 = vadd.f32 %v2740, %v2974
    %v2976 = vpop.f32.mrb[0].mxu0
    %2977 = vmatprep.mubr.f32.mxu0 0.0
    %2978 = vmatmul.mubr.f32.gmra.mrb[0].mxu0 %v2788
    %v2979 = vpop.f32.mrb[0].mxu0
    %v2980 = vadd.f32 %v2740, %v2979
    %v2981 = vpop.f32.mrb[0].mxu0
    %2982 = vmatprep.mubr.f32.mxu0 0.0
    %2983 = vmatmul.mubr.f32.gmra.mrb[0].mxu0 %v2791
    %v2984 = vpop.f32.mrb[0].mxu0
    %v2985 = vadd.f32 %v2740, %v2984
    %v2986 = vpop.f32.mrb[0].mxu0
    %2987 = vmatprep.mubr.f32.mxu0 0.0
    %2988 = vmatmul.mubr.f32.gmra.mrb[0].mxu0 %v2794
    %v2989 = vpop.f32.mrb[0].mxu0
    %v2990 = vadd.f32 %v2740, %v2989
    %v2991 = vpop.f32.mrb[0].mxu0
    %2992 = vmatprep.mubr.f32.mxu0 0.0
    %2993 = vmatmul.mubr.f32.gmra.mrb[0].mxu0 %v2797
    %v2994 = vpop.f32.mrb[0].mxu0
    %v2995 = vadd.f32 %v2740, %v2994
    %v2996 = vpop.f32.mrb[0].mxu0
    %2997 = vmatprep.mubr.f32.mxu0 0.0
    %2998 = vmatmul.mubr.f32.gmra.mrb[0].mxu0 %v2800
    %v2999 = vpop.f32.mrb[0].mxu0
    %v3000 = vadd.f32 %v2740, %v2999
    %v3001 = vpop.f32.mrb[0].mxu0
    %3002 = vmatprep.mubr.f32.mxu0 0.0
    %3003 = vmatmul.mubr.f32.gmra.mrb[0].mxu0 %v2803
    %v3004 = vpop.f32.mrb[0].mxu0
    %v3005 = vadd.f32 %v2740, %v3004
    %v3006 = vpop.f32.mrb[0].mxu0
    %3007 = vmatprep.mubr.f32.mxu0 0.0
    %3008 = vmatmul.mubr.f32.gmra.mrb[0].mxu0 %v2806
    %v3009 = vpop.f32.mrb[0].mxu0
    %v3010 = vadd.f32 %v2740, %v3009
    %v3011 = vpop.f32.mrb[0].mxu0
    %3012 = vmatprep.mubr.f32.mxu0 0.0
    %3013 = vmatmul.mubr.f32.gmra.mrb[0].mxu0 %v2809
    %v3014 = vpop.f32.mrb[0].mxu0
    %v3015 = vadd.f32 %v2740, %v3014
    %v3016 = vpop.f32.mrb[0].mxu0
    %3017 = vmatprep.mubr.f32.mxu0 0.0
    %3018 = vmatmul.mubr.f32.gmra.mrb[0].mxu0 %v2812
    %v3019 = vpop.f32.mrb[0].mxu0
    %v3020 = vadd.f32 %v2740, %v3019
    %v3021 = vpop.f32.mrb[0].mxu0
    %3022 = vmatprep.mubr.f32.mxu0 0.0
    %3023 = vmatmul.mubr.f32.gmra.mrb[0].mxu0 %v2815
    %v3024 = vpop.f32.mrb[0].mxu0
    %v3025 = vadd.f32 %v2740, %v3024
    %v3026 = vpop.f32.mrb[0].mxu0
    %3027 = vmatprep.mubr.f32.mxu0 0.0
    %3028 = vmatmul.mubr.f32.gmra.mrb[0].mxu0 %v2818
    %v3029 = vpop.f32.mrb[0].mxu0
    %v3030 = vadd.f32 %v2740, %v3029
    %v3031 = vpop.f32.mrb[0].mxu0
    %3032 = vmatprep.mubr.f32.mxu0 0.0
    %3033 = vmatmul.mubr.f32.gmra.mrb[0].mxu0 %v2821
    %v3034 = vpop.f32.mrb[0].mxu0
    %v3035 = vadd.f32 %v2740, %v3034
    %v3036 = vpop.f32.mrb[0].mxu0
    %3037 = vmatprep.mubr.f32.mxu0 0.0
    %3038 = vmatmul.mubr.f32.gmra.mrb[0].mxu0 %v2824
    %v3039 = vpop.f32.mrb[0].mxu0
    %v3040 = vadd.f32 %v2740, %v3039
    %v3041 = vpop.f32.mrb[0].mxu0
    %3042 = vmatprep.mubr.f32.mxu0 0.0
    %3043 = vmatmul.mubr.f32.gmra.mrb[0].mxu0 %v2827
    %v3044 = vpop.f32.mrb[0].mxu0
    %v3045 = vadd.f32 %v2740, %v3044
    %v3046 = vpop.f32.mrb[0].mxu0
    %3047 = vmatprep.mubr.f32.mxu0 0.0
    %3048 = vmatmul.mubr.f32.gmra.mrb[0].mxu0 %v2830
    %v3049 = vpop.f32.mrb[0].mxu0
    %v3050 = vadd.f32 %v2740, %v3049
    %v3051 = vpop.f32.mrb[0].mxu0
    %3052 = vmatprep.mubr.f32.mxu0 0.0
    %3053 = vmatmul.mubr.f32.gmra.mrb[0].mxu0 %v2833
    %v3054 = vpop.f32.mrb[0].mxu0
    %v3055 = vadd.f32 %v2740, %v3054
    %v3056 = vpop.f32.mrb[0].mxu0
    %3057 = vmatprep.mubr.f32.mxu0 0.0
    %3058 = vmatmul.mubr.f32.gmra.mrb[0].mxu0 %v2836
    %v3059 = vpop.f32.mrb[0].mxu0
    %v3060 = vadd.f32 %v2740, %v3059
    %v3061 = vpop.f32.mrb[0].mxu0
    %3062 = vdwg.mxu0
    %v3063 = vmul.f32 %v2905, %v1323
    %v3064 = vmul.f32 %v2910, %v1323
    %v3065 = vmul.f32 %v2915, %v1323
    %v3066 = vmul.f32 %v2920, %v1323
    %v3067 = vmul.f32 %v2925, %v1323
    %v3068 = vmul.f32 %v2930, %v1323
    %v3069 = vmul.f32 %v2935, %v1323
    %v3070 = vmul.f32 %v2940, %v1323
    %v3071 = vmul.f32 %v2945, %v1323
    %v3072 = vmul.f32 %v2950, %v1323
    %v3073 = vmul.f32 %v2955, %v1323
    %v3074 = vmul.f32 %v2960, %v1323
    %v3075 = vmul.f32 %v2965, %v1323
    %v3076 = vmul.f32 %v2970, %v1323
    %v3077 = vmul.f32 %v2975, %v1323
    %v3078 = vmul.f32 %v2980, %v1323
    %v3079 = vmul.f32 %v2985, %v1323
    %v3080 = vmul.f32 %v2990, %v1323
    %v3081 = vmul.f32 %v2995, %v1323
    %v3082 = vmul.f32 %v3000, %v1323
    %v3083 = vmul.f32 %v3005, %v1323
    %v3084 = vmul.f32 %v3010, %v1323
    %v3085 = vmul.f32 %v3015, %v1323
    %v3086 = vmul.f32 %v3020, %v1323
    %v3087 = vmul.f32 %v3025, %v1323
    %v3088 = vmul.f32 %v3030, %v1323
    %v3089 = vmul.f32 %v3035, %v1323
    %v3090 = vmul.f32 %v3040, %v1323
    %v3091 = vmul.f32 %v3045, %v1323
    %v3092 = vmul.f32 %v3050, %v1323
    %v3093 = vmul.f32 %v3055, %v1323
    %v3094 = vmul.f32 %v3060, %v1323
    %v3095 = vtanh.pop %v3063
    %v3096 = vtanh.pop %v3064
    %v3097 = vtanh.pop %v3065
    %v3098 = vtanh.pop %v3066
    %v3099 = vtanh.pop %v3067
    %v3100 = vtanh.pop %v3068
    %v3101 = vtanh.pop %v3069
    %v3102 = vtanh.pop %v3070
    %v3103 = vtanh.pop %v3071
    %v3104 = vtanh.pop %v3072
    %v3105 = vtanh.pop %v3073
    %v3106 = vtanh.pop %v3074
    %v3107 = vtanh.pop %v3075
    %v3108 = vtanh.pop %v3076
    %v3109 = vtanh.pop %v3077
    %v3110 = vtanh.pop %v3078
    %v3111 = vtanh.pop %v3079
    %v3112 = vtanh.pop %v3080
    %v3113 = vtanh.pop %v3081
    %v3114 = vtanh.pop %v3082
    %v3115 = vtanh.pop %v3083
    %v3116 = vtanh.pop %v3084
    %v3117 = vtanh.pop %v3085
    %v3118 = vtanh.pop %v3086
    %v3119 = vtanh.pop %v3087
    %v3120 = vtanh.pop %v3088
    %v3121 = vtanh.pop %v3089
    %v3122 = vtanh.pop %v3090
    %v3123 = vtanh.pop %v3091
    %v3124 = vtanh.pop %v3092
    %v3125 = vtanh.pop %v3093
    %v3126 = vtanh.pop %v3094
    %v3127 = vmul.f32 %v2905, %v3095
    %v3128 = vmul.f32 %v2910, %v3096
    %v3129 = vmul.f32 %v2915, %v3097
    %v3130 = vmul.f32 %v2920, %v3098
    %v3131 = vmul.f32 %v2925, %v3099
    %v3132 = vmul.f32 %v2930, %v3100
    %v3133 = vmul.f32 %v2935, %v3101
    %v3134 = vmul.f32 %v2940, %v3102
    %v3135 = vmul.f32 %v2945, %v3103
    %v3136 = vmul.f32 %v2950, %v3104
    %v3137 = vmul.f32 %v2955, %v3105
    %v3138 = vmul.f32 %v2960, %v3106
    %v3139 = vmul.f32 %v2965, %v3107
    %v3140 = vmul.f32 %v2970, %v3108
    %v3141 = vmul.f32 %v2975, %v3109
    %v3142 = vmul.f32 %v2980, %v3110
    %v3143 = vmul.f32 %v2985, %v3111
    %v3144 = vmul.f32 %v2990, %v3112
    %v3145 = vmul.f32 %v2995, %v3113
    %v3146 = vmul.f32 %v3000, %v3114
    %v3147 = vmul.f32 %v3005, %v3115
    %v3148 = vmul.f32 %v3010, %v3116
    %v3149 = vmul.f32 %v3015, %v3117
    %v3150 = vmul.f32 %v3020, %v3118
    %v3151 = vmul.f32 %v3025, %v3119
    %v3152 = vmul.f32 %v3030, %v3120
    %v3153 = vmul.f32 %v3035, %v3121
    %v3154 = vmul.f32 %v3040, %v3122
    %v3155 = vmul.f32 %v3045, %v3123
    %v3156 = vmul.f32 %v3050, %v3124
    %v3157 = vmul.f32 %v3055, %v3125
    %v3158 = vmul.f32 %v3060, %v3126
    %v3159 = vadd.f32 %v3127, %v2905
    %v3160 = vadd.f32 %v3128, %v2910
    %v3161 = vadd.f32 %v3129, %v2915
    %v3162 = vadd.f32 %v3130, %v2920
    %v3163 = vadd.f32 %v3131, %v2925
    %v3164 = vadd.f32 %v3132, %v2930
    %v3165 = vadd.f32 %v3133, %v2935
    %v3166 = vadd.f32 %v3134, %v2940
    %v3167 = vadd.f32 %v3135, %v2945
    %v3168 = vadd.f32 %v3136, %v2950
    %v3169 = vadd.f32 %v3137, %v2955
    %v3170 = vadd.f32 %v3138, %v2960
    %v3171 = vadd.f32 %v3139, %v2965
    %v3172 = vadd.f32 %v3140, %v2970
    %v3173 = vadd.f32 %v3141, %v2975
    %v3174 = vadd.f32 %v3142, %v2980
    %v3175 = vadd.f32 %v3143, %v2985
    %v3176 = vadd.f32 %v3144, %v2990
    %v3177 = vadd.f32 %v3145, %v2995
    %v3178 = vadd.f32 %v3146, %v3000
    %v3179 = vadd.f32 %v3147, %v3005
    %v3180 = vadd.f32 %v3148, %v3010
    %v3181 = vadd.f32 %v3149, %v3015
    %v3182 = vadd.f32 %v3150, %v3020
    %v3183 = vadd.f32 %v3151, %v3025
    %v3184 = vadd.f32 %v3152, %v3030
    %v3185 = vadd.f32 %v3153, %v3035
    %v3186 = vadd.f32 %v3154, %v3040
    %v3187 = vadd.f32 %v3155, %v3045
    %v3188 = vadd.f32 %v3156, %v3050
    %v3189 = vadd.f32 %v3157, %v3055
    %v3190 = vadd.f32 %v3158, %v3060
    %v3191 = vld [vmem:[%s9] sm:$0xff]
    %v3192 = vld [vmem:[%s9 + $0x8] sm:$0xff]
    %v3193 = vld [vmem:[%s9 + $0x10] sm:$0xff]
    %v3194 = vld [vmem:[%s9 + $0x18] sm:$0xff]
    %v3195 = vld [vmem:[%s9 + $0x20] sm:$0xff]
    %v3196 = vld [vmem:[%s9 + $0x28] sm:$0xff]
    %v3197 = vld [vmem:[%s9 + $0x30] sm:$0xff]
    %v3198 = vld [vmem:[%s9 + $0x38] sm:$0xff]
    %v3199 = vld [vmem:[%s10] sm:$0x1]
    %v3201 = vlaneseq
    %v3202 = vshrl.u32 %v3201, 7
    %v3203 = vsub.s32 0, %v3202
    %v3204 = vrot.slane %v3199, %v3203
    %v3207 = vsel %vm536, %v3159, 0
    %v3210 = vsel %vm536, %v3160, 0
    %v3213 = vsel %vm536, %v3161, 0
    %v3216 = vsel %vm536, %v3162, 0
    %v3219 = vsel %vm536, %v3163, 0
    %v3222 = vsel %vm536, %v3164, 0
    %v3225 = vsel %vm536, %v3165, 0
    %v3228 = vsel %vm536, %v3166, 0
    %v3231 = vsel %vm536, %v3167, 0
    %v3234 = vsel %vm536, %v3168, 0
    %v3237 = vsel %vm536, %v3169, 0
    %v3240 = vsel %vm536, %v3170, 0
    %v3243 = vsel %vm536, %v3171, 0
    %v3246 = vsel %vm536, %v3172, 0
    %v3249 = vsel %vm536, %v3173, 0
    %v3252 = vsel %vm536, %v3174, 0
    %v3255 = vsel %vm536, %v3175, 0
    %v3258 = vsel %vm536, %v3176, 0
    %v3261 = vsel %vm536, %v3177, 0
    %v3264 = vsel %vm536, %v3178, 0
    %v3267 = vsel %vm536, %v3179, 0
    %v3270 = vsel %vm536, %v3180, 0
    %v3273 = vsel %vm536, %v3181, 0
    %v3276 = vsel %vm536, %v3182, 0
    %v3279 = vsel %vm536, %v3183, 0
    %v3282 = vsel %vm536, %v3184, 0
    %v3285 = vsel %vm536, %v3185, 0
    %v3288 = vsel %vm536, %v3186, 0
    %v3291 = vsel %vm536, %v3187, 0
    %v3294 = vsel %vm536, %v3188, 0
    %v3297 = vsel %vm536, %v3189, 0
    %v3300 = vsel %vm536, %v3190, 0
    %3302 = vmatprep.subr.mxu0 0.0
    %3303 = vmatpush1.msra.mxu0 %v3191
    %3304 = vmatprep.subr.mxu0 0.0
    %3305 = vmatpush1.msra.mxu0 %v3192
    %3306 = vmatprep.subr.mxu0 0.0
    %3307 = vmatpush1.msra.mxu0 %v3193
    %3308 = vmatprep.subr.mxu0 0.0
    %3309 = vmatpush1.msra.mxu0 %v3194
    %3310 = vmatprep.subr.mxu0 0.0
    %3311 = vmatpush1.msra.mxu0 %v3195
    %3312 = vmatprep.subr.mxu0 0.0
    %3313 = vmatpush1.msra.mxu0 %v3196
    %3314 = vmatprep.subr.mxu0 0.0
    %3315 = vmatpush1.msra.mxu0 %v3197
    %3316 = vmatprep.subr.mxu0 0.0
    %3317 = vmatpush1.msra.mxu0 %v3198
    %3318 = vmatprep.subr.mxu0 0.0
    %3319 = vmatpush1.msra.mxu0 0.0
    %3320 = vmatprep.subr.mxu0 0.0
    %3321 = vmatpush1.msra.mxu0 0.0
    %3322 = vmatprep.subr.mxu0 0.0
    %3323 = vmatpush1.msra.mxu0 0.0
    %3324 = vmatprep.subr.mxu0 0.0
    %3325 = vmatpush1.msra.mxu0 0.0
    %3326 = vmatprep.subr.mxu0 0.0
    %3327 = vmatpush1.msra.mxu0 0.0
    %3328 = vmatprep.subr.mxu0 0.0
    %3329 = vmatpush1.msra.mxu0 0.0
    %3330 = vmatprep.subr.mxu0 0.0
    %3331 = vmatpush1.msra.mxu0 0.0
    %3332 = vmatprep.subr.mxu0 0.0
    %3333 = vmatpush1.msra.mxu0 0.0
    %3334 = vmatprep.subr.mxu0 0.0
    %3335 = vmatpush1.msra.mxu0 0.0
    %3336 = vmatprep.subr.mxu0 0.0
    %3337 = vmatpush1.msra.mxu0 0.0
    %3338 = vmatprep.subr.mxu0 0.0
    %3339 = vmatpush1.msra.mxu0 0.0
    %3340 = vmatprep.subr.mxu0 0.0
    %3341 = vmatpush1.msra.mxu0 0.0
    %3342 = vmatprep.subr.mxu0 0.0
    %3343 = vmatpush1.msra.mxu0 0.0
    %3344 = vmatprep.subr.mxu0 0.0
    %3345 = vmatpush1.msra.mxu0 0.0
    %3346 = vmatprep.subr.mxu0 0.0
    %3347 = vmatpush1.msra.mxu0 0.0
    %3348 = vmatprep.subr.mxu0 0.0
    %3349 = vmatpush1.msra.mxu0 0.0
    %3350 = vmatprep.subr.mxu0 0.0
    %3351 = vmatpush1.msra.mxu0 0.0
    %3352 = vmatprep.subr.mxu0 0.0
    %3353 = vmatpush1.msra.mxu0 0.0
    %3354 = vmatprep.subr.mxu0 0.0
    %3355 = vmatpush1.msra.mxu0 0.0
    %3356 = vmatprep.subr.mxu0 0.0
    %3357 = vmatpush1.msra.mxu0 0.0
    %3358 = vmatprep.subr.mxu0 0.0
    %3359 = vmatpush1.msra.mxu0 0.0
    %3360 = vmatprep.subr.mxu0 0.0
    %3361 = vmatpush1.msra.mxu0 0.0
    %3362 = vmatprep.subr.mxu0 0.0
    %3363 = vmatpush1.msra.mxu0 0.0
    %3364 = vmatprep.subr.mxu0 0.0
    %3365 = vmatpush1.msra.mxu0 0.0
    %3366 = vmatprep.mubr.f32.mxu0 0.0
    %3367 = vmatmul.mubr.f32.gmra.mrb[0].mxu0 %v3207
    %v3368 = vpop.f32.mrb[0].mxu0
    %v3369 = vadd.f32 %v3204, %v3368
    %v3370 = vpop.f32.mrb[0].mxu0
    %3371 = vmatprep.mubr.f32.mxu0 0.0
    %3372 = vmatmul.mubr.f32.gmra.mrb[0].mxu0 %v3210
    %v3373 = vpop.f32.mrb[0].mxu0
    %v3374 = vadd.f32 %v3204, %v3373
    %v3375 = vpop.f32.mrb[0].mxu0
    %3376 = vmatprep.mubr.f32.mxu0 0.0
    %3377 = vmatmul.mubr.f32.gmra.mrb[0].mxu0 %v3213
    %v3378 = vpop.f32.mrb[0].mxu0
    %v3379 = vadd.f32 %v3204, %v3378
    %v3380 = vpop.f32.mrb[0].mxu0
    %3381 = vmatprep.mubr.f32.mxu0 0.0
    %3382 = vmatmul.mubr.f32.gmra.mrb[0].mxu0 %v3216
    %v3383 = vpop.f32.mrb[0].mxu0
    %v3384 = vadd.f32 %v3204, %v3383
    %v3385 = vpop.f32.mrb[0].mxu0
    %3386 = vmatprep.mubr.f32.mxu0 0.0
    %3387 = vmatmul.mubr.f32.gmra.mrb[0].mxu0 %v3219
    %v3388 = vpop.f32.mrb[0].mxu0
    %v3389 = vadd.f32 %v3204, %v3388
    %v3390 = vpop.f32.mrb[0].mxu0
    %3391 = vmatprep.mubr.f32.mxu0 0.0
    %3392 = vmatmul.mubr.f32.gmra.mrb[0].mxu0 %v3222
    %v3393 = vpop.f32.mrb[0].mxu0
    %v3394 = vadd.f32 %v3204, %v3393
    %v3395 = vpop.f32.mrb[0].mxu0
    %3396 = vmatprep.mubr.f32.mxu0 0.0
    %3397 = vmatmul.mubr.f32.gmra.mrb[0].mxu0 %v3225
    %v3398 = vpop.f32.mrb[0].mxu0
    %v3399 = vadd.f32 %v3204, %v3398
    %v3400 = vpop.f32.mrb[0].mxu0
    %3401 = vmatprep.mubr.f32.mxu0 0.0
    %3402 = vmatmul.mubr.f32.gmra.mrb[0].mxu0 %v3228
    %v3403 = vpop.f32.mrb[0].mxu0
    %v3404 = vadd.f32 %v3204, %v3403
    %v3405 = vpop.f32.mrb[0].mxu0
    %3406 = vmatprep.mubr.f32.mxu0 0.0
    %3407 = vmatmul.mubr.f32.gmra.mrb[0].mxu0 %v3231
    %v3408 = vpop.f32.mrb[0].mxu0
    %v3409 = vadd.f32 %v3204, %v3408
    %v3410 = vpop.f32.mrb[0].mxu0
    %3411 = vmatprep.mubr.f32.mxu0 0.0
    %3412 = vmatmul.mubr.f32.gmra.mrb[0].mxu0 %v3234
    %v3413 = vpop.f32.mrb[0].mxu0
    %v3414 = vadd.f32 %v3204, %v3413
    %v3415 = vpop.f32.mrb[0].mxu0
    %3416 = vmatprep.mubr.f32.mxu0 0.0
    %3417 = vmatmul.mubr.f32.gmra.mrb[0].mxu0 %v3237
    %v3418 = vpop.f32.mrb[0].mxu0
    %v3419 = vadd.f32 %v3204, %v3418
    %v3420 = vpop.f32.mrb[0].mxu0
    %3421 = vmatprep.mubr.f32.mxu0 0.0
    %3422 = vmatmul.mubr.f32.gmra.mrb[0].mxu0 %v3240
    %v3423 = vpop.f32.mrb[0].mxu0
    %v3424 = vadd.f32 %v3204, %v3423
    %v3425 = vpop.f32.mrb[0].mxu0
    %3426 = vmatprep.mubr.f32.mxu0 0.0
    %3427 = vmatmul.mubr.f32.gmra.mrb[0].mxu0 %v3243
    %v3428 = vpop.f32.mrb[0].mxu0
    %v3429 = vadd.f32 %v3204, %v3428
    %v3430 = vpop.f32.mrb[0].mxu0
    %3431 = vmatprep.mubr.f32.mxu0 0.0
    %3432 = vmatmul.mubr.f32.gmra.mrb[0].mxu0 %v3246
    %v3433 = vpop.f32.mrb[0].mxu0
    %v3434 = vadd.f32 %v3204, %v3433
    %v3435 = vpop.f32.mrb[0].mxu0
    %3436 = vmatprep.mubr.f32.mxu0 0.0
    %3437 = vmatmul.mubr.f32.gmra.mrb[0].mxu0 %v3249
    %v3438 = vpop.f32.mrb[0].mxu0
    %v3439 = vadd.f32 %v3204, %v3438
    %v3440 = vpop.f32.mrb[0].mxu0
    %3441 = vmatprep.mubr.f32.mxu0 0.0
    %3442 = vmatmul.mubr.f32.gmra.mrb[0].mxu0 %v3252
    %v3443 = vpop.f32.mrb[0].mxu0
    %v3444 = vadd.f32 %v3204, %v3443
    %v3445 = vpop.f32.mrb[0].mxu0
    %3446 = vmatprep.mubr.f32.mxu0 0.0
    %3447 = vmatmul.mubr.f32.gmra.mrb[0].mxu0 %v3255
    %v3448 = vpop.f32.mrb[0].mxu0
    %v3449 = vadd.f32 %v3204, %v3448
    %v3450 = vpop.f32.mrb[0].mxu0
    %3451 = vmatprep.mubr.f32.mxu0 0.0
    %3452 = vmatmul.mubr.f32.gmra.mrb[0].mxu0 %v3258
    %v3453 = vpop.f32.mrb[0].mxu0
    %v3454 = vadd.f32 %v3204, %v3453
    %v3455 = vpop.f32.mrb[0].mxu0
    %3456 = vmatprep.mubr.f32.mxu0 0.0
    %3457 = vmatmul.mubr.f32.gmra.mrb[0].mxu0 %v3261
    %v3458 = vpop.f32.mrb[0].mxu0
    %v3459 = vadd.f32 %v3204, %v3458
    %v3460 = vpop.f32.mrb[0].mxu0
    %3461 = vmatprep.mubr.f32.mxu0 0.0
    %3462 = vmatmul.mubr.f32.gmra.mrb[0].mxu0 %v3264
    %v3463 = vpop.f32.mrb[0].mxu0
    %v3464 = vadd.f32 %v3204, %v3463
    %v3465 = vpop.f32.mrb[0].mxu0
    %3466 = vmatprep.mubr.f32.mxu0 0.0
    %3467 = vmatmul.mubr.f32.gmra.mrb[0].mxu0 %v3267
    %v3468 = vpop.f32.mrb[0].mxu0
    %v3469 = vadd.f32 %v3204, %v3468
    %v3470 = vpop.f32.mrb[0].mxu0
    %3471 = vmatprep.mubr.f32.mxu0 0.0
    %3472 = vmatmul.mubr.f32.gmra.mrb[0].mxu0 %v3270
    %v3473 = vpop.f32.mrb[0].mxu0
    %v3474 = vadd.f32 %v3204, %v3473
    %v3475 = vpop.f32.mrb[0].mxu0
    %3476 = vmatprep.mubr.f32.mxu0 0.0
    %3477 = vmatmul.mubr.f32.gmra.mrb[0].mxu0 %v3273
    %v3478 = vpop.f32.mrb[0].mxu0
    %v3479 = vadd.f32 %v3204, %v3478
    %v3480 = vpop.f32.mrb[0].mxu0
    %3481 = vmatprep.mubr.f32.mxu0 0.0
    %3482 = vmatmul.mubr.f32.gmra.mrb[0].mxu0 %v3276
    %v3483 = vpop.f32.mrb[0].mxu0
    %v3484 = vadd.f32 %v3204, %v3483
    %v3485 = vpop.f32.mrb[0].mxu0
    %3486 = vmatprep.mubr.f32.mxu0 0.0
    %3487 = vmatmul.mubr.f32.gmra.mrb[0].mxu0 %v3279
    %v3488 = vpop.f32.mrb[0].mxu0
    %v3489 = vadd.f32 %v3204, %v3488
    %v3490 = vpop.f32.mrb[0].mxu0
    %3491 = vmatprep.mubr.f32.mxu0 0.0
    %3492 = vmatmul.mubr.f32.gmra.mrb[0].mxu0 %v3282
    %v3493 = vpop.f32.mrb[0].mxu0
    %v3494 = vadd.f32 %v3204, %v3493
    %v3495 = vpop.f32.mrb[0].mxu0
    %3496 = vmatprep.mubr.f32.mxu0 0.0
    %3497 = vmatmul.mubr.f32.gmra.mrb[0].mxu0 %v3285
    %v3498 = vpop.f32.mrb[0].mxu0
    %v3499 = vadd.f32 %v3204, %v3498
    %v3500 = vpop.f32.mrb[0].mxu0
    %3501 = vmatprep.mubr.f32.mxu0 0.0
    %3502 = vmatmul.mubr.f32.gmra.mrb[0].mxu0 %v3288
    %v3503 = vpop.f32.mrb[0].mxu0
    %v3504 = vadd.f32 %v3204, %v3503
    %v3505 = vpop.f32.mrb[0].mxu0
    %3506 = vmatprep.mubr.f32.mxu0 0.0
    %3507 = vmatmul.mubr.f32.gmra.mrb[0].mxu0 %v3291
    %v3508 = vpop.f32.mrb[0].mxu0
    %v3509 = vadd.f32 %v3204, %v3508
    %v3510 = vpop.f32.mrb[0].mxu0
    %3511 = vmatprep.mubr.f32.mxu0 0.0
    %3512 = vmatmul.mubr.f32.gmra.mrb[0].mxu0 %v3294
    %v3513 = vpop.f32.mrb[0].mxu0
    %v3514 = vadd.f32 %v3204, %v3513
    %v3515 = vpop.f32.mrb[0].mxu0
    %3516 = vmatprep.mubr.f32.mxu0 0.0
    %3517 = vmatmul.mubr.f32.gmra.mrb[0].mxu0 %v3297
    %v3518 = vpop.f32.mrb[0].mxu0
    %v3519 = vadd.f32 %v3204, %v3518
    %v3520 = vpop.f32.mrb[0].mxu0
    %3521 = vmatprep.mubr.f32.mxu0 0.0
    %3522 = vmatmul.mubr.f32.gmra.mrb[0].mxu0 %v3300
    %v3523 = vpop.f32.mrb[0].mxu0
    %v3524 = vadd.f32 %v3204, %v3523
    %v3525 = vpop.f32.mrb[0].mxu0
    %3526 = vdwg.mxu0
    %v3527 = vstv %s1886
    %v3528 = vmul.f32 %v3527, %v3369
    %v3529 = vmul.f32 %v3527, %v3374
    %v3530 = vmul.f32 %v3527, %v3379
    %v3531 = vmul.f32 %v3527, %v3384
    %v3532 = vmul.f32 %v3527, %v3389
    %v3533 = vmul.f32 %v3527, %v3394
    %v3534 = vmul.f32 %v3527, %v3399
    %v3535 = vmul.f32 %v3527, %v3404
    %v3536 = vmul.f32 %v3527, %v3409
    %v3537 = vmul.f32 %v3527, %v3414
    %v3538 = vmul.f32 %v3527, %v3419
    %v3539 = vmul.f32 %v3527, %v3424
    %v3540 = vmul.f32 %v3527, %v3429
    %v3541 = vmul.f32 %v3527, %v3434
    %v3542 = vmul.f32 %v3527, %v3439
    %v3543 = vmul.f32 %v3527, %v3444
    %v3544 = vmul.f32 %v3527, %v3449
    %v3545 = vmul.f32 %v3527, %v3454
    %v3546 = vmul.f32 %v3527, %v3459
    %v3547 = vmul.f32 %v3527, %v3464
    %v3548 = vmul.f32 %v3527, %v3469
    %v3549 = vmul.f32 %v3527, %v3474
    %v3550 = vmul.f32 %v3527, %v3479
    %v3551 = vmul.f32 %v3527, %v3484
    %v3552 = vmul.f32 %v3527, %v3489
    %v3553 = vmul.f32 %v3527, %v3494
    %v3554 = vmul.f32 %v3527, %v3499
    %v3555 = vmul.f32 %v3527, %v3504
    %v3556 = vmul.f32 %v3527, %v3509
    %v3557 = vmul.f32 %v3527, %v3514
    %v3558 = vmul.f32 %v3527, %v3519
    %v3559 = vmul.f32 %v3527, %v3524
    %v3560 = vadd.f32 %v1821, %v3528
    %v3561 = vadd.f32 %v1822, %v3529
    %v3562 = vadd.f32 %v1823, %v3530
    %v3563 = vadd.f32 %v1824, %v3531
    %v3564 = vadd.f32 %v1825, %v3532
    %v3565 = vadd.f32 %v1826, %v3533
    %v3566 = vadd.f32 %v1827, %v3534
    %v3567 = vadd.f32 %v1828, %v3535
    %v3568 = vadd.f32 %v1829, %v3536
    %v3569 = vadd.f32 %v1830, %v3537
    %v3570 = vadd.f32 %v1831, %v3538
    %v3571 = vadd.f32 %v1832, %v3539
    %v3572 = vadd.f32 %v1833, %v3540
    %v3573 = vadd.f32 %v1834, %v3541
    %v3574 = vadd.f32 %v1835, %v3542
    %v3575 = vadd.f32 %v1836, %v3543
    %v3576 = vadd.f32 %v1837, %v3544
    %v3577 = vadd.f32 %v1838, %v3545
    %v3578 = vadd.f32 %v1839, %v3546
    %v3579 = vadd.f32 %v1840, %v3547
    %v3580 = vadd.f32 %v1841, %v3548
    %v3581 = vadd.f32 %v1842, %v3549
    %v3582 = vadd.f32 %v1843, %v3550
    %v3583 = vadd.f32 %v1844, %v3551
    %v3584 = vadd.f32 %v1845, %v3552
    %v3585 = vadd.f32 %v1846, %v3553
    %v3586 = vadd.f32 %v1847, %v3554
    %v3587 = vadd.f32 %v1848, %v3555
    %v3588 = vadd.f32 %v1849, %v3556
    %v3589 = vadd.f32 %v1850, %v3557
    %v3590 = vadd.f32 %v1851, %v3558
    %v3591 = vadd.f32 %v1852, %v3559
    %s3592 = scalar_lea.vmem [#allocation9], 512
    %3593 = vst [vmem:[%s3592] sm:$0xff] %v3560
    %3594 = vst [vmem:[%s3592 + $0x8] sm:$0xff] %v3561
    %3595 = vst [vmem:[%s3592 + $0x10] sm:$0xff] %v3562
    %3596 = vst [vmem:[%s3592 + $0x18] sm:$0xff] %v3563
    %3597 = vst [vmem:[%s3592 + $0x20] sm:$0xff] %v3564
    %3598 = vst [vmem:[%s3592 + $0x28] sm:$0xff] %v3565
    %3599 = vst [vmem:[%s3592 + $0x30] sm:$0xff] %v3566
    %3600 = vst [vmem:[%s3592 + $0x38] sm:$0xff] %v3567
    %3601 = vst [vmem:[%s3592 + $0x40] sm:$0xff] %v3568
    %3602 = vst [vmem:[%s3592 + $0x48] sm:$0xff] %v3569
    %3603 = vst [vmem:[%s3592 + $0x50] sm:$0xff] %v3570
    %3604 = vst [vmem:[%s3592 + $0x58] sm:$0xff] %v3571
    %3605 = vst [vmem:[%s3592 + $0x60] sm:$0xff] %v3572
    %3606 = vst [vmem:[%s3592 + $0x68] sm:$0xff] %v3573
    %3607 = vst [vmem:[%s3592 + $0x70] sm:$0xff] %v3574
    %3608 = vst [vmem:[%s3592 + $0x78] sm:$0xff] %v3575
    %3609 = vst [vmem:[%s3592 + $0x80] sm:$0xff] %v3576
    %3610 = vst [vmem:[%s3592 + $0x88] sm:$0xff] %v3577
    %3611 = vst [vmem:[%s3592 + $0x90] sm:$0xff] %v3578
    %3612 = vst [vmem:[%s3592 + $0x98] sm:$0xff] %v3579
    %3613 = vst [vmem:[%s3592 + $0xa0] sm:$0xff] %v3580
    %3614 = vst [vmem:[%s3592 + $0xa8] sm:$0xff] %v3581
    %3615 = vst [vmem:[%s3592 + $0xb0] sm:$0xff] %v3582
    %3616 = vst [vmem:[%s3592 + $0xb8] sm:$0xff] %v3583
    %3617 = vst [vmem:[%s3592 + $0xc0] sm:$0xff] %v3584
    %3618 = vst [vmem:[%s3592 + $0xc8] sm:$0xff] %v3585
    %3619 = vst [vmem:[%s3592 + $0xd0] sm:$0xff] %v3586
    %3620 = vst [vmem:[%s3592 + $0xd8] sm:$0xff] %v3587
    %3621 = vst [vmem:[%s3592 + $0xe0] sm:$0xff] %v3588
    %3622 = vst [vmem:[%s3592 + $0xe8] sm:$0xff] %v3589
    %3623 = vst [vmem:[%s3592 + $0xf0] sm:$0xff] %v3590
    %3624 = vst [vmem:[%s3592 + $0xf8] sm:$0xff] %v3591
    %s3625 = sld [smem:[#allocation2 + $0x2]]
    %v3626 = vld [vmem:[%s3] sm:$0xff]
    %v3627 = vld [vmem:[%s3 + $0x8] sm:$0xff]
    %v3628 = vld [vmem:[%s3 + $0x10] sm:$0xff]
    %v3629 = vld [vmem:[%s3 + $0x18] sm:$0xff]
    %v3630 = vld [vmem:[%s3 + $0x20] sm:$0xff]
    %v3631 = vld [vmem:[%s3 + $0x28] sm:$0xff]
    %v3632 = vld [vmem:[%s3 + $0x30] sm:$0xff]
    %v3633 = vld [vmem:[%s3 + $0x38] sm:$0xff]
    %v3634 = vld [vmem:[%s3 + $0x40] sm:$0xff]
    %v3635 = vld [vmem:[%s3 + $0x48] sm:$0xff]
    %v3636 = vld [vmem:[%s3 + $0x50] sm:$0xff]
    %v3637 = vld [vmem:[%s3 + $0x58] sm:$0xff]
    %v3638 = vld [vmem:[%s3 + $0x60] sm:$0xff]
    %v3639 = vld [vmem:[%s3 + $0x68] sm:$0xff]
    %v3640 = vld [vmem:[%s3 + $0x70] sm:$0xff]
    %v3641 = vld [vmem:[%s3 + $0x78] sm:$0xff]
    %v3642 = vld [vmem:[%s4] sm:$0x1]
    %v3644 = vlaneseq
    %v3645 = vshrl.u32 %v3644, 7
    %v3646 = vsub.s32 0, %v3645
    %v3647 = vrot.slane %v3642, %v3646
    %3649 = vmatprep.subr.mxu0 0.0
    %3650 = vmatpush1.msra.mxu0 %v3626
    %3651 = vmatprep.subr.mxu0 0.0
    %3652 = vmatpush1.msra.mxu0 %v3627
    %3653 = vmatprep.subr.mxu0 0.0
    %3654 = vmatpush1.msra.mxu0 %v3628
    %3655 = vmatprep.subr.mxu0 0.0
    %3656 = vmatpush1.msra.mxu0 %v3629
    %3657 = vmatprep.subr.mxu0 0.0
    %3658 = vmatpush1.msra.mxu0 %v3630
    %3659 = vmatprep.subr.mxu0 0.0
    %3660 = vmatpush1.msra.mxu0 %v3631
    %3661 = vmatprep.subr.mxu0 0.0
    %3662 = vmatpush1.msra.mxu0 %v3632
    %3663 = vmatprep.subr.mxu0 0.0
    %3664 = vmatpush1.msra.mxu0 %v3633
    %3665 = vmatprep.subr.mxu0 0.0
    %3666 = vmatpush1.msra.mxu0 %v3634
    %3667 = vmatprep.subr.mxu0 0.0
    %3668 = vmatpush1.msra.mxu0 %v3635
    %3669 = vmatprep.subr.mxu0 0.0
    %3670 = vmatpush1.msra.mxu0 %v3636
    %3671 = vmatprep.subr.mxu0 0.0
    %3672 = vmatpush1.msra.mxu0 %v3637
    %3673 = vmatprep.subr.mxu0 0.0
    %3674 = vmatpush1.msra.mxu0 %v3638
    %3675 = vmatprep.subr.mxu0 0.0
    %3676 = vmatpush1.msra.mxu0 %v3639
    %3677 = vmatprep.subr.mxu0 0.0
    %3678 = vmatpush1.msra.mxu0 %v3640
    %3679 = vmatprep.subr.mxu0 0.0
    %3680 = vmatpush1.msra.mxu0 %v3641
    %3681 = vmatprep.subr.mxu0 0.0
    %3682 = vmatpush1.msra.mxu0 0.0
    %3683 = vmatprep.subr.mxu0 0.0
    %3684 = vmatpush1.msra.mxu0 0.0
    %3685 = vmatprep.subr.mxu0 0.0
    %3686 = vmatpush1.msra.mxu0 0.0
    %3687 = vmatprep.subr.mxu0 0.0
    %3688 = vmatpush1.msra.mxu0 0.0
    %3689 = vmatprep.subr.mxu0 0.0
    %3690 = vmatpush1.msra.mxu0 0.0
    %3691 = vmatprep.subr.mxu0 0.0
    %3692 = vmatpush1.msra.mxu0 0.0
    %3693 = vmatprep.subr.mxu0 0.0
    %3694 = vmatpush1.msra.mxu0 0.0
    %3695 = vmatprep.subr.mxu0 0.0
    %3696 = vmatpush1.msra.mxu0 0.0
    %3697 = vmatprep.subr.mxu0 0.0
    %3698 = vmatpush1.msra.mxu0 0.0
    %3699 = vmatprep.subr.mxu0 0.0
    %3700 = vmatpush1.msra.mxu0 0.0
    %3701 = vmatprep.subr.mxu0 0.0
    %3702 = vmatpush1.msra.mxu0 0.0
    %3703 = vmatprep.subr.mxu0 0.0
    %3704 = vmatpush1.msra.mxu0 0.0
    %3705 = vmatprep.subr.mxu0 0.0
    %3706 = vmatpush1.msra.mxu0 0.0
    %3707 = vmatprep.subr.mxu0 0.0
    %3708 = vmatpush1.msra.mxu0 0.0
    %3709 = vmatprep.subr.mxu0 0.0
    %3710 = vmatpush1.msra.mxu0 0.0
    %3711 = vmatprep.subr.mxu0 0.0
    %3712 = vmatpush1.msra.mxu0 0.0
    %3713 = vmatprep.mubr.f32.mxu0 0.0
    %3714 = vmatmul.mubr.f32.gmra.mrb[0].mxu0 %v3560
    %v3715 = vpop.f32.mrb[0].mxu0
    %v3716 = vadd.f32 %v3647, %v3715
    %v3717 = vpop.f32.mrb[0].mxu0
    %3718 = vmatprep.mubr.f32.mxu0 0.0
    %3719 = vmatmul.mubr.f32.gmra.mrb[0].mxu0 %v3561
    %v3720 = vpop.f32.mrb[0].mxu0
    %v3721 = vadd.f32 %v3647, %v3720
    %v3722 = vpop.f32.mrb[0].mxu0
    %3723 = vmatprep.mubr.f32.mxu0 0.0
    %3724 = vmatmul.mubr.f32.gmra.mrb[0].mxu0 %v3562
    %v3725 = vpop.f32.mrb[0].mxu0
    %v3726 = vadd.f32 %v3647, %v3725
    %v3727 = vpop.f32.mrb[0].mxu0
    %3728 = vmatprep.mubr.f32.mxu0 0.0
    %3729 = vmatmul.mubr.f32.gmra.mrb[0].mxu0 %v3563
    %v3730 = vpop.f32.mrb[0].mxu0
    %v3731 = vadd.f32 %v3647, %v3730
    %v3732 = vpop.f32.mrb[0].mxu0
    %3733 = vmatprep.mubr.f32.mxu0 0.0
    %3734 = vmatmul.mubr.f32.gmra.mrb[0].mxu0 %v3564
    %v3735 = vpop.f32.mrb[0].mxu0
    %v3736 = vadd.f32 %v3647, %v3735
    %v3737 = vpop.f32.mrb[0].mxu0
    %3738 = vmatprep.mubr.f32.mxu0 0.0
    %3739 = vmatmul.mubr.f32.gmra.mrb[0].mxu0 %v3565
    %v3740 = vpop.f32.mrb[0].mxu0
    %v3741 = vadd.f32 %v3647, %v3740
    %v3742 = vpop.f32.mrb[0].mxu0
    %3743 = vmatprep.mubr.f32.mxu0 0.0
    %3744 = vmatmul.mubr.f32.gmra.mrb[0].mxu0 %v3566
    %v3745 = vpop.f32.mrb[0].mxu0
    %v3746 = vadd.f32 %v3647, %v3745
    %v3747 = vpop.f32.mrb[0].mxu0
    %3748 = vmatprep.mubr.f32.mxu0 0.0
    %3749 = vmatmul.mubr.f32.gmra.mrb[0].mxu0 %v3567
    %v3750 = vpop.f32.mrb[0].mxu0
    %v3751 = vadd.f32 %v3647, %v3750
    %v3752 = vpop.f32.mrb[0].mxu0
    %3753 = vmatprep.mubr.f32.mxu0 0.0
    %3754 = vmatmul.mubr.f32.gmra.mrb[0].mxu0 %v3568
    %v3755 = vpop.f32.mrb[0].mxu0
    %v3756 = vadd.f32 %v3647, %v3755
    %v3757 = vpop.f32.mrb[0].mxu0
    %3758 = vmatprep.mubr.f32.mxu0 0.0
    %3759 = vmatmul.mubr.f32.gmra.mrb[0].mxu0 %v3569
    %v3760 = vpop.f32.mrb[0].mxu0
    %v3761 = vadd.f32 %v3647, %v3760
    %v3762 = vpop.f32.mrb[0].mxu0
    %3763 = vmatprep.mubr.f32.mxu0 0.0
    %3764 = vmatmul.mubr.f32.gmra.mrb[0].mxu0 %v3570
    %v3765 = vpop.f32.mrb[0].mxu0
    %v3766 = vadd.f32 %v3647, %v3765
    %v3767 = vpop.f32.mrb[0].mxu0
    %3768 = vmatprep.mubr.f32.mxu0 0.0
    %3769 = vmatmul.mubr.f32.gmra.mrb[0].mxu0 %v3571
    %v3770 = vpop.f32.mrb[0].mxu0
    %v3771 = vadd.f32 %v3647, %v3770
    %v3772 = vpop.f32.mrb[0].mxu0
    %3773 = vmatprep.mubr.f32.mxu0 0.0
    %3774 = vmatmul.mubr.f32.gmra.mrb[0].mxu0 %v3572
    %v3775 = vpop.f32.mrb[0].mxu0
    %v3776 = vadd.f32 %v3647, %v3775
    %v3777 = vpop.f32.mrb[0].mxu0
    %3778 = vmatprep.mubr.f32.mxu0 0.0
    %3779 = vmatmul.mubr.f32.gmra.mrb[0].mxu0 %v3573
    %v3780 = vpop.f32.mrb[0].mxu0
    %v3781 = vadd.f32 %v3647, %v3780
    %v3782 = vpop.f32.mrb[0].mxu0
    %3783 = vmatprep.mubr.f32.mxu0 0.0
    %3784 = vmatmul.mubr.f32.gmra.mrb[0].mxu0 %v3574
    %v3785 = vpop.f32.mrb[0].mxu0
    %v3786 = vadd.f32 %v3647, %v3785
    %v3787 = vpop.f32.mrb[0].mxu0
    %3788 = vmatprep.mubr.f32.mxu0 0.0
    %3789 = vmatmul.mubr.f32.gmra.mrb[0].mxu0 %v3575
    %v3790 = vpop.f32.mrb[0].mxu0
    %v3791 = vadd.f32 %v3647, %v3790
    %v3792 = vpop.f32.mrb[0].mxu0
    %3793 = vmatprep.mubr.f32.mxu0 0.0
    %3794 = vmatmul.mubr.f32.gmra.mrb[0].mxu0 %v3576
    %v3795 = vpop.f32.mrb[0].mxu0
    %v3796 = vadd.f32 %v3647, %v3795
    %v3797 = vpop.f32.mrb[0].mxu0
    %3798 = vmatprep.mubr.f32.mxu0 0.0
    %3799 = vmatmul.mubr.f32.gmra.mrb[0].mxu0 %v3577
    %v3800 = vpop.f32.mrb[0].mxu0
    %v3801 = vadd.f32 %v3647, %v3800
    %v3802 = vpop.f32.mrb[0].mxu0
    %3803 = vmatprep.mubr.f32.mxu0 0.0
    %3804 = vmatmul.mubr.f32.gmra.mrb[0].mxu0 %v3578
    %v3805 = vpop.f32.mrb[0].mxu0
    %v3806 = vadd.f32 %v3647, %v3805
    %v3807 = vpop.f32.mrb[0].mxu0
    %3808 = vmatprep.mubr.f32.mxu0 0.0
    %3809 = vmatmul.mubr.f32.gmra.mrb[0].mxu0 %v3579
    %v3810 = vpop.f32.mrb[0].mxu0
    %v3811 = vadd.f32 %v3647, %v3810
    %v3812 = vpop.f32.mrb[0].mxu0
    %3813 = vmatprep.mubr.f32.mxu0 0.0
    %3814 = vmatmul.mubr.f32.gmra.mrb[0].mxu0 %v3580
    %v3815 = vpop.f32.mrb[0].mxu0
    %v3816 = vadd.f32 %v3647, %v3815
    %v3817 = vpop.f32.mrb[0].mxu0
    %3818 = vmatprep.mubr.f32.mxu0 0.0
    %3819 = vmatmul.mubr.f32.gmra.mrb[0].mxu0 %v3581
    %v3820 = vpop.f32.mrb[0].mxu0
    %v3821 = vadd.f32 %v3647, %v3820
    %v3822 = vpop.f32.mrb[0].mxu0
    %3823 = vmatprep.mubr.f32.mxu0 0.0
    %3824 = vmatmul.mubr.f32.gmra.mrb[0].mxu0 %v3582
    %v3825 = vpop.f32.mrb[0].mxu0
    %v3826 = vadd.f32 %v3647, %v3825
    %v3827 = vpop.f32.mrb[0].mxu0
    %3828 = vmatprep.mubr.f32.mxu0 0.0
    %3829 = vmatmul.mubr.f32.gmra.mrb[0].mxu0 %v3583
    %v3830 = vpop.f32.mrb[0].mxu0
    %v3831 = vadd.f32 %v3647, %v3830
    %v3832 = vpop.f32.mrb[0].mxu0
    %3833 = vmatprep.mubr.f32.mxu0 0.0
    %3834 = vmatmul.mubr.f32.gmra.mrb[0].mxu0 %v3584
    %v3835 = vpop.f32.mrb[0].mxu0
    %v3836 = vadd.f32 %v3647, %v3835
    %v3837 = vpop.f32.mrb[0].mxu0
    %3838 = vmatprep.mubr.f32.mxu0 0.0
    %3839 = vmatmul.mubr.f32.gmra.mrb[0].mxu0 %v3585
    %v3840 = vpop.f32.mrb[0].mxu0
    %v3841 = vadd.f32 %v3647, %v3840
    %v3842 = vpop.f32.mrb[0].mxu0
    %3843 = vmatprep.mubr.f32.mxu0 0.0
    %3844 = vmatmul.mubr.f32.gmra.mrb[0].mxu0 %v3586
    %v3845 = vpop.f32.mrb[0].mxu0
    %v3846 = vadd.f32 %v3647, %v3845
    %v3847 = vpop.f32.mrb[0].mxu0
    %3848 = vmatprep.mubr.f32.mxu0 0.0
    %3849 = vmatmul.mubr.f32.gmra.mrb[0].mxu0 %v3587
    %v3850 = vpop.f32.mrb[0].mxu0
    %v3851 = vadd.f32 %v3647, %v3850
    %v3852 = vpop.f32.mrb[0].mxu0
    %3853 = vmatprep.mubr.f32.mxu0 0.0
    %3854 = vmatmul.mubr.f32.gmra.mrb[0].mxu0 %v3588
    %v3855 = vpop.f32.mrb[0].mxu0
    %v3856 = vadd.f32 %v3647, %v3855
    %v3857 = vpop.f32.mrb[0].mxu0
    %3858 = vmatprep.mubr.f32.mxu0 0.0
    %3859 = vmatmul.mubr.f32.gmra.mrb[0].mxu0 %v3589
    %v3860 = vpop.f32.mrb[0].mxu0
    %v3861 = vadd.f32 %v3647, %v3860
    %v3862 = vpop.f32.mrb[0].mxu0
    %3863 = vmatprep.mubr.f32.mxu0 0.0
    %3864 = vmatmul.mubr.f32.gmra.mrb[0].mxu0 %v3590
    %v3865 = vpop.f32.mrb[0].mxu0
    %v3866 = vadd.f32 %v3647, %v3865
    %v3867 = vpop.f32.mrb[0].mxu0
    %3868 = vmatprep.mubr.f32.mxu0 0.0
    %3869 = vmatmul.mubr.f32.gmra.mrb[0].mxu0 %v3591
    %v3870 = vpop.f32.mrb[0].mxu0
    %v3871 = vadd.f32 %v3647, %v3870
    %v3872 = vpop.f32.mrb[0].mxu0
    %3873 = vdwg.mxu0
    %v3874 = vmul.f32 %v3716, %v392
    %v3875 = vmul.f32 %v3721, %v392
    %v3876 = vmul.f32 %v3726, %v392
    %v3877 = vmul.f32 %v3731, %v392
    %v3878 = vmul.f32 %v3736, %v392
    %v3879 = vmul.f32 %v3741, %v392
    %v3880 = vmul.f32 %v3746, %v392
    %v3881 = vmul.f32 %v3751, %v392
    %v3882 = vmul.f32 %v3756, %v392
    %v3883 = vmul.f32 %v3761, %v392
    %v3884 = vmul.f32 %v3766, %v392
    %v3885 = vmul.f32 %v3771, %v392
    %v3886 = vmul.f32 %v3776, %v392
    %v3887 = vmul.f32 %v3781, %v392
    %v3888 = vmul.f32 %v3786, %v392
    %v3889 = vmul.f32 %v3791, %v392
    %v3890 = vmul.f32 %v3796, %v392
    %v3891 = vmul.f32 %v3801, %v392
    %v3892 = vmul.f32 %v3806, %v392
    %v3893 = vmul.f32 %v3811, %v392
    %v3894 = vmul.f32 %v3816, %v392
    %v3895 = vmul.f32 %v3821, %v392
    %v3896 = vmul.f32 %v3826, %v392
    %v3897 = vmul.f32 %v3831, %v392
    %v3898 = vmul.f32 %v3836, %v392
    %v3899 = vmul.f32 %v3841, %v392
    %v3900 = vmul.f32 %v3846, %v392
    %v3901 = vmul.f32 %v3851, %v392
    %v3902 = vmul.f32 %v3856, %v392
    %v3903 = vmul.f32 %v3861, %v392
    %v3904 = vmul.f32 %v3866, %v392
    %v3905 = vmul.f32 %v3871, %v392
    %v3906 = vtanh.pop %v3874
    %v3907 = vtanh.pop %v3875
    %v3908 = vtanh.pop %v3876
    %v3909 = vtanh.pop %v3877
    %v3910 = vtanh.pop %v3878
    %v3911 = vtanh.pop %v3879
    %v3912 = vtanh.pop %v3880
    %v3913 = vtanh.pop %v3881
    %v3914 = vtanh.pop %v3882
    %v3915 = vtanh.pop %v3883
    %v3916 = vtanh.pop %v3884
    %v3917 = vtanh.pop %v3885
    %v3918 = vtanh.pop %v3886
    %v3919 = vtanh.pop %v3887
    %v3920 = vtanh.pop %v3888
    %v3921 = vtanh.pop %v3889
    %v3922 = vtanh.pop %v3890
    %v3923 = vtanh.pop %v3891
    %v3924 = vtanh.pop %v3892
    %v3925 = vtanh.pop %v3893
    %v3926 = vtanh.pop %v3894
    %v3927 = vtanh.pop %v3895
    %v3928 = vtanh.pop %v3896
    %v3929 = vtanh.pop %v3897
    %v3930 = vtanh.pop %v3898
    %v3931 = vtanh.pop %v3899
    %v3932 = vtanh.pop %v3900
    %v3933 = vtanh.pop %v3901
    %v3934 = vtanh.pop %v3902
    %v3935 = vtanh.pop %v3903
    %v3936 = vtanh.pop %v3904
    %v3937 = vtanh.pop %v3905
    %v3938 = vmul.f32 %v3716, %v3906
    %v3939 = vmul.f32 %v3721, %v3907
    %v3940 = vmul.f32 %v3726, %v3908
    %v3941 = vmul.f32 %v3731, %v3909
    %v3942 = vmul.f32 %v3736, %v3910
    %v3943 = vmul.f32 %v3741, %v3911
    %v3944 = vmul.f32 %v3746, %v3912
    %v3945 = vmul.f32 %v3751, %v3913
    %v3946 = vmul.f32 %v3756, %v3914
    %v3947 = vmul.f32 %v3761, %v3915
    %v3948 = vmul.f32 %v3766, %v3916
    %v3949 = vmul.f32 %v3771, %v3917
    %v3950 = vmul.f32 %v3776, %v3918
    %v3951 = vmul.f32 %v3781, %v3919
    %v3952 = vmul.f32 %v3786, %v3920
    %v3953 = vmul.f32 %v3791, %v3921
    %v3954 = vmul.f32 %v3796, %v3922
    %v3955 = vmul.f32 %v3801, %v3923
    %v3956 = vmul.f32 %v3806, %v3924
    %v3957 = vmul.f32 %v3811, %v3925
    %v3958 = vmul.f32 %v3816, %v3926
    %v3959 = vmul.f32 %v3821, %v3927
    %v3960 = vmul.f32 %v3826, %v3928
    %v3961 = vmul.f32 %v3831, %v3929
    %v3962 = vmul.f32 %v3836, %v3930
    %v3963 = vmul.f32 %v3841, %v3931
    %v3964 = vmul.f32 %v3846, %v3932
    %v3965 = vmul.f32 %v3851, %v3933
    %v3966 = vmul.f32 %v3856, %v3934
    %v3967 = vmul.f32 %v3861, %v3935
    %v3968 = vmul.f32 %v3866, %v3936
    %v3969 = vmul.f32 %v3871, %v3937
    %v3970 = vadd.f32 %v3938, %v3716
    %v3971 = vadd.f32 %v3939, %v3721
    %v3972 = vadd.f32 %v3940, %v3726
    %v3973 = vadd.f32 %v3941, %v3731
    %v3974 = vadd.f32 %v3942, %v3736
    %v3975 = vadd.f32 %v3943, %v3741
    %v3976 = vadd.f32 %v3944, %v3746
    %v3977 = vadd.f32 %v3945, %v3751
    %v3978 = vadd.f32 %v3946, %v3756
    %v3979 = vadd.f32 %v3947, %v3761
    %v3980 = vadd.f32 %v3948, %v3766
    %v3981 = vadd.f32 %v3949, %v3771
    %v3982 = vadd.f32 %v3950, %v3776
    %v3983 = vadd.f32 %v3951, %v3781
    %v3984 = vadd.f32 %v3952, %v3786
    %v3985 = vadd.f32 %v3953, %v3791
    %v3986 = vadd.f32 %v3954, %v3796
    %v3987 = vadd.f32 %v3955, %v3801
    %v3988 = vadd.f32 %v3956, %v3806
    %v3989 = vadd.f32 %v3957, %v3811
    %v3990 = vadd.f32 %v3958, %v3816
    %v3991 = vadd.f32 %v3959, %v3821
    %v3992 = vadd.f32 %v3960, %v3826
    %v3993 = vadd.f32 %v3961, %v3831
    %v3994 = vadd.f32 %v3962, %v3836
    %v3995 = vadd.f32 %v3963, %v3841
    %v3996 = vadd.f32 %v3964, %v3846
    %v3997 = vadd.f32 %v3965, %v3851
    %v3998 = vadd.f32 %v3966, %v3856
    %v3999 = vadd.f32 %v3967, %v3861
    %v4000 = vadd.f32 %v3968, %v3866
    %v4001 = vadd.f32 %v3969, %v3871
    %v4002 = vld [vmem:[%s5] sm:$0xff]
    %v4003 = vld [vmem:[%s5 + $0x8] sm:$0xff]
    %v4004 = vld [vmem:[%s5 + $0x10] sm:$0xff]
    %v4005 = vld [vmem:[%s5 + $0x18] sm:$0xff]
    %v4006 = vld [vmem:[%s5 + $0x20] sm:$0xff]
    %v4007 = vld [vmem:[%s5 + $0x28] sm:$0xff]
    %v4008 = vld [vmem:[%s5 + $0x30] sm:$0xff]
    %v4009 = vld [vmem:[%s5 + $0x38] sm:$0xff]
    %v4010 = vld [vmem:[%s6] sm:$0x1]
    %v4012 = vlaneseq
    %v4013 = vshrl.u32 %v4012, 7
    %v4014 = vsub.s32 0, %v4013
    %v4015 = vrot.slane %v4010, %v4014
    %v4018 = vsel %vm536, %v3970, 0
    %v4021 = vsel %vm536, %v3971, 0
    %v4024 = vsel %vm536, %v3972, 0
    %v4027 = vsel %vm536, %v3973, 0
    %v4030 = vsel %vm536, %v3974, 0
    %v4033 = vsel %vm536, %v3975, 0
    %v4036 = vsel %vm536, %v3976, 0
    %v4039 = vsel %vm536, %v3977, 0
    %v4042 = vsel %vm536, %v3978, 0
    %v4045 = vsel %vm536, %v3979, 0
    %v4048 = vsel %vm536, %v3980, 0
    %v4051 = vsel %vm536, %v3981, 0
    %v4054 = vsel %vm536, %v3982, 0
    %v4057 = vsel %vm536, %v3983, 0
    %v4060 = vsel %vm536, %v3984, 0
    %v4063 = vsel %vm536, %v3985, 0
    %v4066 = vsel %vm536, %v3986, 0
    %v4069 = vsel %vm536, %v3987, 0
    %v4072 = vsel %vm536, %v3988, 0
    %v4075 = vsel %vm536, %v3989, 0
    %v4078 = vsel %vm536, %v3990, 0
    %v4081 = vsel %vm536, %v3991, 0
    %v4084 = vsel %vm536, %v3992, 0
    %v4087 = vsel %vm536, %v3993, 0
    %v4090 = vsel %vm536, %v3994, 0
    %v4093 = vsel %vm536, %v3995, 0
    %v4096 = vsel %vm536, %v3996, 0
    %v4099 = vsel %vm536, %v3997, 0
    %v4102 = vsel %vm536, %v3998, 0
    %v4105 = vsel %vm536, %v3999, 0
    %v4108 = vsel %vm536, %v4000, 0
    %v4111 = vsel %vm536, %v4001, 0
    %4113 = vmatprep.subr.mxu0 0.0
    %4114 = vmatpush1.msra.mxu0 %v4002
    %4115 = vmatprep.subr.mxu0 0.0
    %4116 = vmatpush1.msra.mxu0 %v4003
    %4117 = vmatprep.subr.mxu0 0.0
    %4118 = vmatpush1.msra.mxu0 %v4004
    %4119 = vmatprep.subr.mxu0 0.0
    %4120 = vmatpush1.msra.mxu0 %v4005
    %4121 = vmatprep.subr.mxu0 0.0
    %4122 = vmatpush1.msra.mxu0 %v4006
    %4123 = vmatprep.subr.mxu0 0.0
    %4124 = vmatpush1.msra.mxu0 %v4007
    %4125 = vmatprep.subr.mxu0 0.0
    %4126 = vmatpush1.msra.mxu0 %v4008
    %4127 = vmatprep.subr.mxu0 0.0
    %4128 = vmatpush1.msra.mxu0 %v4009
    %4129 = vmatprep.subr.mxu0 0.0
    %4130 = vmatpush1.msra.mxu0 0.0
    %4131 = vmatprep.subr.mxu0 0.0
    %4132 = vmatpush1.msra.mxu0 0.0
    %4133 = vmatprep.subr.mxu0 0.0
    %4134 = vmatpush1.msra.mxu0 0.0
    %4135 = vmatprep.subr.mxu0 0.0
    %4136 = vmatpush1.msra.mxu0 0.0
    %4137 = vmatprep.subr.mxu0 0.0
    %4138 = vmatpush1.msra.mxu0 0.0
    %4139 = vmatprep.subr.mxu0 0.0
    %4140 = vmatpush1.msra.mxu0 0.0
    %4141 = vmatprep.subr.mxu0 0.0
    %4142 = vmatpush1.msra.mxu0 0.0
    %4143 = vmatprep.subr.mxu0 0.0
    %4144 = vmatpush1.msra.mxu0 0.0
    %4145 = vmatprep.subr.mxu0 0.0
    %4146 = vmatpush1.msra.mxu0 0.0
    %4147 = vmatprep.subr.mxu0 0.0
    %4148 = vmatpush1.msra.mxu0 0.0
    %4149 = vmatprep.subr.mxu0 0.0
    %4150 = vmatpush1.msra.mxu0 0.0
    %4151 = vmatprep.subr.mxu0 0.0
    %4152 = vmatpush1.msra.mxu0 0.0
    %4153 = vmatprep.subr.mxu0 0.0
    %4154 = vmatpush1.msra.mxu0 0.0
    %4155 = vmatprep.subr.mxu0 0.0
    %4156 = vmatpush1.msra.mxu0 0.0
    %4157 = vmatprep.subr.mxu0 0.0
    %4158 = vmatpush1.msra.mxu0 0.0
    %4159 = vmatprep.subr.mxu0 0.0
    %4160 = vmatpush1.msra.mxu0 0.0
    %4161 = vmatprep.subr.mxu0 0.0
    %4162 = vmatpush1.msra.mxu0 0.0
    %4163 = vmatprep.subr.mxu0 0.0
    %4164 = vmatpush1.msra.mxu0 0.0
    %4165 = vmatprep.subr.mxu0 0.0
    %4166 = vmatpush1.msra.mxu0 0.0
    %4167 = vmatprep.subr.mxu0 0.0
    %4168 = vmatpush1.msra.mxu0 0.0
    %4169 = vmatprep.subr.mxu0 0.0
    %4170 = vmatpush1.msra.mxu0 0.0
    %4171 = vmatprep.subr.mxu0 0.0
    %4172 = vmatpush1.msra.mxu0 0.0
    %4173 = vmatprep.subr.mxu0 0.0
    %4174 = vmatpush1.msra.mxu0 0.0
    %4175 = vmatprep.subr.mxu0 0.0
    %4176 = vmatpush1.msra.mxu0 0.0
    %4177 = vmatprep.mubr.f32.mxu0 0.0
    %4178 = vmatmul.mubr.f32.gmra.mrb[0].mxu0 %v4018
    %v4179 = vpop.f32.mrb[0].mxu0
    %v4180 = vadd.f32 %v4015, %v4179
    %v4181 = vpop.f32.mrb[0].mxu0
    %4182 = vmatprep.mubr.f32.mxu0 0.0
    %4183 = vmatmul.mubr.f32.gmra.mrb[0].mxu0 %v4021
    %v4184 = vpop.f32.mrb[0].mxu0
    %v4185 = vadd.f32 %v4015, %v4184
    %v4186 = vpop.f32.mrb[0].mxu0
    %4187 = vmatprep.mubr.f32.mxu0 0.0
    %4188 = vmatmul.mubr.f32.gmra.mrb[0].mxu0 %v4024
    %v4189 = vpop.f32.mrb[0].mxu0
    %v4190 = vadd.f32 %v4015, %v4189
    %v4191 = vpop.f32.mrb[0].mxu0
    %4192 = vmatprep.mubr.f32.mxu0 0.0
    %4193 = vmatmul.mubr.f32.gmra.mrb[0].mxu0 %v4027
    %v4194 = vpop.f32.mrb[0].mxu0
    %v4195 = vadd.f32 %v4015, %v4194
    %v4196 = vpop.f32.mrb[0].mxu0
    %4197 = vmatprep.mubr.f32.mxu0 0.0
    %4198 = vmatmul.mubr.f32.gmra.mrb[0].mxu0 %v4030
    %v4199 = vpop.f32.mrb[0].mxu0
    %v4200 = vadd.f32 %v4015, %v4199
    %v4201 = vpop.f32.mrb[0].mxu0
    %4202 = vmatprep.mubr.f32.mxu0 0.0
    %4203 = vmatmul.mubr.f32.gmra.mrb[0].mxu0 %v4033
    %v4204 = vpop.f32.mrb[0].mxu0
    %v4205 = vadd.f32 %v4015, %v4204
    %v4206 = vpop.f32.mrb[0].mxu0
    %4207 = vmatprep.mubr.f32.mxu0 0.0
    %4208 = vmatmul.mubr.f32.gmra.mrb[0].mxu0 %v4036
    %v4209 = vpop.f32.mrb[0].mxu0
    %v4210 = vadd.f32 %v4015, %v4209
    %v4211 = vpop.f32.mrb[0].mxu0
    %4212 = vmatprep.mubr.f32.mxu0 0.0
    %4213 = vmatmul.mubr.f32.gmra.mrb[0].mxu0 %v4039
    %v4214 = vpop.f32.mrb[0].mxu0
    %v4215 = vadd.f32 %v4015, %v4214
    %v4216 = vpop.f32.mrb[0].mxu0
    %4217 = vmatprep.mubr.f32.mxu0 0.0
    %4218 = vmatmul.mubr.f32.gmra.mrb[0].mxu0 %v4042
    %v4219 = vpop.f32.mrb[0].mxu0
    %v4220 = vadd.f32 %v4015, %v4219
    %v4221 = vpop.f32.mrb[0].mxu0
    %4222 = vmatprep.mubr.f32.mxu0 0.0
    %4223 = vmatmul.mubr.f32.gmra.mrb[0].mxu0 %v4045
    %v4224 = vpop.f32.mrb[0].mxu0
    %v4225 = vadd.f32 %v4015, %v4224
    %v4226 = vpop.f32.mrb[0].mxu0
    %4227 = vmatprep.mubr.f32.mxu0 0.0
    %4228 = vmatmul.mubr.f32.gmra.mrb[0].mxu0 %v4048
    %v4229 = vpop.f32.mrb[0].mxu0
    %v4230 = vadd.f32 %v4015, %v4229
    %v4231 = vpop.f32.mrb[0].mxu0
    %4232 = vmatprep.mubr.f32.mxu0 0.0
    %4233 = vmatmul.mubr.f32.gmra.mrb[0].mxu0 %v4051
    %v4234 = vpop.f32.mrb[0].mxu0
    %v4235 = vadd.f32 %v4015, %v4234
    %v4236 = vpop.f32.mrb[0].mxu0
    %4237 = vmatprep.mubr.f32.mxu0 0.0
    %4238 = vmatmul.mubr.f32.gmra.mrb[0].mxu0 %v4054
    %v4239 = vpop.f32.mrb[0].mxu0
    %v4240 = vadd.f32 %v4015, %v4239
    %v4241 = vpop.f32.mrb[0].mxu0
    %4242 = vmatprep.mubr.f32.mxu0 0.0
    %4243 = vmatmul.mubr.f32.gmra.mrb[0].mxu0 %v4057
    %v4244 = vpop.f32.mrb[0].mxu0
    %v4245 = vadd.f32 %v4015, %v4244
    %v4246 = vpop.f32.mrb[0].mxu0
    %4247 = vmatprep.mubr.f32.mxu0 0.0
    %4248 = vmatmul.mubr.f32.gmra.mrb[0].mxu0 %v4060
    %v4249 = vpop.f32.mrb[0].mxu0
    %v4250 = vadd.f32 %v4015, %v4249
    %v4251 = vpop.f32.mrb[0].mxu0
    %4252 = vmatprep.mubr.f32.mxu0 0.0
    %4253 = vmatmul.mubr.f32.gmra.mrb[0].mxu0 %v4063
    %v4254 = vpop.f32.mrb[0].mxu0
    %v4255 = vadd.f32 %v4015, %v4254
    %v4256 = vpop.f32.mrb[0].mxu0
    %4257 = vmatprep.mubr.f32.mxu0 0.0
    %4258 = vmatmul.mubr.f32.gmra.mrb[0].mxu0 %v4066
    %v4259 = vpop.f32.mrb[0].mxu0
    %v4260 = vadd.f32 %v4015, %v4259
    %v4261 = vpop.f32.mrb[0].mxu0
    %4262 = vmatprep.mubr.f32.mxu0 0.0
    %4263 = vmatmul.mubr.f32.gmra.mrb[0].mxu0 %v4069
    %v4264 = vpop.f32.mrb[0].mxu0
    %v4265 = vadd.f32 %v4015, %v4264
    %v4266 = vpop.f32.mrb[0].mxu0
    %4267 = vmatprep.mubr.f32.mxu0 0.0
    %4268 = vmatmul.mubr.f32.gmra.mrb[0].mxu0 %v4072
    %v4269 = vpop.f32.mrb[0].mxu0
    %v4270 = vadd.f32 %v4015, %v4269
    %v4271 = vpop.f32.mrb[0].mxu0
    %4272 = vmatprep.mubr.f32.mxu0 0.0
    %4273 = vmatmul.mubr.f32.gmra.mrb[0].mxu0 %v4075
    %v4274 = vpop.f32.mrb[0].mxu0
    %v4275 = vadd.f32 %v4015, %v4274
    %v4276 = vpop.f32.mrb[0].mxu0
    %4277 = vmatprep.mubr.f32.mxu0 0.0
    %4278 = vmatmul.mubr.f32.gmra.mrb[0].mxu0 %v4078
    %v4279 = vpop.f32.mrb[0].mxu0
    %v4280 = vadd.f32 %v4015, %v4279
    %v4281 = vpop.f32.mrb[0].mxu0
    %4282 = vmatprep.mubr.f32.mxu0 0.0
    %4283 = vmatmul.mubr.f32.gmra.mrb[0].mxu0 %v4081
    %v4284 = vpop.f32.mrb[0].mxu0
    %v4285 = vadd.f32 %v4015, %v4284
    %v4286 = vpop.f32.mrb[0].mxu0
    %4287 = vmatprep.mubr.f32.mxu0 0.0
    %4288 = vmatmul.mubr.f32.gmra.mrb[0].mxu0 %v4084
    %v4289 = vpop.f32.mrb[0].mxu0
    %v4290 = vadd.f32 %v4015, %v4289
    %v4291 = vpop.f32.mrb[0].mxu0
    %4292 = vmatprep.mubr.f32.mxu0 0.0
    %4293 = vmatmul.mubr.f32.gmra.mrb[0].mxu0 %v4087
    %v4294 = vpop.f32.mrb[0].mxu0
    %v4295 = vadd.f32 %v4015, %v4294
    %v4296 = vpop.f32.mrb[0].mxu0
    %4297 = vmatprep.mubr.f32.mxu0 0.0
    %4298 = vmatmul.mubr.f32.gmra.mrb[0].mxu0 %v4090
    %v4299 = vpop.f32.mrb[0].mxu0
    %v4300 = vadd.f32 %v4015, %v4299
    %v4301 = vpop.f32.mrb[0].mxu0
    %4302 = vmatprep.mubr.f32.mxu0 0.0
    %4303 = vmatmul.mubr.f32.gmra.mrb[0].mxu0 %v4093
    %v4304 = vpop.f32.mrb[0].mxu0
    %v4305 = vadd.f32 %v4015, %v4304
    %v4306 = vpop.f32.mrb[0].mxu0
    %4307 = vmatprep.mubr.f32.mxu0 0.0
    %4308 = vmatmul.mubr.f32.gmra.mrb[0].mxu0 %v4096
    %v4309 = vpop.f32.mrb[0].mxu0
    %v4310 = vadd.f32 %v4015, %v4309
    %v4311 = vpop.f32.mrb[0].mxu0
    %4312 = vmatprep.mubr.f32.mxu0 0.0
    %4313 = vmatmul.mubr.f32.gmra.mrb[0].mxu0 %v4099
    %v4314 = vpop.f32.mrb[0].mxu0
    %v4315 = vadd.f32 %v4015, %v4314
    %v4316 = vpop.f32.mrb[0].mxu0
    %4317 = vmatprep.mubr.f32.mxu0 0.0
    %4318 = vmatmul.mubr.f32.gmra.mrb[0].mxu0 %v4102
    %v4319 = vpop.f32.mrb[0].mxu0
    %v4320 = vadd.f32 %v4015, %v4319
    %v4321 = vpop.f32.mrb[0].mxu0
    %4322 = vmatprep.mubr.f32.mxu0 0.0
    %4323 = vmatmul.mubr.f32.gmra.mrb[0].mxu0 %v4105
    %v4324 = vpop.f32.mrb[0].mxu0
    %v4325 = vadd.f32 %v4015, %v4324
    %v4326 = vpop.f32.mrb[0].mxu0
    %4327 = vmatprep.mubr.f32.mxu0 0.0
    %4328 = vmatmul.mubr.f32.gmra.mrb[0].mxu0 %v4108
    %v4329 = vpop.f32.mrb[0].mxu0
    %v4330 = vadd.f32 %v4015, %v4329
    %v4331 = vpop.f32.mrb[0].mxu0
    %4332 = vmatprep.mubr.f32.mxu0 0.0
    %4333 = vmatmul.mubr.f32.gmra.mrb[0].mxu0 %v4111
    %v4334 = vpop.f32.mrb[0].mxu0
    %v4335 = vadd.f32 %v4015, %v4334
    %v4336 = vpop.f32.mrb[0].mxu0
    %4337 = vdwg.mxu0
    %v4338 = vmul.f32 %v4180, %v858
    %v4339 = vmul.f32 %v4185, %v858
    %v4340 = vmul.f32 %v4190, %v858
    %v4341 = vmul.f32 %v4195, %v858
    %v4342 = vmul.f32 %v4200, %v858
    %v4343 = vmul.f32 %v4205, %v858
    %v4344 = vmul.f32 %v4210, %v858
    %v4345 = vmul.f32 %v4215, %v858
    %v4346 = vmul.f32 %v4220, %v858
    %v4347 = vmul.f32 %v4225, %v858
    %v4348 = vmul.f32 %v4230, %v858
    %v4349 = vmul.f32 %v4235, %v858
    %v4350 = vmul.f32 %v4240, %v858
    %v4351 = vmul.f32 %v4245, %v858
    %v4352 = vmul.f32 %v4250, %v858
    %v4353 = vmul.f32 %v4255, %v858
    %v4354 = vmul.f32 %v4260, %v858
    %v4355 = vmul.f32 %v4265, %v858
    %v4356 = vmul.f32 %v4270, %v858
    %v4357 = vmul.f32 %v4275, %v858
    %v4358 = vmul.f32 %v4280, %v858
    %v4359 = vmul.f32 %v4285, %v858
    %v4360 = vmul.f32 %v4290, %v858
    %v4361 = vmul.f32 %v4295, %v858
    %v4362 = vmul.f32 %v4300, %v858
    %v4363 = vmul.f32 %v4305, %v858
    %v4364 = vmul.f32 %v4310, %v858
    %v4365 = vmul.f32 %v4315, %v858
    %v4366 = vmul.f32 %v4320, %v858
    %v4367 = vmul.f32 %v4325, %v858
    %v4368 = vmul.f32 %v4330, %v858
    %v4369 = vmul.f32 %v4335, %v858
    %v4370 = vtanh.pop %v4338
    %v4371 = vtanh.pop %v4339
    %v4372 = vtanh.pop %v4340
    %v4373 = vtanh.pop %v4341
    %v4374 = vtanh.pop %v4342
    %v4375 = vtanh.pop %v4343
    %v4376 = vtanh.pop %v4344
    %v4377 = vtanh.pop %v4345
    %v4378 = vtanh.pop %v4346
    %v4379 = vtanh.pop %v4347
    %v4380 = vtanh.pop %v4348
    %v4381 = vtanh.pop %v4349
    %v4382 = vtanh.pop %v4350
    %v4383 = vtanh.pop %v4351
    %v4384 = vtanh.pop %v4352
    %v4385 = vtanh.pop %v4353
    %v4386 = vtanh.pop %v4354
    %v4387 = vtanh.pop %v4355
    %v4388 = vtanh.pop %v4356
    %v4389 = vtanh.pop %v4357
    %v4390 = vtanh.pop %v4358
    %v4391 = vtanh.pop %v4359
    %v4392 = vtanh.pop %v4360
    %v4393 = vtanh.pop %v4361
    %v4394 = vtanh.pop %v4362
    %v4395 = vtanh.pop %v4363
    %v4396 = vtanh.pop %v4364
    %v4397 = vtanh.pop %v4365
    %v4398 = vtanh.pop %v4366
    %v4399 = vtanh.pop %v4367
    %v4400 = vtanh.pop %v4368
    %v4401 = vtanh.pop %v4369
    %v4402 = vmul.f32 %v4180, %v4370
    %v4403 = vmul.f32 %v4185, %v4371
    %v4404 = vmul.f32 %v4190, %v4372
    %v4405 = vmul.f32 %v4195, %v4373
    %v4406 = vmul.f32 %v4200, %v4374
    %v4407 = vmul.f32 %v4205, %v4375
    %v4408 = vmul.f32 %v4210, %v4376
    %v4409 = vmul.f32 %v4215, %v4377
    %v4410 = vmul.f32 %v4220, %v4378
    %v4411 = vmul.f32 %v4225, %v4379
    %v4412 = vmul.f32 %v4230, %v4380
    %v4413 = vmul.f32 %v4235, %v4381
    %v4414 = vmul.f32 %v4240, %v4382
    %v4415 = vmul.f32 %v4245, %v4383
    %v4416 = vmul.f32 %v4250, %v4384
    %v4417 = vmul.f32 %v4255, %v4385
    %v4418 = vmul.f32 %v4260, %v4386
    %v4419 = vmul.f32 %v4265, %v4387
    %v4420 = vmul.f32 %v4270, %v4388
    %v4421 = vmul.f32 %v4275, %v4389
    %v4422 = vmul.f32 %v4280, %v4390
    %v4423 = vmul.f32 %v4285, %v4391
    %v4424 = vmul.f32 %v4290, %v4392
    %v4425 = vmul.f32 %v4295, %v4393
    %v4426 = vmul.f32 %v4300, %v4394
    %v4427 = vmul.f32 %v4305, %v4395
    %v4428 = vmul.f32 %v4310, %v4396
    %v4429 = vmul.f32 %v4315, %v4397
    %v4430 = vmul.f32 %v4320, %v4398
    %v4431 = vmul.f32 %v4325, %v4399
    %v4432 = vmul.f32 %v4330, %v4400
    %v4433 = vmul.f32 %v4335, %v4401
    %v4434 = vadd.f32 %v4402, %v4180
    %v4435 = vadd.f32 %v4403, %v4185
    %v4436 = vadd.f32 %v4404, %v4190
    %v4437 = vadd.f32 %v4405, %v4195
    %v4438 = vadd.f32 %v4406, %v4200
    %v4439 = vadd.f32 %v4407, %v4205
    %v4440 = vadd.f32 %v4408, %v4210
    %v4441 = vadd.f32 %v4409, %v4215
    %v4442 = vadd.f32 %v4410, %v4220
    %v4443 = vadd.f32 %v4411, %v4225
    %v4444 = vadd.f32 %v4412, %v4230
    %v4445 = vadd.f32 %v4413, %v4235
    %v4446 = vadd.f32 %v4414, %v4240
    %v4447 = vadd.f32 %v4415, %v4245
    %v4448 = vadd.f32 %v4416, %v4250
    %v4449 = vadd.f32 %v4417, %v4255
    %v4450 = vadd.f32 %v4418, %v4260
    %v4451 = vadd.f32 %v4419, %v4265
    %v4452 = vadd.f32 %v4420, %v4270
    %v4453 = vadd.f32 %v4421, %v4275
    %v4454 = vadd.f32 %v4422, %v4280
    %v4455 = vadd.f32 %v4423, %v4285
    %v4456 = vadd.f32 %v4424, %v4290
    %v4457 = vadd.f32 %v4425, %v4295
    %v4458 = vadd.f32 %v4426, %v4300
    %v4459 = vadd.f32 %v4427, %v4305
    %v4460 = vadd.f32 %v4428, %v4310
    %v4461 = vadd.f32 %v4429, %v4315
    %v4462 = vadd.f32 %v4430, %v4320
    %v4463 = vadd.f32 %v4431, %v4325
    %v4464 = vadd.f32 %v4432, %v4330
    %v4465 = vadd.f32 %v4433, %v4335
    %v4466 = vld [vmem:[%s7] sm:$0xff]
    %v4467 = vld [vmem:[%s7 + $0x8] sm:$0xff]
    %v4468 = vld [vmem:[%s7 + $0x10] sm:$0xff]
    %v4469 = vld [vmem:[%s7 + $0x18] sm:$0xff]
    %v4470 = vld [vmem:[%s7 + $0x20] sm:$0xff]
    %v4471 = vld [vmem:[%s7 + $0x28] sm:$0xff]
    %v4472 = vld [vmem:[%s7 + $0x30] sm:$0xff]
    %v4473 = vld [vmem:[%s7 + $0x38] sm:$0xff]
    %v4474 = vld [vmem:[%s8] sm:$0x1]
    %v4476 = vlaneseq
    %v4477 = vshrl.u32 %v4476, 7
    %v4478 = vsub.s32 0, %v4477
    %v4479 = vrot.slane %v4474, %v4478
    %v4482 = vsel %vm536, %v4434, 0
    %v4485 = vsel %vm536, %v4435, 0
    %v4488 = vsel %vm536, %v4436, 0
    %v4491 = vsel %vm536, %v4437, 0
    %v4494 = vsel %vm536, %v4438, 0
    %v4497 = vsel %vm536, %v4439, 0
    %v4500 = vsel %vm536, %v4440, 0
    %v4503 = vsel %vm536, %v4441, 0
    %v4506 = vsel %vm536, %v4442, 0
    %v4509 = vsel %vm536, %v4443, 0
    %v4512 = vsel %vm536, %v4444, 0
    %v4515 = vsel %vm536, %v4445, 0
    %v4518 = vsel %vm536, %v4446, 0
    %v4521 = vsel %vm536, %v4447, 0
    %v4524 = vsel %vm536, %v4448, 0
    %v4527 = vsel %vm536, %v4449, 0
    %v4530 = vsel %vm536, %v4450, 0
    %v4533 = vsel %vm536, %v4451, 0
    %v4536 = vsel %vm536, %v4452, 0
    %v4539 = vsel %vm536, %v4453, 0
    %v4542 = vsel %vm536, %v4454, 0
    %v4545 = vsel %vm536, %v4455, 0
    %v4548 = vsel %vm536, %v4456, 0
    %v4551 = vsel %vm536, %v4457, 0
    %v4554 = vsel %vm536, %v4458, 0
    %v4557 = vsel %vm536, %v4459, 0
    %v4560 = vsel %vm536, %v4460, 0
    %v4563 = vsel %vm536, %v4461, 0
    %v4566 = vsel %vm536, %v4462, 0
    %v4569 = vsel %vm536, %v4463, 0
    %v4572 = vsel %vm536, %v4464, 0
    %v4575 = vsel %vm536, %v4465, 0
    %4577 = vmatprep.subr.mxu0 0.0
    %4578 = vmatpush1.msra.mxu0 %v4466
    %4579 = vmatprep.subr.mxu0 0.0
    %4580 = vmatpush1.msra.mxu0 %v4467
    %4581 = vmatprep.subr.mxu0 0.0
    %4582 = vmatpush1.msra.mxu0 %v4468
    %4583 = vmatprep.subr.mxu0 0.0
    %4584 = vmatpush1.msra.mxu0 %v4469
    %4585 = vmatprep.subr.mxu0 0.0
    %4586 = vmatpush1.msra.mxu0 %v4470
    %4587 = vmatprep.subr.mxu0 0.0
    %4588 = vmatpush1.msra.mxu0 %v4471
    %4589 = vmatprep.subr.mxu0 0.0
    %4590 = vmatpush1.msra.mxu0 %v4472
    %4591 = vmatprep.subr.mxu0 0.0
    %4592 = vmatpush1.msra.mxu0 %v4473
    %4593 = vmatprep.subr.mxu0 0.0
    %4594 = vmatpush1.msra.mxu0 0.0
    %4595 = vmatprep.subr.mxu0 0.0
    %4596 = vmatpush1.msra.mxu0 0.0
    %4597 = vmatprep.subr.mxu0 0.0
    %4598 = vmatpush1.msra.mxu0 0.0
    %4599 = vmatprep.subr.mxu0 0.0
    %4600 = vmatpush1.msra.mxu0 0.0
    %4601 = vmatprep.subr.mxu0 0.0
    %4602 = vmatpush1.msra.mxu0 0.0
    %4603 = vmatprep.subr.mxu0 0.0
    %4604 = vmatpush1.msra.mxu0 0.0
    %4605 = vmatprep.subr.mxu0 0.0
    %4606 = vmatpush1.msra.mxu0 0.0
    %4607 = vmatprep.subr.mxu0 0.0
    %4608 = vmatpush1.msra.mxu0 0.0
    %4609 = vmatprep.subr.mxu0 0.0
    %4610 = vmatpush1.msra.mxu0 0.0
    %4611 = vmatprep.subr.mxu0 0.0
    %4612 = vmatpush1.msra.mxu0 0.0
    %4613 = vmatprep.subr.mxu0 0.0
    %4614 = vmatpush1.msra.mxu0 0.0
    %4615 = vmatprep.subr.mxu0 0.0
    %4616 = vmatpush1.msra.mxu0 0.0
    %4617 = vmatprep.subr.mxu0 0.0
    %4618 = vmatpush1.msra.mxu0 0.0
    %4619 = vmatprep.subr.mxu0 0.0
    %4620 = vmatpush1.msra.mxu0 0.0
    %4621 = vmatprep.subr.mxu0 0.0
    %4622 = vmatpush1.msra.mxu0 0.0
    %4623 = vmatprep.subr.mxu0 0.0
    %4624 = vmatpush1.msra.mxu0 0.0
    %4625 = vmatprep.subr.mxu0 0.0
    %4626 = vmatpush1.msra.mxu0 0.0
    %4627 = vmatprep.subr.mxu0 0.0
    %4628 = vmatpush1.msra.mxu0 0.0
    %4629 = vmatprep.subr.mxu0 0.0
    %4630 = vmatpush1.msra.mxu0 0.0
    %4631 = vmatprep.subr.mxu0 0.0
    %4632 = vmatpush1.msra.mxu0 0.0
    %4633 = vmatprep.subr.mxu0 0.0
    %4634 = vmatpush1.msra.mxu0 0.0
    %4635 = vmatprep.subr.mxu0 0.0
    %4636 = vmatpush1.msra.mxu0 0.0
    %4637 = vmatprep.subr.mxu0 0.0
    %4638 = vmatpush1.msra.mxu0 0.0
    %4639 = vmatprep.subr.mxu0 0.0
    %4640 = vmatpush1.msra.mxu0 0.0
    %4641 = vmatprep.mubr.f32.mxu0 0.0
    %4642 = vmatmul.mubr.f32.gmra.mrb[0].mxu0 %v4482
    %v4643 = vpop.f32.mrb[0].mxu0
    %v4644 = vadd.f32 %v4479, %v4643
    %v4645 = vpop.f32.mrb[0].mxu0
    %4646 = vmatprep.mubr.f32.mxu0 0.0
    %4647 = vmatmul.mubr.f32.gmra.mrb[0].mxu0 %v4485
    %v4648 = vpop.f32.mrb[0].mxu0
    %v4649 = vadd.f32 %v4479, %v4648
    %v4650 = vpop.f32.mrb[0].mxu0
    %4651 = vmatprep.mubr.f32.mxu0 0.0
    %4652 = vmatmul.mubr.f32.gmra.mrb[0].mxu0 %v4488
    %v4653 = vpop.f32.mrb[0].mxu0
    %v4654 = vadd.f32 %v4479, %v4653
    %v4655 = vpop.f32.mrb[0].mxu0
    %4656 = vmatprep.mubr.f32.mxu0 0.0
    %4657 = vmatmul.mubr.f32.gmra.mrb[0].mxu0 %v4491
    %v4658 = vpop.f32.mrb[0].mxu0
    %v4659 = vadd.f32 %v4479, %v4658
    %v4660 = vpop.f32.mrb[0].mxu0
    %4661 = vmatprep.mubr.f32.mxu0 0.0
    %4662 = vmatmul.mubr.f32.gmra.mrb[0].mxu0 %v4494
    %v4663 = vpop.f32.mrb[0].mxu0
    %v4664 = vadd.f32 %v4479, %v4663
    %v4665 = vpop.f32.mrb[0].mxu0
    %4666 = vmatprep.mubr.f32.mxu0 0.0
    %4667 = vmatmul.mubr.f32.gmra.mrb[0].mxu0 %v4497
    %v4668 = vpop.f32.mrb[0].mxu0
    %v4669 = vadd.f32 %v4479, %v4668
    %v4670 = vpop.f32.mrb[0].mxu0
    %4671 = vmatprep.mubr.f32.mxu0 0.0
    %4672 = vmatmul.mubr.f32.gmra.mrb[0].mxu0 %v4500
    %v4673 = vpop.f32.mrb[0].mxu0
    %v4674 = vadd.f32 %v4479, %v4673
    %v4675 = vpop.f32.mrb[0].mxu0
    %4676 = vmatprep.mubr.f32.mxu0 0.0
    %4677 = vmatmul.mubr.f32.gmra.mrb[0].mxu0 %v4503
    %v4678 = vpop.f32.mrb[0].mxu0
    %v4679 = vadd.f32 %v4479, %v4678
    %v4680 = vpop.f32.mrb[0].mxu0
    %4681 = vmatprep.mubr.f32.mxu0 0.0
    %4682 = vmatmul.mubr.f32.gmra.mrb[0].mxu0 %v4506
    %v4683 = vpop.f32.mrb[0].mxu0
    %v4684 = vadd.f32 %v4479, %v4683
    %v4685 = vpop.f32.mrb[0].mxu0
    %4686 = vmatprep.mubr.f32.mxu0 0.0
    %4687 = vmatmul.mubr.f32.gmra.mrb[0].mxu0 %v4509
    %v4688 = vpop.f32.mrb[0].mxu0
    %v4689 = vadd.f32 %v4479, %v4688
    %v4690 = vpop.f32.mrb[0].mxu0
    %4691 = vmatprep.mubr.f32.mxu0 0.0
    %4692 = vmatmul.mubr.f32.gmra.mrb[0].mxu0 %v4512
    %v4693 = vpop.f32.mrb[0].mxu0
    %v4694 = vadd.f32 %v4479, %v4693
    %v4695 = vpop.f32.mrb[0].mxu0
    %4696 = vmatprep.mubr.f32.mxu0 0.0
    %4697 = vmatmul.mubr.f32.gmra.mrb[0].mxu0 %v4515
    %v4698 = vpop.f32.mrb[0].mxu0
    %v4699 = vadd.f32 %v4479, %v4698
    %v4700 = vpop.f32.mrb[0].mxu0
    %4701 = vmatprep.mubr.f32.mxu0 0.0
    %4702 = vmatmul.mubr.f32.gmra.mrb[0].mxu0 %v4518
    %v4703 = vpop.f32.mrb[0].mxu0
    %v4704 = vadd.f32 %v4479, %v4703
    %v4705 = vpop.f32.mrb[0].mxu0
    %4706 = vmatprep.mubr.f32.mxu0 0.0
    %4707 = vmatmul.mubr.f32.gmra.mrb[0].mxu0 %v4521
    %v4708 = vpop.f32.mrb[0].mxu0
    %v4709 = vadd.f32 %v4479, %v4708
    %v4710 = vpop.f32.mrb[0].mxu0
    %4711 = vmatprep.mubr.f32.mxu0 0.0
    %4712 = vmatmul.mubr.f32.gmra.mrb[0].mxu0 %v4524
    %v4713 = vpop.f32.mrb[0].mxu0
    %v4714 = vadd.f32 %v4479, %v4713
    %v4715 = vpop.f32.mrb[0].mxu0
    %4716 = vmatprep.mubr.f32.mxu0 0.0
    %4717 = vmatmul.mubr.f32.gmra.mrb[0].mxu0 %v4527
    %v4718 = vpop.f32.mrb[0].mxu0
    %v4719 = vadd.f32 %v4479, %v4718
    %v4720 = vpop.f32.mrb[0].mxu0
    %4721 = vmatprep.mubr.f32.mxu0 0.0
    %4722 = vmatmul.mubr.f32.gmra.mrb[0].mxu0 %v4530
    %v4723 = vpop.f32.mrb[0].mxu0
    %v4724 = vadd.f32 %v4479, %v4723
    %v4725 = vpop.f32.mrb[0].mxu0
    %4726 = vmatprep.mubr.f32.mxu0 0.0
    %4727 = vmatmul.mubr.f32.gmra.mrb[0].mxu0 %v4533
    %v4728 = vpop.f32.mrb[0].mxu0
    %v4729 = vadd.f32 %v4479, %v4728
    %v4730 = vpop.f32.mrb[0].mxu0
    %4731 = vmatprep.mubr.f32.mxu0 0.0
    %4732 = vmatmul.mubr.f32.gmra.mrb[0].mxu0 %v4536
    %v4733 = vpop.f32.mrb[0].mxu0
    %v4734 = vadd.f32 %v4479, %v4733
    %v4735 = vpop.f32.mrb[0].mxu0
    %4736 = vmatprep.mubr.f32.mxu0 0.0
    %4737 = vmatmul.mubr.f32.gmra.mrb[0].mxu0 %v4539
    %v4738 = vpop.f32.mrb[0].mxu0
    %v4739 = vadd.f32 %v4479, %v4738
    %v4740 = vpop.f32.mrb[0].mxu0
    %4741 = vmatprep.mubr.f32.mxu0 0.0
    %4742 = vmatmul.mubr.f32.gmra.mrb[0].mxu0 %v4542
    %v4743 = vpop.f32.mrb[0].mxu0
    %v4744 = vadd.f32 %v4479, %v4743
    %v4745 = vpop.f32.mrb[0].mxu0
    %4746 = vmatprep.mubr.f32.mxu0 0.0
    %4747 = vmatmul.mubr.f32.gmra.mrb[0].mxu0 %v4545
    %v4748 = vpop.f32.mrb[0].mxu0
    %v4749 = vadd.f32 %v4479, %v4748
    %v4750 = vpop.f32.mrb[0].mxu0
    %4751 = vmatprep.mubr.f32.mxu0 0.0
    %4752 = vmatmul.mubr.f32.gmra.mrb[0].mxu0 %v4548
    %v4753 = vpop.f32.mrb[0].mxu0
    %v4754 = vadd.f32 %v4479, %v4753
    %v4755 = vpop.f32.mrb[0].mxu0
    %4756 = vmatprep.mubr.f32.mxu0 0.0
    %4757 = vmatmul.mubr.f32.gmra.mrb[0].mxu0 %v4551
    %v4758 = vpop.f32.mrb[0].mxu0
    %v4759 = vadd.f32 %v4479, %v4758
    %v4760 = vpop.f32.mrb[0].mxu0
    %4761 = vmatprep.mubr.f32.mxu0 0.0
    %4762 = vmatmul.mubr.f32.gmra.mrb[0].mxu0 %v4554
    %v4763 = vpop.f32.mrb[0].mxu0
    %v4764 = vadd.f32 %v4479, %v4763
    %v4765 = vpop.f32.mrb[0].mxu0
    %4766 = vmatprep.mubr.f32.mxu0 0.0
    %4767 = vmatmul.mubr.f32.gmra.mrb[0].mxu0 %v4557
    %v4768 = vpop.f32.mrb[0].mxu0
    %v4769 = vadd.f32 %v4479, %v4768
    %v4770 = vpop.f32.mrb[0].mxu0
    %4771 = vmatprep.mubr.f32.mxu0 0.0
    %4772 = vmatmul.mubr.f32.gmra.mrb[0].mxu0 %v4560
    %v4773 = vpop.f32.mrb[0].mxu0
    %v4774 = vadd.f32 %v4479, %v4773
    %v4775 = vpop.f32.mrb[0].mxu0
    %4776 = vmatprep.mubr.f32.mxu0 0.0
    %4777 = vmatmul.mubr.f32.gmra.mrb[0].mxu0 %v4563
    %v4778 = vpop.f32.mrb[0].mxu0
    %v4779 = vadd.f32 %v4479, %v4778
    %v4780 = vpop.f32.mrb[0].mxu0
    %4781 = vmatprep.mubr.f32.mxu0 0.0
    %4782 = vmatmul.mubr.f32.gmra.mrb[0].mxu0 %v4566
    %v4783 = vpop.f32.mrb[0].mxu0
    %v4784 = vadd.f32 %v4479, %v4783
    %v4785 = vpop.f32.mrb[0].mxu0
    %4786 = vmatprep.mubr.f32.mxu0 0.0
    %4787 = vmatmul.mubr.f32.gmra.mrb[0].mxu0 %v4569
    %v4788 = vpop.f32.mrb[0].mxu0
    %v4789 = vadd.f32 %v4479, %v4788
    %v4790 = vpop.f32.mrb[0].mxu0
    %4791 = vmatprep.mubr.f32.mxu0 0.0
    %4792 = vmatmul.mubr.f32.gmra.mrb[0].mxu0 %v4572
    %v4793 = vpop.f32.mrb[0].mxu0
    %v4794 = vadd.f32 %v4479, %v4793
    %v4795 = vpop.f32.mrb[0].mxu0
    %4796 = vmatprep.mubr.f32.mxu0 0.0
    %4797 = vmatmul.mubr.f32.gmra.mrb[0].mxu0 %v4575
    %v4798 = vpop.f32.mrb[0].mxu0
    %v4799 = vadd.f32 %v4479, %v4798
    %v4800 = vpop.f32.mrb[0].mxu0
    %4801 = vdwg.mxu0
    %v4802 = vmul.f32 %v4644, %v1323
    %v4803 = vmul.f32 %v4649, %v1323
    %v4804 = vmul.f32 %v4654, %v1323
    %v4805 = vmul.f32 %v4659, %v1323
    %v4806 = vmul.f32 %v4664, %v1323
    %v4807 = vmul.f32 %v4669, %v1323
    %v4808 = vmul.f32 %v4674, %v1323
    %v4809 = vmul.f32 %v4679, %v1323
    %v4810 = vmul.f32 %v4684, %v1323
    %v4811 = vmul.f32 %v4689, %v1323
    %v4812 = vmul.f32 %v4694, %v1323
    %v4813 = vmul.f32 %v4699, %v1323
    %v4814 = vmul.f32 %v4704, %v1323
    %v4815 = vmul.f32 %v4709, %v1323
    %v4816 = vmul.f32 %v4714, %v1323
    %v4817 = vmul.f32 %v4719, %v1323
    %v4818 = vmul.f32 %v4724, %v1323
    %v4819 = vmul.f32 %v4729, %v1323
    %v4820 = vmul.f32 %v4734, %v1323
    %v4821 = vmul.f32 %v4739, %v1323
    %v4822 = vmul.f32 %v4744, %v1323
    %v4823 = vmul.f32 %v4749, %v1323
    %v4824 = vmul.f32 %v4754, %v1323
    %v4825 = vmul.f32 %v4759, %v1323
    %v4826 = vmul.f32 %v4764, %v1323
    %v4827 = vmul.f32 %v4769, %v1323
    %v4828 = vmul.f32 %v4774, %v1323
    %v4829 = vmul.f32 %v4779, %v1323
    %v4830 = vmul.f32 %v4784, %v1323
    %v4831 = vmul.f32 %v4789, %v1323
    %v4832 = vmul.f32 %v4794, %v1323
    %v4833 = vmul.f32 %v4799, %v1323
    %v4834 = vtanh.pop %v4802
    %v4835 = vtanh.pop %v4803
    %v4836 = vtanh.pop %v4804
    %v4837 = vtanh.pop %v4805
    %v4838 = vtanh.pop %v4806
    %v4839 = vtanh.pop %v4807
    %v4840 = vtanh.pop %v4808
    %v4841 = vtanh.pop %v4809
    %v4842 = vtanh.pop %v4810
    %v4843 = vtanh.pop %v4811
    %v4844 = vtanh.pop %v4812
    %v4845 = vtanh.pop %v4813
    %v4846 = vtanh.pop %v4814
    %v4847 = vtanh.pop %v4815
    %v4848 = vtanh.pop %v4816
    %v4849 = vtanh.pop %v4817
    %v4850 = vtanh.pop %v4818
    %v4851 = vtanh.pop %v4819
    %v4852 = vtanh.pop %v4820
    %v4853 = vtanh.pop %v4821
    %v4854 = vtanh.pop %v4822
    %v4855 = vtanh.pop %v4823
    %v4856 = vtanh.pop %v4824
    %v4857 = vtanh.pop %v4825
    %v4858 = vtanh.pop %v4826
    %v4859 = vtanh.pop %v4827
    %v4860 = vtanh.pop %v4828
    %v4861 = vtanh.pop %v4829
    %v4862 = vtanh.pop %v4830
    %v4863 = vtanh.pop %v4831
    %v4864 = vtanh.pop %v4832
    %v4865 = vtanh.pop %v4833
    %v4866 = vmul.f32 %v4644, %v4834
    %v4867 = vmul.f32 %v4649, %v4835
    %v4868 = vmul.f32 %v4654, %v4836
    %v4869 = vmul.f32 %v4659, %v4837
    %v4870 = vmul.f32 %v4664, %v4838
    %v4871 = vmul.f32 %v4669, %v4839
    %v4872 = vmul.f32 %v4674, %v4840
    %v4873 = vmul.f32 %v4679, %v4841
    %v4874 = vmul.f32 %v4684, %v4842
    %v4875 = vmul.f32 %v4689, %v4843
    %v4876 = vmul.f32 %v4694, %v4844
    %v4877 = vmul.f32 %v4699, %v4845
    %v4878 = vmul.f32 %v4704, %v4846
    %v4879 = vmul.f32 %v4709, %v4847
    %v4880 = vmul.f32 %v4714, %v4848
    %v4881 = vmul.f32 %v4719, %v4849
    %v4882 = vmul.f32 %v4724, %v4850
    %v4883 = vmul.f32 %v4729, %v4851
    %v4884 = vmul.f32 %v4734, %v4852
    %v4885 = vmul.f32 %v4739, %v4853
    %v4886 = vmul.f32 %v4744, %v4854
    %v4887 = vmul.f32 %v4749, %v4855
    %v4888 = vmul.f32 %v4754, %v4856
    %v4889 = vmul.f32 %v4759, %v4857
    %v4890 = vmul.f32 %v4764, %v4858
    %v4891 = vmul.f32 %v4769, %v4859
    %v4892 = vmul.f32 %v4774, %v4860
    %v4893 = vmul.f32 %v4779, %v4861
    %v4894 = vmul.f32 %v4784, %v4862
    %v4895 = vmul.f32 %v4789, %v4863
    %v4896 = vmul.f32 %v4794, %v4864
    %v4897 = vmul.f32 %v4799, %v4865
    %v4898 = vadd.f32 %v4866, %v4644
    %v4899 = vadd.f32 %v4867, %v4649
    %v4900 = vadd.f32 %v4868, %v4654
    %v4901 = vadd.f32 %v4869, %v4659
    %v4902 = vadd.f32 %v4870, %v4664
    %v4903 = vadd.f32 %v4871, %v4669
    %v4904 = vadd.f32 %v4872, %v4674
    %v4905 = vadd.f32 %v4873, %v4679
    %v4906 = vadd.f32 %v4874, %v4684
    %v4907 = vadd.f32 %v4875, %v4689
    %v4908 = vadd.f32 %v4876, %v4694
    %v4909 = vadd.f32 %v4877, %v4699
    %v4910 = vadd.f32 %v4878, %v4704
    %v4911 = vadd.f32 %v4879, %v4709
    %v4912 = vadd.f32 %v4880, %v4714
    %v4913 = vadd.f32 %v4881, %v4719
    %v4914 = vadd.f32 %v4882, %v4724
    %v4915 = vadd.f32 %v4883, %v4729
    %v4916 = vadd.f32 %v4884, %v4734
    %v4917 = vadd.f32 %v4885, %v4739
    %v4918 = vadd.f32 %v4886, %v4744
    %v4919 = vadd.f32 %v4887, %v4749
    %v4920 = vadd.f32 %v4888, %v4754
    %v4921 = vadd.f32 %v4889, %v4759
    %v4922 = vadd.f32 %v4890, %v4764
    %v4923 = vadd.f32 %v4891, %v4769
    %v4924 = vadd.f32 %v4892, %v4774
    %v4925 = vadd.f32 %v4893, %v4779
    %v4926 = vadd.f32 %v4894, %v4784
    %v4927 = vadd.f32 %v4895, %v4789
    %v4928 = vadd.f32 %v4896, %v4794
    %v4929 = vadd.f32 %v4897, %v4799
    %v4930 = vld [vmem:[%s9] sm:$0xff]
    %v4931 = vld [vmem:[%s9 + $0x8] sm:$0xff]
    %v4932 = vld [vmem:[%s9 + $0x10] sm:$0xff]
    %v4933 = vld [vmem:[%s9 + $0x18] sm:$0xff]
    %v4934 = vld [vmem:[%s9 + $0x20] sm:$0xff]
    %v4935 = vld [vmem:[%s9 + $0x28] sm:$0xff]
    %v4936 = vld [vmem:[%s9 + $0x30] sm:$0xff]
    %v4937 = vld [vmem:[%s9 + $0x38] sm:$0xff]
    %v4938 = vld [vmem:[%s10] sm:$0x1]
    %v4940 = vlaneseq
    %v4941 = vshrl.u32 %v4940, 7
    %v4942 = vsub.s32 0, %v4941
    %v4943 = vrot.slane %v4938, %v4942
    %v4946 = vsel %vm536, %v4898, 0
    %v4949 = vsel %vm536, %v4899, 0
    %v4952 = vsel %vm536, %v4900, 0
    %v4955 = vsel %vm536, %v4901, 0
    %v4958 = vsel %vm536, %v4902, 0
    %v4961 = vsel %vm536, %v4903, 0
    %v4964 = vsel %vm536, %v4904, 0
    %v4967 = vsel %vm536, %v4905, 0
    %v4970 = vsel %vm536, %v4906, 0
    %v4973 = vsel %vm536, %v4907, 0
    %v4976 = vsel %vm536, %v4908, 0
    %v4979 = vsel %vm536, %v4909, 0
    %v4982 = vsel %vm536, %v4910, 0
    %v4985 = vsel %vm536, %v4911, 0
    %v4988 = vsel %vm536, %v4912, 0
    %v4991 = vsel %vm536, %v4913, 0
    %v4994 = vsel %vm536, %v4914, 0
    %v4997 = vsel %vm536, %v4915, 0
    %v5000 = vsel %vm536, %v4916, 0
    %v5003 = vsel %vm536, %v4917, 0
    %v5006 = vsel %vm536, %v4918, 0
    %v5009 = vsel %vm536, %v4919, 0
    %v5012 = vsel %vm536, %v4920, 0
    %v5015 = vsel %vm536, %v4921, 0
    %v5018 = vsel %vm536, %v4922, 0
    %v5021 = vsel %vm536, %v4923, 0
    %v5024 = vsel %vm536, %v4924, 0
    %v5027 = vsel %vm536, %v4925, 0
    %v5030 = vsel %vm536, %v4926, 0
    %v5033 = vsel %vm536, %v4927, 0
    %v5036 = vsel %vm536, %v4928, 0
    %v5039 = vsel %vm536, %v4929, 0
    %5041 = vmatprep.subr.mxu0 0.0
    %5042 = vmatpush1.msra.mxu0 %v4930
    %5043 = vmatprep.subr.mxu0 0.0
    %5044 = vmatpush1.msra.mxu0 %v4931
    %5045 = vmatprep.subr.mxu0 0.0
    %5046 = vmatpush1.msra.mxu0 %v4932
    %5047 = vmatprep.subr.mxu0 0.0
    %5048 = vmatpush1.msra.mxu0 %v4933
    %5049 = vmatprep.subr.mxu0 0.0
    %5050 = vmatpush1.msra.mxu0 %v4934
    %5051 = vmatprep.subr.mxu0 0.0
    %5052 = vmatpush1.msra.mxu0 %v4935
    %5053 = vmatprep.subr.mxu0 0.0
    %5054 = vmatpush1.msra.mxu0 %v4936
    %5055 = vmatprep.subr.mxu0 0.0
    %5056 = vmatpush1.msra.mxu0 %v4937
    %5057 = vmatprep.subr.mxu0 0.0
    %5058 = vmatpush1.msra.mxu0 0.0
    %5059 = vmatprep.subr.mxu0 0.0
    %5060 = vmatpush1.msra.mxu0 0.0
    %5061 = vmatprep.subr.mxu0 0.0
    %5062 = vmatpush1.msra.mxu0 0.0
    %5063 = vmatprep.subr.mxu0 0.0
    %5064 = vmatpush1.msra.mxu0 0.0
    %5065 = vmatprep.subr.mxu0 0.0
    %5066 = vmatpush1.msra.mxu0 0.0
    %5067 = vmatprep.subr.mxu0 0.0
    %5068 = vmatpush1.msra.mxu0 0.0
    %5069 = vmatprep.subr.mxu0 0.0
    %5070 = vmatpush1.msra.mxu0 0.0
    %5071 = vmatprep.subr.mxu0 0.0
    %5072 = vmatpush1.msra.mxu0 0.0
    %5073 = vmatprep.subr.mxu0 0.0
    %5074 = vmatpush1.msra.mxu0 0.0
    %5075 = vmatprep.subr.mxu0 0.0
    %5076 = vmatpush1.msra.mxu0 0.0
    %5077 = vmatprep.subr.mxu0 0.0
    %5078 = vmatpush1.msra.mxu0 0.0
    %5079 = vmatprep.subr.mxu0 0.0
    %5080 = vmatpush1.msra.mxu0 0.0
    %5081 = vmatprep.subr.mxu0 0.0
    %5082 = vmatpush1.msra.mxu0 0.0
    %5083 = vmatprep.subr.mxu0 0.0
    %5084 = vmatpush1.msra.mxu0 0.0
    %5085 = vmatprep.subr.mxu0 0.0
    %5086 = vmatpush1.msra.mxu0 0.0
    %5087 = vmatprep.subr.mxu0 0.0
    %5088 = vmatpush1.msra.mxu0 0.0
    %5089 = vmatprep.subr.mxu0 0.0
    %5090 = vmatpush1.msra.mxu0 0.0
    %5091 = vmatprep.subr.mxu0 0.0
    %5092 = vmatpush1.msra.mxu0 0.0
    %5093 = vmatprep.subr.mxu0 0.0
    %5094 = vmatpush1.msra.mxu0 0.0
    %5095 = vmatprep.subr.mxu0 0.0
    %5096 = vmatpush1.msra.mxu0 0.0
    %5097 = vmatprep.subr.mxu0 0.0
    %5098 = vmatpush1.msra.mxu0 0.0
    %5099 = vmatprep.subr.mxu0 0.0
    %5100 = vmatpush1.msra.mxu0 0.0
    %5101 = vmatprep.subr.mxu0 0.0
    %5102 = vmatpush1.msra.mxu0 0.0
    %5103 = vmatprep.subr.mxu0 0.0
    %5104 = vmatpush1.msra.mxu0 0.0
    %5105 = vmatprep.mubr.f32.mxu0 0.0
    %5106 = vmatmul.mubr.f32.gmra.mrb[0].mxu0 %v4946
    %v5107 = vpop.f32.mrb[0].mxu0
    %v5108 = vadd.f32 %v4943, %v5107
    %v5109 = vpop.f32.mrb[0].mxu0
    %5110 = vmatprep.mubr.f32.mxu0 0.0
    %5111 = vmatmul.mubr.f32.gmra.mrb[0].mxu0 %v4949
    %v5112 = vpop.f32.mrb[0].mxu0
    %v5113 = vadd.f32 %v4943, %v5112
    %v5114 = vpop.f32.mrb[0].mxu0
    %5115 = vmatprep.mubr.f32.mxu0 0.0
    %5116 = vmatmul.mubr.f32.gmra.mrb[0].mxu0 %v4952
    %v5117 = vpop.f32.mrb[0].mxu0
    %v5118 = vadd.f32 %v4943, %v5117
    %v5119 = vpop.f32.mrb[0].mxu0
    %5120 = vmatprep.mubr.f32.mxu0 0.0
    %5121 = vmatmul.mubr.f32.gmra.mrb[0].mxu0 %v4955
    %v5122 = vpop.f32.mrb[0].mxu0
    %v5123 = vadd.f32 %v4943, %v5122
    %v5124 = vpop.f32.mrb[0].mxu0
    %5125 = vmatprep.mubr.f32.mxu0 0.0
    %5126 = vmatmul.mubr.f32.gmra.mrb[0].mxu0 %v4958
    %v5127 = vpop.f32.mrb[0].mxu0
    %v5128 = vadd.f32 %v4943, %v5127
    %v5129 = vpop.f32.mrb[0].mxu0
    %5130 = vmatprep.mubr.f32.mxu0 0.0
    %5131 = vmatmul.mubr.f32.gmra.mrb[0].mxu0 %v4961
    %v5132 = vpop.f32.mrb[0].mxu0
    %v5133 = vadd.f32 %v4943, %v5132
    %v5134 = vpop.f32.mrb[0].mxu0
    %5135 = vmatprep.mubr.f32.mxu0 0.0
    %5136 = vmatmul.mubr.f32.gmra.mrb[0].mxu0 %v4964
    %v5137 = vpop.f32.mrb[0].mxu0
    %v5138 = vadd.f32 %v4943, %v5137
    %v5139 = vpop.f32.mrb[0].mxu0
    %5140 = vmatprep.mubr.f32.mxu0 0.0
    %5141 = vmatmul.mubr.f32.gmra.mrb[0].mxu0 %v4967
    %v5142 = vpop.f32.mrb[0].mxu0
    %v5143 = vadd.f32 %v4943, %v5142
    %v5144 = vpop.f32.mrb[0].mxu0
    %5145 = vmatprep.mubr.f32.mxu0 0.0
    %5146 = vmatmul.mubr.f32.gmra.mrb[0].mxu0 %v4970
    %v5147 = vpop.f32.mrb[0].mxu0
    %v5148 = vadd.f32 %v4943, %v5147
    %v5149 = vpop.f32.mrb[0].mxu0
    %5150 = vmatprep.mubr.f32.mxu0 0.0
    %5151 = vmatmul.mubr.f32.gmra.mrb[0].mxu0 %v4973
    %v5152 = vpop.f32.mrb[0].mxu0
    %v5153 = vadd.f32 %v4943, %v5152
    %v5154 = vpop.f32.mrb[0].mxu0
    %5155 = vmatprep.mubr.f32.mxu0 0.0
    %5156 = vmatmul.mubr.f32.gmra.mrb[0].mxu0 %v4976
    %v5157 = vpop.f32.mrb[0].mxu0
    %v5158 = vadd.f32 %v4943, %v5157
    %v5159 = vpop.f32.mrb[0].mxu0
    %5160 = vmatprep.mubr.f32.mxu0 0.0
    %5161 = vmatmul.mubr.f32.gmra.mrb[0].mxu0 %v4979
    %v5162 = vpop.f32.mrb[0].mxu0
    %v5163 = vadd.f32 %v4943, %v5162
    %v5164 = vpop.f32.mrb[0].mxu0
    %5165 = vmatprep.mubr.f32.mxu0 0.0
    %5166 = vmatmul.mubr.f32.gmra.mrb[0].mxu0 %v4982
    %v5167 = vpop.f32.mrb[0].mxu0
    %v5168 = vadd.f32 %v4943, %v5167
    %v5169 = vpop.f32.mrb[0].mxu0
    %5170 = vmatprep.mubr.f32.mxu0 0.0
    %5171 = vmatmul.mubr.f32.gmra.mrb[0].mxu0 %v4985
    %v5172 = vpop.f32.mrb[0].mxu0
    %v5173 = vadd.f32 %v4943, %v5172
    %v5174 = vpop.f32.mrb[0].mxu0
    %5175 = vmatprep.mubr.f32.mxu0 0.0
    %5176 = vmatmul.mubr.f32.gmra.mrb[0].mxu0 %v4988
    %v5177 = vpop.f32.mrb[0].mxu0
    %v5178 = vadd.f32 %v4943, %v5177
    %v5179 = vpop.f32.mrb[0].mxu0
    %5180 = vmatprep.mubr.f32.mxu0 0.0
    %5181 = vmatmul.mubr.f32.gmra.mrb[0].mxu0 %v4991
    %v5182 = vpop.f32.mrb[0].mxu0
    %v5183 = vadd.f32 %v4943, %v5182
    %v5184 = vpop.f32.mrb[0].mxu0
    %5185 = vmatprep.mubr.f32.mxu0 0.0
    %5186 = vmatmul.mubr.f32.gmra.mrb[0].mxu0 %v4994
    %v5187 = vpop.f32.mrb[0].mxu0
    %v5188 = vadd.f32 %v4943, %v5187
    %v5189 = vpop.f32.mrb[0].mxu0
    %5190 = vmatprep.mubr.f32.mxu0 0.0
    %5191 = vmatmul.mubr.f32.gmra.mrb[0].mxu0 %v4997
    %v5192 = vpop.f32.mrb[0].mxu0
    %v5193 = vadd.f32 %v4943, %v5192
    %v5194 = vpop.f32.mrb[0].mxu0
    %5195 = vmatprep.mubr.f32.mxu0 0.0
    %5196 = vmatmul.mubr.f32.gmra.mrb[0].mxu0 %v5000
    %v5197 = vpop.f32.mrb[0].mxu0
    %v5198 = vadd.f32 %v4943, %v5197
    %v5199 = vpop.f32.mrb[0].mxu0
    %5200 = vmatprep.mubr.f32.mxu0 0.0
    %5201 = vmatmul.mubr.f32.gmra.mrb[0].mxu0 %v5003
    %v5202 = vpop.f32.mrb[0].mxu0
    %v5203 = vadd.f32 %v4943, %v5202
    %v5204 = vpop.f32.mrb[0].mxu0
    %5205 = vmatprep.mubr.f32.mxu0 0.0
    %5206 = vmatmul.mubr.f32.gmra.mrb[0].mxu0 %v5006
    %v5207 = vpop.f32.mrb[0].mxu0
    %v5208 = vadd.f32 %v4943, %v5207
    %v5209 = vpop.f32.mrb[0].mxu0
    %5210 = vmatprep.mubr.f32.mxu0 0.0
    %5211 = vmatmul.mubr.f32.gmra.mrb[0].mxu0 %v5009
    %v5212 = vpop.f32.mrb[0].mxu0
    %v5213 = vadd.f32 %v4943, %v5212
    %v5214 = vpop.f32.mrb[0].mxu0
    %5215 = vmatprep.mubr.f32.mxu0 0.0
    %5216 = vmatmul.mubr.f32.gmra.mrb[0].mxu0 %v5012
    %v5217 = vpop.f32.mrb[0].mxu0
    %v5218 = vadd.f32 %v4943, %v5217
    %v5219 = vpop.f32.mrb[0].mxu0
    %5220 = vmatprep.mubr.f32.mxu0 0.0
    %5221 = vmatmul.mubr.f32.gmra.mrb[0].mxu0 %v5015
    %v5222 = vpop.f32.mrb[0].mxu0
    %v5223 = vadd.f32 %v4943, %v5222
    %v5224 = vpop.f32.mrb[0].mxu0
    %5225 = vmatprep.mubr.f32.mxu0 0.0
    %5226 = vmatmul.mubr.f32.gmra.mrb[0].mxu0 %v5018
    %v5227 = vpop.f32.mrb[0].mxu0
    %v5228 = vadd.f32 %v4943, %v5227
    %v5229 = vpop.f32.mrb[0].mxu0
    %5230 = vmatprep.mubr.f32.mxu0 0.0
    %5231 = vmatmul.mubr.f32.gmra.mrb[0].mxu0 %v5021
    %v5232 = vpop.f32.mrb[0].mxu0
    %v5233 = vadd.f32 %v4943, %v5232
    %v5234 = vpop.f32.mrb[0].mxu0
    %5235 = vmatprep.mubr.f32.mxu0 0.0
    %5236 = vmatmul.mubr.f32.gmra.mrb[0].mxu0 %v5024
    %v5237 = vpop.f32.mrb[0].mxu0
    %v5238 = vadd.f32 %v4943, %v5237
    %v5239 = vpop.f32.mrb[0].mxu0
    %5240 = vmatprep.mubr.f32.mxu0 0.0
    %5241 = vmatmul.mubr.f32.gmra.mrb[0].mxu0 %v5027
    %v5242 = vpop.f32.mrb[0].mxu0
    %v5243 = vadd.f32 %v4943, %v5242
    %v5244 = vpop.f32.mrb[0].mxu0
    %5245 = vmatprep.mubr.f32.mxu0 0.0
    %5246 = vmatmul.mubr.f32.gmra.mrb[0].mxu0 %v5030
    %v5247 = vpop.f32.mrb[0].mxu0
    %v5248 = vadd.f32 %v4943, %v5247
    %v5249 = vpop.f32.mrb[0].mxu0
    %5250 = vmatprep.mubr.f32.mxu0 0.0
    %5251 = vmatmul.mubr.f32.gmra.mrb[0].mxu0 %v5033
    %v5252 = vpop.f32.mrb[0].mxu0
    %v5253 = vadd.f32 %v4943, %v5252
    %v5254 = vpop.f32.mrb[0].mxu0
    %5255 = vmatprep.mubr.f32.mxu0 0.0
    %5256 = vmatmul.mubr.f32.gmra.mrb[0].mxu0 %v5036
    %v5257 = vpop.f32.mrb[0].mxu0
    %v5258 = vadd.f32 %v4943, %v5257
    %v5259 = vpop.f32.mrb[0].mxu0
    %5260 = vmatprep.mubr.f32.mxu0 0.0
    %5261 = vmatmul.mubr.f32.gmra.mrb[0].mxu0 %v5039
    %v5262 = vpop.f32.mrb[0].mxu0
    %v5263 = vadd.f32 %v4943, %v5262
    %v5264 = vpop.f32.mrb[0].mxu0
    %5265 = vdwg.mxu0
    %v5266 = vstv %s3625
    %v5267 = vmul.f32 %v5266, %v5108
    %v5268 = vmul.f32 %v5266, %v5113
    %v5269 = vmul.f32 %v5266, %v5118
    %v5270 = vmul.f32 %v5266, %v5123
    %v5271 = vmul.f32 %v5266, %v5128
    %v5272 = vmul.f32 %v5266, %v5133
    %v5273 = vmul.f32 %v5266, %v5138
    %v5274 = vmul.f32 %v5266, %v5143
    %v5275 = vmul.f32 %v5266, %v5148
    %v5276 = vmul.f32 %v5266, %v5153
    %v5277 = vmul.f32 %v5266, %v5158
    %v5278 = vmul.f32 %v5266, %v5163
    %v5279 = vmul.f32 %v5266, %v5168
    %v5280 = vmul.f32 %v5266, %v5173
    %v5281 = vmul.f32 %v5266, %v5178
    %v5282 = vmul.f32 %v5266, %v5183
    %v5283 = vmul.f32 %v5266, %v5188
    %v5284 = vmul.f32 %v5266, %v5193
    %v5285 = vmul.f32 %v5266, %v5198
    %v5286 = vmul.f32 %v5266, %v5203
    %v5287 = vmul.f32 %v5266, %v5208
    %v5288 = vmul.f32 %v5266, %v5213
    %v5289 = vmul.f32 %v5266, %v5218
    %v5290 = vmul.f32 %v5266, %v5223
    %v5291 = vmul.f32 %v5266, %v5228
    %v5292 = vmul.f32 %v5266, %v5233
    %v5293 = vmul.f32 %v5266, %v5238
    %v5294 = vmul.f32 %v5266, %v5243
    %v5295 = vmul.f32 %v5266, %v5248
    %v5296 = vmul.f32 %v5266, %v5253
    %v5297 = vmul.f32 %v5266, %v5258
    %v5298 = vmul.f32 %v5266, %v5263
    %v5299 = vadd.f32 %v3560, %v5267
    %v5300 = vadd.f32 %v3561, %v5268
    %v5301 = vadd.f32 %v3562, %v5269
    %v5302 = vadd.f32 %v3563, %v5270
    %v5303 = vadd.f32 %v3564, %v5271
    %v5304 = vadd.f32 %v3565, %v5272
    %v5305 = vadd.f32 %v3566, %v5273
    %v5306 = vadd.f32 %v3567, %v5274
    %v5307 = vadd.f32 %v3568, %v5275
    %v5308 = vadd.f32 %v3569, %v5276
    %v5309 = vadd.f32 %v3570, %v5277
    %v5310 = vadd.f32 %v3571, %v5278
    %v5311 = vadd.f32 %v3572, %v5279
    %v5312 = vadd.f32 %v3573, %v5280
    %v5313 = vadd.f32 %v3574, %v5281
    %v5314 = vadd.f32 %v3575, %v5282
    %v5315 = vadd.f32 %v3576, %v5283
    %v5316 = vadd.f32 %v3577, %v5284
    %v5317 = vadd.f32 %v3578, %v5285
    %v5318 = vadd.f32 %v3579, %v5286
    %v5319 = vadd.f32 %v3580, %v5287
    %v5320 = vadd.f32 %v3581, %v5288
    %v5321 = vadd.f32 %v3582, %v5289
    %v5322 = vadd.f32 %v3583, %v5290
    %v5323 = vadd.f32 %v3584, %v5291
    %v5324 = vadd.f32 %v3585, %v5292
    %v5325 = vadd.f32 %v3586, %v5293
    %v5326 = vadd.f32 %v3587, %v5294
    %v5327 = vadd.f32 %v3588, %v5295
    %v5328 = vadd.f32 %v3589, %v5296
    %v5329 = vadd.f32 %v3590, %v5297
    %v5330 = vadd.f32 %v3591, %v5298
    %s5331 = scalar_lea.vmem [#allocation9], 768
    %5332 = vst [vmem:[%s5331] sm:$0xff] %v5299
    %5333 = vst [vmem:[%s5331 + $0x8] sm:$0xff] %v5300
    %5334 = vst [vmem:[%s5331 + $0x10] sm:$0xff] %v5301
    %5335 = vst [vmem:[%s5331 + $0x18] sm:$0xff] %v5302
    %5336 = vst [vmem:[%s5331 + $0x20] sm:$0xff] %v5303
    %5337 = vst [vmem:[%s5331 + $0x28] sm:$0xff] %v5304
    %5338 = vst [vmem:[%s5331 + $0x30] sm:$0xff] %v5305
    %5339 = vst [vmem:[%s5331 + $0x38] sm:$0xff] %v5306
    %5340 = vst [vmem:[%s5331 + $0x40] sm:$0xff] %v5307
    %5341 = vst [vmem:[%s5331 + $0x48] sm:$0xff] %v5308
    %5342 = vst [vmem:[%s5331 + $0x50] sm:$0xff] %v5309
    %5343 = vst [vmem:[%s5331 + $0x58] sm:$0xff] %v5310
    %5344 = vst [vmem:[%s5331 + $0x60] sm:$0xff] %v5311
    %5345 = vst [vmem:[%s5331 + $0x68] sm:$0xff] %v5312
    %5346 = vst [vmem:[%s5331 + $0x70] sm:$0xff] %v5313
    %5347 = vst [vmem:[%s5331 + $0x78] sm:$0xff] %v5314
    %5348 = vst [vmem:[%s5331 + $0x80] sm:$0xff] %v5315
    %5349 = vst [vmem:[%s5331 + $0x88] sm:$0xff] %v5316
    %5350 = vst [vmem:[%s5331 + $0x90] sm:$0xff] %v5317
    %5351 = vst [vmem:[%s5331 + $0x98] sm:$0xff] %v5318
    %5352 = vst [vmem:[%s5331 + $0xa0] sm:$0xff] %v5319
    %5353 = vst [vmem:[%s5331 + $0xa8] sm:$0xff] %v5320
    %5354 = vst [vmem:[%s5331 + $0xb0] sm:$0xff] %v5321
    %5355 = vst [vmem:[%s5331 + $0xb8] sm:$0xff] %v5322
    %5356 = vst [vmem:[%s5331 + $0xc0] sm:$0xff] %v5323
    %5357 = vst [vmem:[%s5331 + $0xc8] sm:$0xff] %v5324
    %5358 = vst [vmem:[%s5331 + $0xd0] sm:$0xff] %v5325
    %5359 = vst [vmem:[%s5331 + $0xd8] sm:$0xff] %v5326
    %5360 = vst [vmem:[%s5331 + $0xe0] sm:$0xff] %v5327
    %5361 = vst [vmem:[%s5331 + $0xe8] sm:$0xff] %v5328
    %5362 = vst [vmem:[%s5331 + $0xf0] sm:$0xff] %v5329
    %5363 = vst [vmem:[%s5331 + $0xf8] sm:$0xff] %v5330
    %s5364 = sld [smem:[#allocation2 + $0x3]]
    %v5365 = vld [vmem:[%s3] sm:$0xff]
    %v5366 = vld [vmem:[%s3 + $0x8] sm:$0xff]
    %v5367 = vld [vmem:[%s3 + $0x10] sm:$0xff]
    %v5368 = vld [vmem:[%s3 + $0x18] sm:$0xff]
    %v5369 = vld [vmem:[%s3 + $0x20] sm:$0xff]
    %v5370 = vld [vmem:[%s3 + $0x28] sm:$0xff]
    %v5371 = vld [vmem:[%s3 + $0x30] sm:$0xff]
    %v5372 = vld [vmem:[%s3 + $0x38] sm:$0xff]
    %v5373 = vld [vmem:[%s3 + $0x40] sm:$0xff]
    %v5374 = vld [vmem:[%s3 + $0x48] sm:$0xff]
    %v5375 = vld [vmem:[%s3 + $0x50] sm:$0xff]
    %v5376 = vld [vmem:[%s3 + $0x58] sm:$0xff]
    %v5377 = vld [vmem:[%s3 + $0x60] sm:$0xff]
    %v5378 = vld [vmem:[%s3 + $0x68] sm:$0xff]
    %v5379 = vld [vmem:[%s3 + $0x70] sm:$0xff]
    %v5380 = vld [vmem:[%s3 + $0x78] sm:$0xff]
    %v5381 = vld [vmem:[%s4] sm:$0x1]
    %v5383 = vlaneseq
    %v5384 = vshrl.u32 %v5383, 7
    %v5385 = vsub.s32 0, %v5384
    %v5386 = vrot.slane %v5381, %v5385
    %5388 = vmatprep.subr.mxu0 0.0
    %5389 = vmatpush1.msra.mxu0 %v5365
    %5390 = vmatprep.subr.mxu0 0.0
    %5391 = vmatpush1.msra.mxu0 %v5366
    %5392 = vmatprep.subr.mxu0 0.0
    %5393 = vmatpush1.msra.mxu0 %v5367
    %5394 = vmatprep.subr.mxu0 0.0
    %5395 = vmatpush1.msra.mxu0 %v5368
    %5396 = vmatprep.subr.mxu0 0.0
    %5397 = vmatpush1.msra.mxu0 %v5369
    %5398 = vmatprep.subr.mxu0 0.0
    %5399 = vmatpush1.msra.mxu0 %v5370
    %5400 = vmatprep.subr.mxu0 0.0
    %5401 = vmatpush1.msra.mxu0 %v5371
    %5402 = vmatprep.subr.mxu0 0.0
    %5403 = vmatpush1.msra.mxu0 %v5372
    %5404 = vmatprep.subr.mxu0 0.0
    %5405 = vmatpush1.msra.mxu0 %v5373
    %5406 = vmatprep.subr.mxu0 0.0
    %5407 = vmatpush1.msra.mxu0 %v5374
    %5408 = vmatprep.subr.mxu0 0.0
    %5409 = vmatpush1.msra.mxu0 %v5375
    %5410 = vmatprep.subr.mxu0 0.0
    %5411 = vmatpush1.msra.mxu0 %v5376
    %5412 = vmatprep.subr.mxu0 0.0
    %5413 = vmatpush1.msra.mxu0 %v5377
    %5414 = vmatprep.subr.mxu0 0.0
    %5415 = vmatpush1.msra.mxu0 %v5378
    %5416 = vmatprep.subr.mxu0 0.0
    %5417 = vmatpush1.msra.mxu0 %v5379
    %5418 = vmatprep.subr.mxu0 0.0
    %5419 = vmatpush1.msra.mxu0 %v5380
    %5420 = vmatprep.subr.mxu0 0.0
    %5421 = vmatpush1.msra.mxu0 0.0
    %5422 = vmatprep.subr.mxu0 0.0
    %5423 = vmatpush1.msra.mxu0 0.0
    %5424 = vmatprep.subr.mxu0 0.0
    %5425 = vmatpush1.msra.mxu0 0.0
    %5426 = vmatprep.subr.mxu0 0.0
    %5427 = vmatpush1.msra.mxu0 0.0
    %5428 = vmatprep.subr.mxu0 0.0
    %5429 = vmatpush1.msra.mxu0 0.0
    %5430 = vmatprep.subr.mxu0 0.0
    %5431 = vmatpush1.msra.mxu0 0.0
    %5432 = vmatprep.subr.mxu0 0.0
    %5433 = vmatpush1.msra.mxu0 0.0
    %5434 = vmatprep.subr.mxu0 0.0
    %5435 = vmatpush1.msra.mxu0 0.0
    %5436 = vmatprep.subr.mxu0 0.0
    %5437 = vmatpush1.msra.mxu0 0.0
    %5438 = vmatprep.subr.mxu0 0.0
    %5439 = vmatpush1.msra.mxu0 0.0
    %5440 = vmatprep.subr.mxu0 0.0
    %5441 = vmatpush1.msra.mxu0 0.0
    %5442 = vmatprep.subr.mxu0 0.0
    %5443 = vmatpush1.msra.mxu0 0.0
    %5444 = vmatprep.subr.mxu0 0.0
    %5445 = vmatpush1.msra.mxu0 0.0
    %5446 = vmatprep.subr.mxu0 0.0
    %5447 = vmatpush1.msra.mxu0 0.0
    %5448 = vmatprep.subr.mxu0 0.0
    %5449 = vmatpush1.msra.mxu0 0.0
    %5450 = vmatprep.subr.mxu0 0.0
    %5451 = vmatpush1.msra.mxu0 0.0
    %5452 = vmatprep.mubr.f32.mxu0 0.0
    %5453 = vmatmul.mubr.f32.gmra.mrb[0].mxu0 %v5299
    %v5454 = vpop.f32.mrb[0].mxu0
    %v5455 = vadd.f32 %v5386, %v5454
    %v5456 = vpop.f32.mrb[0].mxu0
    %5457 = vmatprep.mubr.f32.mxu0 0.0
    %5458 = vmatmul.mubr.f32.gmra.mrb[0].mxu0 %v5300
    %v5459 = vpop.f32.mrb[0].mxu0
    %v5460 = vadd.f32 %v5386, %v5459
    %v5461 = vpop.f32.mrb[0].mxu0
    %5462 = vmatprep.mubr.f32.mxu0 0.0
    %5463 = vmatmul.mubr.f32.gmra.mrb[0].mxu0 %v5301
    %v5464 = vpop.f32.mrb[0].mxu0
    %v5465 = vadd.f32 %v5386, %v5464
    %v5466 = vpop.f32.mrb[0].mxu0
    %5467 = vmatprep.mubr.f32.mxu0 0.0
    %5468 = vmatmul.mubr.f32.gmra.mrb[0].mxu0 %v5302
    %v5469 = vpop.f32.mrb[0].mxu0
    %v5470 = vadd.f32 %v5386, %v5469
    %v5471 = vpop.f32.mrb[0].mxu0
    %5472 = vmatprep.mubr.f32.mxu0 0.0
    %5473 = vmatmul.mubr.f32.gmra.mrb[0].mxu0 %v5303
    %v5474 = vpop.f32.mrb[0].mxu0
    %v5475 = vadd.f32 %v5386, %v5474
    %v5476 = vpop.f32.mrb[0].mxu0
    %5477 = vmatprep.mubr.f32.mxu0 0.0
    %5478 = vmatmul.mubr.f32.gmra.mrb[0].mxu0 %v5304
    %v5479 = vpop.f32.mrb[0].mxu0
    %v5480 = vadd.f32 %v5386, %v5479
    %v5481 = vpop.f32.mrb[0].mxu0
    %5482 = vmatprep.mubr.f32.mxu0 0.0
    %5483 = vmatmul.mubr.f32.gmra.mrb[0].mxu0 %v5305
    %v5484 = vpop.f32.mrb[0].mxu0
    %v5485 = vadd.f32 %v5386, %v5484
    %v5486 = vpop.f32.mrb[0].mxu0
    %5487 = vmatprep.mubr.f32.mxu0 0.0
    %5488 = vmatmul.mubr.f32.gmra.mrb[0].mxu0 %v5306
    %v5489 = vpop.f32.mrb[0].mxu0
    %v5490 = vadd.f32 %v5386, %v5489
    %v5491 = vpop.f32.mrb[0].mxu0
    %5492 = vmatprep.mubr.f32.mxu0 0.0
    %5493 = vmatmul.mubr.f32.gmra.mrb[0].mxu0 %v5307
    %v5494 = vpop.f32.mrb[0].mxu0
    %v5495 = vadd.f32 %v5386, %v5494
    %v5496 = vpop.f32.mrb[0].mxu0
    %5497 = vmatprep.mubr.f32.mxu0 0.0
    %5498 = vmatmul.mubr.f32.gmra.mrb[0].mxu0 %v5308
    %v5499 = vpop.f32.mrb[0].mxu0
    %v5500 = vadd.f32 %v5386, %v5499
    %v5501 = vpop.f32.mrb[0].mxu0
    %5502 = vmatprep.mubr.f32.mxu0 0.0
    %5503 = vmatmul.mubr.f32.gmra.mrb[0].mxu0 %v5309
    %v5504 = vpop.f32.mrb[0].mxu0
    %v5505 = vadd.f32 %v5386, %v5504
    %v5506 = vpop.f32.mrb[0].mxu0
    %5507 = vmatprep.mubr.f32.mxu0 0.0
    %5508 = vmatmul.mubr.f32.gmra.mrb[0].mxu0 %v5310
    %v5509 = vpop.f32.mrb[0].mxu0
    %v5510 = vadd.f32 %v5386, %v5509
    %v5511 = vpop.f32.mrb[0].mxu0
    %5512 = vmatprep.mubr.f32.mxu0 0.0
    %5513 = vmatmul.mubr.f32.gmra.mrb[0].mxu0 %v5311
    %v5514 = vpop.f32.mrb[0].mxu0
    %v5515 = vadd.f32 %v5386, %v5514
    %v5516 = vpop.f32.mrb[0].mxu0
    %5517 = vmatprep.mubr.f32.mxu0 0.0
    %5518 = vmatmul.mubr.f32.gmra.mrb[0].mxu0 %v5312
    %v5519 = vpop.f32.mrb[0].mxu0
    %v5520 = vadd.f32 %v5386, %v5519
    %v5521 = vpop.f32.mrb[0].mxu0
    %5522 = vmatprep.mubr.f32.mxu0 0.0
    %5523 = vmatmul.mubr.f32.gmra.mrb[0].mxu0 %v5313
    %v5524 = vpop.f32.mrb[0].mxu0
    %v5525 = vadd.f32 %v5386, %v5524
    %v5526 = vpop.f32.mrb[0].mxu0
    %5527 = vmatprep.mubr.f32.mxu0 0.0
    %5528 = vmatmul.mubr.f32.gmra.mrb[0].mxu0 %v5314
    %v5529 = vpop.f32.mrb[0].mxu0
    %v5530 = vadd.f32 %v5386, %v5529
    %v5531 = vpop.f32.mrb[0].mxu0
    %5532 = vmatprep.mubr.f32.mxu0 0.0
    %5533 = vmatmul.mubr.f32.gmra.mrb[0].mxu0 %v5315
    %v5534 = vpop.f32.mrb[0].mxu0
    %v5535 = vadd.f32 %v5386, %v5534
    %v5536 = vpop.f32.mrb[0].mxu0
    %5537 = vmatprep.mubr.f32.mxu0 0.0
    %5538 = vmatmul.mubr.f32.gmra.mrb[0].mxu0 %v5316
    %v5539 = vpop.f32.mrb[0].mxu0
    %v5540 = vadd.f32 %v5386, %v5539
    %v5541 = vpop.f32.mrb[0].mxu0
    %5542 = vmatprep.mubr.f32.mxu0 0.0
    %5543 = vmatmul.mubr.f32.gmra.mrb[0].mxu0 %v5317
    %v5544 = vpop.f32.mrb[0].mxu0
    %v5545 = vadd.f32 %v5386, %v5544
    %v5546 = vpop.f32.mrb[0].mxu0
    %5547 = vmatprep.mubr.f32.mxu0 0.0
    %5548 = vmatmul.mubr.f32.gmra.mrb[0].mxu0 %v5318
    %v5549 = vpop.f32.mrb[0].mxu0
    %v5550 = vadd.f32 %v5386, %v5549
    %v5551 = vpop.f32.mrb[0].mxu0
    %5552 = vmatprep.mubr.f32.mxu0 0.0
    %5553 = vmatmul.mubr.f32.gmra.mrb[0].mxu0 %v5319
    %v5554 = vpop.f32.mrb[0].mxu0
    %v5555 = vadd.f32 %v5386, %v5554
    %v5556 = vpop.f32.mrb[0].mxu0
    %5557 = vmatprep.mubr.f32.mxu0 0.0
    %5558 = vmatmul.mubr.f32.gmra.mrb[0].mxu0 %v5320
    %v5559 = vpop.f32.mrb[0].mxu0
    %v5560 = vadd.f32 %v5386, %v5559
    %v5561 = vpop.f32.mrb[0].mxu0
    %5562 = vmatprep.mubr.f32.mxu0 0.0
    %5563 = vmatmul.mubr.f32.gmra.mrb[0].mxu0 %v5321
    %v5564 = vpop.f32.mrb[0].mxu0
    %v5565 = vadd.f32 %v5386, %v5564
    %v5566 = vpop.f32.mrb[0].mxu0
    %5567 = vmatprep.mubr.f32.mxu0 0.0
    %5568 = vmatmul.mubr.f32.gmra.mrb[0].mxu0 %v5322
    %v5569 = vpop.f32.mrb[0].mxu0
    %v5570 = vadd.f32 %v5386, %v5569
    %v5571 = vpop.f32.mrb[0].mxu0
    %5572 = vmatprep.mubr.f32.mxu0 0.0
    %5573 = vmatmul.mubr.f32.gmra.mrb[0].mxu0 %v5323
    %v5574 = vpop.f32.mrb[0].mxu0
    %v5575 = vadd.f32 %v5386, %v5574
    %v5576 = vpop.f32.mrb[0].mxu0
    %5577 = vmatprep.mubr.f32.mxu0 0.0
    %5578 = vmatmul.mubr.f32.gmra.mrb[0].mxu0 %v5324
    %v5579 = vpop.f32.mrb[0].mxu0
    %v5580 = vadd.f32 %v5386, %v5579
    %v5581 = vpop.f32.mrb[0].mxu0
    %5582 = vmatprep.mubr.f32.mxu0 0.0
    %5583 = vmatmul.mubr.f32.gmra.mrb[0].mxu0 %v5325
    %v5584 = vpop.f32.mrb[0].mxu0
    %v5585 = vadd.f32 %v5386, %v5584
    %v5586 = vpop.f32.mrb[0].mxu0
    %5587 = vmatprep.mubr.f32.mxu0 0.0
    %5588 = vmatmul.mubr.f32.gmra.mrb[0].mxu0 %v5326
    %v5589 = vpop.f32.mrb[0].mxu0
    %v5590 = vadd.f32 %v5386, %v5589
    %v5591 = vpop.f32.mrb[0].mxu0
    %5592 = vmatprep.mubr.f32.mxu0 0.0
    %5593 = vmatmul.mubr.f32.gmra.mrb[0].mxu0 %v5327
    %v5594 = vpop.f32.mrb[0].mxu0
    %v5595 = vadd.f32 %v5386, %v5594
    %v5596 = vpop.f32.mrb[0].mxu0
    %5597 = vmatprep.mubr.f32.mxu0 0.0
    %5598 = vmatmul.mubr.f32.gmra.mrb[0].mxu0 %v5328
    %v5599 = vpop.f32.mrb[0].mxu0
    %v5600 = vadd.f32 %v5386, %v5599
    %v5601 = vpop.f32.mrb[0].mxu0
    %5602 = vmatprep.mubr.f32.mxu0 0.0
    %5603 = vmatmul.mubr.f32.gmra.mrb[0].mxu0 %v5329
    %v5604 = vpop.f32.mrb[0].mxu0
    %v5605 = vadd.f32 %v5386, %v5604
    %v5606 = vpop.f32.mrb[0].mxu0
    %5607 = vmatprep.mubr.f32.mxu0 0.0
    %5608 = vmatmul.mubr.f32.gmra.mrb[0].mxu0 %v5330
    %v5609 = vpop.f32.mrb[0].mxu0
    %v5610 = vadd.f32 %v5386, %v5609
    %v5611 = vpop.f32.mrb[0].mxu0
    %5612 = vdwg.mxu0
    %v5613 = vmul.f32 %v5455, %v392
    %v5614 = vmul.f32 %v5460, %v392
    %v5615 = vmul.f32 %v5465, %v392
    %v5616 = vmul.f32 %v5470, %v392
    %v5617 = vmul.f32 %v5475, %v392
    %v5618 = vmul.f32 %v5480, %v392
    %v5619 = vmul.f32 %v5485, %v392
    %v5620 = vmul.f32 %v5490, %v392
    %v5621 = vmul.f32 %v5495, %v392
    %v5622 = vmul.f32 %v5500, %v392
    %v5623 = vmul.f32 %v5505, %v392
    %v5624 = vmul.f32 %v5510, %v392
    %v5625 = vmul.f32 %v5515, %v392
    %v5626 = vmul.f32 %v5520, %v392
    %v5627 = vmul.f32 %v5525, %v392
    %v5628 = vmul.f32 %v5530, %v392
    %v5629 = vmul.f32 %v5535, %v392
    %v5630 = vmul.f32 %v5540, %v392
    %v5631 = vmul.f32 %v5545, %v392
    %v5632 = vmul.f32 %v5550, %v392
    %v5633 = vmul.f32 %v5555, %v392
    %v5634 = vmul.f32 %v5560, %v392
    %v5635 = vmul.f32 %v5565, %v392
    %v5636 = vmul.f32 %v5570, %v392
    %v5637 = vmul.f32 %v5575, %v392
    %v5638 = vmul.f32 %v5580, %v392
    %v5639 = vmul.f32 %v5585, %v392
    %v5640 = vmul.f32 %v5590, %v392
    %v5641 = vmul.f32 %v5595, %v392
    %v5642 = vmul.f32 %v5600, %v392
    %v5643 = vmul.f32 %v5605, %v392
    %v5644 = vmul.f32 %v5610, %v392
    %v5645 = vtanh.pop %v5613
    %v5646 = vtanh.pop %v5614
    %v5647 = vtanh.pop %v5615
    %v5648 = vtanh.pop %v5616
    %v5649 = vtanh.pop %v5617
    %v5650 = vtanh.pop %v5618
    %v5651 = vtanh.pop %v5619
    %v5652 = vtanh.pop %v5620
    %v5653 = vtanh.pop %v5621
    %v5654 = vtanh.pop %v5622
    %v5655 = vtanh.pop %v5623
    %v5656 = vtanh.pop %v5624
    %v5657 = vtanh.pop %v5625
    %v5658 = vtanh.pop %v5626
    %v5659 = vtanh.pop %v5627
    %v5660 = vtanh.pop %v5628
    %v5661 = vtanh.pop %v5629
    %v5662 = vtanh.pop %v5630
    %v5663 = vtanh.pop %v5631
    %v5664 = vtanh.pop %v5632
    %v5665 = vtanh.pop %v5633
    %v5666 = vtanh.pop %v5634
    %v5667 = vtanh.pop %v5635
    %v5668 = vtanh.pop %v5636
    %v5669 = vtanh.pop %v5637
    %v5670 = vtanh.pop %v5638
    %v5671 = vtanh.pop %v5639
    %v5672 = vtanh.pop %v5640
    %v5673 = vtanh.pop %v5641
    %v5674 = vtanh.pop %v5642
    %v5675 = vtanh.pop %v5643
    %v5676 = vtanh.pop %v5644
    %v5677 = vmul.f32 %v5455, %v5645
    %v5678 = vmul.f32 %v5460, %v5646
    %v5679 = vmul.f32 %v5465, %v5647
    %v5680 = vmul.f32 %v5470, %v5648
    %v5681 = vmul.f32 %v5475, %v5649
    %v5682 = vmul.f32 %v5480, %v5650
    %v5683 = vmul.f32 %v5485, %v5651
    %v5684 = vmul.f32 %v5490, %v5652
    %v5685 = vmul.f32 %v5495, %v5653
    %v5686 = vmul.f32 %v5500, %v5654
    %v5687 = vmul.f32 %v5505, %v5655
    %v5688 = vmul.f32 %v5510, %v5656
    %v5689 = vmul.f32 %v5515, %v5657
    %v5690 = vmul.f32 %v5520, %v5658
    %v5691 = vmul.f32 %v5525, %v5659
    %v5692 = vmul.f32 %v5530, %v5660
    %v5693 = vmul.f32 %v5535, %v5661
    %v5694 = vmul.f32 %v5540, %v5662
    %v5695 = vmul.f32 %v5545, %v5663
    %v5696 = vmul.f32 %v5550, %v5664
    %v5697 = vmul.f32 %v5555, %v5665
    %v5698 = vmul.f32 %v5560, %v5666
    %v5699 = vmul.f32 %v5565, %v5667
    %v5700 = vmul.f32 %v5570, %v5668
    %v5701 = vmul.f32 %v5575, %v5669
    %v5702 = vmul.f32 %v5580, %v5670
    %v5703 = vmul.f32 %v5585, %v5671
    %v5704 = vmul.f32 %v5590, %v5672
    %v5705 = vmul.f32 %v5595, %v5673
    %v5706 = vmul.f32 %v5600, %v5674
    %v5707 = vmul.f32 %v5605, %v5675
    %v5708 = vmul.f32 %v5610, %v5676
    %v5709 = vadd.f32 %v5677, %v5455
    %v5710 = vadd.f32 %v5678, %v5460
    %v5711 = vadd.f32 %v5679, %v5465
    %v5712 = vadd.f32 %v5680, %v5470
    %v5713 = vadd.f32 %v5681, %v5475
    %v5714 = vadd.f32 %v5682, %v5480
    %v5715 = vadd.f32 %v5683, %v5485
    %v5716 = vadd.f32 %v5684, %v5490
    %v5717 = vadd.f32 %v5685, %v5495
    %v5718 = vadd.f32 %v5686, %v5500
    %v5719 = vadd.f32 %v5687, %v5505
    %v5720 = vadd.f32 %v5688, %v5510
    %v5721 = vadd.f32 %v5689, %v5515
    %v5722 = vadd.f32 %v5690, %v5520
    %v5723 = vadd.f32 %v5691, %v5525
    %v5724 = vadd.f32 %v5692, %v5530
    %v5725 = vadd.f32 %v5693, %v5535
    %v5726 = vadd.f32 %v5694, %v5540
    %v5727 = vadd.f32 %v5695, %v5545
    %v5728 = vadd.f32 %v5696, %v5550
    %v5729 = vadd.f32 %v5697, %v5555
    %v5730 = vadd.f32 %v5698, %v5560
    %v5731 = vadd.f32 %v5699, %v5565
    %v5732 = vadd.f32 %v5700, %v5570
    %v5733 = vadd.f32 %v5701, %v5575
    %v5734 = vadd.f32 %v5702, %v5580
    %v5735 = vadd.f32 %v5703, %v5585
    %v5736 = vadd.f32 %v5704, %v5590
    %v5737 = vadd.f32 %v5705, %v5595
    %v5738 = vadd.f32 %v5706, %v5600
    %v5739 = vadd.f32 %v5707, %v5605
    %v5740 = vadd.f32 %v5708, %v5610
    %v5741 = vld [vmem:[%s5] sm:$0xff]
    %v5742 = vld [vmem:[%s5 + $0x8] sm:$0xff]
    %v5743 = vld [vmem:[%s5 + $0x10] sm:$0xff]
    %v5744 = vld [vmem:[%s5 + $0x18] sm:$0xff]
    %v5745 = vld [vmem:[%s5 + $0x20] sm:$0xff]
    %v5746 = vld [vmem:[%s5 + $0x28] sm:$0xff]
    %v5747 = vld [vmem:[%s5 + $0x30] sm:$0xff]
    %v5748 = vld [vmem:[%s5 + $0x38] sm:$0xff]
    %v5749 = vld [vmem:[%s6] sm:$0x1]
    %v5751 = vlaneseq
    %v5752 = vshrl.u32 %v5751, 7
    %v5753 = vsub.s32 0, %v5752
    %v5754 = vrot.slane %v5749, %v5753
    %v5757 = vsel %vm536, %v5709, 0
    %v5760 = vsel %vm536, %v5710, 0
    %v5763 = vsel %vm536, %v5711, 0
    %v5766 = vsel %vm536, %v5712, 0
    %v5769 = vsel %vm536, %v5713, 0
    %v5772 = vsel %vm536, %v5714, 0
    %v5775 = vsel %vm536, %v5715, 0
    %v5778 = vsel %vm536, %v5716, 0
    %v5781 = vsel %vm536, %v5717, 0
    %v5784 = vsel %vm536, %v5718, 0
    %v5787 = vsel %vm536, %v5719, 0
    %v5790 = vsel %vm536, %v5720, 0
    %v5793 = vsel %vm536, %v5721, 0
    %v5796 = vsel %vm536, %v5722, 0
    %v5799 = vsel %vm536, %v5723, 0
    %v5802 = vsel %vm536, %v5724, 0
    %v5805 = vsel %vm536, %v5725, 0
    %v5808 = vsel %vm536, %v5726, 0
    %v5811 = vsel %vm536, %v5727, 0
    %v5814 = vsel %vm536, %v5728, 0
    %v5817 = vsel %vm536, %v5729, 0
    %v5820 = vsel %vm536, %v5730, 0
    %v5823 = vsel %vm536, %v5731, 0
    %v5826 = vsel %vm536, %v5732, 0
    %v5829 = vsel %vm536, %v5733, 0
    %v5832 = vsel %vm536, %v5734, 0
    %v5835 = vsel %vm536, %v5735, 0
    %v5838 = vsel %vm536, %v5736, 0
    %v5841 = vsel %vm536, %v5737, 0
    %v5844 = vsel %vm536, %v5738, 0
    %v5847 = vsel %vm536, %v5739, 0
    %v5850 = vsel %vm536, %v5740, 0
    %5852 = vmatprep.subr.mxu0 0.0
    %5853 = vmatpush1.msra.mxu0 %v5741
    %5854 = vmatprep.subr.mxu0 0.0
    %5855 = vmatpush1.msra.mxu0 %v5742
    %5856 = vmatprep.subr.mxu0 0.0
    %5857 = vmatpush1.msra.mxu0 %v5743
    %5858 = vmatprep.subr.mxu0 0.0
    %5859 = vmatpush1.msra.mxu0 %v5744
    %5860 = vmatprep.subr.mxu0 0.0
    %5861 = vmatpush1.msra.mxu0 %v5745
    %5862 = vmatprep.subr.mxu0 0.0
    %5863 = vmatpush1.msra.mxu0 %v5746
    %5864 = vmatprep.subr.mxu0 0.0
    %5865 = vmatpush1.msra.mxu0 %v5747
    %5866 = vmatprep.subr.mxu0 0.0
    %5867 = vmatpush1.msra.mxu0 %v5748
    %5868 = vmatprep.subr.mxu0 0.0
    %5869 = vmatpush1.msra.mxu0 0.0
    %5870 = vmatprep.subr.mxu0 0.0
    %5871 = vmatpush1.msra.mxu0 0.0
    %5872 = vmatprep.subr.mxu0 0.0
    %5873 = vmatpush1.msra.mxu0 0.0
    %5874 = vmatprep.subr.mxu0 0.0
    %5875 = vmatpush1.msra.mxu0 0.0
    %5876 = vmatprep.subr.mxu0 0.0
    %5877 = vmatpush1.msra.mxu0 0.0
    %5878 = vmatprep.subr.mxu0 0.0
    %5879 = vmatpush1.msra.mxu0 0.0
    %5880 = vmatprep.subr.mxu0 0.0
    %5881 = vmatpush1.msra.mxu0 0.0
    %5882 = vmatprep.subr.mxu0 0.0
    %5883 = vmatpush1.msra.mxu0 0.0
    %5884 = vmatprep.subr.mxu0 0.0
    %5885 = vmatpush1.msra.mxu0 0.0
    %5886 = vmatprep.subr.mxu0 0.0
    %5887 = vmatpush1.msra.mxu0 0.0
    %5888 = vmatprep.subr.mxu0 0.0
    %5889 = vmatpush1.msra.mxu0 0.0
    %5890 = vmatprep.subr.mxu0 0.0
    %5891 = vmatpush1.msra.mxu0 0.0
    %5892 = vmatprep.subr.mxu0 0.0
    %5893 = vmatpush1.msra.mxu0 0.0
    %5894 = vmatprep.subr.mxu0 0.0
    %5895 = vmatpush1.msra.mxu0 0.0
    %5896 = vmatprep.subr.mxu0 0.0
    %5897 = vmatpush1.msra.mxu0 0.0
    %5898 = vmatprep.subr.mxu0 0.0
    %5899 = vmatpush1.msra.mxu0 0.0
    %5900 = vmatprep.subr.mxu0 0.0
    %5901 = vmatpush1.msra.mxu0 0.0
    %5902 = vmatprep.subr.mxu0 0.0
    %5903 = vmatpush1.msra.mxu0 0.0
    %5904 = vmatprep.subr.mxu0 0.0
    %5905 = vmatpush1.msra.mxu0 0.0
    %5906 = vmatprep.subr.mxu0 0.0
    %5907 = vmatpush1.msra.mxu0 0.0
    %5908 = vmatprep.subr.mxu0 0.0
    %5909 = vmatpush1.msra.mxu0 0.0
    %5910 = vmatprep.subr.mxu0 0.0
    %5911 = vmatpush1.msra.mxu0 0.0
    %5912 = vmatprep.subr.mxu0 0.0
    %5913 = vmatpush1.msra.mxu0 0.0
    %5914 = vmatprep.subr.mxu0 0.0
    %5915 = vmatpush1.msra.mxu0 0.0
    %5916 = vmatprep.mubr.f32.mxu0 0.0
    %5917 = vmatmul.mubr.f32.gmra.mrb[0].mxu0 %v5757
    %v5918 = vpop.f32.mrb[0].mxu0
    %v5919 = vadd.f32 %v5754, %v5918
    %v5920 = vpop.f32.mrb[0].mxu0
    %5921 = vmatprep.mubr.f32.mxu0 0.0
    %5922 = vmatmul.mubr.f32.gmra.mrb[0].mxu0 %v5760
    %v5923 = vpop.f32.mrb[0].mxu0
    %v5924 = vadd.f32 %v5754, %v5923
    %v5925 = vpop.f32.mrb[0].mxu0
    %5926 = vmatprep.mubr.f32.mxu0 0.0
    %5927 = vmatmul.mubr.f32.gmra.mrb[0].mxu0 %v5763
    %v5928 = vpop.f32.mrb[0].mxu0
    %v5929 = vadd.f32 %v5754, %v5928
    %v5930 = vpop.f32.mrb[0].mxu0
    %5931 = vmatprep.mubr.f32.mxu0 0.0
    %5932 = vmatmul.mubr.f32.gmra.mrb[0].mxu0 %v5766
    %v5933 = vpop.f32.mrb[0].mxu0
    %v5934 = vadd.f32 %v5754, %v5933
    %v5935 = vpop.f32.mrb[0].mxu0
    %5936 = vmatprep.mubr.f32.mxu0 0.0
    %5937 = vmatmul.mubr.f32.gmra.mrb[0].mxu0 %v5769
    %v5938 = vpop.f32.mrb[0].mxu0
    %v5939 = vadd.f32 %v5754, %v5938
    %v5940 = vpop.f32.mrb[0].mxu0
    %5941 = vmatprep.mubr.f32.mxu0 0.0
    %5942 = vmatmul.mubr.f32.gmra.mrb[0].mxu0 %v5772
    %v5943 = vpop.f32.mrb[0].mxu0
    %v5944 = vadd.f32 %v5754, %v5943
    %v5945 = vpop.f32.mrb[0].mxu0
    %5946 = vmatprep.mubr.f32.mxu0 0.0
    %5947 = vmatmul.mubr.f32.gmra.mrb[0].mxu0 %v5775
    %v5948 = vpop.f32.mrb[0].mxu0
    %v5949 = vadd.f32 %v5754, %v5948
    %v5950 = vpop.f32.mrb[0].mxu0
    %5951 = vmatprep.mubr.f32.mxu0 0.0
    %5952 = vmatmul.mubr.f32.gmra.mrb[0].mxu0 %v5778
    %v5953 = vpop.f32.mrb[0].mxu0
    %v5954 = vadd.f32 %v5754, %v5953
    %v5955 = vpop.f32.mrb[0].mxu0
    %5956 = vmatprep.mubr.f32.mxu0 0.0
    %5957 = vmatmul.mubr.f32.gmra.mrb[0].mxu0 %v5781
    %v5958 = vpop.f32.mrb[0].mxu0
    %v5959 = vadd.f32 %v5754, %v5958
    %v5960 = vpop.f32.mrb[0].mxu0
    %5961 = vmatprep.mubr.f32.mxu0 0.0
    %5962 = vmatmul.mubr.f32.gmra.mrb[0].mxu0 %v5784
    %v5963 = vpop.f32.mrb[0].mxu0
    %v5964 = vadd.f32 %v5754, %v5963
    %v5965 = vpop.f32.mrb[0].mxu0
    %5966 = vmatprep.mubr.f32.mxu0 0.0
    %5967 = vmatmul.mubr.f32.gmra.mrb[0].mxu0 %v5787
    %v5968 = vpop.f32.mrb[0].mxu0
    %v5969 = vadd.f32 %v5754, %v5968
    %v5970 = vpop.f32.mrb[0].mxu0
    %5971 = vmatprep.mubr.f32.mxu0 0.0
    %5972 = vmatmul.mubr.f32.gmra.mrb[0].mxu0 %v5790
    %v5973 = vpop.f32.mrb[0].mxu0
    %v5974 = vadd.f32 %v5754, %v5973
    %v5975 = vpop.f32.mrb[0].mxu0
    %5976 = vmatprep.mubr.f32.mxu0 0.0
    %5977 = vmatmul.mubr.f32.gmra.mrb[0].mxu0 %v5793
    %v5978 = vpop.f32.mrb[0].mxu0
    %v5979 = vadd.f32 %v5754, %v5978
    %v5980 = vpop.f32.mrb[0].mxu0
    %5981 = vmatprep.mubr.f32.mxu0 0.0
    %5982 = vmatmul.mubr.f32.gmra.mrb[0].mxu0 %v5796
    %v5983 = vpop.f32.mrb[0].mxu0
    %v5984 = vadd.f32 %v5754, %v5983
    %v5985 = vpop.f32.mrb[0].mxu0
    %5986 = vmatprep.mubr.f32.mxu0 0.0
    %5987 = vmatmul.mubr.f32.gmra.mrb[0].mxu0 %v5799
    %v5988 = vpop.f32.mrb[0].mxu0
    %v5989 = vadd.f32 %v5754, %v5988
    %v5990 = vpop.f32.mrb[0].mxu0
    %5991 = vmatprep.mubr.f32.mxu0 0.0
    %5992 = vmatmul.mubr.f32.gmra.mrb[0].mxu0 %v5802
    %v5993 = vpop.f32.mrb[0].mxu0
    %v5994 = vadd.f32 %v5754, %v5993
    %v5995 = vpop.f32.mrb[0].mxu0
    %5996 = vmatprep.mubr.f32.mxu0 0.0
    %5997 = vmatmul.mubr.f32.gmra.mrb[0].mxu0 %v5805
    %v5998 = vpop.f32.mrb[0].mxu0
    %v5999 = vadd.f32 %v5754, %v5998
    %v6000 = vpop.f32.mrb[0].mxu0
    %6001 = vmatprep.mubr.f32.mxu0 0.0
    %6002 = vmatmul.mubr.f32.gmra.mrb[0].mxu0 %v5808
    %v6003 = vpop.f32.mrb[0].mxu0
    %v6004 = vadd.f32 %v5754, %v6003
    %v6005 = vpop.f32.mrb[0].mxu0
    %6006 = vmatprep.mubr.f32.mxu0 0.0
    %6007 = vmatmul.mubr.f32.gmra.mrb[0].mxu0 %v5811
    %v6008 = vpop.f32.mrb[0].mxu0
    %v6009 = vadd.f32 %v5754, %v6008
    %v6010 = vpop.f32.mrb[0].mxu0
    %6011 = vmatprep.mubr.f32.mxu0 0.0
    %6012 = vmatmul.mubr.f32.gmra.mrb[0].mxu0 %v5814
    %v6013 = vpop.f32.mrb[0].mxu0
    %v6014 = vadd.f32 %v5754, %v6013
    %v6015 = vpop.f32.mrb[0].mxu0
    %6016 = vmatprep.mubr.f32.mxu0 0.0
    %6017 = vmatmul.mubr.f32.gmra.mrb[0].mxu0 %v5817
    %v6018 = vpop.f32.mrb[0].mxu0
    %v6019 = vadd.f32 %v5754, %v6018
    %v6020 = vpop.f32.mrb[0].mxu0
    %6021 = vmatprep.mubr.f32.mxu0 0.0
    %6022 = vmatmul.mubr.f32.gmra.mrb[0].mxu0 %v5820
    %v6023 = vpop.f32.mrb[0].mxu0
    %v6024 = vadd.f32 %v5754, %v6023
    %v6025 = vpop.f32.mrb[0].mxu0
    %6026 = vmatprep.mubr.f32.mxu0 0.0
    %6027 = vmatmul.mubr.f32.gmra.mrb[0].mxu0 %v5823
    %v6028 = vpop.f32.mrb[0].mxu0
    %v6029 = vadd.f32 %v5754, %v6028
    %v6030 = vpop.f32.mrb[0].mxu0
    %6031 = vmatprep.mubr.f32.mxu0 0.0
    %6032 = vmatmul.mubr.f32.gmra.mrb[0].mxu0 %v5826
    %v6033 = vpop.f32.mrb[0].mxu0
    %v6034 = vadd.f32 %v5754, %v6033
    %v6035 = vpop.f32.mrb[0].mxu0
    %6036 = vmatprep.mubr.f32.mxu0 0.0
    %6037 = vmatmul.mubr.f32.gmra.mrb[0].mxu0 %v5829
    %v6038 = vpop.f32.mrb[0].mxu0
    %v6039 = vadd.f32 %v5754, %v6038
    %v6040 = vpop.f32.mrb[0].mxu0
    %6041 = vmatprep.mubr.f32.mxu0 0.0
    %6042 = vmatmul.mubr.f32.gmra.mrb[0].mxu0 %v5832
    %v6043 = vpop.f32.mrb[0].mxu0
    %v6044 = vadd.f32 %v5754, %v6043
    %v6045 = vpop.f32.mrb[0].mxu0
    %6046 = vmatprep.mubr.f32.mxu0 0.0
    %6047 = vmatmul.mubr.f32.gmra.mrb[0].mxu0 %v5835
    %v6048 = vpop.f32.mrb[0].mxu0
    %v6049 = vadd.f32 %v5754, %v6048
    %v6050 = vpop.f32.mrb[0].mxu0
    %6051 = vmatprep.mubr.f32.mxu0 0.0
    %6052 = vmatmul.mubr.f32.gmra.mrb[0].mxu0 %v5838
    %v6053 = vpop.f32.mrb[0].mxu0
    %v6054 = vadd.f32 %v5754, %v6053
    %v6055 = vpop.f32.mrb[0].mxu0
    %6056 = vmatprep.mubr.f32.mxu0 0.0
    %6057 = vmatmul.mubr.f32.gmra.mrb[0].mxu0 %v5841
    %v6058 = vpop.f32.mrb[0].mxu0
    %v6059 = vadd.f32 %v5754, %v6058
    %v6060 = vpop.f32.mrb[0].mxu0
    %6061 = vmatprep.mubr.f32.mxu0 0.0
    %6062 = vmatmul.mubr.f32.gmra.mrb[0].mxu0 %v5844
    %v6063 = vpop.f32.mrb[0].mxu0
    %v6064 = vadd.f32 %v5754, %v6063
    %v6065 = vpop.f32.mrb[0].mxu0
    %6066 = vmatprep.mubr.f32.mxu0 0.0
    %6067 = vmatmul.mubr.f32.gmra.mrb[0].mxu0 %v5847
    %v6068 = vpop.f32.mrb[0].mxu0
    %v6069 = vadd.f32 %v5754, %v6068
    %v6070 = vpop.f32.mrb[0].mxu0
    %6071 = vmatprep.mubr.f32.mxu0 0.0
    %6072 = vmatmul.mubr.f32.gmra.mrb[0].mxu0 %v5850
    %v6073 = vpop.f32.mrb[0].mxu0
    %v6074 = vadd.f32 %v5754, %v6073
    %v6075 = vpop.f32.mrb[0].mxu0
    %6076 = vdwg.mxu0
    %v6077 = vmul.f32 %v5919, %v858
    %v6078 = vmul.f32 %v5924, %v858
    %v6079 = vmul.f32 %v5929, %v858
    %v6080 = vmul.f32 %v5934, %v858
    %v6081 = vmul.f32 %v5939, %v858
    %v6082 = vmul.f32 %v5944, %v858
    %v6083 = vmul.f32 %v5949, %v858
    %v6084 = vmul.f32 %v5954, %v858
    %v6085 = vmul.f32 %v5959, %v858
    %v6086 = vmul.f32 %v5964, %v858
    %v6087 = vmul.f32 %v5969, %v858
    %v6088 = vmul.f32 %v5974, %v858
    %v6089 = vmul.f32 %v5979, %v858
    %v6090 = vmul.f32 %v5984, %v858
    %v6091 = vmul.f32 %v5989, %v858
    %v6092 = vmul.f32 %v5994, %v858
    %v6093 = vmul.f32 %v5999, %v858
    %v6094 = vmul.f32 %v6004, %v858
    %v6095 = vmul.f32 %v6009, %v858
    %v6096 = vmul.f32 %v6014, %v858
    %v6097 = vmul.f32 %v6019, %v858
    %v6098 = vmul.f32 %v6024, %v858
    %v6099 = vmul.f32 %v6029, %v858
    %v6100 = vmul.f32 %v6034, %v858
    %v6101 = vmul.f32 %v6039, %v858
    %v6102 = vmul.f32 %v6044, %v858
    %v6103 = vmul.f32 %v6049, %v858
    %v6104 = vmul.f32 %v6054, %v858
    %v6105 = vmul.f32 %v6059, %v858
    %v6106 = vmul.f32 %v6064, %v858
    %v6107 = vmul.f32 %v6069, %v858
    %v6108 = vmul.f32 %v6074, %v858
    %v6109 = vtanh.pop %v6077
    %v6110 = vtanh.pop %v6078
    %v6111 = vtanh.pop %v6079
    %v6112 = vtanh.pop %v6080
    %v6113 = vtanh.pop %v6081
    %v6114 = vtanh.pop %v6082
    %v6115 = vtanh.pop %v6083
    %v6116 = vtanh.pop %v6084
    %v6117 = vtanh.pop %v6085
    %v6118 = vtanh.pop %v6086
    %v6119 = vtanh.pop %v6087
    %v6120 = vtanh.pop %v6088
    %v6121 = vtanh.pop %v6089
    %v6122 = vtanh.pop %v6090
    %v6123 = vtanh.pop %v6091
    %v6124 = vtanh.pop %v6092
    %v6125 = vtanh.pop %v6093
    %v6126 = vtanh.pop %v6094
    %v6127 = vtanh.pop %v6095
    %v6128 = vtanh.pop %v6096
    %v6129 = vtanh.pop %v6097
    %v6130 = vtanh.pop %v6098
    %v6131 = vtanh.pop %v6099
    %v6132 = vtanh.pop %v6100
    %v6133 = vtanh.pop %v6101
    %v6134 = vtanh.pop %v6102
    %v6135 = vtanh.pop %v6103
    %v6136 = vtanh.pop %v6104
    %v6137 = vtanh.pop %v6105
    %v6138 = vtanh.pop %v6106
    %v6139 = vtanh.pop %v6107
    %v6140 = vtanh.pop %v6108
    %v6141 = vmul.f32 %v5919, %v6109
    %v6142 = vmul.f32 %v5924, %v6110
    %v6143 = vmul.f32 %v5929, %v6111
    %v6144 = vmul.f32 %v5934, %v6112
    %v6145 = vmul.f32 %v5939, %v6113
    %v6146 = vmul.f32 %v5944, %v6114
    %v6147 = vmul.f32 %v5949, %v6115
    %v6148 = vmul.f32 %v5954, %v6116
    %v6149 = vmul.f32 %v5959, %v6117
    %v6150 = vmul.f32 %v5964, %v6118
    %v6151 = vmul.f32 %v5969, %v6119
    %v6152 = vmul.f32 %v5974, %v6120
    %v6153 = vmul.f32 %v5979, %v6121
    %v6154 = vmul.f32 %v5984, %v6122
    %v6155 = vmul.f32 %v5989, %v6123
    %v6156 = vmul.f32 %v5994, %v6124
    %v6157 = vmul.f32 %v5999, %v6125
    %v6158 = vmul.f32 %v6004, %v6126
    %v6159 = vmul.f32 %v6009, %v6127
    %v6160 = vmul.f32 %v6014, %v6128
    %v6161 = vmul.f32 %v6019, %v6129
    %v6162 = vmul.f32 %v6024, %v6130
    %v6163 = vmul.f32 %v6029, %v6131
    %v6164 = vmul.f32 %v6034, %v6132
    %v6165 = vmul.f32 %v6039, %v6133
    %v6166 = vmul.f32 %v6044, %v6134
    %v6167 = vmul.f32 %v6049, %v6135
    %v6168 = vmul.f32 %v6054, %v6136
    %v6169 = vmul.f32 %v6059, %v6137
    %v6170 = vmul.f32 %v6064, %v6138
    %v6171 = vmul.f32 %v6069, %v6139
    %v6172 = vmul.f32 %v6074, %v6140
    %v6173 = vadd.f32 %v6141, %v5919
    %v6174 = vadd.f32 %v6142, %v5924
    %v6175 = vadd.f32 %v6143, %v5929
    %v6176 = vadd.f32 %v6144, %v5934
    %v6177 = vadd.f32 %v6145, %v5939
    %v6178 = vadd.f32 %v6146, %v5944
    %v6179 = vadd.f32 %v6147, %v5949
    %v6180 = vadd.f32 %v6148, %v5954
    %v6181 = vadd.f32 %v6149, %v5959
    %v6182 = vadd.f32 %v6150, %v5964
    %v6183 = vadd.f32 %v6151, %v5969
    %v6184 = vadd.f32 %v6152, %v5974
    %v6185 = vadd.f32 %v6153, %v5979
    %v6186 = vadd.f32 %v6154, %v5984
    %v6187 = vadd.f32 %v6155, %v5989
    %v6188 = vadd.f32 %v6156, %v5994
    %v6189 = vadd.f32 %v6157, %v5999
    %v6190 = vadd.f32 %v6158, %v6004
    %v6191 = vadd.f32 %v6159, %v6009
    %v6192 = vadd.f32 %v6160, %v6014
    %v6193 = vadd.f32 %v6161, %v6019
    %v6194 = vadd.f32 %v6162, %v6024
    %v6195 = vadd.f32 %v6163, %v6029
    %v6196 = vadd.f32 %v6164, %v6034
    %v6197 = vadd.f32 %v6165, %v6039
    %v6198 = vadd.f32 %v6166, %v6044
    %v6199 = vadd.f32 %v6167, %v6049
    %v6200 = vadd.f32 %v6168, %v6054
    %v6201 = vadd.f32 %v6169, %v6059
    %v6202 = vadd.f32 %v6170, %v6064
    %v6203 = vadd.f32 %v6171, %v6069
    %v6204 = vadd.f32 %v6172, %v6074
    %v6205 = vld [vmem:[%s7] sm:$0xff]
    %v6206 = vld [vmem:[%s7 + $0x8] sm:$0xff]
    %v6207 = vld [vmem:[%s7 + $0x10] sm:$0xff]
    %v6208 = vld [vmem:[%s7 + $0x18] sm:$0xff]
    %v6209 = vld [vmem:[%s7 + $0x20] sm:$0xff]
    %v6210 = vld [vmem:[%s7 + $0x28] sm:$0xff]
    %v6211 = vld [vmem:[%s7 + $0x30] sm:$0xff]
    %v6212 = vld [vmem:[%s7 + $0x38] sm:$0xff]
    %v6213 = vld [vmem:[%s8] sm:$0x1]
    %v6215 = vlaneseq
    %v6216 = vshrl.u32 %v6215, 7
    %v6217 = vsub.s32 0, %v6216
    %v6218 = vrot.slane %v6213, %v6217
    %v6221 = vsel %vm536, %v6173, 0
    %v6224 = vsel %vm536, %v6174, 0
    %v6227 = vsel %vm536, %v6175, 0
    %v6230 = vsel %vm536, %v6176, 0
    %v6233 = vsel %vm536, %v6177, 0
    %v6236 = vsel %vm536, %v6178, 0
    %v6239 = vsel %vm536, %v6179, 0
    %v6242 = vsel %vm536, %v6180, 0
    %v6245 = vsel %vm536, %v6181, 0
    %v6248 = vsel %vm536, %v6182, 0
    %v6251 = vsel %vm536, %v6183, 0
    %v6254 = vsel %vm536, %v6184, 0
    %v6257 = vsel %vm536, %v6185, 0
    %v6260 = vsel %vm536, %v6186, 0
    %v6263 = vsel %vm536, %v6187, 0
    %v6266 = vsel %vm536, %v6188, 0
    %v6269 = vsel %vm536, %v6189, 0
    %v6272 = vsel %vm536, %v6190, 0
    %v6275 = vsel %vm536, %v6191, 0
    %v6278 = vsel %vm536, %v6192, 0
    %v6281 = vsel %vm536, %v6193, 0
    %v6284 = vsel %vm536, %v6194, 0
    %v6287 = vsel %vm536, %v6195, 0
    %v6290 = vsel %vm536, %v6196, 0
    %v6293 = vsel %vm536, %v6197, 0
    %v6296 = vsel %vm536, %v6198, 0
    %v6299 = vsel %vm536, %v6199, 0
    %v6302 = vsel %vm536, %v6200, 0
    %v6305 = vsel %vm536, %v6201, 0
    %v6308 = vsel %vm536, %v6202, 0
    %v6311 = vsel %vm536, %v6203, 0
    %v6314 = vsel %vm536, %v6204, 0
    %6316 = vmatprep.subr.mxu0 0.0
    %6317 = vmatpush1.msra.mxu0 %v6205
    %6318 = vmatprep.subr.mxu0 0.0
    %6319 = vmatpush1.msra.mxu0 %v6206
    %6320 = vmatprep.subr.mxu0 0.0
    %6321 = vmatpush1.msra.mxu0 %v6207
    %6322 = vmatprep.subr.mxu0 0.0
    %6323 = vmatpush1.msra.mxu0 %v6208
    %6324 = vmatprep.subr.mxu0 0.0
    %6325 = vmatpush1.msra.mxu0 %v6209
    %6326 = vmatprep.subr.mxu0 0.0
    %6327 = vmatpush1.msra.mxu0 %v6210
    %6328 = vmatprep.subr.mxu0 0.0
    %6329 = vmatpush1.msra.mxu0 %v6211
    %6330 = vmatprep.subr.mxu0 0.0
    %6331 = vmatpush1.msra.mxu0 %v6212
    %6332 = vmatprep.subr.mxu0 0.0
    %6333 = vmatpush1.msra.mxu0 0.0
    %6334 = vmatprep.subr.mxu0 0.0
    %6335 = vmatpush1.msra.mxu0 0.0
    %6336 = vmatprep.subr.mxu0 0.0
    %6337 = vmatpush1.msra.mxu0 0.0
    %6338 = vmatprep.subr.mxu0 0.0
    %6339 = vmatpush1.msra.mxu0 0.0
    %6340 = vmatprep.subr.mxu0 0.0
    %6341 = vmatpush1.msra.mxu0 0.0
    %6342 = vmatprep.subr.mxu0 0.0
    %6343 = vmatpush1.msra.mxu0 0.0
    %6344 = vmatprep.subr.mxu0 0.0
    %6345 = vmatpush1.msra.mxu0 0.0
    %6346 = vmatprep.subr.mxu0 0.0
    %6347 = vmatpush1.msra.mxu0 0.0
    %6348 = vmatprep.subr.mxu0 0.0
    %6349 = vmatpush1.msra.mxu0 0.0
    %6350 = vmatprep.subr.mxu0 0.0
    %6351 = vmatpush1.msra.mxu0 0.0
    %6352 = vmatprep.subr.mxu0 0.0
    %6353 = vmatpush1.msra.mxu0 0.0
    %6354 = vmatprep.subr.mxu0 0.0
    %6355 = vmatpush1.msra.mxu0 0.0
    %6356 = vmatprep.subr.mxu0 0.0
    %6357 = vmatpush1.msra.mxu0 0.0
    %6358 = vmatprep.subr.mxu0 0.0
    %6359 = vmatpush1.msra.mxu0 0.0
    %6360 = vmatprep.subr.mxu0 0.0
    %6361 = vmatpush1.msra.mxu0 0.0
    %6362 = vmatprep.subr.mxu0 0.0
    %6363 = vmatpush1.msra.mxu0 0.0
    %6364 = vmatprep.subr.mxu0 0.0
    %6365 = vmatpush1.msra.mxu0 0.0
    %6366 = vmatprep.subr.mxu0 0.0
    %6367 = vmatpush1.msra.mxu0 0.0
    %6368 = vmatprep.subr.mxu0 0.0
    %6369 = vmatpush1.msra.mxu0 0.0
    %6370 = vmatprep.subr.mxu0 0.0
    %6371 = vmatpush1.msra.mxu0 0.0
    %6372 = vmatprep.subr.mxu0 0.0
    %6373 = vmatpush1.msra.mxu0 0.0
    %6374 = vmatprep.subr.mxu0 0.0
    %6375 = vmatpush1.msra.mxu0 0.0
    %6376 = vmatprep.subr.mxu0 0.0
    %6377 = vmatpush1.msra.mxu0 0.0
    %6378 = vmatprep.subr.mxu0 0.0
    %6379 = vmatpush1.msra.mxu0 0.0
    %6380 = vmatprep.mubr.f32.mxu0 0.0
    %6381 = vmatmul.mubr.f32.gmra.mrb[0].mxu0 %v6221
    %v6382 = vpop.f32.mrb[0].mxu0
    %v6383 = vadd.f32 %v6218, %v6382
    %v6384 = vpop.f32.mrb[0].mxu0
    %6385 = vmatprep.mubr.f32.mxu0 0.0
    %6386 = vmatmul.mubr.f32.gmra.mrb[0].mxu0 %v6224
    %v6387 = vpop.f32.mrb[0].mxu0
    %v6388 = vadd.f32 %v6218, %v6387
    %v6389 = vpop.f32.mrb[0].mxu0
    %6390 = vmatprep.mubr.f32.mxu0 0.0
    %6391 = vmatmul.mubr.f32.gmra.mrb[0].mxu0 %v6227
    %v6392 = vpop.f32.mrb[0].mxu0
    %v6393 = vadd.f32 %v6218, %v6392
    %v6394 = vpop.f32.mrb[0].mxu0
    %6395 = vmatprep.mubr.f32.mxu0 0.0
    %6396 = vmatmul.mubr.f32.gmra.mrb[0].mxu0 %v6230
    %v6397 = vpop.f32.mrb[0].mxu0
    %v6398 = vadd.f32 %v6218, %v6397
    %v6399 = vpop.f32.mrb[0].mxu0
    %6400 = vmatprep.mubr.f32.mxu0 0.0
    %6401 = vmatmul.mubr.f32.gmra.mrb[0].mxu0 %v6233
    %v6402 = vpop.f32.mrb[0].mxu0
    %v6403 = vadd.f32 %v6218, %v6402
    %v6404 = vpop.f32.mrb[0].mxu0
    %6405 = vmatprep.mubr.f32.mxu0 0.0
    %6406 = vmatmul.mubr.f32.gmra.mrb[0].mxu0 %v6236
    %v6407 = vpop.f32.mrb[0].mxu0
    %v6408 = vadd.f32 %v6218, %v6407
    %v6409 = vpop.f32.mrb[0].mxu0
    %6410 = vmatprep.mubr.f32.mxu0 0.0
    %6411 = vmatmul.mubr.f32.gmra.mrb[0].mxu0 %v6239
    %v6412 = vpop.f32.mrb[0].mxu0
    %v6413 = vadd.f32 %v6218, %v6412
    %v6414 = vpop.f32.mrb[0].mxu0
    %6415 = vmatprep.mubr.f32.mxu0 0.0
    %6416 = vmatmul.mubr.f32.gmra.mrb[0].mxu0 %v6242
    %v6417 = vpop.f32.mrb[0].mxu0
    %v6418 = vadd.f32 %v6218, %v6417
    %v6419 = vpop.f32.mrb[0].mxu0
    %6420 = vmatprep.mubr.f32.mxu0 0.0
    %6421 = vmatmul.mubr.f32.gmra.mrb[0].mxu0 %v6245
    %v6422 = vpop.f32.mrb[0].mxu0
    %v6423 = vadd.f32 %v6218, %v6422
    %v6424 = vpop.f32.mrb[0].mxu0
    %6425 = vmatprep.mubr.f32.mxu0 0.0
    %6426 = vmatmul.mubr.f32.gmra.mrb[0].mxu0 %v6248
    %v6427 = vpop.f32.mrb[0].mxu0
    %v6428 = vadd.f32 %v6218, %v6427
    %v6429 = vpop.f32.mrb[0].mxu0
    %6430 = vmatprep.mubr.f32.mxu0 0.0
    %6431 = vmatmul.mubr.f32.gmra.mrb[0].mxu0 %v6251
    %v6432 = vpop.f32.mrb[0].mxu0
    %v6433 = vadd.f32 %v6218, %v6432
    %v6434 = vpop.f32.mrb[0].mxu0
    %6435 = vmatprep.mubr.f32.mxu0 0.0
    %6436 = vmatmul.mubr.f32.gmra.mrb[0].mxu0 %v6254
    %v6437 = vpop.f32.mrb[0].mxu0
    %v6438 = vadd.f32 %v6218, %v6437
    %v6439 = vpop.f32.mrb[0].mxu0
    %6440 = vmatprep.mubr.f32.mxu0 0.0
    %6441 = vmatmul.mubr.f32.gmra.mrb[0].mxu0 %v6257
    %v6442 = vpop.f32.mrb[0].mxu0
    %v6443 = vadd.f32 %v6218, %v6442
    %v6444 = vpop.f32.mrb[0].mxu0
    %6445 = vmatprep.mubr.f32.mxu0 0.0
    %6446 = vmatmul.mubr.f32.gmra.mrb[0].mxu0 %v6260
    %v6447 = vpop.f32.mrb[0].mxu0
    %v6448 = vadd.f32 %v6218, %v6447
    %v6449 = vpop.f32.mrb[0].mxu0
    %6450 = vmatprep.mubr.f32.mxu0 0.0
    %6451 = vmatmul.mubr.f32.gmra.mrb[0].mxu0 %v6263
    %v6452 = vpop.f32.mrb[0].mxu0
    %v6453 = vadd.f32 %v6218, %v6452
    %v6454 = vpop.f32.mrb[0].mxu0
    %6455 = vmatprep.mubr.f32.mxu0 0.0
    %6456 = vmatmul.mubr.f32.gmra.mrb[0].mxu0 %v6266
    %v6457 = vpop.f32.mrb[0].mxu0
    %v6458 = vadd.f32 %v6218, %v6457
    %v6459 = vpop.f32.mrb[0].mxu0
    %6460 = vmatprep.mubr.f32.mxu0 0.0
    %6461 = vmatmul.mubr.f32.gmra.mrb[0].mxu0 %v6269
    %v6462 = vpop.f32.mrb[0].mxu0
    %v6463 = vadd.f32 %v6218, %v6462
    %v6464 = vpop.f32.mrb[0].mxu0
    %6465 = vmatprep.mubr.f32.mxu0 0.0
    %6466 = vmatmul.mubr.f32.gmra.mrb[0].mxu0 %v6272
    %v6467 = vpop.f32.mrb[0].mxu0
    %v6468 = vadd.f32 %v6218, %v6467
    %v6469 = vpop.f32.mrb[0].mxu0
    %6470 = vmatprep.mubr.f32.mxu0 0.0
    %6471 = vmatmul.mubr.f32.gmra.mrb[0].mxu0 %v6275
    %v6472 = vpop.f32.mrb[0].mxu0
    %v6473 = vadd.f32 %v6218, %v6472
    %v6474 = vpop.f32.mrb[0].mxu0
    %6475 = vmatprep.mubr.f32.mxu0 0.0
    %6476 = vmatmul.mubr.f32.gmra.mrb[0].mxu0 %v6278
    %v6477 = vpop.f32.mrb[0].mxu0
    %v6478 = vadd.f32 %v6218, %v6477
    %v6479 = vpop.f32.mrb[0].mxu0
    %6480 = vmatprep.mubr.f32.mxu0 0.0
    %6481 = vmatmul.mubr.f32.gmra.mrb[0].mxu0 %v6281
    %v6482 = vpop.f32.mrb[0].mxu0
    %v6483 = vadd.f32 %v6218, %v6482
    %v6484 = vpop.f32.mrb[0].mxu0
    %6485 = vmatprep.mubr.f32.mxu0 0.0
    %6486 = vmatmul.mubr.f32.gmra.mrb[0].mxu0 %v6284
    %v6487 = vpop.f32.mrb[0].mxu0
    %v6488 = vadd.f32 %v6218, %v6487
    %v6489 = vpop.f32.mrb[0].mxu0
    %6490 = vmatprep.mubr.f32.mxu0 0.0
    %6491 = vmatmul.mubr.f32.gmra.mrb[0].mxu0 %v6287
    %v6492 = vpop.f32.mrb[0].mxu0
    %v6493 = vadd.f32 %v6218, %v6492
    %v6494 = vpop.f32.mrb[0].mxu0
    %6495 = vmatprep.mubr.f32.mxu0 0.0
    %6496 = vmatmul.mubr.f32.gmra.mrb[0].mxu0 %v6290
    %v6497 = vpop.f32.mrb[0].mxu0
    %v6498 = vadd.f32 %v6218, %v6497
    %v6499 = vpop.f32.mrb[0].mxu0
    %6500 = vmatprep.mubr.f32.mxu0 0.0
    %6501 = vmatmul.mubr.f32.gmra.mrb[0].mxu0 %v6293
    %v6502 = vpop.f32.mrb[0].mxu0
    %v6503 = vadd.f32 %v6218, %v6502
    %v6504 = vpop.f32.mrb[0].mxu0
    %6505 = vmatprep.mubr.f32.mxu0 0.0
    %6506 = vmatmul.mubr.f32.gmra.mrb[0].mxu0 %v6296
    %v6507 = vpop.f32.mrb[0].mxu0
    %v6508 = vadd.f32 %v6218, %v6507
    %v6509 = vpop.f32.mrb[0].mxu0
    %6510 = vmatprep.mubr.f32.mxu0 0.0
    %6511 = vmatmul.mubr.f32.gmra.mrb[0].mxu0 %v6299
    %v6512 = vpop.f32.mrb[0].mxu0
    %v6513 = vadd.f32 %v6218, %v6512
    %v6514 = vpop.f32.mrb[0].mxu0
    %6515 = vmatprep.mubr.f32.mxu0 0.0
    %6516 = vmatmul.mubr.f32.gmra.mrb[0].mxu0 %v6302
    %v6517 = vpop.f32.mrb[0].mxu0
    %v6518 = vadd.f32 %v6218, %v6517
    %v6519 = vpop.f32.mrb[0].mxu0
    %6520 = vmatprep.mubr.f32.mxu0 0.0
    %6521 = vmatmul.mubr.f32.gmra.mrb[0].mxu0 %v6305
    %v6522 = vpop.f32.mrb[0].mxu0
    %v6523 = vadd.f32 %v6218, %v6522
    %v6524 = vpop.f32.mrb[0].mxu0
    %6525 = vmatprep.mubr.f32.mxu0 0.0
    %6526 = vmatmul.mubr.f32.gmra.mrb[0].mxu0 %v6308
    %v6527 = vpop.f32.mrb[0].mxu0
    %v6528 = vadd.f32 %v6218, %v6527
    %v6529 = vpop.f32.mrb[0].mxu0
    %6530 = vmatprep.mubr.f32.mxu0 0.0
    %6531 = vmatmul.mubr.f32.gmra.mrb[0].mxu0 %v6311
    %v6532 = vpop.f32.mrb[0].mxu0
    %v6533 = vadd.f32 %v6218, %v6532
    %v6534 = vpop.f32.mrb[0].mxu0
    %6535 = vmatprep.mubr.f32.mxu0 0.0
    %6536 = vmatmul.mubr.f32.gmra.mrb[0].mxu0 %v6314
    %v6537 = vpop.f32.mrb[0].mxu0
    %v6538 = vadd.f32 %v6218, %v6537
    %v6539 = vpop.f32.mrb[0].mxu0
    %6540 = vdwg.mxu0
    %v6541 = vmul.f32 %v6383, %v1323
    %v6542 = vmul.f32 %v6388, %v1323
    %v6543 = vmul.f32 %v6393, %v1323
    %v6544 = vmul.f32 %v6398, %v1323
    %v6545 = vmul.f32 %v6403, %v1323
    %v6546 = vmul.f32 %v6408, %v1323
    %v6547 = vmul.f32 %v6413, %v1323
    %v6548 = vmul.f32 %v6418, %v1323
    %v6549 = vmul.f32 %v6423, %v1323
    %v6550 = vmul.f32 %v6428, %v1323
    %v6551 = vmul.f32 %v6433, %v1323
    %v6552 = vmul.f32 %v6438, %v1323
    %v6553 = vmul.f32 %v6443, %v1323
    %v6554 = vmul.f32 %v6448, %v1323
    %v6555 = vmul.f32 %v6453, %v1323
    %v6556 = vmul.f32 %v6458, %v1323
    %v6557 = vmul.f32 %v6463, %v1323
    %v6558 = vmul.f32 %v6468, %v1323
    %v6559 = vmul.f32 %v6473, %v1323
    %v6560 = vmul.f32 %v6478, %v1323
    %v6561 = vmul.f32 %v6483, %v1323
    %v6562 = vmul.f32 %v6488, %v1323
    %v6563 = vmul.f32 %v6493, %v1323
    %v6564 = vmul.f32 %v6498, %v1323
    %v6565 = vmul.f32 %v6503, %v1323
    %v6566 = vmul.f32 %v6508, %v1323
    %v6567 = vmul.f32 %v6513, %v1323
    %v6568 = vmul.f32 %v6518, %v1323
    %v6569 = vmul.f32 %v6523, %v1323
    %v6570 = vmul.f32 %v6528, %v1323
    %v6571 = vmul.f32 %v6533, %v1323
    %v6572 = vmul.f32 %v6538, %v1323
    %v6573 = vtanh.pop %v6541
    %v6574 = vtanh.pop %v6542
    %v6575 = vtanh.pop %v6543
    %v6576 = vtanh.pop %v6544
    %v6577 = vtanh.pop %v6545
    %v6578 = vtanh.pop %v6546
    %v6579 = vtanh.pop %v6547
    %v6580 = vtanh.pop %v6548
    %v6581 = vtanh.pop %v6549
    %v6582 = vtanh.pop %v6550
    %v6583 = vtanh.pop %v6551
    %v6584 = vtanh.pop %v6552
    %v6585 = vtanh.pop %v6553
    %v6586 = vtanh.pop %v6554
    %v6587 = vtanh.pop %v6555
    %v6588 = vtanh.pop %v6556
    %v6589 = vtanh.pop %v6557
    %v6590 = vtanh.pop %v6558
    %v6591 = vtanh.pop %v6559
    %v6592 = vtanh.pop %v6560
    %v6593 = vtanh.pop %v6561
    %v6594 = vtanh.pop %v6562
    %v6595 = vtanh.pop %v6563
    %v6596 = vtanh.pop %v6564
    %v6597 = vtanh.pop %v6565
    %v6598 = vtanh.pop %v6566
    %v6599 = vtanh.pop %v6567
    %v6600 = vtanh.pop %v6568
    %v6601 = vtanh.pop %v6569
    %v6602 = vtanh.pop %v6570
    %v6603 = vtanh.pop %v6571
    %v6604 = vtanh.pop %v6572
    %v6605 = vmul.f32 %v6383, %v6573
    %v6606 = vmul.f32 %v6388, %v6574
    %v6607 = vmul.f32 %v6393, %v6575
    %v6608 = vmul.f32 %v6398, %v6576
    %v6609 = vmul.f32 %v6403, %v6577
    %v6610 = vmul.f32 %v6408, %v6578
    %v6611 = vmul.f32 %v6413, %v6579
    %v6612 = vmul.f32 %v6418, %v6580
    %v6613 = vmul.f32 %v6423, %v6581
    %v6614 = vmul.f32 %v6428, %v6582
    %v6615 = vmul.f32 %v6433, %v6583
    %v6616 = vmul.f32 %v6438, %v6584
    %v6617 = vmul.f32 %v6443, %v6585
    %v6618 = vmul.f32 %v6448, %v6586
    %v6619 = vmul.f32 %v6453, %v6587
    %v6620 = vmul.f32 %v6458, %v6588
    %v6621 = vmul.f32 %v6463, %v6589
    %v6622 = vmul.f32 %v6468, %v6590
    %v6623 = vmul.f32 %v6473, %v6591
    %v6624 = vmul.f32 %v6478, %v6592
    %v6625 = vmul.f32 %v6483, %v6593
    %v6626 = vmul.f32 %v6488, %v6594
    %v6627 = vmul.f32 %v6493, %v6595
    %v6628 = vmul.f32 %v6498, %v6596
    %v6629 = vmul.f32 %v6503, %v6597
    %v6630 = vmul.f32 %v6508, %v6598
    %v6631 = vmul.f32 %v6513, %v6599
    %v6632 = vmul.f32 %v6518, %v6600
    %v6633 = vmul.f32 %v6523, %v6601
    %v6634 = vmul.f32 %v6528, %v6602
    %v6635 = vmul.f32 %v6533, %v6603
    %v6636 = vmul.f32 %v6538, %v6604
    %v6637 = vadd.f32 %v6605, %v6383
    %v6638 = vadd.f32 %v6606, %v6388
    %v6639 = vadd.f32 %v6607, %v6393
    %v6640 = vadd.f32 %v6608, %v6398
    %v6641 = vadd.f32 %v6609, %v6403
    %v6642 = vadd.f32 %v6610, %v6408
    %v6643 = vadd.f32 %v6611, %v6413
    %v6644 = vadd.f32 %v6612, %v6418
    %v6645 = vadd.f32 %v6613, %v6423
    %v6646 = vadd.f32 %v6614, %v6428
    %v6647 = vadd.f32 %v6615, %v6433
    %v6648 = vadd.f32 %v6616, %v6438
    %v6649 = vadd.f32 %v6617, %v6443
    %v6650 = vadd.f32 %v6618, %v6448
    %v6651 = vadd.f32 %v6619, %v6453
    %v6652 = vadd.f32 %v6620, %v6458
    %v6653 = vadd.f32 %v6621, %v6463
    %v6654 = vadd.f32 %v6622, %v6468
    %v6655 = vadd.f32 %v6623, %v6473
    %v6656 = vadd.f32 %v6624, %v6478
    %v6657 = vadd.f32 %v6625, %v6483
    %v6658 = vadd.f32 %v6626, %v6488
    %v6659 = vadd.f32 %v6627, %v6493
    %v6660 = vadd.f32 %v6628, %v6498
    %v6661 = vadd.f32 %v6629, %v6503
    %v6662 = vadd.f32 %v6630, %v6508
    %v6663 = vadd.f32 %v6631, %v6513
    %v6664 = vadd.f32 %v6632, %v6518
    %v6665 = vadd.f32 %v6633, %v6523
    %v6666 = vadd.f32 %v6634, %v6528
    %v6667 = vadd.f32 %v6635, %v6533
    %v6668 = vadd.f32 %v6636, %v6538
    %v6669 = vld [vmem:[%s9] sm:$0xff]
    %v6670 = vld [vmem:[%s9 + $0x8] sm:$0xff]
    %v6671 = vld [vmem:[%s9 + $0x10] sm:$0xff]
    %v6672 = vld [vmem:[%s9 + $0x18] sm:$0xff]
    %v6673 = vld [vmem:[%s9 + $0x20] sm:$0xff]
    %v6674 = vld [vmem:[%s9 + $0x28] sm:$0xff]
    %v6675 = vld [vmem:[%s9 + $0x30] sm:$0xff]
    %v6676 = vld [vmem:[%s9 + $0x38] sm:$0xff]
    %v6677 = vld [vmem:[%s10] sm:$0x1]
    %v6679 = vlaneseq
    %v6680 = vshrl.u32 %v6679, 7
    %v6681 = vsub.s32 0, %v6680
    %v6682 = vrot.slane %v6677, %v6681
    %v6685 = vsel %vm536, %v6637, 0
    %v6688 = vsel %vm536, %v6638, 0
    %v6691 = vsel %vm536, %v6639, 0
    %v6694 = vsel %vm536, %v6640, 0
    %v6697 = vsel %vm536, %v6641, 0
    %v6700 = vsel %vm536, %v6642, 0
    %v6703 = vsel %vm536, %v6643, 0
    %v6706 = vsel %vm536, %v6644, 0
    %v6709 = vsel %vm536, %v6645, 0
    %v6712 = vsel %vm536, %v6646, 0
    %v6715 = vsel %vm536, %v6647, 0
    %v6718 = vsel %vm536, %v6648, 0
    %v6721 = vsel %vm536, %v6649, 0
    %v6724 = vsel %vm536, %v6650, 0
    %v6727 = vsel %vm536, %v6651, 0
    %v6730 = vsel %vm536, %v6652, 0
    %v6733 = vsel %vm536, %v6653, 0
    %v6736 = vsel %vm536, %v6654, 0
    %v6739 = vsel %vm536, %v6655, 0
    %v6742 = vsel %vm536, %v6656, 0
    %v6745 = vsel %vm536, %v6657, 0
    %v6748 = vsel %vm536, %v6658, 0
    %v6751 = vsel %vm536, %v6659, 0
    %v6754 = vsel %vm536, %v6660, 0
    %v6757 = vsel %vm536, %v6661, 0
    %v6760 = vsel %vm536, %v6662, 0
    %v6763 = vsel %vm536, %v6663, 0
    %v6766 = vsel %vm536, %v6664, 0
    %v6769 = vsel %vm536, %v6665, 0
    %v6772 = vsel %vm536, %v6666, 0
    %v6775 = vsel %vm536, %v6667, 0
    %v6778 = vsel %vm536, %v6668, 0
    %6780 = vmatprep.subr.mxu0 0.0
    %6781 = vmatpush1.msra.mxu0 %v6669
    %6782 = vmatprep.subr.mxu0 0.0
    %6783 = vmatpush1.msra.mxu0 %v6670
    %6784 = vmatprep.subr.mxu0 0.0
    %6785 = vmatpush1.msra.mxu0 %v6671
    %6786 = vmatprep.subr.mxu0 0.0
    %6787 = vmatpush1.msra.mxu0 %v6672
    %6788 = vmatprep.subr.mxu0 0.0
    %6789 = vmatpush1.msra.mxu0 %v6673
    %6790 = vmatprep.subr.mxu0 0.0
    %6791 = vmatpush1.msra.mxu0 %v6674
    %6792 = vmatprep.subr.mxu0 0.0
    %6793 = vmatpush1.msra.mxu0 %v6675
    %6794 = vmatprep.subr.mxu0 0.0
    %6795 = vmatpush1.msra.mxu0 %v6676
    %6796 = vmatprep.subr.mxu0 0.0
    %6797 = vmatpush1.msra.mxu0 0.0
    %6798 = vmatprep.subr.mxu0 0.0
    %6799 = vmatpush1.msra.mxu0 0.0
    %6800 = vmatprep.subr.mxu0 0.0
    %6801 = vmatpush1.msra.mxu0 0.0
    %6802 = vmatprep.subr.mxu0 0.0
    %6803 = vmatpush1.msra.mxu0 0.0
    %6804 = vmatprep.subr.mxu0 0.0
    %6805 = vmatpush1.msra.mxu0 0.0
    %6806 = vmatprep.subr.mxu0 0.0
    %6807 = vmatpush1.msra.mxu0 0.0
    %6808 = vmatprep.subr.mxu0 0.0
    %6809 = vmatpush1.msra.mxu0 0.0
    %6810 = vmatprep.subr.mxu0 0.0
    %6811 = vmatpush1.msra.mxu0 0.0
    %6812 = vmatprep.subr.mxu0 0.0
    %6813 = vmatpush1.msra.mxu0 0.0
    %6814 = vmatprep.subr.mxu0 0.0
    %6815 = vmatpush1.msra.mxu0 0.0
    %6816 = vmatprep.subr.mxu0 0.0
    %6817 = vmatpush1.msra.mxu0 0.0
    %6818 = vmatprep.subr.mxu0 0.0
    %6819 = vmatpush1.msra.mxu0 0.0
    %6820 = vmatprep.subr.mxu0 0.0
    %6821 = vmatpush1.msra.mxu0 0.0
    %6822 = vmatprep.subr.mxu0 0.0
    %6823 = vmatpush1.msra.mxu0 0.0
    %6824 = vmatprep.subr.mxu0 0.0
    %6825 = vmatpush1.msra.mxu0 0.0
    %6826 = vmatprep.subr.mxu0 0.0
    %6827 = vmatpush1.msra.mxu0 0.0
    %6828 = vmatprep.subr.mxu0 0.0
    %6829 = vmatpush1.msra.mxu0 0.0
    %6830 = vmatprep.subr.mxu0 0.0
    %6831 = vmatpush1.msra.mxu0 0.0
    %6832 = vmatprep.subr.mxu0 0.0
    %6833 = vmatpush1.msra.mxu0 0.0
    %6834 = vmatprep.subr.mxu0 0.0
    %6835 = vmatpush1.msra.mxu0 0.0
    %6836 = vmatprep.subr.mxu0 0.0
    %6837 = vmatpush1.msra.mxu0 0.0
    %6838 = vmatprep.subr.mxu0 0.0
    %6839 = vmatpush1.msra.mxu0 0.0
    %6840 = vmatprep.subr.mxu0 0.0
    %6841 = vmatpush1.msra.mxu0 0.0
    %6842 = vmatprep.subr.mxu0 0.0
    %6843 = vmatpush1.msra.mxu0 0.0
    %6844 = vmatprep.mubr.f32.mxu0 0.0
    %6845 = vmatmul.mubr.f32.gmra.mrb[0].mxu0 %v6685
    %v6846 = vpop.f32.mrb[0].mxu0
    %v6847 = vadd.f32 %v6682, %v6846
    %v6848 = vpop.f32.mrb[0].mxu0
    %6849 = vmatprep.mubr.f32.mxu0 0.0
    %6850 = vmatmul.mubr.f32.gmra.mrb[0].mxu0 %v6688
    %v6851 = vpop.f32.mrb[0].mxu0
    %v6852 = vadd.f32 %v6682, %v6851
    %v6853 = vpop.f32.mrb[0].mxu0
    %6854 = vmatprep.mubr.f32.mxu0 0.0
    %6855 = vmatmul.mubr.f32.gmra.mrb[0].mxu0 %v6691
    %v6856 = vpop.f32.mrb[0].mxu0
    %v6857 = vadd.f32 %v6682, %v6856
    %v6858 = vpop.f32.mrb[0].mxu0
    %6859 = vmatprep.mubr.f32.mxu0 0.0
    %6860 = vmatmul.mubr.f32.gmra.mrb[0].mxu0 %v6694
    %v6861 = vpop.f32.mrb[0].mxu0
    %v6862 = vadd.f32 %v6682, %v6861
    %v6863 = vpop.f32.mrb[0].mxu0
    %6864 = vmatprep.mubr.f32.mxu0 0.0
    %6865 = vmatmul.mubr.f32.gmra.mrb[0].mxu0 %v6697
    %v6866 = vpop.f32.mrb[0].mxu0
    %v6867 = vadd.f32 %v6682, %v6866
    %v6868 = vpop.f32.mrb[0].mxu0
    %6869 = vmatprep.mubr.f32.mxu0 0.0
    %6870 = vmatmul.mubr.f32.gmra.mrb[0].mxu0 %v6700
    %v6871 = vpop.f32.mrb[0].mxu0
    %v6872 = vadd.f32 %v6682, %v6871
    %v6873 = vpop.f32.mrb[0].mxu0
    %6874 = vmatprep.mubr.f32.mxu0 0.0
    %6875 = vmatmul.mubr.f32.gmra.mrb[0].mxu0 %v6703
    %v6876 = vpop.f32.mrb[0].mxu0
    %v6877 = vadd.f32 %v6682, %v6876
    %v6878 = vpop.f32.mrb[0].mxu0
    %6879 = vmatprep.mubr.f32.mxu0 0.0
    %6880 = vmatmul.mubr.f32.gmra.mrb[0].mxu0 %v6706
    %v6881 = vpop.f32.mrb[0].mxu0
    %v6882 = vadd.f32 %v6682, %v6881
    %v6883 = vpop.f32.mrb[0].mxu0
    %6884 = vmatprep.mubr.f32.mxu0 0.0
    %6885 = vmatmul.mubr.f32.gmra.mrb[0].mxu0 %v6709
    %v6886 = vpop.f32.mrb[0].mxu0
    %v6887 = vadd.f32 %v6682, %v6886
    %v6888 = vpop.f32.mrb[0].mxu0
    %6889 = vmatprep.mubr.f32.mxu0 0.0
    %6890 = vmatmul.mubr.f32.gmra.mrb[0].mxu0 %v6712
    %v6891 = vpop.f32.mrb[0].mxu0
    %v6892 = vadd.f32 %v6682, %v6891
    %v6893 = vpop.f32.mrb[0].mxu0
    %6894 = vmatprep.mubr.f32.mxu0 0.0
    %6895 = vmatmul.mubr.f32.gmra.mrb[0].mxu0 %v6715
    %v6896 = vpop.f32.mrb[0].mxu0
    %v6897 = vadd.f32 %v6682, %v6896
    %v6898 = vpop.f32.mrb[0].mxu0
    %6899 = vmatprep.mubr.f32.mxu0 0.0
    %6900 = vmatmul.mubr.f32.gmra.mrb[0].mxu0 %v6718
    %v6901 = vpop.f32.mrb[0].mxu0
    %v6902 = vadd.f32 %v6682, %v6901
    %v6903 = vpop.f32.mrb[0].mxu0
    %6904 = vmatprep.mubr.f32.mxu0 0.0
    %6905 = vmatmul.mubr.f32.gmra.mrb[0].mxu0 %v6721
    %v6906 = vpop.f32.mrb[0].mxu0
    %v6907 = vadd.f32 %v6682, %v6906
    %v6908 = vpop.f32.mrb[0].mxu0
    %6909 = vmatprep.mubr.f32.mxu0 0.0
    %6910 = vmatmul.mubr.f32.gmra.mrb[0].mxu0 %v6724
    %v6911 = vpop.f32.mrb[0].mxu0
    %v6912 = vadd.f32 %v6682, %v6911
    %v6913 = vpop.f32.mrb[0].mxu0
    %6914 = vmatprep.mubr.f32.mxu0 0.0
    %6915 = vmatmul.mubr.f32.gmra.mrb[0].mxu0 %v6727
    %v6916 = vpop.f32.mrb[0].mxu0
    %v6917 = vadd.f32 %v6682, %v6916
    %v6918 = vpop.f32.mrb[0].mxu0
    %6919 = vmatprep.mubr.f32.mxu0 0.0
    %6920 = vmatmul.mubr.f32.gmra.mrb[0].mxu0 %v6730
    %v6921 = vpop.f32.mrb[0].mxu0
    %v6922 = vadd.f32 %v6682, %v6921
    %v6923 = vpop.f32.mrb[0].mxu0
    %6924 = vmatprep.mubr.f32.mxu0 0.0
    %6925 = vmatmul.mubr.f32.gmra.mrb[0].mxu0 %v6733
    %v6926 = vpop.f32.mrb[0].mxu0
    %v6927 = vadd.f32 %v6682, %v6926
    %v6928 = vpop.f32.mrb[0].mxu0
    %6929 = vmatprep.mubr.f32.mxu0 0.0
    %6930 = vmatmul.mubr.f32.gmra.mrb[0].mxu0 %v6736
    %v6931 = vpop.f32.mrb[0].mxu0
    %v6932 = vadd.f32 %v6682, %v6931
    %v6933 = vpop.f32.mrb[0].mxu0
    %6934 = vmatprep.mubr.f32.mxu0 0.0
    %6935 = vmatmul.mubr.f32.gmra.mrb[0].mxu0 %v6739
    %v6936 = vpop.f32.mrb[0].mxu0
    %v6937 = vadd.f32 %v6682, %v6936
    %v6938 = vpop.f32.mrb[0].mxu0
    %6939 = vmatprep.mubr.f32.mxu0 0.0
    %6940 = vmatmul.mubr.f32.gmra.mrb[0].mxu0 %v6742
    %v6941 = vpop.f32.mrb[0].mxu0
    %v6942 = vadd.f32 %v6682, %v6941
    %v6943 = vpop.f32.mrb[0].mxu0
    %6944 = vmatprep.mubr.f32.mxu0 0.0
    %6945 = vmatmul.mubr.f32.gmra.mrb[0].mxu0 %v6745
    %v6946 = vpop.f32.mrb[0].mxu0
    %v6947 = vadd.f32 %v6682, %v6946
    %v6948 = vpop.f32.mrb[0].mxu0
    %6949 = vmatprep.mubr.f32.mxu0 0.0
    %6950 = vmatmul.mubr.f32.gmra.mrb[0].mxu0 %v6748
    %v6951 = vpop.f32.mrb[0].mxu0
    %v6952 = vadd.f32 %v6682, %v6951
    %v6953 = vpop.f32.mrb[0].mxu0
    %6954 = vmatprep.mubr.f32.mxu0 0.0
    %6955 = vmatmul.mubr.f32.gmra.mrb[0].mxu0 %v6751
    %v6956 = vpop.f32.mrb[0].mxu0
    %v6957 = vadd.f32 %v6682, %v6956
    %v6958 = vpop.f32.mrb[0].mxu0
    %6959 = vmatprep.mubr.f32.mxu0 0.0
    %6960 = vmatmul.mubr.f32.gmra.mrb[0].mxu0 %v6754
    %v6961 = vpop.f32.mrb[0].mxu0
    %v6962 = vadd.f32 %v6682, %v6961
    %v6963 = vpop.f32.mrb[0].mxu0
    %6964 = vmatprep.mubr.f32.mxu0 0.0
    %6965 = vmatmul.mubr.f32.gmra.mrb[0].mxu0 %v6757
    %v6966 = vpop.f32.mrb[0].mxu0
    %v6967 = vadd.f32 %v6682, %v6966
    %v6968 = vpop.f32.mrb[0].mxu0
    %6969 = vmatprep.mubr.f32.mxu0 0.0
    %6970 = vmatmul.mubr.f32.gmra.mrb[0].mxu0 %v6760
    %v6971 = vpop.f32.mrb[0].mxu0
    %v6972 = vadd.f32 %v6682, %v6971
    %v6973 = vpop.f32.mrb[0].mxu0
    %6974 = vmatprep.mubr.f32.mxu0 0.0
    %6975 = vmatmul.mubr.f32.gmra.mrb[0].mxu0 %v6763
    %v6976 = vpop.f32.mrb[0].mxu0
    %v6977 = vadd.f32 %v6682, %v6976
    %v6978 = vpop.f32.mrb[0].mxu0
    %6979 = vmatprep.mubr.f32.mxu0 0.0
    %6980 = vmatmul.mubr.f32.gmra.mrb[0].mxu0 %v6766
    %v6981 = vpop.f32.mrb[0].mxu0
    %v6982 = vadd.f32 %v6682, %v6981
    %v6983 = vpop.f32.mrb[0].mxu0
    %6984 = vmatprep.mubr.f32.mxu0 0.0
    %6985 = vmatmul.mubr.f32.gmra.mrb[0].mxu0 %v6769
    %v6986 = vpop.f32.mrb[0].mxu0
    %v6987 = vadd.f32 %v6682, %v6986
    %v6988 = vpop.f32.mrb[0].mxu0
    %6989 = vmatprep.mubr.f32.mxu0 0.0
    %6990 = vmatmul.mubr.f32.gmra.mrb[0].mxu0 %v6772
    %v6991 = vpop.f32.mrb[0].mxu0
    %v6992 = vadd.f32 %v6682, %v6991
    %v6993 = vpop.f32.mrb[0].mxu0
    %6994 = vmatprep.mubr.f32.mxu0 0.0
    %6995 = vmatmul.mubr.f32.gmra.mrb[0].mxu0 %v6775
    %v6996 = vpop.f32.mrb[0].mxu0
    %v6997 = vadd.f32 %v6682, %v6996
    %v6998 = vpop.f32.mrb[0].mxu0
    %6999 = vmatprep.mubr.f32.mxu0 0.0
    %7000 = vmatmul.mubr.f32.gmra.mrb[0].mxu0 %v6778
    %v7001 = vpop.f32.mrb[0].mxu0
    %v7002 = vadd.f32 %v6682, %v7001
    %v7003 = vpop.f32.mrb[0].mxu0
    %7004 = vdwg.mxu0
    %v7005 = vstv %s5364
    %v7006 = vmul.f32 %v7005, %v6847
    %v7007 = vmul.f32 %v7005, %v6852
    %v7008 = vmul.f32 %v7005, %v6857
    %v7009 = vmul.f32 %v7005, %v6862
    %v7010 = vmul.f32 %v7005, %v6867
    %v7011 = vmul.f32 %v7005, %v6872
    %v7012 = vmul.f32 %v7005, %v6877
    %v7013 = vmul.f32 %v7005, %v6882
    %v7014 = vmul.f32 %v7005, %v6887
    %v7015 = vmul.f32 %v7005, %v6892
    %v7016 = vmul.f32 %v7005, %v6897
    %v7017 = vmul.f32 %v7005, %v6902
    %v7018 = vmul.f32 %v7005, %v6907
    %v7019 = vmul.f32 %v7005, %v6912
    %v7020 = vmul.f32 %v7005, %v6917
    %v7021 = vmul.f32 %v7005, %v6922
    %v7022 = vmul.f32 %v7005, %v6927
    %v7023 = vmul.f32 %v7005, %v6932
    %v7024 = vmul.f32 %v7005, %v6937
    %v7025 = vmul.f32 %v7005, %v6942
    %v7026 = vmul.f32 %v7005, %v6947
    %v7027 = vmul.f32 %v7005, %v6952
    %v7028 = vmul.f32 %v7005, %v6957
    %v7029 = vmul.f32 %v7005, %v6962
    %v7030 = vmul.f32 %v7005, %v6967
    %v7031 = vmul.f32 %v7005, %v6972
    %v7032 = vmul.f32 %v7005, %v6977
    %v7033 = vmul.f32 %v7005, %v6982
    %v7034 = vmul.f32 %v7005, %v6987
    %v7035 = vmul.f32 %v7005, %v6992
    %v7036 = vmul.f32 %v7005, %v6997
    %v7037 = vmul.f32 %v7005, %v7002
    %v7038 = vadd.f32 %v5299, %v7006
    %v7039 = vadd.f32 %v5300, %v7007
    %v7040 = vadd.f32 %v5301, %v7008
    %v7041 = vadd.f32 %v5302, %v7009
    %v7042 = vadd.f32 %v5303, %v7010
    %v7043 = vadd.f32 %v5304, %v7011
    %v7044 = vadd.f32 %v5305, %v7012
    %v7045 = vadd.f32 %v5306, %v7013
    %v7046 = vadd.f32 %v5307, %v7014
    %v7047 = vadd.f32 %v5308, %v7015
    %v7048 = vadd.f32 %v5309, %v7016
    %v7049 = vadd.f32 %v5310, %v7017
    %v7050 = vadd.f32 %v5311, %v7018
    %v7051 = vadd.f32 %v5312, %v7019
    %v7052 = vadd.f32 %v5313, %v7020
    %v7053 = vadd.f32 %v5314, %v7021
    %v7054 = vadd.f32 %v5315, %v7022
    %v7055 = vadd.f32 %v5316, %v7023
    %v7056 = vadd.f32 %v5317, %v7024
    %v7057 = vadd.f32 %v5318, %v7025
    %v7058 = vadd.f32 %v5319, %v7026
    %v7059 = vadd.f32 %v5320, %v7027
    %v7060 = vadd.f32 %v5321, %v7028
    %v7061 = vadd.f32 %v5322, %v7029
    %v7062 = vadd.f32 %v5323, %v7030
    %v7063 = vadd.f32 %v5324, %v7031
    %v7064 = vadd.f32 %v5325, %v7032
    %v7065 = vadd.f32 %v5326, %v7033
    %v7066 = vadd.f32 %v5327, %v7034
    %v7067 = vadd.f32 %v5328, %v7035
    %v7068 = vadd.f32 %v5329, %v7036
    %v7069 = vadd.f32 %v5330, %v7037
    %s7070 = scalar_lea.vmem [#allocation9], 1024
    %7071 = vst [vmem:[%s7070] sm:$0xff] %v7038
    %7072 = vst [vmem:[%s7070 + $0x8] sm:$0xff] %v7039
    %7073 = vst [vmem:[%s7070 + $0x10] sm:$0xff] %v7040
    %7074 = vst [vmem:[%s7070 + $0x18] sm:$0xff] %v7041
    %7075 = vst [vmem:[%s7070 + $0x20] sm:$0xff] %v7042
    %7076 = vst [vmem:[%s7070 + $0x28] sm:$0xff] %v7043
    %7077 = vst [vmem:[%s7070 + $0x30] sm:$0xff] %v7044
    %7078 = vst [vmem:[%s7070 + $0x38] sm:$0xff] %v7045
    %7079 = vst [vmem:[%s7070 + $0x40] sm:$0xff] %v7046
    %7080 = vst [vmem:[%s7070 + $0x48] sm:$0xff] %v7047
    %7081 = vst [vmem:[%s7070 + $0x50] sm:$0xff] %v7048
    %7082 = vst [vmem:[%s7070 + $0x58] sm:$0xff] %v7049
    %7083 = vst [vmem:[%s7070 + $0x60] sm:$0xff] %v7050
    %7084 = vst [vmem:[%s7070 + $0x68] sm:$0xff] %v7051
    %7085 = vst [vmem:[%s7070 + $0x70] sm:$0xff] %v7052
    %7086 = vst [vmem:[%s7070 + $0x78] sm:$0xff] %v7053
    %7087 = vst [vmem:[%s7070 + $0x80] sm:$0xff] %v7054
    %7088 = vst [vmem:[%s7070 + $0x88] sm:$0xff] %v7055
    %7089 = vst [vmem:[%s7070 + $0x90] sm:$0xff] %v7056
    %7090 = vst [vmem:[%s7070 + $0x98] sm:$0xff] %v7057
    %7091 = vst [vmem:[%s7070 + $0xa0] sm:$0xff] %v7058
    %7092 = vst [vmem:[%s7070 + $0xa8] sm:$0xff] %v7059
    %7093 = vst [vmem:[%s7070 + $0xb0] sm:$0xff] %v7060
    %7094 = vst [vmem:[%s7070 + $0xb8] sm:$0xff] %v7061
    %7095 = vst [vmem:[%s7070 + $0xc0] sm:$0xff] %v7062
    %7096 = vst [vmem:[%s7070 + $0xc8] sm:$0xff] %v7063
    %7097 = vst [vmem:[%s7070 + $0xd0] sm:$0xff] %v7064
    %7098 = vst [vmem:[%s7070 + $0xd8] sm:$0xff] %v7065
    %7099 = vst [vmem:[%s7070 + $0xe0] sm:$0xff] %v7066
    %7100 = vst [vmem:[%s7070 + $0xe8] sm:$0xff] %v7067
    %7101 = vst [vmem:[%s7070 + $0xf0] sm:$0xff] %v7068
    %7102 = vst [vmem:[%s7070 + $0xf8] sm:$0xff] %v7069
    // Predicated region
    $region58: #{tpu_custom_call.1} parent=1 // pred_check
      _
    $region59: #{tpu_custom_call.1} parent=1 // pred_check_branch
      %7104 = sbr.rel (0) target = $region61
    $region60: #{tpu_custom_call.1} parent=1 // pred_region
      %s7106 = ssub.s32 20480, 20480
      %7107 = vsyncadd [#allocation4], %s7106
      %s7108 = sshll.u32 [#allocation9], 4
      %s7109 = int_to_ptr.vmem [resolvable:$true] %s7108
      %7114 = dma.vmem_to_hbm [thread:$0]  %s7109, 20480, %s11, [#allocation4], 128, 128, 8
    $region61: #{tpu_custom_call.1} parent=1 // pred_fallthru
      _
    // Predicated region
    $region62: #{tpu_custom_call.1} parent=1 // pred_check
      _
    $region63: #{tpu_custom_call.1} parent=1 // pred_check_branch
      %7116 = sbr.rel (0) target = $region65
    $region64: #{tpu_custom_call.1} parent=1 // pred_region
      %7117 = dma.done [#allocation4], 20480
    $region65: #{tpu_custom_call.1} parent=1 // pred_fallthru
      _
    %7118 = vsyncpa [#allocation3], 1
    %7119 = vsyncpa [#allocation4], 1
    %7120 = vsyncpa [#allocation5], 1
    %7121 = vsyncpa [#allocation6], 1

</llo_original>
